<compile_context>
chip_gen: v6e
topology: v6e:2x2x1
jax: 0.10.0
libtpu: 0.0.40
codegen_flags: <defaults>
</compile_context>

<pallas_src>
import jax
import jax.numpy as jnp
import numpy as np
from jax.experimental import pallas as pl
from jax.experimental.pallas import tpu as pltpu

# Images per grid step.  8 is a good default on all generations (conv1 M=208,
# dense 8x128 output store).  Raise toward 16-24 on v6e/v7x to fill the
# 256-row MXU (the block-diagonal pool/gather matrices grow as B^2).
BATCH_BLOCK = 8


# ----------------------------------------------------------------------------
# Fused kernel: one grid step == B images; everything stays in vregs/VMEM.
#   Activation layout: rows = (image-within-block, output height) stacked in
#   sublanes, lanes = width * channels (channel minor).
# ----------------------------------------------------------------------------
def _fused_forward_kernel(x_ref, m1_ref, b1_ref, q_ref, pshift_ref, m2_ref,
                          b2_ref, re_ref, ro_ref, sce_ref, sco_ref,
                          wfc1_ref, bfc1_ref, wfc2_ref, bfc2_ref, out_ref):
    f32 = jnp.float32
    bf16 = jnp.bfloat16
    B = out_ref.shape[0]

    # ---- conv1 (1->16, 3x3, valid): single deep-K matmul over the 3 vertical
    #      taps (tap concat done host-side), + bias + ReLU -> (26B, 416)
    h1 = jnp.dot(x_ref[...], m1_ref[...], preferred_element_type=f32) + b1_ref[...]
    h1 = jnp.maximum(h1, 0.0).astype(bf16)

    # ---- AvgPool2d(2), column half: exact {0, 0.5} matrix -> (26B, 208)
    hq = jnp.dot(h1, q_ref[...], preferred_element_type=f32).astype(bf16)

    # ---- AvgPool2d(2) row half fused with conv2's vertical-tap row selection,
    #      then conv2 (16->64, 3x3, valid) + bias + ReLU -> (11B, 704)
    h2 = b2_ref[...]
    for di in range(3):
        p1d = jnp.dot(pshift_ref[di], hq, preferred_element_type=f32).astype(bf16)
        h2 = h2 + jnp.dot(p1d, m2_ref[di], preferred_element_type=f32)
    h2 = jnp.maximum(h2, 0.0).astype(bf16)

    # ---- MaxPool2d(2): rows first (cheap 0/1 gathers, h-major output rows
    #      h*B + b), then columns -> (5B, 320)
    rmax = jnp.maximum(
        jnp.dot(re_ref[...], h2, preferred_element_type=f32),
        jnp.dot(ro_ref[...], h2, preferred_element_type=f32)).astype(bf16)
    p2 = jnp.maximum(
        jnp.dot(rmax, sce_ref[...], preferred_element_type=f32),
        jnp.dot(rmax, sco_ref[...], preferred_element_type=f32)).astype(bf16)

    # ---- flatten (folded into fc1 weights) + Dropout (identity, eval) + fc1
    # TODO(synk): training-mode dropout masking is not reproduced.
    f1 = bfc1_ref[...]                                       # (1, 128) bias init
    for h in range(5):
        f1 = f1 + jnp.dot(p2[h * B:(h + 1) * B, :], wfc1_ref[h],
                          preferred_element_type=f32)
    f1 = f1.astype(bf16)                                     # (B, 128)

    # ---- fc2 -> dense (B, 128) tile; columns >= 10 are zero padding ---------
    out_ref[...] = (jnp.dot(f1, wfc2_ref[...], preferred_element_type=f32)
                    + bfc2_ref[...])


# ----------------------------------------------------------------------------
# One-time host-side parameter preparation (exact, numpy; no hot-path cost)
# ----------------------------------------------------------------------------
def prepare_pallas_params(params, batch_block=BATCH_BLOCK):
    B = batch_block
    w1 = np.asarray(params["w_cnn1"], np.float32)   # (16, 1, 3, 3)
    b1 = np.asarray(params["b_cnn1"], np.float32)   # (16,)
    w2 = np.asarray(params["w_cnn2"], np.float32)   # (64, 16, 3, 3)
    b2 = np.asarray(params["b_cnn2"], np.float32)   # (64,)
    wf1 = np.asarray(params["w_fc1"], np.float32)   # (100, 1600)
    bf1 = np.asarray(params["b_fc1"], np.float32)   # (100,)
    wf2 = np.asarray(params["w_fc2"], np.float32)   # (10, 100)
    bf2 = np.asarray(params["b_fc2"], np.float32)   # (10,)

    taps = np.arange(3)

    # conv1 as one (84, 416) banded matrix: rows = di*28 + w, cols = j*16 + oc
    ind1 = (np.arange(28)[None, :, None] ==
            np.arange(26)[None, None, :] + taps[:, None, None]).astype(np.float32)
    M1 = np.einsum("awj,oda->dwjo", ind1, w1[:, 0]).reshape(3 * 28, 26 * 16)
    b1row = np.tile(b1, 26).reshape(1, 26 * 16)

    # 2x2 avg-pool, column half (exact {0, 0.5})
    A = (np.arange(26)[:, None] // 2 == np.arange(13)[None, :]).astype(np.float32)
    Q = 0.5 * np.kron(A, np.eye(16, dtype=np.float32))            # (416, 208)

    # 2x2 avg-pool rows fused with conv2 vertical-tap row selection,
    # block-diagonal over the B images of one grid step: (3, 11B, 26B)
    rowsel = np.zeros((3, 11, 26), np.float32)
    for di in range(3):
        for i in range(11):
            rowsel[di, i, 2 * (i + di)] = 0.5
            rowsel[di, i, 2 * (i + di) + 1] = 0.5
    eyeB = np.eye(B, dtype=np.float32)
    Pshift = np.stack([np.kron(eyeB, rowsel[di]) for di in range(3)])

    # conv2 as 3 banded matrices: rows = w*16 + ic, cols = j*64 + oc
    ind2 = (np.arange(13)[None, :, None] ==
            np.arange(11)[None, None, :] + taps[:, None, None]).astype(np.float32)
    M2 = np.einsum("awj,oida->dwijo", ind2, w2).reshape(3, 13 * 16, 11 * 64)
    b2row = np.tile(b2, 11).reshape(1, 11 * 64)

    # 2x2 max-pool: rows first (0/1 gathers, h-major output rows h*B + b)
    Re = np.zeros((5 * B, 11 * B), np.float32)
    Ro = np.zeros((5 * B, 11 * B), np.float32)
    for h in range(5):
        for bb in range(B):
            Re[h * B + bb, bb * 11 + 2 * h] = 1.0
            Ro[h * B + bb, bb * 11 + 2 * h + 1] = 1.0
    # ...then columns (0/1 gathers over width, channel preserved)
    Ece = (np.arange(11)[:, None] == 2 * np.arange(5)[None, :]).astype(np.float32)
    Eco = (np.arange(11)[:, None] == 2 * np.arange(5)[None, :] + 1).astype(np.float32)
    Sce = np.kron(Ece, np.eye(64, dtype=np.float32))               # (704, 320)
    Sco = np.kron(Eco, np.eye(64, dtype=np.float32))               # (704, 320)

    # fc1: fold the PyTorch NCHW flatten (index = oc*25 + h*5 + w) into the
    # weight, split by pooled row h; pad 100 -> 128 output lanes.
    Wf1 = wf1.reshape(100, 64, 5, 5).transpose(2, 3, 1, 0).reshape(5, 320, 100)
    Wf1 = np.pad(Wf1, ((0, 0), (0, 0), (0, 28)))
    bf1p = np.pad(bf1, (0, 28)).reshape(1, 128)

    # fc2: transpose + pad to (128, 128); columns >= 10 stay zero.
    Wf2 = np.pad(wf2.T, ((0, 28), (0, 118)))
    bf2p = np.pad(bf2, (0, 118)).reshape(1, 128)

    bf16 = jnp.bfloat16
    f32 = jnp.float32
    return {
        "M1": jnp.asarray(M1, bf16), "b1": jnp.asarray(b1row, f32),
        "Q": jnp.asarray(Q, bf16), "Pshift": jnp.asarray(Pshift, bf16),
        "M2": jnp.asarray(M2, bf16), "b2": jnp.asarray(b2row, f32),
        "Re": jnp.asarray(Re, bf16), "Ro": jnp.asarray(Ro, bf16),
        "Sce": jnp.asarray(Sce, bf16), "Sco": jnp.asarray(Sco, bf16),
        "Wfc1": jnp.asarray(Wf1, bf16), "bfc1": jnp.asarray(bf1p, f32),
        "Wfc2": jnp.asarray(Wf2, bf16), "bfc2": jnp.asarray(bf2p, f32),
    }


def _const_spec(shape):
    zeros = (0,) * len(shape)
    return pl.BlockSpec(shape, lambda i, _z=zeros: _z)


# ----------------------------------------------------------------------------
# Forward pass: single fused pallas_call, B images per grid step
# ----------------------------------------------------------------------------
@jax.jit
def forward(prep, x_nchw):
    B = BATCH_BLOCK
    n = x_nchw.shape[0]
    n_pad = ((n + B - 1) // B) * B
    x = x_nchw.astype(jnp.float32).reshape(n, 28, 28)
    if n_pad != n:
        x = jnp.pad(x, ((0, n_pad - n), (0, 0), (0, 0)))

    # Fold conv1's 3 vertical taps into the lane dim on the XLA side (tiny):
    # xcat[b*26 + i, di*28 + w] = x[b, i + di, w]
    xcat = jnp.concatenate([x[:, 0:26, :], x[:, 1:27, :], x[:, 2:28, :]], axis=-1)
    xcat = xcat.reshape(n_pad * 26, 84).astype(jnp.bfloat16)

    num_blocks = n_pad // B
    # On v7x, megacore sharding duplicates the constant DMA per TensorCore;
    # only shard when there is enough per-core work.
    dims = ("parallel",) if num_blocks >= 4 else ("arbitrary",)

    out = pl.pallas_call(
        _fused_forward_kernel,
        out_shape=jax.ShapeDtypeStruct((n_pad, 128), jnp.float32),
        grid_spec=pltpu.PrefetchScalarGridSpec(
            num_scalar_prefetch=0,
            grid=(num_blocks,),
            in_specs=[
                pl.BlockSpec((B * 26, 84), lambda i: (i, 0)),   # tap-stacked input
                _const_spec((84, 416)),            # M1   (conv1 banded weights)
                _const_spec((1, 416)),             # conv1 bias row
                _const_spec((416, 208)),           # Q    (avg-pool columns)
                _const_spec((3, 11 * B, 26 * B)),  # Pshift (avg-pool rows + taps)
                _const_spec((3, 208, 704)),        # M2   (conv2 banded weights)
                _const_spec((1, 704)),             # conv2 bias row
                _const_spec((5 * B, 11 * B)),      # Re   (max-pool even rows)
                _const_spec((5 * B, 11 * B)),      # Ro   (max-pool odd rows)
                _const_spec((704, 320)),           # Sce  (max-pool even cols)
                _const_spec((704, 320)),           # Sco  (max-pool odd cols)
                _const_spec((5, 320, 128)),        # fc1 weight (flatten folded)
                _const_spec((1, 128)),             # fc1 bias (padded)
                _const_spec((128, 128)),           # fc2 weight (padded)
                _const_spec((1, 128)),             # fc2 bias (padded)
            ],
            out_specs=pl.BlockSpec((B, 128), lambda i: (i, 0)),
        ),
        compiler_params=pltpu.CompilerParams(
            dimension_semantics=dims,
            vmem_limit_bytes=32 * 1024 * 1024,
        ),
    )(xcat,
      prep["M1"], prep["b1"], prep["Q"], prep["Pshift"], prep["M2"], prep["b2"],
      prep["Re"], prep["Ro"], prep["Sce"], prep["Sco"],
      prep["Wfc1"], prep["bfc1"], prep["Wfc2"], prep["bfc2"])

    return out[:n, :10]


# ----------------------------------------------------------------------------
# Parameter init (PyTorch layouts) and pure-JAX reference for validation
# ----------------------------------------------------------------------------
def init_params(key):
    ks = jax.random.split(key, 8)
    return {
        "w_cnn1": jax.random.normal(ks[0], (16, 1, 3, 3), jnp.float32) * 0.1,
        "b_cnn1": jax.random.normal(ks[1], (16,), jnp.float32) * 0.05,
        "w_cnn2": jax.random.normal(ks[2], (64, 16, 3, 3), jnp.float32) * 0.05,
        "b_cnn2": jax.random.normal(ks[3], (64,), jnp.float32) * 0.05,
        "w_fc1": jax.random.normal(ks[4], (100, 1600), jnp.float32) * 0.02,
        "b_fc1": jax.random.normal(ks[5], (100,), jnp.float32) * 0.05,
        "w_fc2": jax.random.normal(ks[6], (10, 100), jnp.float32) * 0.05,
        "b_fc2": jax.random.normal(ks[7], (10,), jnp.float32) * 0.05,
    }


@jax.jit
def reference_forward(params, x_nchw):
    hp = jax.lax.Precision.HIGHEST
    x = x_nchw.astype(jnp.float32)
    y = jax.lax.conv_general_dilated(
        x, params["w_cnn1"], window_strides=(1, 1), padding="VALID",
        dimension_numbers=("NCHW", "OIHW", "NCHW"), precision=hp)
    y = jnp.maximum(y + params["b_cnn1"][None, :, None, None], 0.0)   # (N,16,26,26)
    n = y.shape[0]
    y = y.reshape(n, 16, 13, 2, 13, 2).mean(axis=(3, 5))              # (N,16,13,13)
    y = jax.lax.conv_general_dilated(
        y, params["w_cnn2"], window_strides=(1, 1), padding="VALID",
        dimension_numbers=("NCHW", "OIHW", "NCHW"), precision=hp)
    y = jnp.maximum(y + params["b_cnn2"][None, :, None, None], 0.0)   # (N,64,11,11)
    y = y[:, :, :10, :10].reshape(n, 64, 5, 2, 5, 2).max(axis=(3, 5))  # (N,64,5,5)
    y = y.reshape(n, -1)                                              # (N,1600)
    y = jnp.dot(y, params["w_fc1"].T, precision=hp) + params["b_fc1"]
    y = jnp.dot(y, params["w_fc2"].T, precision=hp) + params["b_fc2"]
    return y


if __name__ == "__main__":
    key = jax.random.PRNGKey(0)
    pkey, xkey = jax.random.split(key)
    params = init_params(pkey)
    prep = prepare_pallas_params(params, BATCH_BLOCK)

    # Input implied by fc1(1600): 28x28 single-channel images, NCHW.
    x = jax.random.normal(xkey, (16, 1, 28, 28), jnp.float32)

    logits = forward(prep, x)
    jax.block_until_ready(logits)
    assert logits.shape == (16, 10) and logits.dtype == jnp.float32

    ref = reference_forward(params, x)
    err = float(jnp.max(jnp.abs(logits - ref)))
    # bf16 MXU operands (f32 accumulate) => slightly wider tolerance than f32.
    assert err < 2e-2, f"mismatch vs pure-JAX reference: max abs err = {err}"

    print("KERNEL_OK")
</pallas_src>

<mosaic_0001>
module attributes {stable_mosaic.version = 11 : i64} {
  func.func @_fused_forward_kernel(%arg0: i32, %arg1: memref<208x84xbf16, #tpu.memory_space<vmem>>, %arg2: memref<84x416xbf16, #tpu.memory_space<vmem>>, %arg3: memref<1x416xf32, #tpu.memory_space<vmem>>, %arg4: memref<416x208xbf16, #tpu.memory_space<vmem>>, %arg5: memref<3x88x208xbf16, #tpu.memory_space<vmem>>, %arg6: memref<3x208x704xbf16, #tpu.memory_space<vmem>>, %arg7: memref<1x704xf32, #tpu.memory_space<vmem>>, %arg8: memref<40x88xbf16, #tpu.memory_space<vmem>>, %arg9: memref<40x88xbf16, #tpu.memory_space<vmem>>, %arg10: memref<704x320xbf16, #tpu.memory_space<vmem>>, %arg11: memref<704x320xbf16, #tpu.memory_space<vmem>>, %arg12: memref<5x320x128xbf16, #tpu.memory_space<vmem>>, %arg13: memref<1x128xf32, #tpu.memory_space<vmem>>, %arg14: memref<128x128xbf16, #tpu.memory_space<vmem>>, %arg15: memref<1x128xf32, #tpu.memory_space<vmem>>, %arg16: memref<8x128xf32, #tpu.memory_space<vmem>>) attributes {dimension_semantics = [#tpu.dimension_semantics<arbitrary>], iteration_bounds = array<i64: 2>, scalar_prefetch = 0 : i64, scratch_operands = 0 : i64, tpu.core_type = #tpu.core_type<tc>, window_params = [{transform_indices = @transform_0, window_bounds = array<i64: 208, 84>}, {pipeline_mode = #tpu.pipeline_mode<synchronous>, transform_indices = @transform_1, window_bounds = array<i64: 84, 416>}, {pipeline_mode = #tpu.pipeline_mode<synchronous>, transform_indices = @transform_2, window_bounds = array<i64: 1, 416>}, {pipeline_mode = #tpu.pipeline_mode<synchronous>, transform_indices = @transform_3, window_bounds = array<i64: 416, 208>}, {pipeline_mode = #tpu.pipeline_mode<synchronous>, transform_indices = @transform_4, window_bounds = array<i64: 3, 88, 208>}, {pipeline_mode = #tpu.pipeline_mode<synchronous>, transform_indices = @transform_5, window_bounds = array<i64: 3, 208, 704>}, {pipeline_mode = #tpu.pipeline_mode<synchronous>, transform_indices = @transform_6, window_bounds = array<i64: 1, 704>}, {pipeline_mode = #tpu.pipeline_mode<synchronous>, transform_indices = @transform_7, window_bounds = array<i64: 40, 88>}, {pipeline_mode = #tpu.pipeline_mode<synchronous>, transform_indices = @transform_8, window_bounds = array<i64: 40, 88>}, {pipeline_mode = #tpu.pipeline_mode<synchronous>, transform_indices = @transform_9, window_bounds = array<i64: 704, 320>}, {pipeline_mode = #tpu.pipeline_mode<synchronous>, transform_indices = @transform_10, window_bounds = array<i64: 704, 320>}, {pipeline_mode = #tpu.pipeline_mode<synchronous>, transform_indices = @transform_11, window_bounds = array<i64: 5, 320, 128>}, {pipeline_mode = #tpu.pipeline_mode<synchronous>, transform_indices = @transform_12, window_bounds = array<i64: 1, 128>}, {pipeline_mode = #tpu.pipeline_mode<synchronous>, transform_indices = @transform_13, window_bounds = array<i64: 128, 128>}, {pipeline_mode = #tpu.pipeline_mode<synchronous>, transform_indices = @transform_14, window_bounds = array<i64: 1, 128>}, {transform_indices = @transform_15, window_bounds = array<i64: 8, 128>}]} {
    %c0 = arith.constant 0 : index
    %c0_0 = arith.constant 0 : index
    %0 = vector.load %arg1[%c0, %c0_0] : memref<208x84xbf16, #tpu.memory_space<vmem>>, vector<208x84xbf16>
    %c0_1 = arith.constant 0 : index
    %c0_2 = arith.constant 0 : index
    %1 = vector.load %arg2[%c0_1, %c0_2] : memref<84x416xbf16, #tpu.memory_space<vmem>>, vector<84x416xbf16>
    %cst = arith.constant dense<0.000000e+00> : vector<208x416xf32>
    %2 = tpu.matmul %0, %1, %cst {dimension_numbers = #tpu.dot_dimension_numbers<[1], [0], [0], [1], [0, 0, 1, 1], [], []>} : vector<208x84xbf16>, vector<84x416xbf16>, vector<208x416xf32> -> vector<208x416xf32>
    %c0_3 = arith.constant 0 : index
    %c0_4 = arith.constant 0 : index
    %3 = vector.load %arg3[%c0_3, %c0_4] : memref<1x416xf32, #tpu.memory_space<vmem>>, vector<1x416xf32>
    %4 = vector.broadcast %3 : vector<1x416xf32> to vector<208x416xf32>
    %5 = arith.addf %2, %4 : vector<208x416xf32>
    %cst_5 = arith.constant 0.000000e+00 : f32
    %6 = vector.broadcast %cst_5 : f32 to vector<208x416xf32>
    %7 = arith.maximumf %5, %6 : vector<208x416xf32>
    %8 = arith.truncf %7 : vector<208x416xf32> to vector<208x416xbf16>
    %c0_6 = arith.constant 0 : index
    %c0_7 = arith.constant 0 : index
    %9 = vector.load %arg4[%c0_6, %c0_7] : memref<416x208xbf16, #tpu.memory_space<vmem>>, vector<416x208xbf16>
    %cst_8 = arith.constant dense<0.000000e+00> : vector<208x208xf32>
    %10 = tpu.matmul %8, %9, %cst_8 {dimension_numbers = #tpu.dot_dimension_numbers<[1], [0], [0], [1], [0, 0, 1, 1], [], []>} : vector<208x416xbf16>, vector<416x208xbf16>, vector<208x208xf32> -> vector<208x208xf32>
    %11 = arith.truncf %10 : vector<208x208xf32> to vector<208x208xbf16>
    %c0_9 = arith.constant 0 : index
    %c0_10 = arith.constant 0 : index
    %12 = vector.load %arg7[%c0_9, %c0_10] : memref<1x704xf32, #tpu.memory_space<vmem>>, vector<1x704xf32>
    %c0_11 = arith.constant 0 : index
    %c0_12 = arith.constant 0 : index
    %c0_13 = arith.constant 0 : index
    %13 = vector.load %arg5[%c0_11, %c0_12, %c0_13] : memref<3x88x208xbf16, #tpu.memory_space<vmem>>, vector<1x88x208xbf16>
    %14 = vector.shape_cast %13 : vector<1x88x208xbf16> to vector<88x208xbf16>
    %cst_14 = arith.constant dense<0.000000e+00> : vector<88x208xf32>
    %15 = tpu.matmul %14, %11, %cst_14 {dimension_numbers = #tpu.dot_dimension_numbers<[1], [0], [0], [1], [0, 0, 1, 1], [], []>} : vector<88x208xbf16>, vector<208x208xbf16>, vector<88x208xf32> -> vector<88x208xf32>
    %16 = arith.truncf %15 : vector<88x208xf32> to vector<88x208xbf16>
    %c0_15 = arith.constant 0 : index
    %c0_16 = arith.constant 0 : index
    %c0_17 = arith.constant 0 : index
    %17 = vector.load %arg6[%c0_15, %c0_16, %c0_17] : memref<3x208x704xbf16, #tpu.memory_space<vmem>>, vector<1x208x704xbf16>
    %18 = vector.shape_cast %17 : vector<1x208x704xbf16> to vector<208x704xbf16>
    %cst_18 = arith.constant dense<0.000000e+00> : vector<88x704xf32>
    %19 = tpu.matmul %16, %18, %cst_18 {dimension_numbers = #tpu.dot_dimension_numbers<[1], [0], [0], [1], [0, 0, 1, 1], [], []>} : vector<88x208xbf16>, vector<208x704xbf16>, vector<88x704xf32> -> vector<88x704xf32>
    %20 = vector.broadcast %12 : vector<1x704xf32> to vector<88x704xf32>
    %21 = arith.addf %20, %19 : vector<88x704xf32>
    %c1 = arith.constant 1 : index
    %c0_19 = arith.constant 0 : index
    %c0_20 = arith.constant 0 : index
    %22 = vector.load %arg5[%c1, %c0_19, %c0_20] : memref<3x88x208xbf16, #tpu.memory_space<vmem>>, vector<1x88x208xbf16>
    %23 = vector.shape_cast %22 : vector<1x88x208xbf16> to vector<88x208xbf16>
    %cst_21 = arith.constant dense<0.000000e+00> : vector<88x208xf32>
    %24 = tpu.matmul %23, %11, %cst_21 {dimension_numbers = #tpu.dot_dimension_numbers<[1], [0], [0], [1], [0, 0, 1, 1], [], []>} : vector<88x208xbf16>, vector<208x208xbf16>, vector<88x208xf32> -> vector<88x208xf32>
    %25 = arith.truncf %24 : vector<88x208xf32> to vector<88x208xbf16>
    %c1_22 = arith.constant 1 : index
    %c0_23 = arith.constant 0 : index
    %c0_24 = arith.constant 0 : index
    %26 = vector.load %arg6[%c1_22, %c0_23, %c0_24] : memref<3x208x704xbf16, #tpu.memory_space<vmem>>, vector<1x208x704xbf16>
    %27 = vector.shape_cast %26 : vector<1x208x704xbf16> to vector<208x704xbf16>
    %cst_25 = arith.constant dense<0.000000e+00> : vector<88x704xf32>
    %28 = tpu.matmul %25, %27, %cst_25 {dimension_numbers = #tpu.dot_dimension_numbers<[1], [0], [0], [1], [0, 0, 1, 1], [], []>} : vector<88x208xbf16>, vector<208x704xbf16>, vector<88x704xf32> -> vector<88x704xf32>
    %29 = arith.addf %21, %28 : vector<88x704xf32>
    %c2 = arith.constant 2 : index
    %c0_26 = arith.constant 0 : index
    %c0_27 = arith.constant 0 : index
    %30 = vector.load %arg5[%c2, %c0_26, %c0_27] : memref<3x88x208xbf16, #tpu.memory_space<vmem>>, vector<1x88x208xbf16>
    %31 = vector.shape_cast %30 : vector<1x88x208xbf16> to vector<88x208xbf16>
    %cst_28 = arith.constant dense<0.000000e+00> : vector<88x208xf32>
    %32 = tpu.matmul %31, %11, %cst_28 {dimension_numbers = #tpu.dot_dimension_numbers<[1], [0], [0], [1], [0, 0, 1, 1], [], []>} : vector<88x208xbf16>, vector<208x208xbf16>, vector<88x208xf32> -> vector<88x208xf32>
    %33 = arith.truncf %32 : vector<88x208xf32> to vector<88x208xbf16>
    %c2_29 = arith.constant 2 : index
    %c0_30 = arith.constant 0 : index
    %c0_31 = arith.constant 0 : index
    %34 = vector.load %arg6[%c2_29, %c0_30, %c0_31] : memref<3x208x704xbf16, #tpu.memory_space<vmem>>, vector<1x208x704xbf16>
    %35 = vector.shape_cast %34 : vector<1x208x704xbf16> to vector<208x704xbf16>
    %cst_32 = arith.constant dense<0.000000e+00> : vector<88x704xf32>
    %36 = tpu.matmul %33, %35, %cst_32 {dimension_numbers = #tpu.dot_dimension_numbers<[1], [0], [0], [1], [0, 0, 1, 1], [], []>} : vector<88x208xbf16>, vector<208x704xbf16>, vector<88x704xf32> -> vector<88x704xf32>
    %37 = arith.addf %29, %36 : vector<88x704xf32>
    %cst_33 = arith.constant 0.000000e+00 : f32
    %38 = vector.broadcast %cst_33 : f32 to vector<88x704xf32>
    %39 = arith.maximumf %37, %38 : vector<88x704xf32>
    %40 = arith.truncf %39 : vector<88x704xf32> to vector<88x704xbf16>
    %c0_34 = arith.constant 0 : index
    %c0_35 = arith.constant 0 : index
    %41 = vector.load %arg8[%c0_34, %c0_35] : memref<40x88xbf16, #tpu.memory_space<vmem>>, vector<40x88xbf16>
    %cst_36 = arith.constant dense<0.000000e+00> : vector<40x704xf32>
    %42 = tpu.matmul %41, %40, %cst_36 {dimension_numbers = #tpu.dot_dimension_numbers<[1], [0], [0], [1], [0, 0, 1, 1], [], []>} : vector<40x88xbf16>, vector<88x704xbf16>, vector<40x704xf32> -> vector<40x704xf32>
    %c0_37 = arith.constant 0 : index
    %c0_38 = arith.constant 0 : index
    %43 = vector.load %arg9[%c0_37, %c0_38] : memref<40x88xbf16, #tpu.memory_space<vmem>>, vector<40x88xbf16>
    %cst_39 = arith.constant dense<0.000000e+00> : vector<40x704xf32>
    %44 = tpu.matmul %43, %40, %cst_39 {dimension_numbers = #tpu.dot_dimension_numbers<[1], [0], [0], [1], [0, 0, 1, 1], [], []>} : vector<40x88xbf16>, vector<88x704xbf16>, vector<40x704xf32> -> vector<40x704xf32>
    %45 = arith.maximumf %42, %44 : vector<40x704xf32>
    %46 = arith.truncf %45 : vector<40x704xf32> to vector<40x704xbf16>
    %c0_40 = arith.constant 0 : index
    %c0_41 = arith.constant 0 : index
    %47 = vector.load %arg10[%c0_40, %c0_41] : memref<704x320xbf16, #tpu.memory_space<vmem>>, vector<704x320xbf16>
    %cst_42 = arith.constant dense<0.000000e+00> : vector<40x320xf32>
    %48 = tpu.matmul %46, %47, %cst_42 {dimension_numbers = #tpu.dot_dimension_numbers<[1], [0], [0], [1], [0, 0, 1, 1], [], []>} : vector<40x704xbf16>, vector<704x320xbf16>, vector<40x320xf32> -> vector<40x320xf32>
    %c0_43 = arith.constant 0 : index
    %c0_44 = arith.constant 0 : index
    %49 = vector.load %arg11[%c0_43, %c0_44] : memref<704x320xbf16, #tpu.memory_space<vmem>>, vector<704x320xbf16>
    %cst_45 = arith.constant dense<0.000000e+00> : vector<40x320xf32>
    %50 = tpu.matmul %46, %49, %cst_45 {dimension_numbers = #tpu.dot_dimension_numbers<[1], [0], [0], [1], [0, 0, 1, 1], [], []>} : vector<40x704xbf16>, vector<704x320xbf16>, vector<40x320xf32> -> vector<40x320xf32>
    %51 = arith.maximumf %48, %50 : vector<40x320xf32>
    %52 = arith.truncf %51 : vector<40x320xf32> to vector<40x320xbf16>
    %c0_46 = arith.constant 0 : index
    %c0_47 = arith.constant 0 : index
    %53 = vector.load %arg13[%c0_46, %c0_47] : memref<1x128xf32, #tpu.memory_space<vmem>>, vector<1x128xf32>
    %54 = vector.extract_strided_slice %52 {offsets = [0, 0], sizes = [8, 320], strides = [1, 1]} : vector<40x320xbf16> to vector<8x320xbf16>
    %c0_48 = arith.constant 0 : index
    %c0_49 = arith.constant 0 : index
    %c0_50 = arith.constant 0 : index
    %55 = vector.load %arg12[%c0_48, %c0_49, %c0_50] : memref<5x320x128xbf16, #tpu.memory_space<vmem>>, vector<1x320x128xbf16>
    %56 = vector.shape_cast %55 : vector<1x320x128xbf16> to vector<320x128xbf16>
    %cst_51 = arith.constant dense<0.000000e+00> : vector<8x128xf32>
    %57 = tpu.matmul %54, %56, %cst_51 {dimension_numbers = #tpu.dot_dimension_numbers<[1], [0], [0], [1], [0, 0, 1, 1], [], []>} : vector<8x320xbf16>, vector<320x128xbf16>, vector<8x128xf32> -> vector<8x128xf32>
    %58 = vector.broadcast %53 : vector<1x128xf32> to vector<8x128xf32>
    %59 = arith.addf %58, %57 : vector<8x128xf32>
    %60 = vector.extract_strided_slice %52 {offsets = [8, 0], sizes = [8, 320], strides = [1, 1]} : vector<40x320xbf16> to vector<8x320xbf16>
    %c1_52 = arith.constant 1 : index
    %c0_53 = arith.constant 0 : index
    %c0_54 = arith.constant 0 : index
    %61 = vector.load %arg12[%c1_52, %c0_53, %c0_54] : memref<5x320x128xbf16, #tpu.memory_space<vmem>>, vector<1x320x128xbf16>
    %62 = vector.shape_cast %61 : vector<1x320x128xbf16> to vector<320x128xbf16>
    %cst_55 = arith.constant dense<0.000000e+00> : vector<8x128xf32>
    %63 = tpu.matmul %60, %62, %cst_55 {dimension_numbers = #tpu.dot_dimension_numbers<[1], [0], [0], [1], [0, 0, 1, 1], [], []>} : vector<8x320xbf16>, vector<320x128xbf16>, vector<8x128xf32> -> vector<8x128xf32>
    %64 = arith.addf %59, %63 : vector<8x128xf32>
    %65 = vector.extract_strided_slice %52 {offsets = [16, 0], sizes = [8, 320], strides = [1, 1]} : vector<40x320xbf16> to vector<8x320xbf16>
    %c2_56 = arith.constant 2 : index
    %c0_57 = arith.constant 0 : index
    %c0_58 = arith.constant 0 : index
    %66 = vector.load %arg12[%c2_56, %c0_57, %c0_58] : memref<5x320x128xbf16, #tpu.memory_space<vmem>>, vector<1x320x128xbf16>
    %67 = vector.shape_cast %66 : vector<1x320x128xbf16> to vector<320x128xbf16>
    %cst_59 = arith.constant dense<0.000000e+00> : vector<8x128xf32>
    %68 = tpu.matmul %65, %67, %cst_59 {dimension_numbers = #tpu.dot_dimension_numbers<[1], [0], [0], [1], [0, 0, 1, 1], [], []>} : vector<8x320xbf16>, vector<320x128xbf16>, vector<8x128xf32> -> vector<8x128xf32>
    %69 = arith.addf %64, %68 : vector<8x128xf32>
    %70 = vector.extract_strided_slice %52 {offsets = [24, 0], sizes = [8, 320], strides = [1, 1]} : vector<40x320xbf16> to vector<8x320xbf16>
    %c3 = arith.constant 3 : index
    %c0_60 = arith.constant 0 : index
    %c0_61 = arith.constant 0 : index
    %71 = vector.load %arg12[%c3, %c0_60, %c0_61] : memref<5x320x128xbf16, #tpu.memory_space<vmem>>, vector<1x320x128xbf16>
    %72 = vector.shape_cast %71 : vector<1x320x128xbf16> to vector<320x128xbf16>
    %cst_62 = arith.constant dense<0.000000e+00> : vector<8x128xf32>
    %73 = tpu.matmul %70, %72, %cst_62 {dimension_numbers = #tpu.dot_dimension_numbers<[1], [0], [0], [1], [0, 0, 1, 1], [], []>} : vector<8x320xbf16>, vector<320x128xbf16>, vector<8x128xf32> -> vector<8x128xf32>
    %74 = arith.addf %69, %73 : vector<8x128xf32>
    %75 = vector.extract_strided_slice %52 {offsets = [32, 0], sizes = [8, 320], strides = [1, 1]} : vector<40x320xbf16> to vector<8x320xbf16>
    %c4 = arith.constant 4 : index
    %c0_63 = arith.constant 0 : index
    %c0_64 = arith.constant 0 : index
    %76 = vector.load %arg12[%c4, %c0_63, %c0_64] : memref<5x320x128xbf16, #tpu.memory_space<vmem>>, vector<1x320x128xbf16>
    %77 = vector.shape_cast %76 : vector<1x320x128xbf16> to vector<320x128xbf16>
    %cst_65 = arith.constant dense<0.000000e+00> : vector<8x128xf32>
    %78 = tpu.matmul %75, %77, %cst_65 {dimension_numbers = #tpu.dot_dimension_numbers<[1], [0], [0], [1], [0, 0, 1, 1], [], []>} : vector<8x320xbf16>, vector<320x128xbf16>, vector<8x128xf32> -> vector<8x128xf32>
    %79 = arith.addf %74, %78 : vector<8x128xf32>
    %80 = arith.truncf %79 : vector<8x128xf32> to vector<8x128xbf16>
    %c0_66 = arith.constant 0 : index
    %c0_67 = arith.constant 0 : index
    %81 = vector.load %arg14[%c0_66, %c0_67] : memref<128x128xbf16, #tpu.memory_space<vmem>>, vector<128x128xbf16>
    %cst_68 = arith.constant dense<0.000000e+00> : vector<8x128xf32>
    %82 = tpu.matmul %80, %81, %cst_68 {dimension_numbers = #tpu.dot_dimension_numbers<[1], [0], [0], [1], [0, 0, 1, 1], [], []>} : vector<8x128xbf16>, vector<128x128xbf16>, vector<8x128xf32> -> vector<8x128xf32>
    %c0_69 = arith.constant 0 : index
    %c0_70 = arith.constant 0 : index
    %83 = vector.load %arg15[%c0_69, %c0_70] : memref<1x128xf32, #tpu.memory_space<vmem>>, vector<1x128xf32>
    %84 = vector.broadcast %83 : vector<1x128xf32> to vector<8x128xf32>
    %85 = arith.addf %82, %84 : vector<8x128xf32>
    %c0_71 = arith.constant 0 : index
    %c0_72 = arith.constant 0 : index
    %86 = vector.load %arg16[%c0_71, %c0_72] : memref<8x128xf32, #tpu.memory_space<vmem>>, vector<8x128xf32>
    tpu.vector_store %arg16[%c0_71, %c0_72], %85 {strides = array<i32>} : memref<8x128xf32, #tpu.memory_space<vmem>>, vector<8x128xf32>,
    return
  }
  func.func @transform_0(%arg0: i32) -> (i32, i32) {
    %c0_i32 = arith.constant 0 : i32
    %c0_i32_0 = arith.constant 0 : i32
    return %arg0, %c0_i32 : i32, i32
  }
  func.func @transform_1(%arg0: i32) -> (i32, i32) {
    %c0_i32 = arith.constant 0 : i32
    %c0_i32_0 = arith.constant 0 : i32
    %c0_i32_1 = arith.constant 0 : i32
    return %c0_i32, %c0_i32_0 : i32, i32
  }
  func.func @transform_2(%arg0: i32) -> (i32, i32) {
    %c0_i32 = arith.constant 0 : i32
    %c0_i32_0 = arith.constant 0 : i32
    %c0_i32_1 = arith.constant 0 : i32
    return %c0_i32, %c0_i32_0 : i32, i32
  }
  func.func @transform_3(%arg0: i32) -> (i32, i32) {
    %c0_i32 = arith.constant 0 : i32
    %c0_i32_0 = arith.constant 0 : i32
    %c0_i32_1 = arith.constant 0 : i32
    return %c0_i32, %c0_i32_0 : i32, i32
  }
  func.func @transform_4(%arg0: i32) -> (i32, i32, i32) {
    %c0_i32 = arith.constant 0 : i32
    %c0_i32_0 = arith.constant 0 : i32
    %c0_i32_1 = arith.constant 0 : i32
    %c0_i32_2 = arith.constant 0 : i32
    return %c0_i32, %c0_i32_0, %c0_i32_1 : i32, i32, i32
  }
  func.func @transform_5(%arg0: i32) -> (i32, i32, i32) {
    %c0_i32 = arith.constant 0 : i32
    %c0_i32_0 = arith.constant 0 : i32
    %c0_i32_1 = arith.constant 0 : i32
    %c0_i32_2 = arith.constant 0 : i32
    return %c0_i32, %c0_i32_0, %c0_i32_1 : i32, i32, i32
  }
  func.func @transform_6(%arg0: i32) -> (i32, i32) {
    %c0_i32 = arith.constant 0 : i32
    %c0_i32_0 = arith.constant 0 : i32
    %c0_i32_1 = arith.constant 0 : i32
    return %c0_i32, %c0_i32_0 : i32, i32
  }
  func.func @transform_7(%arg0: i32) -> (i32, i32) {
    %c0_i32 = arith.constant 0 : i32
    %c0_i32_0 = arith.constant 0 : i32
    %c0_i32_1 = arith.constant 0 : i32
    return %c0_i32, %c0_i32_0 : i32, i32
  }
  func.func @transform_8(%arg0: i32) -> (i32, i32) {
    %c0_i32 = arith.constant 0 : i32
    %c0_i32_0 = arith.constant 0 : i32
    %c0_i32_1 = arith.constant 0 : i32
    return %c0_i32, %c0_i32_0 : i32, i32
  }
  func.func @transform_9(%arg0: i32) -> (i32, i32) {
    %c0_i32 = arith.constant 0 : i32
    %c0_i32_0 = arith.constant 0 : i32
    %c0_i32_1 = arith.constant 0 : i32
    return %c0_i32, %c0_i32_0 : i32, i32
  }
  func.func @transform_10(%arg0: i32) -> (i32, i32) {
    %c0_i32 = arith.constant 0 : i32
    %c0_i32_0 = arith.constant 0 : i32
    %c0_i32_1 = arith.constant 0 : i32
    return %c0_i32, %c0_i32_0 : i32, i32
  }
  func.func @transform_11(%arg0: i32) -> (i32, i32, i32) {
    %c0_i32 = arith.constant 0 : i32
    %c0_i32_0 = arith.constant 0 : i32
    %c0_i32_1 = arith.constant 0 : i32
    %c0_i32_2 = arith.constant 0 : i32
    return %c0_i32, %c0_i32_0, %c0_i32_1 : i32, i32, i32
  }
  func.func @transform_12(%arg0: i32) -> (i32, i32) {
    %c0_i32 = arith.constant 0 : i32
    %c0_i32_0 = arith.constant 0 : i32
    %c0_i32_1 = arith.constant 0 : i32
    return %c0_i32, %c0_i32_0 : i32, i32
  }
  func.func @transform_13(%arg0: i32) -> (i32, i32) {
    %c0_i32 = arith.constant 0 : i32
    %c0_i32_0 = arith.constant 0 : i32
    %c0_i32_1 = arith.constant 0 : i32
    return %c0_i32, %c0_i32_0 : i32, i32
  }
  func.func @transform_14(%arg0: i32) -> (i32, i32) {
    %c0_i32 = arith.constant 0 : i32
    %c0_i32_0 = arith.constant 0 : i32
    %c0_i32_1 = arith.constant 0 : i32
    return %c0_i32, %c0_i32_0 : i32, i32
  }
  func.func @transform_15(%arg0: i32) -> (i32, i32) {
    %c0_i32 = arith.constant 0 : i32
    %c0_i32_0 = arith.constant 0 : i32
    return %arg0, %c0_i32 : i32, i32
  }
}

</mosaic_0001>

<llo_original>
// kernel: forward.1
$region0: #{forward.1}
  #allocation0 [shape = 'u32[]', space=smem, size = 0x4, offset = 0x4, fixed_abs, tag = 'smem constant byte address 0x4 - core index']
  #allocation1 [shape = 'u32[144,128]{1,0:T(1,128)}', space=vmem, size = 0x12000, scoped, tag = 'internal scratch']
  %s0 = inlined_call_operand.vmem [shape: bf16[416,84], index: 0, kind: input, shape index: {}]
  %s1 = inlined_call_operand.vmem [shape: bf16[84,416], index: 1, kind: input, shape index: {}]
  %s2 = inlined_call_operand.vmem [shape: f32[1,416], index: 2, kind: input, shape index: {}]
  %s3 = inlined_call_operand.vmem [shape: bf16[416,208], index: 3, kind: input, shape index: {}]
  %s4 = inlined_call_operand.vmem [shape: bf16[3,88,208], index: 4, kind: input, shape index: {}]
  %s5 = inlined_call_operand.vmem [shape: bf16[3,208,704], index: 5, kind: input, shape index: {}]
  %s6 = inlined_call_operand.vmem [shape: f32[1,704], index: 6, kind: input, shape index: {}]
  %s7 = inlined_call_operand.vmem [shape: bf16[40,88], index: 7, kind: input, shape index: {}]
  %s8 = inlined_call_operand.vmem [shape: bf16[40,88], index: 8, kind: input, shape index: {}]
  %s9 = inlined_call_operand.vmem [shape: bf16[704,320], index: 9, kind: input, shape index: {}]
  %s10 = inlined_call_operand.vmem [shape: bf16[704,320], index: 10, kind: input, shape index: {}]
  %s11 = inlined_call_operand.vmem [shape: bf16[5,320,128], index: 11, kind: input, shape index: {}]
  %s12 = inlined_call_operand.vmem [shape: f32[1,128], index: 12, kind: input, shape index: {}]
  %s13 = inlined_call_operand.vmem [shape: bf16[128,128], index: 13, kind: input, shape index: {}]
  %s14 = inlined_call_operand.vmem [shape: f32[1,128], index: 14, kind: input, shape index: {}]
  %s15 = inlined_call_operand.hbm [shape: f32[16,128], index: 15, kind: output, shape index: {}]
  %s16 = sld [smem:[#allocation0]]
  $region93: #{forward.1} parent=0
    _
  %s18 = ssub.s32 1, %s16
  %s19 = scalar_select 0, %s18, %s16
  $region1: #{forward.1} parent=0
    #allocation2 [shape = 'u8[8192]{0}', space=vmem, size = 0x2000, scoped, tag = 'output window, operand 0']
    #allocation3 [shape = 's32[2]{0}', space=sflag, size = 0x8, scoped, tag = 'scoped memory for forward.1']
    %20 = vsyncpa [#allocation3], 0
    %s21 = scalar_lea.sflag [#allocation3], 1
    %22 = vsyncpa %s21, 0
    loop: start=0, step=1, limit=4
    $region2: #{forward.1} parent=1 // loop_pre_header
      _
    $region3: #{forward.1} parent=1 // loop_header
      %s24 = sphi 0, %s28
      %p25 = scmp.ge.s32.totalorder %s24, 4
      %s34 = sphi 0, %s36
      %s37 = sphi 0, %s34
      %s38 = sphi 0, %s37
      %s54 = sphi 0, %s38
      %s58 = sphi 0, %s58
      %s60 = sphi 0, %s58
      %s61 = sphi 0, %s60
      %s75 = sphi 0, %s61
      %s79 = sphi 0, %s79
      %s81 = sphi 0, %s79
      %s82 = sphi 0, %s81
      %s96 = sphi 0, %s82
      %s100 = sphi 0, %s100
      %s102 = sphi 0, %s100
      %s103 = sphi 0, %s102
      %s117 = sphi 0, %s103
      %s121 = sphi 0, %s121
      %s123 = sphi 0, %s121
      %s124 = sphi 0, %s123
      %s138 = sphi 0, %s124
      %s142 = sphi 0, %s142
      %s144 = sphi 0, %s142
      %s145 = sphi 0, %s144
      %s159 = sphi 0, %s145
      %s163 = sphi 0, %s163
      %s165 = sphi 0, %s163
      %s166 = sphi 0, %s165
      %s180 = sphi 0, %s166
      %s184 = sphi 0, %s184
      %s186 = sphi 0, %s184
      %s187 = sphi 0, %s186
      %s201 = sphi 0, %s187
      %s205 = sphi 0, %s205
      %s207 = sphi 0, %s205
      %s208 = sphi 0, %s207
      %s222 = sphi 0, %s208
      %s226 = sphi 0, %s226
      %s228 = sphi 0, %s226
      %s229 = sphi 0, %s228
      %s243 = sphi 0, %s229
      %s247 = sphi 0, %s247
      %s249 = sphi 0, %s247
      %s250 = sphi 0, %s249
      %s264 = sphi 0, %s250
      %s268 = sphi 0, %s268
      %s270 = sphi 0, %s268
      %s271 = sphi 0, %s270
      %s285 = sphi 0, %s271
      %s289 = sphi 0, %s289
      %s291 = sphi 0, %s289
      %s292 = sphi 0, %s291
      %s306 = sphi 0, %s292
      %s310 = sphi 0, %s310
      %s312 = sphi 0, %s310
      %s313 = sphi 0, %s312
      %s327 = sphi 0, %s313
      %s331 = sphi 0, %s331
      %s333 = sphi 0, %s331
      %s334 = sphi 0, %s333
      %s348 = sphi 0, %s334
      %s354 = sphi 0, %s356
      %s357 = sphi 0, %s354
      %s358 = sphi 0, %s357
      %s374 = sphi 0, %s358
    $region4: #{forward.1} parent=1 // loop_header_branch
      %27 = sbr.rel (%p25) target = $region8
    $region5: #{forward.1} parent=1 // loop_body
      %s29 = ssub.s32 %s24, 1
      %s30 = ssub.s32 %s24, 2
      %s31 = sadd.s32 %s24, 1
      %s32 = ssub.s32 %s24, %s31
      %p33 = scmp.eq.s32.totalorder %s32, 0
      %s35 = sadd.s32 %s34, 1
      %s36 = scalar_select %p33, %s34, %s35
      %p39 = pneg %p33
      %p40 = scmp.eq.s32.totalorder %s24, 1
      %p41 = por %p39, %p40
      %p42 = scmp.ne.s32.totalorder %s34, %s37
      %p43 = scmp.eq.s32.totalorder %s24, 0
      %p44 = por %p42, %p43
      %p45 = scmp.ne.s32.totalorder %s34, %s37
      %p46 = scmp.eq.s32.totalorder %s29, 1
      %p47 = por %p45, %p46
      %p48 = scmp.ne.s32.totalorder %s37, %s38
      %p49 = scmp.eq.s32.totalorder %s29, 0
      %p50 = por %p48, %p49
      %p51 = scmp.ne.s32.totalorder %s37, %s38
      %p52 = scmp.eq.s32.totalorder %s30, 1
      %p53 = por %p51, %p52
      %p55 = scmp.ne.s32.totalorder %s38, %s54
      %p56 = scmp.eq.s32.totalorder %s30, 0
      %p57 = por %p55, %p56
      %s59 = sadd.s32 %s58, 1
      %p62 = scmp.eq.s32.totalorder %s24, 1
      %p63 = scmp.ne.s32.totalorder %s58, %s60
      %p64 = scmp.eq.s32.totalorder %s24, 0
      %p65 = por %p63, %p64
      %p66 = scmp.ne.s32.totalorder %s58, %s60
      %p67 = scmp.eq.s32.totalorder %s29, 1
      %p68 = por %p66, %p67
      %p69 = scmp.ne.s32.totalorder %s60, %s61
      %p70 = scmp.eq.s32.totalorder %s29, 0
      %p71 = por %p69, %p70
      %p72 = scmp.ne.s32.totalorder %s60, %s61
      %p73 = scmp.eq.s32.totalorder %s30, 1
      %p74 = por %p72, %p73
      %p76 = scmp.ne.s32.totalorder %s61, %s75
      %p77 = scmp.eq.s32.totalorder %s30, 0
      %p78 = por %p76, %p77
      %s80 = sadd.s32 %s79, 1
      %p83 = scmp.eq.s32.totalorder %s24, 1
      %p84 = scmp.ne.s32.totalorder %s79, %s81
      %p85 = scmp.eq.s32.totalorder %s24, 0
      %p86 = por %p84, %p85
      %p87 = scmp.ne.s32.totalorder %s79, %s81
      %p88 = scmp.eq.s32.totalorder %s29, 1
      %p89 = por %p87, %p88
      %p90 = scmp.ne.s32.totalorder %s81, %s82
      %p91 = scmp.eq.s32.totalorder %s29, 0
      %p92 = por %p90, %p91
      %p93 = scmp.ne.s32.totalorder %s81, %s82
      %p94 = scmp.eq.s32.totalorder %s30, 1
      %p95 = por %p93, %p94
      %p97 = scmp.ne.s32.totalorder %s82, %s96
      %p98 = scmp.eq.s32.totalorder %s30, 0
      %p99 = por %p97, %p98
      %s101 = sadd.s32 %s100, 1
      %p104 = scmp.eq.s32.totalorder %s24, 1
      %p105 = scmp.ne.s32.totalorder %s100, %s102
      %p106 = scmp.eq.s32.totalorder %s24, 0
      %p107 = por %p105, %p106
      %p108 = scmp.ne.s32.totalorder %s100, %s102
      %p109 = scmp.eq.s32.totalorder %s29, 1
      %p110 = por %p108, %p109
      %p111 = scmp.ne.s32.totalorder %s102, %s103
      %p112 = scmp.eq.s32.totalorder %s29, 0
      %p113 = por %p111, %p112
      %p114 = scmp.ne.s32.totalorder %s102, %s103
      %p115 = scmp.eq.s32.totalorder %s30, 1
      %p116 = por %p114, %p115
      %p118 = scmp.ne.s32.totalorder %s103, %s117
      %p119 = scmp.eq.s32.totalorder %s30, 0
      %p120 = por %p118, %p119
      %s122 = sadd.s32 %s121, 1
      %p125 = scmp.eq.s32.totalorder %s24, 1
      %p126 = scmp.ne.s32.totalorder %s121, %s123
      %p127 = scmp.eq.s32.totalorder %s24, 0
      %p128 = por %p126, %p127
      %p129 = scmp.ne.s32.totalorder %s121, %s123
      %p130 = scmp.eq.s32.totalorder %s29, 1
      %p131 = por %p129, %p130
      %p132 = scmp.ne.s32.totalorder %s123, %s124
      %p133 = scmp.eq.s32.totalorder %s29, 0
      %p134 = por %p132, %p133
      %p135 = scmp.ne.s32.totalorder %s123, %s124
      %p136 = scmp.eq.s32.totalorder %s30, 1
      %p137 = por %p135, %p136
      %p139 = scmp.ne.s32.totalorder %s124, %s138
      %p140 = scmp.eq.s32.totalorder %s30, 0
      %p141 = por %p139, %p140
      %s143 = sadd.s32 %s142, 1
      %p146 = scmp.eq.s32.totalorder %s24, 1
      %p147 = scmp.ne.s32.totalorder %s142, %s144
      %p148 = scmp.eq.s32.totalorder %s24, 0
      %p149 = por %p147, %p148
      %p150 = scmp.ne.s32.totalorder %s142, %s144
      %p151 = scmp.eq.s32.totalorder %s29, 1
      %p152 = por %p150, %p151
      %p153 = scmp.ne.s32.totalorder %s144, %s145
      %p154 = scmp.eq.s32.totalorder %s29, 0
      %p155 = por %p153, %p154
      %p156 = scmp.ne.s32.totalorder %s144, %s145
      %p157 = scmp.eq.s32.totalorder %s30, 1
      %p158 = por %p156, %p157
      %p160 = scmp.ne.s32.totalorder %s145, %s159
      %p161 = scmp.eq.s32.totalorder %s30, 0
      %p162 = por %p160, %p161
      %s164 = sadd.s32 %s163, 1
      %p167 = scmp.eq.s32.totalorder %s24, 1
      %p168 = scmp.ne.s32.totalorder %s163, %s165
      %p169 = scmp.eq.s32.totalorder %s24, 0
      %p170 = por %p168, %p169
      %p171 = scmp.ne.s32.totalorder %s163, %s165
      %p172 = scmp.eq.s32.totalorder %s29, 1
      %p173 = por %p171, %p172
      %p174 = scmp.ne.s32.totalorder %s165, %s166
      %p175 = scmp.eq.s32.totalorder %s29, 0
      %p176 = por %p174, %p175
      %p177 = scmp.ne.s32.totalorder %s165, %s166
      %p178 = scmp.eq.s32.totalorder %s30, 1
      %p179 = por %p177, %p178
      %p181 = scmp.ne.s32.totalorder %s166, %s180
      %p182 = scmp.eq.s32.totalorder %s30, 0
      %p183 = por %p181, %p182
      %s185 = sadd.s32 %s184, 1
      %p188 = scmp.eq.s32.totalorder %s24, 1
      %p189 = scmp.ne.s32.totalorder %s184, %s186
      %p190 = scmp.eq.s32.totalorder %s24, 0
      %p191 = por %p189, %p190
      %p192 = scmp.ne.s32.totalorder %s184, %s186
      %p193 = scmp.eq.s32.totalorder %s29, 1
      %p194 = por %p192, %p193
      %p195 = scmp.ne.s32.totalorder %s186, %s187
      %p196 = scmp.eq.s32.totalorder %s29, 0
      %p197 = por %p195, %p196
      %p198 = scmp.ne.s32.totalorder %s186, %s187
      %p199 = scmp.eq.s32.totalorder %s30, 1
      %p200 = por %p198, %p199
      %p202 = scmp.ne.s32.totalorder %s187, %s201
      %p203 = scmp.eq.s32.totalorder %s30, 0
      %p204 = por %p202, %p203
      %s206 = sadd.s32 %s205, 1
      %p209 = scmp.eq.s32.totalorder %s24, 1
      %p210 = scmp.ne.s32.totalorder %s205, %s207
      %p211 = scmp.eq.s32.totalorder %s24, 0
      %p212 = por %p210, %p211
      %p213 = scmp.ne.s32.totalorder %s205, %s207
      %p214 = scmp.eq.s32.totalorder %s29, 1
      %p215 = por %p213, %p214
      %p216 = scmp.ne.s32.totalorder %s207, %s208
      %p217 = scmp.eq.s32.totalorder %s29, 0
      %p218 = por %p216, %p217
      %p219 = scmp.ne.s32.totalorder %s207, %s208
      %p220 = scmp.eq.s32.totalorder %s30, 1
      %p221 = por %p219, %p220
      %p223 = scmp.ne.s32.totalorder %s208, %s222
      %p224 = scmp.eq.s32.totalorder %s30, 0
      %p225 = por %p223, %p224
      %s227 = sadd.s32 %s226, 1
      %p230 = scmp.eq.s32.totalorder %s24, 1
      %p231 = scmp.ne.s32.totalorder %s226, %s228
      %p232 = scmp.eq.s32.totalorder %s24, 0
      %p233 = por %p231, %p232
      %p234 = scmp.ne.s32.totalorder %s226, %s228
      %p235 = scmp.eq.s32.totalorder %s29, 1
      %p236 = por %p234, %p235
      %p237 = scmp.ne.s32.totalorder %s228, %s229
      %p238 = scmp.eq.s32.totalorder %s29, 0
      %p239 = por %p237, %p238
      %p240 = scmp.ne.s32.totalorder %s228, %s229
      %p241 = scmp.eq.s32.totalorder %s30, 1
      %p242 = por %p240, %p241
      %p244 = scmp.ne.s32.totalorder %s229, %s243
      %p245 = scmp.eq.s32.totalorder %s30, 0
      %p246 = por %p244, %p245
      %s248 = sadd.s32 %s247, 1
      %p251 = scmp.eq.s32.totalorder %s24, 1
      %p252 = scmp.ne.s32.totalorder %s247, %s249
      %p253 = scmp.eq.s32.totalorder %s24, 0
      %p254 = por %p252, %p253
      %p255 = scmp.ne.s32.totalorder %s247, %s249
      %p256 = scmp.eq.s32.totalorder %s29, 1
      %p257 = por %p255, %p256
      %p258 = scmp.ne.s32.totalorder %s249, %s250
      %p259 = scmp.eq.s32.totalorder %s29, 0
      %p260 = por %p258, %p259
      %p261 = scmp.ne.s32.totalorder %s249, %s250
      %p262 = scmp.eq.s32.totalorder %s30, 1
      %p263 = por %p261, %p262
      %p265 = scmp.ne.s32.totalorder %s250, %s264
      %p266 = scmp.eq.s32.totalorder %s30, 0
      %p267 = por %p265, %p266
      %s269 = sadd.s32 %s268, 1
      %p272 = scmp.eq.s32.totalorder %s24, 1
      %p273 = scmp.ne.s32.totalorder %s268, %s270
      %p274 = scmp.eq.s32.totalorder %s24, 0
      %p275 = por %p273, %p274
      %p276 = scmp.ne.s32.totalorder %s268, %s270
      %p277 = scmp.eq.s32.totalorder %s29, 1
      %p278 = por %p276, %p277
      %p279 = scmp.ne.s32.totalorder %s270, %s271
      %p280 = scmp.eq.s32.totalorder %s29, 0
      %p281 = por %p279, %p280
      %p282 = scmp.ne.s32.totalorder %s270, %s271
      %p283 = scmp.eq.s32.totalorder %s30, 1
      %p284 = por %p282, %p283
      %p286 = scmp.ne.s32.totalorder %s271, %s285
      %p287 = scmp.eq.s32.totalorder %s30, 0
      %p288 = por %p286, %p287
      %s290 = sadd.s32 %s289, 1
      %p293 = scmp.eq.s32.totalorder %s24, 1
      %p294 = scmp.ne.s32.totalorder %s289, %s291
      %p295 = scmp.eq.s32.totalorder %s24, 0
      %p296 = por %p294, %p295
      %p297 = scmp.ne.s32.totalorder %s289, %s291
      %p298 = scmp.eq.s32.totalorder %s29, 1
      %p299 = por %p297, %p298
      %p300 = scmp.ne.s32.totalorder %s291, %s292
      %p301 = scmp.eq.s32.totalorder %s29, 0
      %p302 = por %p300, %p301
      %p303 = scmp.ne.s32.totalorder %s291, %s292
      %p304 = scmp.eq.s32.totalorder %s30, 1
      %p305 = por %p303, %p304
      %p307 = scmp.ne.s32.totalorder %s292, %s306
      %p308 = scmp.eq.s32.totalorder %s30, 0
      %p309 = por %p307, %p308
      %s311 = sadd.s32 %s310, 1
      %p314 = scmp.eq.s32.totalorder %s24, 1
      %p315 = scmp.ne.s32.totalorder %s310, %s312
      %p316 = scmp.eq.s32.totalorder %s24, 0
      %p317 = por %p315, %p316
      %p318 = scmp.ne.s32.totalorder %s310, %s312
      %p319 = scmp.eq.s32.totalorder %s29, 1
      %p320 = por %p318, %p319
      %p321 = scmp.ne.s32.totalorder %s312, %s313
      %p322 = scmp.eq.s32.totalorder %s29, 0
      %p323 = por %p321, %p322
      %p324 = scmp.ne.s32.totalorder %s312, %s313
      %p325 = scmp.eq.s32.totalorder %s30, 1
      %p326 = por %p324, %p325
      %p328 = scmp.ne.s32.totalorder %s313, %s327
      %p329 = scmp.eq.s32.totalorder %s30, 0
      %p330 = por %p328, %p329
      %s332 = sadd.s32 %s331, 1
      %p335 = scmp.eq.s32.totalorder %s24, 1
      %p336 = scmp.ne.s32.totalorder %s331, %s333
      %p337 = scmp.eq.s32.totalorder %s24, 0
      %p338 = por %p336, %p337
      %p339 = scmp.ne.s32.totalorder %s331, %s333
      %p340 = scmp.eq.s32.totalorder %s29, 1
      %p341 = por %p339, %p340
      %p342 = scmp.ne.s32.totalorder %s333, %s334
      %p343 = scmp.eq.s32.totalorder %s29, 0
      %p344 = por %p342, %p343
      %p345 = scmp.ne.s32.totalorder %s333, %s334
      %p346 = scmp.eq.s32.totalorder %s30, 1
      %p347 = por %p345, %p346
      %p349 = scmp.ne.s32.totalorder %s334, %s348
      %p350 = scmp.eq.s32.totalorder %s30, 0
      %p351 = por %p349, %p350
      %s352 = ssub.s32 %s24, %s31
      %p353 = scmp.eq.s32.totalorder %s352, 0
      %s355 = sadd.s32 %s354, 1
      %s356 = scalar_select %p353, %s354, %s355
      %p359 = pneg %p353
      %p360 = scmp.eq.s32.totalorder %s24, 1
      %p361 = por %p359, %p360
      %p362 = scmp.ne.s32.totalorder %s354, %s357
      %p363 = scmp.eq.s32.totalorder %s24, 0
      %p364 = por %p362, %p363
      %p365 = scmp.ne.s32.totalorder %s354, %s357
      %p366 = scmp.eq.s32.totalorder %s29, 1
      %p367 = por %p365, %p366
      %p368 = scmp.ne.s32.totalorder %s357, %s358
      %p369 = scmp.eq.s32.totalorder %s29, 0
      %p370 = por %p368, %p369
      %p371 = scmp.ne.s32.totalorder %s357, %s358
      %p372 = scmp.eq.s32.totalorder %s30, 1
      %p373 = por %p371, %p372
      %p375 = scmp.ne.s32.totalorder %s358, %s374
      %p376 = scmp.eq.s32.totalorder %s30, 0
      %p377 = por %p375, %p376
      %p378 = scmp.le.s32.totalorder 1, %s24
      %p379 = scmp.lt.s32.totalorder %s24, 3
      %p380 = pnand %p378, %p379
      %p381 = pneg %p380
      // Predicated region
      $region9: #{forward.1} parent=5 // pred_check
        _
      $region10: #{forward.1} parent=5 // pred_check_branch
        %383 = sbr.rel (%p380) target = $region12
      $region11: #{forward.1} parent=5 // pred_region
        %s384 = ssub.s32 %s24, 1
        // Predicated region
        $region13: #{forward.1} parent=11 // pred_check
          %p385 = pneg %p71
        $region14: #{forward.1} parent=11 // pred_check_branch
          %387 = sbr.rel (%p385) target = $region16
        $region15: #{forward.1} parent=11 // pred_region
          _
        $region16: #{forward.1} parent=11 // pred_fallthru
          _
        // Predicated region
        $region17: #{forward.1} parent=11 // pred_check
          %p388 = pneg %p92
        $region18: #{forward.1} parent=11 // pred_check_branch
          %390 = sbr.rel (%p388) target = $region20
        $region19: #{forward.1} parent=11 // pred_region
          _
        $region20: #{forward.1} parent=11 // pred_fallthru
          _
        // Predicated region
        $region21: #{forward.1} parent=11 // pred_check
          %p391 = pneg %p113
        $region22: #{forward.1} parent=11 // pred_check_branch
          %393 = sbr.rel (%p391) target = $region24
        $region23: #{forward.1} parent=11 // pred_region
          _
        $region24: #{forward.1} parent=11 // pred_fallthru
          _
        // Predicated region
        $region25: #{forward.1} parent=11 // pred_check
          %p394 = pneg %p134
        $region26: #{forward.1} parent=11 // pred_check_branch
          %396 = sbr.rel (%p394) target = $region28
        $region27: #{forward.1} parent=11 // pred_region
          _
        $region28: #{forward.1} parent=11 // pred_fallthru
          _
        // Predicated region
        $region29: #{forward.1} parent=11 // pred_check
          %p397 = pneg %p155
        $region30: #{forward.1} parent=11 // pred_check_branch
          %399 = sbr.rel (%p397) target = $region32
        $region31: #{forward.1} parent=11 // pred_region
          _
        $region32: #{forward.1} parent=11 // pred_fallthru
          _
        // Predicated region
        $region33: #{forward.1} parent=11 // pred_check
          %p400 = pneg %p176
        $region34: #{forward.1} parent=11 // pred_check_branch
          %402 = sbr.rel (%p400) target = $region36
        $region35: #{forward.1} parent=11 // pred_region
          _
        $region36: #{forward.1} parent=11 // pred_fallthru
          _
        // Predicated region
        $region37: #{forward.1} parent=11 // pred_check
          %p403 = pneg %p197
        $region38: #{forward.1} parent=11 // pred_check_branch
          %405 = sbr.rel (%p403) target = $region40
        $region39: #{forward.1} parent=11 // pred_region
          _
        $region40: #{forward.1} parent=11 // pred_fallthru
          _
        // Predicated region
        $region41: #{forward.1} parent=11 // pred_check
          %p406 = pneg %p218
        $region42: #{forward.1} parent=11 // pred_check_branch
          %408 = sbr.rel (%p406) target = $region44
        $region43: #{forward.1} parent=11 // pred_region
          _
        $region44: #{forward.1} parent=11 // pred_fallthru
          _
        // Predicated region
        $region45: #{forward.1} parent=11 // pred_check
          %p409 = pneg %p239
        $region46: #{forward.1} parent=11 // pred_check_branch
          %411 = sbr.rel (%p409) target = $region48
        $region47: #{forward.1} parent=11 // pred_region
          _
        $region48: #{forward.1} parent=11 // pred_fallthru
          _
        // Predicated region
        $region49: #{forward.1} parent=11 // pred_check
          %p412 = pneg %p260
        $region50: #{forward.1} parent=11 // pred_check_branch
          %414 = sbr.rel (%p412) target = $region52
        $region51: #{forward.1} parent=11 // pred_region
          _
        $region52: #{forward.1} parent=11 // pred_fallthru
          _
        // Predicated region
        $region53: #{forward.1} parent=11 // pred_check
          %p415 = pneg %p281
        $region54: #{forward.1} parent=11 // pred_check_branch
          %417 = sbr.rel (%p415) target = $region56
        $region55: #{forward.1} parent=11 // pred_region
          _
        $region56: #{forward.1} parent=11 // pred_fallthru
          _
        // Predicated region
        $region57: #{forward.1} parent=11 // pred_check
          %p418 = pneg %p302
        $region58: #{forward.1} parent=11 // pred_check_branch
          %420 = sbr.rel (%p418) target = $region60
        $region59: #{forward.1} parent=11 // pred_region
          _
        $region60: #{forward.1} parent=11 // pred_fallthru
          _
        // Predicated region
        $region61: #{forward.1} parent=11 // pred_check
          %p421 = pneg %p323
        $region62: #{forward.1} parent=11 // pred_check_branch
          %423 = sbr.rel (%p421) target = $region64
        $region63: #{forward.1} parent=11 // pred_region
          _
        $region64: #{forward.1} parent=11 // pred_fallthru
          _
        // Predicated region
        $region65: #{forward.1} parent=11 // pred_check
          %p424 = pneg %p344
        $region66: #{forward.1} parent=11 // pred_check_branch
          %426 = sbr.rel (%p424) target = $region68
        $region67: #{forward.1} parent=11 // pred_region
          _
        $region68: #{forward.1} parent=11 // pred_fallthru
          _
      $region12: #{forward.1} parent=5 // pred_fallthru
        _
      %p427 = scmp.lt.s32.totalorder %s24, 2
      // Predicated region
      $region69: #{forward.1} parent=5 // pred_check
        %p428 = pneg %p427
      $region70: #{forward.1} parent=5 // pred_check_branch
        %430 = sbr.rel (%p428) target = $region72
      $region71: #{forward.1} parent=5 // pred_region
        // Predicated region
        $region73: #{forward.1} parent=71 // pred_check
          %p431 = pneg %p44
        $region74: #{forward.1} parent=71 // pred_check_branch
          %433 = sbr.rel (%p431) target = $region76
        $region75: #{forward.1} parent=71 // pred_region
          %s434 = smul.u32 26, %s24
          %p435 = scmp.lt.s32.totalorder %s434, 51
          %s436 = scalar_select %p435, %s434, 51
          %s437 = smul.addr %s436, 4
          %s438 = scalar_lea.vmem %s0, %s437
          %s439 = smul.u32 26, %s24
        $region76: #{forward.1} parent=71 // pred_fallthru
          _
      $region72: #{forward.1} parent=5 // pred_fallthru
        _
      %p440 = scmp.le.s32.totalorder 1, %s24
      %p441 = scmp.lt.s32.totalorder %s24, 3
      %p442 = pnand %p440, %p441
      %p443 = pneg %p442
      // Predicated region
      $region77: #{forward.1} parent=5 // pred_check
        _
      $region78: #{forward.1} parent=5 // pred_check_branch
        %445 = sbr.rel (%p442) target = $region80
      $region79: #{forward.1} parent=5 // pred_region
        %s446 = ssub.s32 %s24, 1
        %s447 = smul.u32 26, %s29
        %p448 = scmp.lt.s32.totalorder %s447, 51
        %s449 = scalar_select %p448, %s447, 51
        %s450 = smul.addr %s449, 4
        %s451 = scalar_lea.vmem %s0, %s450
        %p452 = pneg %p50
        %p453 = pneg %p47
        %p454 = pneg %p71
        %p455 = pneg %p68
        %p456 = pneg %p92
        %p457 = pneg %p89
        %p458 = pneg %p113
        %p459 = pneg %p110
        %p460 = pneg %p134
        %p461 = pneg %p131
        %p462 = pneg %p155
        %p463 = pneg %p152
        %p464 = pneg %p176
        %p465 = pneg %p173
        %p466 = pneg %p197
        %p467 = pneg %p194
        %p468 = pneg %p218
        %p469 = pneg %p215
        %p470 = pneg %p239
        %p471 = pneg %p236
        %p472 = pneg %p260
        %p473 = pneg %p257
        %p474 = pneg %p281
        %p475 = pneg %p278
        %p476 = pneg %p302
        %p477 = pneg %p299
        %p478 = pneg %p323
        %p479 = pneg %p320
        %p480 = pneg %p344
        %p481 = pneg %p341
        %p482 = pneg %p370
        %p483 = pneg %p367
        %s484 = sand.u32 %s357, 1
        %s485 = scalar_lea.sflag [#allocation3], %s484
        %s486 = sand.u32 %s357, 1
        %s487 = smul.addr %s486, 8
        %s488 = scalar_lea.vmem [#allocation2], %s487
        %s489 = smul.u32 26, %s29
        %p490 = scmp.lt.s32.totalorder %s489, 51
        %s491 = scalar_select %p490, %s489, 51
        %s492 = smul.addr %s491, 4
        %s493 = scalar_lea.vmem %s0, %s492
        %s494 = smul.u32 26, %s29
        %v496 = vld [vmem:[%s493] sm:$0xf]
        %v497 = vld [vmem:[%s493 + $0x4] sm:$0xf]
        %v498 = vld [vmem:[%s493 + $0x8] sm:$0xf]
        %v499 = vld [vmem:[%s493 + $0xc] sm:$0xf]
        %v500 = vld [vmem:[%s493 + $0x10] sm:$0xf]
        %v501 = vld [vmem:[%s493 + $0x14] sm:$0xf]
        %v502 = vld [vmem:[%s493 + $0x18] sm:$0xf]
        %v503 = vld [vmem:[%s493 + $0x1c] sm:$0xf]
        %v504 = vld [vmem:[%s493 + $0x20] sm:$0xf]
        %v505 = vld [vmem:[%s493 + $0x24] sm:$0xf]
        %v506 = vld [vmem:[%s493 + $0x28] sm:$0xf]
        %v507 = vld [vmem:[%s493 + $0x2c] sm:$0xf]
        %v508 = vld [vmem:[%s493 + $0x30] sm:$0xf]
        %v509 = vld [vmem:[%s493 + $0x34] sm:$0xf]
        %v510 = vld [vmem:[%s493 + $0x38] sm:$0xf]
        %v511 = vld [vmem:[%s493 + $0x3c] sm:$0xf]
        %v512 = vld [vmem:[%s493 + $0x40] sm:$0xf]
        %v513 = vld [vmem:[%s493 + $0x44] sm:$0xf]
        %v514 = vld [vmem:[%s493 + $0x48] sm:$0xf]
        %v515 = vld [vmem:[%s493 + $0x4c] sm:$0xf]
        %v516 = vld [vmem:[%s493 + $0x50] sm:$0xf]
        %v517 = vld [vmem:[%s493 + $0x54] sm:$0xf]
        %v518 = vld [vmem:[%s493 + $0x58] sm:$0xf]
        %v519 = vld [vmem:[%s493 + $0x5c] sm:$0xf]
        %v520 = vld [vmem:[%s493 + $0x60] sm:$0xf]
        %v521 = vld [vmem:[%s493 + $0x64] sm:$0xf]
        %v522 = vld [vmem:[%s1] sm:$0xff]
        %v523 = vld [vmem:[%s1 + $0x8] sm:$0xff]
        %v524 = vld [vmem:[%s1 + $0x10] sm:$0xff]
        %v525 = vld [vmem:[%s1 + $0x18] sm:$0xff]
        %v526 = vld [vmem:[%s1 + $0x20] sm:$0xff]
        %v527 = vld [vmem:[%s1 + $0x28] sm:$0xff]
        %v528 = vld [vmem:[%s1 + $0x30] sm:$0xff]
        %v529 = vld [vmem:[%s1 + $0x38] sm:$0xff]
        %v530 = vld [vmem:[%s1 + $0x40] sm:$0xff]
        %v531 = vld [vmem:[%s1 + $0x48] sm:$0xff]
        %v532 = vld [vmem:[%s1 + $0x50] sm:$0xff]
        %v533 = vld [vmem:[%s1 + $0x58] sm:$0xff]
        %v534 = vld [vmem:[%s1 + $0x60] sm:$0xff]
        %v535 = vld [vmem:[%s1 + $0x68] sm:$0xff]
        %v536 = vld [vmem:[%s1 + $0x70] sm:$0xff]
        %v537 = vld [vmem:[%s1 + $0x78] sm:$0xff]
        %v538 = vld [vmem:[%s1 + $0x80] sm:$0xff]
        %v539 = vld [vmem:[%s1 + $0x88] sm:$0xff]
        %v540 = vld [vmem:[%s1 + $0x90] sm:$0xff]
        %v541 = vld [vmem:[%s1 + $0x98] sm:$0xff]
        %v542 = vld [vmem:[%s1 + $0xa0] sm:$0x33]
        %v543 = vld [vmem:[%s1 + $0xa8] sm:$0x33]
        %v544 = vld [vmem:[%s2] sm:$0xf]
        %v546 = vlaneseq
        %v547 = vshrl.u32 %v546, 7
        %v548 = vsub.s32 0, %v547
        %v549 = vrot.slane %v544, %v548
        %v550 = vlaneseq
        %v551 = vshrl.u32 %v550, 7
        %v552 = vsub.s32 1, %v551
        %v553 = vrot.slane %v544, %v552
        %v554 = vlaneseq
        %v555 = vshrl.u32 %v554, 7
        %v556 = vsub.s32 2, %v555
        %v557 = vrot.slane %v544, %v556
        %v558 = vlaneseq
        %v559 = vshrl.u32 %v558, 7
        %v560 = vsub.s32 3, %v559
        %v561 = vrot.slane %v544, %v560
        %v592 = vunpack.c.l.b16 %v496
        %v593 = vunpack.c.l.b16 %v497
        %v594 = vunpack.c.l.b16 %v498
        %v595 = vunpack.c.l.b16 %v499
        %v596 = vunpack.c.l.b16 %v500
        %v597 = vunpack.c.l.b16 %v501
        %v598 = vunpack.c.l.b16 %v502
        %v599 = vunpack.c.l.b16 %v503
        %v600 = vunpack.c.l.b16 %v504
        %v601 = vunpack.c.l.b16 %v505
        %v602 = vunpack.c.l.b16 %v506
        %v603 = vunpack.c.l.b16 %v507
        %v604 = vunpack.c.l.b16 %v508
        %v605 = vunpack.c.l.b16 %v509
        %v606 = vunpack.c.l.b16 %v510
        %v607 = vunpack.c.l.b16 %v511
        %v608 = vunpack.c.l.b16 %v512
        %v609 = vunpack.c.l.b16 %v513
        %v610 = vunpack.c.l.b16 %v514
        %v611 = vunpack.c.l.b16 %v515
        %v612 = vunpack.c.l.b16 %v516
        %v613 = vunpack.c.l.b16 %v517
        %v614 = vunpack.c.l.b16 %v518
        %v615 = vunpack.c.l.b16 %v519
        %v616 = vunpack.c.l.b16 %v520
        %v617 = vunpack.c.l.b16 %v521
        %v618 = vpack.c.b16 %v593, %v592
        %v619 = vpack.c.b16 %v595, %v594
        %v620 = vpack.c.b16 %v597, %v596
        %v621 = vpack.c.b16 %v599, %v598
        %v622 = vpack.c.b16 %v601, %v600
        %v623 = vpack.c.b16 %v603, %v602
        %v624 = vpack.c.b16 %v605, %v604
        %v625 = vpack.c.b16 %v607, %v606
        %v626 = vpack.c.b16 %v609, %v608
        %v627 = vpack.c.b16 %v611, %v610
        %v628 = vpack.c.b16 %v613, %v612
        %v629 = vpack.c.b16 %v615, %v614
        %v630 = vpack.c.b16 %v617, %v616
        %v653 = vunpack.c.l.b16 %v522
        %v654 = vunpack.c.h.b16 %v522
        %v655 = vunpack.c.l.b16 %v523
        %v656 = vunpack.c.h.b16 %v523
        %v657 = vunpack.c.l.b16 %v524
        %v658 = vunpack.c.h.b16 %v524
        %v659 = vunpack.c.l.b16 %v525
        %v660 = vunpack.c.h.b16 %v525
        %v661 = vunpack.c.l.b16 %v526
        %v662 = vunpack.c.h.b16 %v526
        %v663 = vunpack.c.l.b16 %v527
        %v664 = vunpack.c.h.b16 %v527
        %v665 = vunpack.c.l.b16 %v528
        %v666 = vunpack.c.h.b16 %v528
        %v667 = vunpack.c.l.b16 %v529
        %v668 = vunpack.c.h.b16 %v529
        %v669 = vunpack.c.l.b16 %v530
        %v670 = vunpack.c.h.b16 %v530
        %v671 = vunpack.c.l.b16 %v531
        %v672 = vunpack.c.h.b16 %v531
        %v673 = vunpack.c.l.b16 %v532
        %v674 = vunpack.c.h.b16 %v532
        %v675 = vunpack.c.l.b16 %v533
        %v676 = vunpack.c.h.b16 %v533
        %v677 = vunpack.c.l.b16 %v534
        %v678 = vunpack.c.h.b16 %v534
        %v679 = vunpack.c.l.b16 %v535
        %v680 = vunpack.c.h.b16 %v535
        %v681 = vunpack.c.l.b16 %v536
        %v682 = vunpack.c.h.b16 %v536
        %v683 = vunpack.c.l.b16 %v537
        %v684 = vunpack.c.h.b16 %v537
        %v685 = vunpack.c.l.b16 %v538
        %v686 = vunpack.c.h.b16 %v538
        %v687 = vunpack.c.l.b16 %v539
        %v688 = vunpack.c.h.b16 %v539
        %v689 = vunpack.c.l.b16 %v540
        %v690 = vunpack.c.h.b16 %v540
        %v691 = vunpack.c.l.b16 %v541
        %v692 = vunpack.c.h.b16 %v541
        %v693 = vunpack.c.l.b16 %v542
        %v694 = vunpack.c.h.b16 %v542
        %v695 = vunpack.c.l.b16 %v543
        %v696 = vunpack.c.h.b16 %v543
        %v697 = vpack.c.b16 %v657, %v653
        %v698 = vpack.c.b16 %v658, %v654
        %v699 = vpack.c.b16 %v659, %v655
        %v700 = vpack.c.b16 %v660, %v656
        %v701 = vpack.c.b16 %v665, %v661
        %v702 = vpack.c.b16 %v666, %v662
        %v703 = vpack.c.b16 %v667, %v663
        %v704 = vpack.c.b16 %v668, %v664
        %v705 = vpack.c.b16 %v673, %v669
        %v706 = vpack.c.b16 %v674, %v670
        %v707 = vpack.c.b16 %v675, %v671
        %v708 = vpack.c.b16 %v676, %v672
        %v709 = vpack.c.b16 %v681, %v677
        %v710 = vpack.c.b16 %v682, %v678
        %v711 = vpack.c.b16 %v683, %v679
        %v712 = vpack.c.b16 %v684, %v680
        %v713 = vpack.c.b16 %v689, %v685
        %v714 = vpack.c.b16 %v690, %v686
        %v715 = vpack.c.b16 %v691, %v687
        %v716 = vpack.c.b16 %v692, %v688
        %v717 = vpack.c.b16 %v693, %v693
        %v718 = vpack.c.b16 %v694, %v694
        %v719 = vpack.c.b16 %v695, %v695
        %v720 = vpack.c.b16 %v696, %v696
        %vm741 = vcmask 687104
        %v743 = vsel %vm741, %v618, 0
        %v746 = vsel %vm741, %v619, 0
        %v749 = vsel %vm741, %v620, 0
        %v752 = vsel %vm741, %v621, 0
        %v755 = vsel %vm741, %v622, 0
        %v758 = vsel %vm741, %v623, 0
        %v761 = vsel %vm741, %v624, 0
        %v764 = vsel %vm741, %v625, 0
        %v767 = vsel %vm741, %v626, 0
        %v770 = vsel %vm741, %v627, 0
        %v773 = vsel %vm741, %v628, 0
        %v776 = vsel %vm741, %v629, 0
        %v779 = vsel %vm741, %v630, 0
        %vm781 = vcmask 1041408
        %v783 = vsel %vm781, %v717, 0
        %v786 = vsel %vm781, %v718, 0
        %v789 = vsel %vm781, %v719, 0
        %v792 = vsel %vm781, %v720, 0
        %794 = vmatprep.subr.bf16.mxu0 0
        %795 = vmatpush1.bf16.msra.mxu0 0
        %796 = vmatprep.subr.bf16.mxu0 0
        %797 = vmatpush1.bf16.msra.mxu0 0
        %798 = vmatprep.subr.bf16.mxu0 %v786
        %799 = vmatpush1.bf16.msra.mxu0 %v783
        %800 = vmatprep.subr.bf16.mxu0 %v714
        %801 = vmatpush1.bf16.msra.mxu0 %v713
        %802 = vmatprep.subr.bf16.mxu0 %v710
        %803 = vmatpush1.bf16.msra.mxu0 %v709
        %804 = vmatprep.subr.bf16.mxu0 %v706
        %805 = vmatpush1.bf16.msra.mxu0 %v705
        %806 = vmatprep.subr.bf16.mxu0 %v702
        %807 = vmatpush1.bf16.msra.mxu0 %v701
        %808 = vmatprep.subr.bf16.mxu0 %v698
        %809 = vmatpush1.bf16.msra.mxu0 %v697
        %810 = vmatprep.subr.bf16.mxu0 0
        %811 = vmatpush2.bf16.msra.mxu0 0
        %812 = vmatprep.subr.bf16.mxu0 0
        %813 = vmatpush2.bf16.msra.mxu0 0
        %814 = vmatprep.subr.bf16.mxu0 0
        %815 = vmatpush2.bf16.msra.mxu0 0
        %816 = vmatprep.subr.bf16.mxu0 0
        %817 = vmatpush2.bf16.msra.mxu0 0
        %818 = vmatprep.subr.bf16.mxu0 0
        %819 = vmatpush2.bf16.msra.mxu0 0
        %820 = vmatprep.subr.bf16.mxu0 0
        %821 = vmatpush2.bf16.msra.mxu0 0
        %822 = vmatprep.subr.bf16.mxu0 0
        %823 = vmatpush2.bf16.msra.mxu0 0
        %824 = vmatprep.subr.bf16.mxu0 0
        %825 = vmatpush2.bf16.msra.mxu0 0
        %826 = vmatprep.mubr.bf16.mxu0 0
        %827 = vmatmul.mubr.bf16.gmra.mxu0 %v743
        %v828 = vpop.f32.mrf.mxu0
        %v829 = vadd.f32 %v549, %v828
        %v830 = vpop.f32.mrf.mxu0
        %v831 = vadd.f32 %v553, %v830
        %v832 = vpop.f32.mrf.mxu0
        %v833 = vadd.f32 %v549, %v832
        %v834 = vpop.f32.mrf.mxu0
        %v835 = vadd.f32 %v553, %v834
        %836 = vmatprep.mubr.bf16.mxu0 0
        %837 = vmatmul.mubr.bf16.gmra.mxu0 %v746
        %v838 = vpop.f32.mrf.mxu0
        %v839 = vadd.f32 %v549, %v838
        %v840 = vpop.f32.mrf.mxu0
        %v841 = vadd.f32 %v553, %v840
        %v842 = vpop.f32.mrf.mxu0
        %v843 = vadd.f32 %v549, %v842
        %v844 = vpop.f32.mrf.mxu0
        %v845 = vadd.f32 %v553, %v844
        %846 = vmatprep.mubr.bf16.mxu0 0
        %847 = vmatmul.mubr.bf16.gmra.mxu0 %v749
        %v848 = vpop.f32.mrf.mxu0
        %v849 = vadd.f32 %v549, %v848
        %v850 = vpop.f32.mrf.mxu0
        %v851 = vadd.f32 %v553, %v850
        %v852 = vpop.f32.mrf.mxu0
        %v853 = vadd.f32 %v549, %v852
        %v854 = vpop.f32.mrf.mxu0
        %v855 = vadd.f32 %v553, %v854
        %856 = vmatprep.mubr.bf16.mxu0 0
        %857 = vmatmul.mubr.bf16.gmra.mxu0 %v752
        %v858 = vpop.f32.mrf.mxu0
        %v859 = vadd.f32 %v549, %v858
        %v860 = vpop.f32.mrf.mxu0
        %v861 = vadd.f32 %v553, %v860
        %v862 = vpop.f32.mrf.mxu0
        %v863 = vadd.f32 %v549, %v862
        %v864 = vpop.f32.mrf.mxu0
        %v865 = vadd.f32 %v553, %v864
        %866 = vmatprep.mubr.bf16.mxu0 0
        %867 = vmatmul.mubr.bf16.gmra.mxu0 %v755
        %v868 = vpop.f32.mrf.mxu0
        %v869 = vadd.f32 %v549, %v868
        %v870 = vpop.f32.mrf.mxu0
        %v871 = vadd.f32 %v553, %v870
        %v872 = vpop.f32.mrf.mxu0
        %v873 = vadd.f32 %v549, %v872
        %v874 = vpop.f32.mrf.mxu0
        %v875 = vadd.f32 %v553, %v874
        %876 = vmatprep.mubr.bf16.mxu0 0
        %877 = vmatmul.mubr.bf16.gmra.mxu0 %v758
        %v878 = vpop.f32.mrf.mxu0
        %v879 = vadd.f32 %v549, %v878
        %v880 = vpop.f32.mrf.mxu0
        %v881 = vadd.f32 %v553, %v880
        %v882 = vpop.f32.mrf.mxu0
        %v883 = vadd.f32 %v549, %v882
        %v884 = vpop.f32.mrf.mxu0
        %v885 = vadd.f32 %v553, %v884
        %886 = vmatprep.mubr.bf16.mxu0 0
        %887 = vmatmul.mubr.bf16.gmra.mxu0 %v761
        %v888 = vpop.f32.mrf.mxu0
        %v889 = vadd.f32 %v549, %v888
        %v890 = vpop.f32.mrf.mxu0
        %v891 = vadd.f32 %v553, %v890
        %v892 = vpop.f32.mrf.mxu0
        %v893 = vadd.f32 %v549, %v892
        %v894 = vpop.f32.mrf.mxu0
        %v895 = vadd.f32 %v553, %v894
        %896 = vmatprep.mubr.bf16.mxu0 0
        %897 = vmatmul.mubr.bf16.gmra.mxu0 %v764
        %v898 = vpop.f32.mrf.mxu0
        %v899 = vadd.f32 %v549, %v898
        %v900 = vpop.f32.mrf.mxu0
        %v901 = vadd.f32 %v553, %v900
        %v902 = vpop.f32.mrf.mxu0
        %v903 = vadd.f32 %v549, %v902
        %v904 = vpop.f32.mrf.mxu0
        %v905 = vadd.f32 %v553, %v904
        %906 = vmatprep.mubr.bf16.mxu0 0
        %907 = vmatmul.mubr.bf16.gmra.mxu0 %v767
        %v908 = vpop.f32.mrf.mxu0
        %v909 = vadd.f32 %v549, %v908
        %v910 = vpop.f32.mrf.mxu0
        %v911 = vadd.f32 %v553, %v910
        %v912 = vpop.f32.mrf.mxu0
        %v913 = vadd.f32 %v549, %v912
        %v914 = vpop.f32.mrf.mxu0
        %v915 = vadd.f32 %v553, %v914
        %916 = vmatprep.mubr.bf16.mxu0 0
        %917 = vmatmul.mubr.bf16.gmra.mxu0 %v770
        %v918 = vpop.f32.mrf.mxu0
        %v919 = vadd.f32 %v549, %v918
        %v920 = vpop.f32.mrf.mxu0
        %v921 = vadd.f32 %v553, %v920
        %v922 = vpop.f32.mrf.mxu0
        %v923 = vadd.f32 %v549, %v922
        %v924 = vpop.f32.mrf.mxu0
        %v925 = vadd.f32 %v553, %v924
        %926 = vmatprep.mubr.bf16.mxu0 0
        %927 = vmatmul.mubr.bf16.gmra.mxu0 %v773
        %v928 = vpop.f32.mrf.mxu0
        %v929 = vadd.f32 %v549, %v928
        %v930 = vpop.f32.mrf.mxu0
        %v931 = vadd.f32 %v553, %v930
        %v932 = vpop.f32.mrf.mxu0
        %v933 = vadd.f32 %v549, %v932
        %v934 = vpop.f32.mrf.mxu0
        %v935 = vadd.f32 %v553, %v934
        %936 = vmatprep.mubr.bf16.mxu0 0
        %937 = vmatmul.mubr.bf16.gmra.mxu0 %v776
        %v938 = vpop.f32.mrf.mxu0
        %v939 = vadd.f32 %v549, %v938
        %v940 = vpop.f32.mrf.mxu0
        %v941 = vadd.f32 %v553, %v940
        %v942 = vpop.f32.mrf.mxu0
        %v943 = vadd.f32 %v549, %v942
        %v944 = vpop.f32.mrf.mxu0
        %v945 = vadd.f32 %v553, %v944
        %946 = vmatprep.mubr.bf16.mxu0 0
        %947 = vmatmul.mubr.bf16.gmra.mxu0 %v779
        %v948 = vpop.f32.mrf.mxu0
        %v949 = vadd.f32 %v549, %v948
        %v950 = vpop.f32.mrf.mxu0
        %v951 = vadd.f32 %v553, %v950
        %v952 = vpop.f32.mrf.mxu0
        %v953 = vadd.f32 %v549, %v952
        %v954 = vpop.f32.mrf.mxu0
        %v955 = vadd.f32 %v553, %v954
        %956 = vdwg.mxu0
        %957 = vmatprep.subr.bf16.mxu0 0
        %958 = vmatpush1.bf16.msra.mxu0 0
        %959 = vmatprep.subr.bf16.mxu0 0
        %960 = vmatpush1.bf16.msra.mxu0 0
        %961 = vmatprep.subr.bf16.mxu0 %v792
        %962 = vmatpush1.bf16.msra.mxu0 %v789
        %963 = vmatprep.subr.bf16.mxu0 %v716
        %964 = vmatpush1.bf16.msra.mxu0 %v715
        %965 = vmatprep.subr.bf16.mxu0 %v712
        %966 = vmatpush1.bf16.msra.mxu0 %v711
        %967 = vmatprep.subr.bf16.mxu0 %v708
        %968 = vmatpush1.bf16.msra.mxu0 %v707
        %969 = vmatprep.subr.bf16.mxu0 %v704
        %970 = vmatpush1.bf16.msra.mxu0 %v703
        %971 = vmatprep.subr.bf16.mxu0 %v700
        %972 = vmatpush1.bf16.msra.mxu0 %v699
        %973 = vmatprep.subr.bf16.mxu0 0
        %974 = vmatpush2.bf16.msra.mxu0 0
        %975 = vmatprep.subr.bf16.mxu0 0
        %976 = vmatpush2.bf16.msra.mxu0 0
        %977 = vmatprep.subr.bf16.mxu0 0
        %978 = vmatpush2.bf16.msra.mxu0 0
        %979 = vmatprep.subr.bf16.mxu0 0
        %980 = vmatpush2.bf16.msra.mxu0 0
        %981 = vmatprep.subr.bf16.mxu0 0
        %982 = vmatpush2.bf16.msra.mxu0 0
        %983 = vmatprep.subr.bf16.mxu0 0
        %984 = vmatpush2.bf16.msra.mxu0 0
        %985 = vmatprep.subr.bf16.mxu0 0
        %986 = vmatpush2.bf16.msra.mxu0 0
        %987 = vmatprep.subr.bf16.mxu0 0
        %988 = vmatpush2.bf16.msra.mxu0 0
        %989 = vmatprep.mubr.bf16.mxu0 0
        %990 = vmatmul.mubr.bf16.gmra.mxu0 %v743
        %v991 = vpop.f32.mrf.mxu0
        %v992 = vadd.f32 %v557, %v991
        %v993 = vpop.f32.mrf.mxu0
        %v994 = vadd.f32 %v561, %v993
        %v995 = vpop.f32.mrf.mxu0
        %v996 = vadd.f32 %v557, %v995
        %v997 = vpop.f32.mrf.mxu0
        %v998 = vadd.f32 %v561, %v997
        %999 = vmatprep.mubr.bf16.mxu0 0
        %1000 = vmatmul.mubr.bf16.gmra.mxu0 %v746
        %v1001 = vpop.f32.mrf.mxu0
        %v1002 = vadd.f32 %v557, %v1001
        %v1003 = vpop.f32.mrf.mxu0
        %v1004 = vadd.f32 %v561, %v1003
        %v1005 = vpop.f32.mrf.mxu0
        %v1006 = vadd.f32 %v557, %v1005
        %v1007 = vpop.f32.mrf.mxu0
        %v1008 = vadd.f32 %v561, %v1007
        %1009 = vmatprep.mubr.bf16.mxu0 0
        %1010 = vmatmul.mubr.bf16.gmra.mxu0 %v749
        %v1011 = vpop.f32.mrf.mxu0
        %v1012 = vadd.f32 %v557, %v1011
        %v1013 = vpop.f32.mrf.mxu0
        %v1014 = vadd.f32 %v561, %v1013
        %v1015 = vpop.f32.mrf.mxu0
        %v1016 = vadd.f32 %v557, %v1015
        %v1017 = vpop.f32.mrf.mxu0
        %v1018 = vadd.f32 %v561, %v1017
        %1019 = vmatprep.mubr.bf16.mxu0 0
        %1020 = vmatmul.mubr.bf16.gmra.mxu0 %v752
        %v1021 = vpop.f32.mrf.mxu0
        %v1022 = vadd.f32 %v557, %v1021
        %v1023 = vpop.f32.mrf.mxu0
        %v1024 = vadd.f32 %v561, %v1023
        %v1025 = vpop.f32.mrf.mxu0
        %v1026 = vadd.f32 %v557, %v1025
        %v1027 = vpop.f32.mrf.mxu0
        %v1028 = vadd.f32 %v561, %v1027
        %1029 = vmatprep.mubr.bf16.mxu0 0
        %1030 = vmatmul.mubr.bf16.gmra.mxu0 %v755
        %v1031 = vpop.f32.mrf.mxu0
        %v1032 = vadd.f32 %v557, %v1031
        %v1033 = vpop.f32.mrf.mxu0
        %v1034 = vadd.f32 %v561, %v1033
        %v1035 = vpop.f32.mrf.mxu0
        %v1036 = vadd.f32 %v557, %v1035
        %v1037 = vpop.f32.mrf.mxu0
        %v1038 = vadd.f32 %v561, %v1037
        %1039 = vmatprep.mubr.bf16.mxu0 0
        %1040 = vmatmul.mubr.bf16.gmra.mxu0 %v758
        %v1041 = vpop.f32.mrf.mxu0
        %v1042 = vadd.f32 %v557, %v1041
        %v1043 = vpop.f32.mrf.mxu0
        %v1044 = vadd.f32 %v561, %v1043
        %v1045 = vpop.f32.mrf.mxu0
        %v1046 = vadd.f32 %v557, %v1045
        %v1047 = vpop.f32.mrf.mxu0
        %v1048 = vadd.f32 %v561, %v1047
        %1049 = vmatprep.mubr.bf16.mxu0 0
        %1050 = vmatmul.mubr.bf16.gmra.mxu0 %v761
        %v1051 = vpop.f32.mrf.mxu0
        %v1052 = vadd.f32 %v557, %v1051
        %v1053 = vpop.f32.mrf.mxu0
        %v1054 = vadd.f32 %v561, %v1053
        %v1055 = vpop.f32.mrf.mxu0
        %v1056 = vadd.f32 %v557, %v1055
        %v1057 = vpop.f32.mrf.mxu0
        %v1058 = vadd.f32 %v561, %v1057
        %1059 = vmatprep.mubr.bf16.mxu0 0
        %1060 = vmatmul.mubr.bf16.gmra.mxu0 %v764
        %v1061 = vpop.f32.mrf.mxu0
        %v1062 = vadd.f32 %v557, %v1061
        %v1063 = vpop.f32.mrf.mxu0
        %v1064 = vadd.f32 %v561, %v1063
        %v1065 = vpop.f32.mrf.mxu0
        %v1066 = vadd.f32 %v557, %v1065
        %v1067 = vpop.f32.mrf.mxu0
        %v1068 = vadd.f32 %v561, %v1067
        %1069 = vmatprep.mubr.bf16.mxu0 0
        %1070 = vmatmul.mubr.bf16.gmra.mxu0 %v767
        %v1071 = vpop.f32.mrf.mxu0
        %v1072 = vadd.f32 %v557, %v1071
        %v1073 = vpop.f32.mrf.mxu0
        %v1074 = vadd.f32 %v561, %v1073
        %v1075 = vpop.f32.mrf.mxu0
        %v1076 = vadd.f32 %v557, %v1075
        %v1077 = vpop.f32.mrf.mxu0
        %v1078 = vadd.f32 %v561, %v1077
        %1079 = vmatprep.mubr.bf16.mxu0 0
        %1080 = vmatmul.mubr.bf16.gmra.mxu0 %v770
        %v1081 = vpop.f32.mrf.mxu0
        %v1082 = vadd.f32 %v557, %v1081
        %v1083 = vpop.f32.mrf.mxu0
        %v1084 = vadd.f32 %v561, %v1083
        %v1085 = vpop.f32.mrf.mxu0
        %v1086 = vadd.f32 %v557, %v1085
        %v1087 = vpop.f32.mrf.mxu0
        %v1088 = vadd.f32 %v561, %v1087
        %1089 = vmatprep.mubr.bf16.mxu0 0
        %1090 = vmatmul.mubr.bf16.gmra.mxu0 %v773
        %v1091 = vpop.f32.mrf.mxu0
        %v1092 = vadd.f32 %v557, %v1091
        %v1093 = vpop.f32.mrf.mxu0
        %v1094 = vadd.f32 %v561, %v1093
        %v1095 = vpop.f32.mrf.mxu0
        %v1096 = vadd.f32 %v557, %v1095
        %v1097 = vpop.f32.mrf.mxu0
        %v1098 = vadd.f32 %v561, %v1097
        %1099 = vmatprep.mubr.bf16.mxu0 0
        %1100 = vmatmul.mubr.bf16.gmra.mxu0 %v776
        %v1101 = vpop.f32.mrf.mxu0
        %v1102 = vadd.f32 %v557, %v1101
        %v1103 = vpop.f32.mrf.mxu0
        %v1104 = vadd.f32 %v561, %v1103
        %v1105 = vpop.f32.mrf.mxu0
        %v1106 = vadd.f32 %v557, %v1105
        %v1107 = vpop.f32.mrf.mxu0
        %v1108 = vadd.f32 %v561, %v1107
        %1109 = vmatprep.mubr.bf16.mxu0 0
        %1110 = vmatmul.mubr.bf16.gmra.mxu0 %v779
        %v1111 = vpop.f32.mrf.mxu0
        %v1112 = vadd.f32 %v557, %v1111
        %v1113 = vpop.f32.mrf.mxu0
        %v1114 = vadd.f32 %v561, %v1113
        %v1115 = vpop.f32.mrf.mxu0
        %v1116 = vadd.f32 %v557, %v1115
        %v1117 = vpop.f32.mrf.mxu0
        %v1118 = vadd.f32 %v561, %v1117
        %1119 = vdwg.mxu0
        %v1120 = vmax.f32 %v829, 0.0
        %v1121 = vmax.f32 %v831, 0.0
        %v1122 = vmax.f32 %v992, 0.0
        %v1123 = vmax.f32 %v994, 0.0
        %v1124 = vmax.f32 %v833, 0.0
        %v1125 = vmax.f32 %v835, 0.0
        %v1126 = vmax.f32 %v996, 0.0
        %v1127 = vmax.f32 %v998, 0.0
        %v1128 = vmax.f32 %v839, 0.0
        %v1129 = vmax.f32 %v841, 0.0
        %v1130 = vmax.f32 %v1002, 0.0
        %v1131 = vmax.f32 %v1004, 0.0
        %v1132 = vmax.f32 %v843, 0.0
        %v1133 = vmax.f32 %v845, 0.0
        %v1134 = vmax.f32 %v1006, 0.0
        %v1135 = vmax.f32 %v1008, 0.0
        %v1136 = vmax.f32 %v849, 0.0
        %v1137 = vmax.f32 %v851, 0.0
        %v1138 = vmax.f32 %v1012, 0.0
        %v1139 = vmax.f32 %v1014, 0.0
        %v1140 = vmax.f32 %v853, 0.0
        %v1141 = vmax.f32 %v855, 0.0
        %v1142 = vmax.f32 %v1016, 0.0
        %v1143 = vmax.f32 %v1018, 0.0
        %v1144 = vmax.f32 %v859, 0.0
        %v1145 = vmax.f32 %v861, 0.0
        %v1146 = vmax.f32 %v1022, 0.0
        %v1147 = vmax.f32 %v1024, 0.0
        %v1148 = vmax.f32 %v863, 0.0
        %v1149 = vmax.f32 %v865, 0.0
        %v1150 = vmax.f32 %v1026, 0.0
        %v1151 = vmax.f32 %v1028, 0.0
        %v1152 = vmax.f32 %v869, 0.0
        %v1153 = vmax.f32 %v871, 0.0
        %v1154 = vmax.f32 %v1032, 0.0
        %v1155 = vmax.f32 %v1034, 0.0
        %v1156 = vmax.f32 %v873, 0.0
        %v1157 = vmax.f32 %v875, 0.0
        %v1158 = vmax.f32 %v1036, 0.0
        %v1159 = vmax.f32 %v1038, 0.0
        %v1160 = vmax.f32 %v879, 0.0
        %v1161 = vmax.f32 %v881, 0.0
        %v1162 = vmax.f32 %v1042, 0.0
        %v1163 = vmax.f32 %v1044, 0.0
        %v1164 = vmax.f32 %v883, 0.0
        %v1165 = vmax.f32 %v885, 0.0
        %v1166 = vmax.f32 %v1046, 0.0
        %v1167 = vmax.f32 %v1048, 0.0
        %v1168 = vmax.f32 %v889, 0.0
        %v1169 = vmax.f32 %v891, 0.0
        %v1170 = vmax.f32 %v1052, 0.0
        %v1171 = vmax.f32 %v1054, 0.0
        %v1172 = vmax.f32 %v893, 0.0
        %v1173 = vmax.f32 %v895, 0.0
        %v1174 = vmax.f32 %v1056, 0.0
        %v1175 = vmax.f32 %v1058, 0.0
        %v1176 = vmax.f32 %v899, 0.0
        %v1177 = vmax.f32 %v901, 0.0
        %v1178 = vmax.f32 %v1062, 0.0
        %v1179 = vmax.f32 %v1064, 0.0
        %v1180 = vmax.f32 %v903, 0.0
        %v1181 = vmax.f32 %v905, 0.0
        %v1182 = vmax.f32 %v1066, 0.0
        %v1183 = vmax.f32 %v1068, 0.0
        %v1184 = vmax.f32 %v909, 0.0
        %v1185 = vmax.f32 %v911, 0.0
        %v1186 = vmax.f32 %v1072, 0.0
        %v1187 = vmax.f32 %v1074, 0.0
        %v1188 = vmax.f32 %v913, 0.0
        %v1189 = vmax.f32 %v915, 0.0
        %v1190 = vmax.f32 %v1076, 0.0
        %v1191 = vmax.f32 %v1078, 0.0
        %v1192 = vmax.f32 %v919, 0.0
        %v1193 = vmax.f32 %v921, 0.0
        %v1194 = vmax.f32 %v1082, 0.0
        %v1195 = vmax.f32 %v1084, 0.0
        %v1196 = vmax.f32 %v923, 0.0
        %v1197 = vmax.f32 %v925, 0.0
        %v1198 = vmax.f32 %v1086, 0.0
        %v1199 = vmax.f32 %v1088, 0.0
        %v1200 = vmax.f32 %v929, 0.0
        %v1201 = vmax.f32 %v931, 0.0
        %v1202 = vmax.f32 %v1092, 0.0
        %v1203 = vmax.f32 %v1094, 0.0
        %v1204 = vmax.f32 %v933, 0.0
        %v1205 = vmax.f32 %v935, 0.0
        %v1206 = vmax.f32 %v1096, 0.0
        %v1207 = vmax.f32 %v1098, 0.0
        %v1208 = vmax.f32 %v939, 0.0
        %v1209 = vmax.f32 %v941, 0.0
        %v1210 = vmax.f32 %v1102, 0.0
        %v1211 = vmax.f32 %v1104, 0.0
        %v1212 = vmax.f32 %v943, 0.0
        %v1213 = vmax.f32 %v945, 0.0
        %v1214 = vmax.f32 %v1106, 0.0
        %v1215 = vmax.f32 %v1108, 0.0
        %v1216 = vmax.f32 %v949, 0.0
        %v1217 = vmax.f32 %v951, 0.0
        %v1218 = vmax.f32 %v1112, 0.0
        %v1219 = vmax.f32 %v1114, 0.0
        %v1220 = vmax.f32 %v953, 0.0
        %v1221 = vmax.f32 %v955, 0.0
        %v1222 = vmax.f32 %v1116, 0.0
        %v1223 = vmax.f32 %v1118, 0.0
        %v1224 = vpack.c.bf16 %v1124, %v1120
        %v1225 = vpack.c.bf16 %v1125, %v1121
        %v1226 = vpack.c.bf16 %v1126, %v1122
        %v1227 = vpack.c.bf16 %v1127, %v1123
        %v1228 = vpack.c.bf16 %v1132, %v1128
        %v1229 = vpack.c.bf16 %v1133, %v1129
        %v1230 = vpack.c.bf16 %v1134, %v1130
        %v1231 = vpack.c.bf16 %v1135, %v1131
        %v1232 = vpack.c.bf16 %v1140, %v1136
        %v1233 = vpack.c.bf16 %v1141, %v1137
        %v1234 = vpack.c.bf16 %v1142, %v1138
        %v1235 = vpack.c.bf16 %v1143, %v1139
        %v1236 = vpack.c.bf16 %v1148, %v1144
        %v1237 = vpack.c.bf16 %v1149, %v1145
        %v1238 = vpack.c.bf16 %v1150, %v1146
        %v1239 = vpack.c.bf16 %v1151, %v1147
        %v1240 = vpack.c.bf16 %v1156, %v1152
        %v1241 = vpack.c.bf16 %v1157, %v1153
        %v1242 = vpack.c.bf16 %v1158, %v1154
        %v1243 = vpack.c.bf16 %v1159, %v1155
        %v1244 = vpack.c.bf16 %v1164, %v1160
        %v1245 = vpack.c.bf16 %v1165, %v1161
        %v1246 = vpack.c.bf16 %v1166, %v1162
        %v1247 = vpack.c.bf16 %v1167, %v1163
        %v1248 = vpack.c.bf16 %v1172, %v1168
        %v1249 = vpack.c.bf16 %v1173, %v1169
        %v1250 = vpack.c.bf16 %v1174, %v1170
        %v1251 = vpack.c.bf16 %v1175, %v1171
        %v1252 = vpack.c.bf16 %v1180, %v1176
        %v1253 = vpack.c.bf16 %v1181, %v1177
        %v1254 = vpack.c.bf16 %v1182, %v1178
        %v1255 = vpack.c.bf16 %v1183, %v1179
        %v1256 = vpack.c.bf16 %v1188, %v1184
        %v1257 = vpack.c.bf16 %v1189, %v1185
        %v1258 = vpack.c.bf16 %v1190, %v1186
        %v1259 = vpack.c.bf16 %v1191, %v1187
        %v1260 = vpack.c.bf16 %v1196, %v1192
        %v1261 = vpack.c.bf16 %v1197, %v1193
        %v1262 = vpack.c.bf16 %v1198, %v1194
        %v1263 = vpack.c.bf16 %v1199, %v1195
        %v1264 = vpack.c.bf16 %v1204, %v1200
        %v1265 = vpack.c.bf16 %v1205, %v1201
        %v1266 = vpack.c.bf16 %v1206, %v1202
        %v1267 = vpack.c.bf16 %v1207, %v1203
        %v1268 = vpack.c.bf16 %v1212, %v1208
        %v1269 = vpack.c.bf16 %v1213, %v1209
        %v1270 = vpack.c.bf16 %v1214, %v1210
        %v1271 = vpack.c.bf16 %v1215, %v1211
        %v1272 = vpack.c.bf16 %v1220, %v1216
        %v1273 = vpack.c.bf16 %v1221, %v1217
        %v1274 = vpack.c.bf16 %v1222, %v1218
        %v1275 = vpack.c.bf16 %v1223, %v1219
        %v1276 = vld [vmem:[%s3] sm:$0xff]
        %v1277 = vld [vmem:[%s3 + $0x8] sm:$0xff]
        %v1278 = vld [vmem:[%s3 + $0x10] sm:$0xff]
        %v1279 = vld [vmem:[%s3 + $0x18] sm:$0xff]
        %v1280 = vld [vmem:[%s3 + $0x20] sm:$0xff]
        %v1281 = vld [vmem:[%s3 + $0x28] sm:$0xff]
        %v1282 = vld [vmem:[%s3 + $0x30] sm:$0xff]
        %v1283 = vld [vmem:[%s3 + $0x38] sm:$0xff]
        %v1284 = vld [vmem:[%s3 + $0x40] sm:$0xff]
        %v1285 = vld [vmem:[%s3 + $0x48] sm:$0xff]
        %v1286 = vld [vmem:[%s3 + $0x50] sm:$0xff]
        %v1287 = vld [vmem:[%s3 + $0x58] sm:$0xff]
        %v1288 = vld [vmem:[%s3 + $0x60] sm:$0xff]
        %v1289 = vld [vmem:[%s3 + $0x68] sm:$0xff]
        %v1290 = vld [vmem:[%s3 + $0x70] sm:$0xff]
        %v1291 = vld [vmem:[%s3 + $0x78] sm:$0xff]
        %v1292 = vld [vmem:[%s3 + $0x80] sm:$0xff]
        %v1293 = vld [vmem:[%s3 + $0x88] sm:$0xff]
        %v1294 = vld [vmem:[%s3 + $0x90] sm:$0xff]
        %v1295 = vld [vmem:[%s3 + $0x98] sm:$0xff]
        %v1296 = vld [vmem:[%s3 + $0xa0] sm:$0xff]
        %v1297 = vld [vmem:[%s3 + $0xa8] sm:$0xff]
        %v1298 = vld [vmem:[%s3 + $0xb0] sm:$0xff]
        %v1299 = vld [vmem:[%s3 + $0xb8] sm:$0xff]
        %v1300 = vld [vmem:[%s3 + $0xc0] sm:$0xff]
        %v1301 = vld [vmem:[%s3 + $0xc8] sm:$0xff]
        %v1302 = vld [vmem:[%s3 + $0xd0] sm:$0xff]
        %v1303 = vld [vmem:[%s3 + $0xd8] sm:$0xff]
        %v1304 = vld [vmem:[%s3 + $0xe0] sm:$0xff]
        %v1305 = vld [vmem:[%s3 + $0xe8] sm:$0xff]
        %v1306 = vld [vmem:[%s3 + $0xf0] sm:$0xff]
        %v1307 = vld [vmem:[%s3 + $0xf8] sm:$0xff]
        %v1308 = vld [vmem:[%s3 + $0x100] sm:$0xff]
        %v1309 = vld [vmem:[%s3 + $0x108] sm:$0xff]
        %v1310 = vld [vmem:[%s3 + $0x110] sm:$0xff]
        %v1311 = vld [vmem:[%s3 + $0x118] sm:$0xff]
        %v1312 = vld [vmem:[%s3 + $0x120] sm:$0xff]
        %v1313 = vld [vmem:[%s3 + $0x128] sm:$0xff]
        %v1314 = vld [vmem:[%s3 + $0x130] sm:$0xff]
        %v1315 = vld [vmem:[%s3 + $0x138] sm:$0xff]
        %v1316 = vld [vmem:[%s3 + $0x140] sm:$0xff]
        %v1317 = vld [vmem:[%s3 + $0x148] sm:$0xff]
        %v1318 = vld [vmem:[%s3 + $0x150] sm:$0xff]
        %v1319 = vld [vmem:[%s3 + $0x158] sm:$0xff]
        %v1320 = vld [vmem:[%s3 + $0x160] sm:$0xff]
        %v1321 = vld [vmem:[%s3 + $0x168] sm:$0xff]
        %v1322 = vld [vmem:[%s3 + $0x170] sm:$0xff]
        %v1323 = vld [vmem:[%s3 + $0x178] sm:$0xff]
        %v1324 = vld [vmem:[%s3 + $0x180] sm:$0xff]
        %v1325 = vld [vmem:[%s3 + $0x188] sm:$0xff]
        %v1326 = vld [vmem:[%s3 + $0x190] sm:$0xff]
        %v1327 = vld [vmem:[%s3 + $0x198] sm:$0xff]
        %v1380 = vunpack.c.l.b16 %v1276
        %v1381 = vunpack.c.h.b16 %v1276
        %v1382 = vunpack.c.l.b16 %v1277
        %v1383 = vunpack.c.h.b16 %v1277
        %v1384 = vunpack.c.l.b16 %v1278
        %v1385 = vunpack.c.h.b16 %v1278
        %v1386 = vunpack.c.l.b16 %v1279
        %v1387 = vunpack.c.h.b16 %v1279
        %v1388 = vunpack.c.l.b16 %v1280
        %v1389 = vunpack.c.h.b16 %v1280
        %v1390 = vunpack.c.l.b16 %v1281
        %v1391 = vunpack.c.h.b16 %v1281
        %v1392 = vunpack.c.l.b16 %v1282
        %v1393 = vunpack.c.h.b16 %v1282
        %v1394 = vunpack.c.l.b16 %v1283
        %v1395 = vunpack.c.h.b16 %v1283
        %v1396 = vunpack.c.l.b16 %v1284
        %v1397 = vunpack.c.h.b16 %v1284
        %v1398 = vunpack.c.l.b16 %v1285
        %v1399 = vunpack.c.h.b16 %v1285
        %v1400 = vunpack.c.l.b16 %v1286
        %v1401 = vunpack.c.h.b16 %v1286
        %v1402 = vunpack.c.l.b16 %v1287
        %v1403 = vunpack.c.h.b16 %v1287
        %v1404 = vunpack.c.l.b16 %v1288
        %v1405 = vunpack.c.h.b16 %v1288
        %v1406 = vunpack.c.l.b16 %v1289
        %v1407 = vunpack.c.h.b16 %v1289
        %v1408 = vunpack.c.l.b16 %v1290
        %v1409 = vunpack.c.h.b16 %v1290
        %v1410 = vunpack.c.l.b16 %v1291
        %v1411 = vunpack.c.h.b16 %v1291
        %v1412 = vunpack.c.l.b16 %v1292
        %v1413 = vunpack.c.h.b16 %v1292
        %v1414 = vunpack.c.l.b16 %v1293
        %v1415 = vunpack.c.h.b16 %v1293
        %v1416 = vunpack.c.l.b16 %v1294
        %v1417 = vunpack.c.h.b16 %v1294
        %v1418 = vunpack.c.l.b16 %v1295
        %v1419 = vunpack.c.h.b16 %v1295
        %v1420 = vunpack.c.l.b16 %v1296
        %v1421 = vunpack.c.h.b16 %v1296
        %v1422 = vunpack.c.l.b16 %v1297
        %v1423 = vunpack.c.h.b16 %v1297
        %v1424 = vunpack.c.l.b16 %v1298
        %v1425 = vunpack.c.h.b16 %v1298
        %v1426 = vunpack.c.l.b16 %v1299
        %v1427 = vunpack.c.h.b16 %v1299
        %v1428 = vunpack.c.l.b16 %v1300
        %v1429 = vunpack.c.h.b16 %v1300
        %v1430 = vunpack.c.l.b16 %v1301
        %v1431 = vunpack.c.h.b16 %v1301
        %v1432 = vunpack.c.l.b16 %v1302
        %v1433 = vunpack.c.h.b16 %v1302
        %v1434 = vunpack.c.l.b16 %v1303
        %v1435 = vunpack.c.h.b16 %v1303
        %v1436 = vunpack.c.l.b16 %v1304
        %v1437 = vunpack.c.h.b16 %v1304
        %v1438 = vunpack.c.l.b16 %v1305
        %v1439 = vunpack.c.h.b16 %v1305
        %v1440 = vunpack.c.l.b16 %v1306
        %v1441 = vunpack.c.h.b16 %v1306
        %v1442 = vunpack.c.l.b16 %v1307
        %v1443 = vunpack.c.h.b16 %v1307
        %v1444 = vunpack.c.l.b16 %v1308
        %v1445 = vunpack.c.h.b16 %v1308
        %v1446 = vunpack.c.l.b16 %v1309
        %v1447 = vunpack.c.h.b16 %v1309
        %v1448 = vunpack.c.l.b16 %v1310
        %v1449 = vunpack.c.h.b16 %v1310
        %v1450 = vunpack.c.l.b16 %v1311
        %v1451 = vunpack.c.h.b16 %v1311
        %v1452 = vunpack.c.l.b16 %v1312
        %v1453 = vunpack.c.h.b16 %v1312
        %v1454 = vunpack.c.l.b16 %v1313
        %v1455 = vunpack.c.h.b16 %v1313
        %v1456 = vunpack.c.l.b16 %v1314
        %v1457 = vunpack.c.h.b16 %v1314
        %v1458 = vunpack.c.l.b16 %v1315
        %v1459 = vunpack.c.h.b16 %v1315
        %v1460 = vunpack.c.l.b16 %v1316
        %v1461 = vunpack.c.h.b16 %v1316
        %v1462 = vunpack.c.l.b16 %v1317
        %v1463 = vunpack.c.h.b16 %v1317
        %v1464 = vunpack.c.l.b16 %v1318
        %v1465 = vunpack.c.h.b16 %v1318
        %v1466 = vunpack.c.l.b16 %v1319
        %v1467 = vunpack.c.h.b16 %v1319
        %v1468 = vunpack.c.l.b16 %v1320
        %v1469 = vunpack.c.h.b16 %v1320
        %v1470 = vunpack.c.l.b16 %v1321
        %v1471 = vunpack.c.h.b16 %v1321
        %v1472 = vunpack.c.l.b16 %v1322
        %v1473 = vunpack.c.h.b16 %v1322
        %v1474 = vunpack.c.l.b16 %v1323
        %v1475 = vunpack.c.h.b16 %v1323
        %v1476 = vunpack.c.l.b16 %v1324
        %v1477 = vunpack.c.h.b16 %v1324
        %v1478 = vunpack.c.l.b16 %v1325
        %v1479 = vunpack.c.h.b16 %v1325
        %v1480 = vunpack.c.l.b16 %v1326
        %v1481 = vunpack.c.h.b16 %v1326
        %v1482 = vunpack.c.l.b16 %v1327
        %v1483 = vunpack.c.h.b16 %v1327
        %v1484 = vpack.c.b16 %v1382, %v1380
        %v1485 = vpack.c.b16 %v1383, %v1381
        %v1486 = vpack.c.b16 %v1386, %v1384
        %v1487 = vpack.c.b16 %v1387, %v1385
        %v1488 = vpack.c.b16 %v1390, %v1388
        %v1489 = vpack.c.b16 %v1391, %v1389
        %v1490 = vpack.c.b16 %v1394, %v1392
        %v1491 = vpack.c.b16 %v1395, %v1393
        %v1492 = vpack.c.b16 %v1398, %v1396
        %v1493 = vpack.c.b16 %v1399, %v1397
        %v1494 = vpack.c.b16 %v1402, %v1400
        %v1495 = vpack.c.b16 %v1403, %v1401
        %v1496 = vpack.c.b16 %v1406, %v1404
        %v1497 = vpack.c.b16 %v1407, %v1405
        %v1498 = vpack.c.b16 %v1410, %v1408
        %v1499 = vpack.c.b16 %v1411, %v1409
        %v1500 = vpack.c.b16 %v1414, %v1412
        %v1501 = vpack.c.b16 %v1415, %v1413
        %v1502 = vpack.c.b16 %v1418, %v1416
        %v1503 = vpack.c.b16 %v1419, %v1417
        %v1504 = vpack.c.b16 %v1422, %v1420
        %v1505 = vpack.c.b16 %v1423, %v1421
        %v1506 = vpack.c.b16 %v1426, %v1424
        %v1507 = vpack.c.b16 %v1427, %v1425
        %v1508 = vpack.c.b16 %v1430, %v1428
        %v1509 = vpack.c.b16 %v1431, %v1429
        %v1510 = vpack.c.b16 %v1434, %v1432
        %v1511 = vpack.c.b16 %v1435, %v1433
        %v1512 = vpack.c.b16 %v1438, %v1436
        %v1513 = vpack.c.b16 %v1439, %v1437
        %v1514 = vpack.c.b16 %v1442, %v1440
        %v1515 = vpack.c.b16 %v1443, %v1441
        %v1516 = vpack.c.b16 %v1446, %v1444
        %v1517 = vpack.c.b16 %v1447, %v1445
        %v1518 = vpack.c.b16 %v1450, %v1448
        %v1519 = vpack.c.b16 %v1451, %v1449
        %v1520 = vpack.c.b16 %v1454, %v1452
        %v1521 = vpack.c.b16 %v1455, %v1453
        %v1522 = vpack.c.b16 %v1458, %v1456
        %v1523 = vpack.c.b16 %v1459, %v1457
        %v1524 = vpack.c.b16 %v1462, %v1460
        %v1525 = vpack.c.b16 %v1463, %v1461
        %v1526 = vpack.c.b16 %v1466, %v1464
        %v1527 = vpack.c.b16 %v1467, %v1465
        %v1528 = vpack.c.b16 %v1470, %v1468
        %v1529 = vpack.c.b16 %v1471, %v1469
        %v1530 = vpack.c.b16 %v1474, %v1472
        %v1531 = vpack.c.b16 %v1475, %v1473
        %v1532 = vpack.c.b16 %v1478, %v1476
        %v1533 = vpack.c.b16 %v1479, %v1477
        %v1534 = vpack.c.b16 %v1482, %v1480
        %v1535 = vpack.c.b16 %v1483, %v1481
        %vm1588 = vcmask 261120
        %v1590 = vsel %vm1588, %v1227, 0
        %v1593 = vsel %vm1588, %v1231, 0
        %v1596 = vsel %vm1588, %v1235, 0
        %v1599 = vsel %vm1588, %v1239, 0
        %v1602 = vsel %vm1588, %v1243, 0
        %v1605 = vsel %vm1588, %v1247, 0
        %v1608 = vsel %vm1588, %v1251, 0
        %v1611 = vsel %vm1588, %v1255, 0
        %v1614 = vsel %vm1588, %v1259, 0
        %v1617 = vsel %vm1588, %v1263, 0
        %v1620 = vsel %vm1588, %v1267, 0
        %v1623 = vsel %vm1588, %v1271, 0
        %v1626 = vsel %vm1588, %v1275, 0
        %1628 = vmatprep.subr.bf16.mxu0 %v1499
        %1629 = vmatpush1.bf16.msra.mxu0 %v1498
        %1630 = vmatprep.subr.bf16.mxu0 %v1497
        %1631 = vmatpush1.bf16.msra.mxu0 %v1496
        %1632 = vmatprep.subr.bf16.mxu0 %v1495
        %1633 = vmatpush1.bf16.msra.mxu0 %v1494
        %1634 = vmatprep.subr.bf16.mxu0 %v1493
        %1635 = vmatpush1.bf16.msra.mxu0 %v1492
        %1636 = vmatprep.subr.bf16.mxu0 %v1491
        %1637 = vmatpush1.bf16.msra.mxu0 %v1490
        %1638 = vmatprep.subr.bf16.mxu0 %v1489
        %1639 = vmatpush1.bf16.msra.mxu0 %v1488
        %1640 = vmatprep.subr.bf16.mxu0 %v1487
        %1641 = vmatpush1.bf16.msra.mxu0 %v1486
        %1642 = vmatprep.subr.bf16.mxu0 %v1485
        %1643 = vmatpush1.bf16.msra.mxu0 %v1484
        %1644 = vmatprep.subr.bf16.mxu0 %v1515
        %1645 = vmatpush2.bf16.msra.mxu0 %v1514
        %1646 = vmatprep.subr.bf16.mxu0 %v1513
        %1647 = vmatpush2.bf16.msra.mxu0 %v1512
        %1648 = vmatprep.subr.bf16.mxu0 %v1511
        %1649 = vmatpush2.bf16.msra.mxu0 %v1510
        %1650 = vmatprep.subr.bf16.mxu0 %v1509
        %1651 = vmatpush2.bf16.msra.mxu0 %v1508
        %1652 = vmatprep.subr.bf16.mxu0 %v1507
        %1653 = vmatpush2.bf16.msra.mxu0 %v1506
        %1654 = vmatprep.subr.bf16.mxu0 %v1505
        %1655 = vmatpush2.bf16.msra.mxu0 %v1504
        %1656 = vmatprep.subr.bf16.mxu0 %v1503
        %1657 = vmatpush2.bf16.msra.mxu0 %v1502
        %1658 = vmatprep.subr.bf16.mxu0 %v1501
        %1659 = vmatpush2.bf16.msra.mxu0 %v1500
        %1660 = vmatprep.mubr.bf16.mxu0 %v1225
        %1661 = vmatmul.mubr.bf16.gmra.mxu0 %v1224
        %v1662 = vpop.f32.mrf.mxu0
        %v1663 = vadd.f32 0.0, %v1662
        %v1664 = vpop.f32.mrf.mxu0
        %v1665 = vadd.f32 0.0, %v1664
        %v1666 = vpop.f32.mrf.mxu0
        %v1667 = vadd.f32 0.0, %v1666
        %v1668 = vpop.f32.mrf.mxu0
        %v1669 = vadd.f32 0.0, %v1668
        %1670 = vmatprep.mubr.bf16.mxu0 %v1229
        %1671 = vmatmul.mubr.bf16.gmra.mxu0 %v1228
        %v1672 = vpop.f32.mrf.mxu0
        %v1673 = vadd.f32 0.0, %v1672
        %v1674 = vpop.f32.mrf.mxu0
        %v1675 = vadd.f32 0.0, %v1674
        %v1676 = vpop.f32.mrf.mxu0
        %v1677 = vadd.f32 0.0, %v1676
        %v1678 = vpop.f32.mrf.mxu0
        %v1679 = vadd.f32 0.0, %v1678
        %1680 = vmatprep.mubr.bf16.mxu0 %v1233
        %1681 = vmatmul.mubr.bf16.gmra.mxu0 %v1232
        %v1682 = vpop.f32.mrf.mxu0
        %v1683 = vadd.f32 0.0, %v1682
        %v1684 = vpop.f32.mrf.mxu0
        %v1685 = vadd.f32 0.0, %v1684
        %v1686 = vpop.f32.mrf.mxu0
        %v1687 = vadd.f32 0.0, %v1686
        %v1688 = vpop.f32.mrf.mxu0
        %v1689 = vadd.f32 0.0, %v1688
        %1690 = vmatprep.mubr.bf16.mxu0 %v1237
        %1691 = vmatmul.mubr.bf16.gmra.mxu0 %v1236
        %v1692 = vpop.f32.mrf.mxu0
        %v1693 = vadd.f32 0.0, %v1692
        %v1694 = vpop.f32.mrf.mxu0
        %v1695 = vadd.f32 0.0, %v1694
        %v1696 = vpop.f32.mrf.mxu0
        %v1697 = vadd.f32 0.0, %v1696
        %v1698 = vpop.f32.mrf.mxu0
        %v1699 = vadd.f32 0.0, %v1698
        %1700 = vmatprep.mubr.bf16.mxu0 %v1241
        %1701 = vmatmul.mubr.bf16.gmra.mxu0 %v1240
        %v1702 = vpop.f32.mrf.mxu0
        %v1703 = vadd.f32 0.0, %v1702
        %v1704 = vpop.f32.mrf.mxu0
        %v1705 = vadd.f32 0.0, %v1704
        %v1706 = vpop.f32.mrf.mxu0
        %v1707 = vadd.f32 0.0, %v1706
        %v1708 = vpop.f32.mrf.mxu0
        %v1709 = vadd.f32 0.0, %v1708
        %1710 = vmatprep.mubr.bf16.mxu0 %v1245
        %1711 = vmatmul.mubr.bf16.gmra.mxu0 %v1244
        %v1712 = vpop.f32.mrf.mxu0
        %v1713 = vadd.f32 0.0, %v1712
        %v1714 = vpop.f32.mrf.mxu0
        %v1715 = vadd.f32 0.0, %v1714
        %v1716 = vpop.f32.mrf.mxu0
        %v1717 = vadd.f32 0.0, %v1716
        %v1718 = vpop.f32.mrf.mxu0
        %v1719 = vadd.f32 0.0, %v1718
        %1720 = vmatprep.mubr.bf16.mxu0 %v1249
        %1721 = vmatmul.mubr.bf16.gmra.mxu0 %v1248
        %v1722 = vpop.f32.mrf.mxu0
        %v1723 = vadd.f32 0.0, %v1722
        %v1724 = vpop.f32.mrf.mxu0
        %v1725 = vadd.f32 0.0, %v1724
        %v1726 = vpop.f32.mrf.mxu0
        %v1727 = vadd.f32 0.0, %v1726
        %v1728 = vpop.f32.mrf.mxu0
        %v1729 = vadd.f32 0.0, %v1728
        %1730 = vmatprep.mubr.bf16.mxu0 %v1253
        %1731 = vmatmul.mubr.bf16.gmra.mxu0 %v1252
        %v1732 = vpop.f32.mrf.mxu0
        %v1733 = vadd.f32 0.0, %v1732
        %v1734 = vpop.f32.mrf.mxu0
        %v1735 = vadd.f32 0.0, %v1734
        %v1736 = vpop.f32.mrf.mxu0
        %v1737 = vadd.f32 0.0, %v1736
        %v1738 = vpop.f32.mrf.mxu0
        %v1739 = vadd.f32 0.0, %v1738
        %1740 = vmatprep.mubr.bf16.mxu0 %v1257
        %1741 = vmatmul.mubr.bf16.gmra.mxu0 %v1256
        %v1742 = vpop.f32.mrf.mxu0
        %v1743 = vadd.f32 0.0, %v1742
        %v1744 = vpop.f32.mrf.mxu0
        %v1745 = vadd.f32 0.0, %v1744
        %v1746 = vpop.f32.mrf.mxu0
        %v1747 = vadd.f32 0.0, %v1746
        %v1748 = vpop.f32.mrf.mxu0
        %v1749 = vadd.f32 0.0, %v1748
        %1750 = vmatprep.mubr.bf16.mxu0 %v1261
        %1751 = vmatmul.mubr.bf16.gmra.mxu0 %v1260
        %v1752 = vpop.f32.mrf.mxu0
        %v1753 = vadd.f32 0.0, %v1752
        %v1754 = vpop.f32.mrf.mxu0
        %v1755 = vadd.f32 0.0, %v1754
        %v1756 = vpop.f32.mrf.mxu0
        %v1757 = vadd.f32 0.0, %v1756
        %v1758 = vpop.f32.mrf.mxu0
        %v1759 = vadd.f32 0.0, %v1758
        %1760 = vmatprep.mubr.bf16.mxu0 %v1265
        %1761 = vmatmul.mubr.bf16.gmra.mxu0 %v1264
        %v1762 = vpop.f32.mrf.mxu0
        %v1763 = vadd.f32 0.0, %v1762
        %v1764 = vpop.f32.mrf.mxu0
        %v1765 = vadd.f32 0.0, %v1764
        %v1766 = vpop.f32.mrf.mxu0
        %v1767 = vadd.f32 0.0, %v1766
        %v1768 = vpop.f32.mrf.mxu0
        %v1769 = vadd.f32 0.0, %v1768
        %1770 = vmatprep.mubr.bf16.mxu0 %v1269
        %1771 = vmatmul.mubr.bf16.gmra.mxu0 %v1268
        %v1772 = vpop.f32.mrf.mxu0
        %v1773 = vadd.f32 0.0, %v1772
        %v1774 = vpop.f32.mrf.mxu0
        %v1775 = vadd.f32 0.0, %v1774
        %v1776 = vpop.f32.mrf.mxu0
        %v1777 = vadd.f32 0.0, %v1776
        %v1778 = vpop.f32.mrf.mxu0
        %v1779 = vadd.f32 0.0, %v1778
        %1780 = vmatprep.mubr.bf16.mxu0 %v1273
        %1781 = vmatmul.mubr.bf16.gmra.mxu0 %v1272
        %v1782 = vpop.f32.mrf.mxu0
        %v1783 = vadd.f32 0.0, %v1782
        %v1784 = vpop.f32.mrf.mxu0
        %v1785 = vadd.f32 0.0, %v1784
        %v1786 = vpop.f32.mrf.mxu0
        %v1787 = vadd.f32 0.0, %v1786
        %v1788 = vpop.f32.mrf.mxu0
        %v1789 = vadd.f32 0.0, %v1788
        %1790 = vdwg.mxu0
        %1791 = vmatprep.subr.bf16.mxu0 %v1531
        %1792 = vmatpush1.bf16.msra.mxu0 %v1530
        %1793 = vmatprep.subr.bf16.mxu0 %v1529
        %1794 = vmatpush1.bf16.msra.mxu0 %v1528
        %1795 = vmatprep.subr.bf16.mxu0 %v1527
        %1796 = vmatpush1.bf16.msra.mxu0 %v1526
        %1797 = vmatprep.subr.bf16.mxu0 %v1525
        %1798 = vmatpush1.bf16.msra.mxu0 %v1524
        %1799 = vmatprep.subr.bf16.mxu0 %v1523
        %1800 = vmatpush1.bf16.msra.mxu0 %v1522
        %1801 = vmatprep.subr.bf16.mxu0 %v1521
        %1802 = vmatpush1.bf16.msra.mxu0 %v1520
        %1803 = vmatprep.subr.bf16.mxu0 %v1519
        %1804 = vmatpush1.bf16.msra.mxu0 %v1518
        %1805 = vmatprep.subr.bf16.mxu0 %v1517
        %1806 = vmatpush1.bf16.msra.mxu0 %v1516
        %1807 = vmatprep.subr.bf16.mxu0 0
        %1808 = vmatpush2.bf16.msra.mxu0 0
        %1809 = vmatprep.subr.bf16.mxu0 0
        %1810 = vmatpush2.bf16.msra.mxu0 0
        %1811 = vmatprep.subr.bf16.mxu0 0
        %1812 = vmatpush2.bf16.msra.mxu0 0
        %1813 = vmatprep.subr.bf16.mxu0 0
        %1814 = vmatpush2.bf16.msra.mxu0 0
        %1815 = vmatprep.subr.bf16.mxu0 0
        %1816 = vmatpush2.bf16.msra.mxu0 0
        %1817 = vmatprep.subr.bf16.mxu0 0
        %1818 = vmatpush2.bf16.msra.mxu0 0
        %1819 = vmatprep.subr.bf16.mxu0 %v1535
        %1820 = vmatpush2.bf16.msra.mxu0 %v1534
        %1821 = vmatprep.subr.bf16.mxu0 %v1533
        %1822 = vmatpush2.bf16.msra.mxu0 %v1532
        %1823 = vmatprep.mubr.bf16.mxu0 %v1590
        %1824 = vmatmul.mubr.bf16.gmra.mxu0 %v1226
        %v1825 = vpop.f32.mrf.mxu0
        %v1826 = vadd.f32 %v1663, %v1825
        %v1827 = vpop.f32.mrf.mxu0
        %v1828 = vadd.f32 %v1665, %v1827
        %v1829 = vpop.f32.mrf.mxu0
        %v1830 = vadd.f32 %v1667, %v1829
        %v1831 = vpop.f32.mrf.mxu0
        %v1832 = vadd.f32 %v1669, %v1831
        %1833 = vmatprep.mubr.bf16.mxu0 %v1593
        %1834 = vmatmul.mubr.bf16.gmra.mxu0 %v1230
        %v1835 = vpop.f32.mrf.mxu0
        %v1836 = vadd.f32 %v1673, %v1835
        %v1837 = vpop.f32.mrf.mxu0
        %v1838 = vadd.f32 %v1675, %v1837
        %v1839 = vpop.f32.mrf.mxu0
        %v1840 = vadd.f32 %v1677, %v1839
        %v1841 = vpop.f32.mrf.mxu0
        %v1842 = vadd.f32 %v1679, %v1841
        %1843 = vmatprep.mubr.bf16.mxu0 %v1596
        %1844 = vmatmul.mubr.bf16.gmra.mxu0 %v1234
        %v1845 = vpop.f32.mrf.mxu0
        %v1846 = vadd.f32 %v1683, %v1845
        %v1847 = vpop.f32.mrf.mxu0
        %v1848 = vadd.f32 %v1685, %v1847
        %v1849 = vpop.f32.mrf.mxu0
        %v1850 = vadd.f32 %v1687, %v1849
        %v1851 = vpop.f32.mrf.mxu0
        %v1852 = vadd.f32 %v1689, %v1851
        %1853 = vmatprep.mubr.bf16.mxu0 %v1599
        %1854 = vmatmul.mubr.bf16.gmra.mxu0 %v1238
        %v1855 = vpop.f32.mrf.mxu0
        %v1856 = vadd.f32 %v1693, %v1855
        %v1857 = vpop.f32.mrf.mxu0
        %v1858 = vadd.f32 %v1695, %v1857
        %v1859 = vpop.f32.mrf.mxu0
        %v1860 = vadd.f32 %v1697, %v1859
        %v1861 = vpop.f32.mrf.mxu0
        %v1862 = vadd.f32 %v1699, %v1861
        %1863 = vmatprep.mubr.bf16.mxu0 %v1602
        %1864 = vmatmul.mubr.bf16.gmra.mxu0 %v1242
        %v1865 = vpop.f32.mrf.mxu0
        %v1866 = vadd.f32 %v1703, %v1865
        %v1867 = vpop.f32.mrf.mxu0
        %v1868 = vadd.f32 %v1705, %v1867
        %v1869 = vpop.f32.mrf.mxu0
        %v1870 = vadd.f32 %v1707, %v1869
        %v1871 = vpop.f32.mrf.mxu0
        %v1872 = vadd.f32 %v1709, %v1871
        %1873 = vmatprep.mubr.bf16.mxu0 %v1605
        %1874 = vmatmul.mubr.bf16.gmra.mxu0 %v1246
        %v1875 = vpop.f32.mrf.mxu0
        %v1876 = vadd.f32 %v1713, %v1875
        %v1877 = vpop.f32.mrf.mxu0
        %v1878 = vadd.f32 %v1715, %v1877
        %v1879 = vpop.f32.mrf.mxu0
        %v1880 = vadd.f32 %v1717, %v1879
        %v1881 = vpop.f32.mrf.mxu0
        %v1882 = vadd.f32 %v1719, %v1881
        %1883 = vmatprep.mubr.bf16.mxu0 %v1608
        %1884 = vmatmul.mubr.bf16.gmra.mxu0 %v1250
        %v1885 = vpop.f32.mrf.mxu0
        %v1886 = vadd.f32 %v1723, %v1885
        %v1887 = vpop.f32.mrf.mxu0
        %v1888 = vadd.f32 %v1725, %v1887
        %v1889 = vpop.f32.mrf.mxu0
        %v1890 = vadd.f32 %v1727, %v1889
        %v1891 = vpop.f32.mrf.mxu0
        %v1892 = vadd.f32 %v1729, %v1891
        %1893 = vmatprep.mubr.bf16.mxu0 %v1611
        %1894 = vmatmul.mubr.bf16.gmra.mxu0 %v1254
        %v1895 = vpop.f32.mrf.mxu0
        %v1896 = vadd.f32 %v1733, %v1895
        %v1897 = vpop.f32.mrf.mxu0
        %v1898 = vadd.f32 %v1735, %v1897
        %v1899 = vpop.f32.mrf.mxu0
        %v1900 = vadd.f32 %v1737, %v1899
        %v1901 = vpop.f32.mrf.mxu0
        %v1902 = vadd.f32 %v1739, %v1901
        %1903 = vmatprep.mubr.bf16.mxu0 %v1614
        %1904 = vmatmul.mubr.bf16.gmra.mxu0 %v1258
        %v1905 = vpop.f32.mrf.mxu0
        %v1906 = vadd.f32 %v1743, %v1905
        %v1907 = vpop.f32.mrf.mxu0
        %v1908 = vadd.f32 %v1745, %v1907
        %v1909 = vpop.f32.mrf.mxu0
        %v1910 = vadd.f32 %v1747, %v1909
        %v1911 = vpop.f32.mrf.mxu0
        %v1912 = vadd.f32 %v1749, %v1911
        %1913 = vmatprep.mubr.bf16.mxu0 %v1617
        %1914 = vmatmul.mubr.bf16.gmra.mxu0 %v1262
        %v1915 = vpop.f32.mrf.mxu0
        %v1916 = vadd.f32 %v1753, %v1915
        %v1917 = vpop.f32.mrf.mxu0
        %v1918 = vadd.f32 %v1755, %v1917
        %v1919 = vpop.f32.mrf.mxu0
        %v1920 = vadd.f32 %v1757, %v1919
        %v1921 = vpop.f32.mrf.mxu0
        %v1922 = vadd.f32 %v1759, %v1921
        %1923 = vmatprep.mubr.bf16.mxu0 %v1620
        %1924 = vmatmul.mubr.bf16.gmra.mxu0 %v1266
        %v1925 = vpop.f32.mrf.mxu0
        %v1926 = vadd.f32 %v1763, %v1925
        %v1927 = vpop.f32.mrf.mxu0
        %v1928 = vadd.f32 %v1765, %v1927
        %v1929 = vpop.f32.mrf.mxu0
        %v1930 = vadd.f32 %v1767, %v1929
        %v1931 = vpop.f32.mrf.mxu0
        %v1932 = vadd.f32 %v1769, %v1931
        %1933 = vmatprep.mubr.bf16.mxu0 %v1623
        %1934 = vmatmul.mubr.bf16.gmra.mxu0 %v1270
        %v1935 = vpop.f32.mrf.mxu0
        %v1936 = vadd.f32 %v1773, %v1935
        %v1937 = vpop.f32.mrf.mxu0
        %v1938 = vadd.f32 %v1775, %v1937
        %v1939 = vpop.f32.mrf.mxu0
        %v1940 = vadd.f32 %v1777, %v1939
        %v1941 = vpop.f32.mrf.mxu0
        %v1942 = vadd.f32 %v1779, %v1941
        %1943 = vmatprep.mubr.bf16.mxu0 %v1626
        %1944 = vmatmul.mubr.bf16.gmra.mxu0 %v1274
        %v1945 = vpop.f32.mrf.mxu0
        %v1946 = vadd.f32 %v1783, %v1945
        %v1947 = vpop.f32.mrf.mxu0
        %v1948 = vadd.f32 %v1785, %v1947
        %v1949 = vpop.f32.mrf.mxu0
        %v1950 = vadd.f32 %v1787, %v1949
        %v1951 = vpop.f32.mrf.mxu0
        %v1952 = vadd.f32 %v1789, %v1951
        %1953 = vdwg.mxu0
        %v1954 = vpack.c.bf16 %v1830, %v1826
        %v1955 = vpack.c.bf16 %v1832, %v1828
        %v1956 = vpack.c.bf16 %v1840, %v1836
        %v1957 = vpack.c.bf16 %v1842, %v1838
        %v1958 = vpack.c.bf16 %v1850, %v1846
        %v1959 = vpack.c.bf16 %v1852, %v1848
        %v1960 = vpack.c.bf16 %v1860, %v1856
        %v1961 = vpack.c.bf16 %v1862, %v1858
        %v1962 = vpack.c.bf16 %v1870, %v1866
        %v1963 = vpack.c.bf16 %v1872, %v1868
        %v1964 = vpack.c.bf16 %v1880, %v1876
        %v1965 = vpack.c.bf16 %v1882, %v1878
        %v1966 = vpack.c.bf16 %v1890, %v1886
        %v1967 = vpack.c.bf16 %v1892, %v1888
        %v1968 = vpack.c.bf16 %v1900, %v1896
        %v1969 = vpack.c.bf16 %v1902, %v1898
        %v1970 = vpack.c.bf16 %v1910, %v1906
        %v1971 = vpack.c.bf16 %v1912, %v1908
        %v1972 = vpack.c.bf16 %v1920, %v1916
        %v1973 = vpack.c.bf16 %v1922, %v1918
        %v1974 = vpack.c.bf16 %v1930, %v1926
        %v1975 = vpack.c.bf16 %v1932, %v1928
        %v1976 = vpack.c.bf16 %v1940, %v1936
        %v1977 = vpack.c.bf16 %v1942, %v1938
        %v1978 = vpack.c.bf16 %v1950, %v1946
        %v1979 = vpack.c.bf16 %v1952, %v1948
        %v1980 = vld [vmem:[%s6] sm:$0x3f]
        %v1981 = vld [vmem:[%s4] sm:$0xff]
        %v1982 = vld [vmem:[%s4 + $0x8] sm:$0xff]
        %v1983 = vld [vmem:[%s4 + $0x10] sm:$0xff]
        %v1984 = vld [vmem:[%s4 + $0x18] sm:$0xff]
        %v1985 = vld [vmem:[%s4 + $0x20] sm:$0xff]
        %v1986 = vld [vmem:[%s4 + $0x28] sm:$0xff]
        %v1987 = vld [vmem:[%s4 + $0x30] sm:$0xff]
        %v1988 = vld [vmem:[%s4 + $0x38] sm:$0xff]
        %v1989 = vld [vmem:[%s4 + $0x40] sm:$0xff]
        %v1990 = vld [vmem:[%s4 + $0x48] sm:$0xff]
        %v1991 = vld [vmem:[%s4 + $0x50] sm:$0xff]
        %v2003 = vunpack.c.l.b16 %v1981
        %v2004 = vunpack.c.h.b16 %v1981
        %v2005 = vunpack.c.l.b16 %v1982
        %v2006 = vunpack.c.h.b16 %v1982
        %v2007 = vunpack.c.l.b16 %v1983
        %v2008 = vunpack.c.h.b16 %v1983
        %v2009 = vunpack.c.l.b16 %v1984
        %v2010 = vunpack.c.h.b16 %v1984
        %v2011 = vunpack.c.l.b16 %v1985
        %v2012 = vunpack.c.h.b16 %v1985
        %v2013 = vunpack.c.l.b16 %v1986
        %v2014 = vunpack.c.h.b16 %v1986
        %v2015 = vunpack.c.l.b16 %v1987
        %v2016 = vunpack.c.h.b16 %v1987
        %v2017 = vunpack.c.l.b16 %v1988
        %v2018 = vunpack.c.h.b16 %v1988
        %v2019 = vunpack.c.l.b16 %v1989
        %v2020 = vunpack.c.h.b16 %v1989
        %v2021 = vunpack.c.l.b16 %v1990
        %v2022 = vunpack.c.h.b16 %v1990
        %v2023 = vunpack.c.l.b16 %v1991
        %v2024 = vunpack.c.h.b16 %v1991
        %v2025 = vpack.c.b16 %v2005, %v2003
        %v2026 = vpack.c.b16 %v2006, %v2004
        %v2027 = vpack.c.b16 %v2009, %v2007
        %v2028 = vpack.c.b16 %v2010, %v2008
        %v2029 = vpack.c.b16 %v2013, %v2011
        %v2030 = vpack.c.b16 %v2014, %v2012
        %v2031 = vpack.c.b16 %v2017, %v2015
        %v2032 = vpack.c.b16 %v2018, %v2016
        %v2033 = vpack.c.b16 %v2021, %v2019
        %v2034 = vpack.c.b16 %v2022, %v2020
        %v2035 = vpack.c.b16 %v2023, %v2023
        %v2036 = vpack.c.b16 %v2024, %v2024
        %vm2043 = vcmask 654336
        %v2045 = vsel %vm2043, %v2026, 0
        %v2048 = vsel %vm2043, %v2028, 0
        %v2051 = vsel %vm2043, %v2030, 0
        %v2054 = vsel %vm2043, %v2032, 0
        %v2057 = vsel %vm2043, %v2034, 0
        %v2060 = vsel %vm2043, %v2036, 0
        %2062 = vmatprep.subr.bf16.mxu0 %v1969
        %2063 = vmatpush1.bf16.msra.mxu0 %v1968
        %2064 = vmatprep.subr.bf16.mxu0 %v1967
        %2065 = vmatpush1.bf16.msra.mxu0 %v1966
        %2066 = vmatprep.subr.bf16.mxu0 %v1965
        %2067 = vmatpush1.bf16.msra.mxu0 %v1964
        %2068 = vmatprep.subr.bf16.mxu0 %v1963
        %2069 = vmatpush1.bf16.msra.mxu0 %v1962
        %2070 = vmatprep.subr.bf16.mxu0 %v1961
        %2071 = vmatpush1.bf16.msra.mxu0 %v1960
        %2072 = vmatprep.subr.bf16.mxu0 %v1959
        %2073 = vmatpush1.bf16.msra.mxu0 %v1958
        %2074 = vmatprep.subr.bf16.mxu0 %v1957
        %2075 = vmatpush1.bf16.msra.mxu0 %v1956
        %2076 = vmatprep.subr.bf16.mxu0 %v1955
        %2077 = vmatpush1.bf16.msra.mxu0 %v1954
        %2078 = vmatprep.subr.bf16.mxu0 0
        %2079 = vmatpush2.bf16.msra.mxu0 0
        %2080 = vmatprep.subr.bf16.mxu0 0
        %2081 = vmatpush2.bf16.msra.mxu0 0
        %2082 = vmatprep.subr.bf16.mxu0 0
        %2083 = vmatpush2.bf16.msra.mxu0 0
        %2084 = vmatprep.subr.bf16.mxu0 %v1979
        %2085 = vmatpush2.bf16.msra.mxu0 %v1978
        %2086 = vmatprep.subr.bf16.mxu0 %v1977
        %2087 = vmatpush2.bf16.msra.mxu0 %v1976
        %2088 = vmatprep.subr.bf16.mxu0 %v1975
        %2089 = vmatpush2.bf16.msra.mxu0 %v1974
        %2090 = vmatprep.subr.bf16.mxu0 %v1973
        %2091 = vmatpush2.bf16.msra.mxu0 %v1972
        %2092 = vmatprep.subr.bf16.mxu0 %v1971
        %2093 = vmatpush2.bf16.msra.mxu0 %v1970
        %2094 = vmatprep.mubr.bf16.mxu0 %v2045
        %2095 = vmatmul.mubr.bf16.gmra.mxu0 %v2025
        %v2096 = vpop.f32.mrf.mxu0
        %v2097 = vadd.f32 0.0, %v2096
        %v2098 = vpop.f32.mrf.mxu0
        %v2099 = vadd.f32 0.0, %v2098
        %v2100 = vpop.f32.mrf.mxu0
        %v2101 = vadd.f32 0.0, %v2100
        %v2102 = vpop.f32.mrf.mxu0
        %v2103 = vadd.f32 0.0, %v2102
        %2104 = vmatprep.mubr.bf16.mxu0 %v2048
        %2105 = vmatmul.mubr.bf16.gmra.mxu0 %v2027
        %v2106 = vpop.f32.mrf.mxu0
        %v2107 = vadd.f32 0.0, %v2106
        %v2108 = vpop.f32.mrf.mxu0
        %v2109 = vadd.f32 0.0, %v2108
        %v2110 = vpop.f32.mrf.mxu0
        %v2111 = vadd.f32 0.0, %v2110
        %v2112 = vpop.f32.mrf.mxu0
        %v2113 = vadd.f32 0.0, %v2112
        %2114 = vmatprep.mubr.bf16.mxu0 %v2051
        %2115 = vmatmul.mubr.bf16.gmra.mxu0 %v2029
        %v2116 = vpop.f32.mrf.mxu0
        %v2117 = vadd.f32 0.0, %v2116
        %v2118 = vpop.f32.mrf.mxu0
        %v2119 = vadd.f32 0.0, %v2118
        %v2120 = vpop.f32.mrf.mxu0
        %v2121 = vadd.f32 0.0, %v2120
        %v2122 = vpop.f32.mrf.mxu0
        %v2123 = vadd.f32 0.0, %v2122
        %2124 = vmatprep.mubr.bf16.mxu0 %v2054
        %2125 = vmatmul.mubr.bf16.gmra.mxu0 %v2031
        %v2126 = vpop.f32.mrf.mxu0
        %v2127 = vadd.f32 0.0, %v2126
        %v2128 = vpop.f32.mrf.mxu0
        %v2129 = vadd.f32 0.0, %v2128
        %v2130 = vpop.f32.mrf.mxu0
        %v2131 = vadd.f32 0.0, %v2130
        %v2132 = vpop.f32.mrf.mxu0
        %v2133 = vadd.f32 0.0, %v2132
        %2134 = vmatprep.mubr.bf16.mxu0 %v2057
        %2135 = vmatmul.mubr.bf16.gmra.mxu0 %v2033
        %v2136 = vpop.f32.mrf.mxu0
        %v2137 = vadd.f32 0.0, %v2136
        %v2138 = vpop.f32.mrf.mxu0
        %v2139 = vadd.f32 0.0, %v2138
        %v2140 = vpop.f32.mrf.mxu0
        %v2141 = vadd.f32 0.0, %v2140
        %v2142 = vpop.f32.mrf.mxu0
        %v2143 = vadd.f32 0.0, %v2142
        %2144 = vmatprep.mubr.bf16.mxu0 %v2060
        %2145 = vmatmul.mubr.bf16.gmra.mxu0 %v2035
        %v2146 = vpop.f32.mrf.mxu0
        %v2147 = vadd.f32 0.0, %v2146
        %v2148 = vpop.f32.mrf.mxu0
        %v2149 = vadd.f32 0.0, %v2148
        %v2150 = vpop.f32.mrf.mxu0
        %v2151 = vpop.f32.mrf.mxu0
        %2152 = vdwg.mxu0
        %v2153 = vpack.c.bf16 %v2101, %v2097
        %v2154 = vpack.c.bf16 %v2103, %v2099
        %v2155 = vpack.c.bf16 %v2111, %v2107
        %v2156 = vpack.c.bf16 %v2113, %v2109
        %v2157 = vpack.c.bf16 %v2121, %v2117
        %v2158 = vpack.c.bf16 %v2123, %v2119
        %v2159 = vpack.c.bf16 %v2131, %v2127
        %v2160 = vpack.c.bf16 %v2133, %v2129
        %v2161 = vpack.c.bf16 %v2141, %v2137
        %v2162 = vpack.c.bf16 %v2143, %v2139
        %v2163 = vpack.c.bf16 %v2147, %v2147
        %v2164 = vpack.c.bf16 %v2149, %v2149
        %v2165 = vld [vmem:[%s5] sm:$0xff]
        %v2166 = vld [vmem:[%s5 + $0x8] sm:$0xff]
        %v2167 = vld [vmem:[%s5 + $0x10] sm:$0xff]
        %v2168 = vld [vmem:[%s5 + $0x18] sm:$0xff]
        %v2169 = vld [vmem:[%s5 + $0x20] sm:$0xff]
        %v2170 = vld [vmem:[%s5 + $0x28] sm:$0xff]
        %v2171 = vld [vmem:[%s5 + $0x30] sm:$0xff]
        %v2172 = vld [vmem:[%s5 + $0x38] sm:$0xff]
        %v2173 = vld [vmem:[%s5 + $0x40] sm:$0xff]
        %v2174 = vld [vmem:[%s5 + $0x48] sm:$0xff]
        %v2175 = vld [vmem:[%s5 + $0x50] sm:$0xff]
        %v2176 = vld [vmem:[%s5 + $0x58] sm:$0xff]
        %v2177 = vld [vmem:[%s5 + $0x60] sm:$0xff]
        %v2178 = vld [vmem:[%s5 + $0x68] sm:$0xff]
        %v2179 = vld [vmem:[%s5 + $0x70] sm:$0xff]
        %v2180 = vld [vmem:[%s5 + $0x78] sm:$0xff]
        %v2181 = vld [vmem:[%s5 + $0x80] sm:$0xff]
        %v2182 = vld [vmem:[%s5 + $0x88] sm:$0xff]
        %v2183 = vld [vmem:[%s5 + $0x90] sm:$0xff]
        %v2184 = vld [vmem:[%s5 + $0x98] sm:$0xff]
        %v2185 = vld [vmem:[%s5 + $0xa0] sm:$0xff]
        %v2186 = vld [vmem:[%s5 + $0xa8] sm:$0xff]
        %v2187 = vld [vmem:[%s5 + $0xb0] sm:$0xff]
        %v2188 = vld [vmem:[%s5 + $0xb8] sm:$0xff]
        %v2189 = vld [vmem:[%s5 + $0xc0] sm:$0xff]
        %v2190 = vld [vmem:[%s5 + $0xc8] sm:$0xff]
        %v2191 = vld [vmem:[%s5 + $0xd0] sm:$0xff]
        %v2192 = vld [vmem:[%s5 + $0xd8] sm:$0xff]
        %v2193 = vld [vmem:[%s5 + $0xe0] sm:$0xff]
        %v2194 = vld [vmem:[%s5 + $0xe8] sm:$0xff]
        %v2195 = vld [vmem:[%s5 + $0xf0] sm:$0xff]
        %v2196 = vld [vmem:[%s5 + $0xf8] sm:$0xff]
        %v2197 = vld [vmem:[%s5 + $0x100] sm:$0xff]
        %v2198 = vld [vmem:[%s5 + $0x108] sm:$0xff]
        %v2199 = vld [vmem:[%s5 + $0x110] sm:$0xff]
        %v2200 = vld [vmem:[%s5 + $0x118] sm:$0xff]
        %v2201 = vld [vmem:[%s5 + $0x120] sm:$0xff]
        %v2202 = vld [vmem:[%s5 + $0x128] sm:$0xff]
        %v2203 = vld [vmem:[%s5 + $0x130] sm:$0xff]
        %v2204 = vld [vmem:[%s5 + $0x138] sm:$0xff]
        %v2205 = vld [vmem:[%s5 + $0x140] sm:$0xff]
        %v2206 = vld [vmem:[%s5 + $0x148] sm:$0xff]
        %v2207 = vld [vmem:[%s5 + $0x150] sm:$0xff]
        %v2208 = vld [vmem:[%s5 + $0x158] sm:$0xff]
        %v2209 = vld [vmem:[%s5 + $0x160] sm:$0xff]
        %v2210 = vld [vmem:[%s5 + $0x168] sm:$0xff]
        %v2211 = vld [vmem:[%s5 + $0x170] sm:$0xff]
        %v2212 = vld [vmem:[%s5 + $0x178] sm:$0xff]
        %v2213 = vld [vmem:[%s5 + $0x180] sm:$0xff]
        %v2214 = vld [vmem:[%s5 + $0x188] sm:$0xff]
        %v2215 = vld [vmem:[%s5 + $0x190] sm:$0xff]
        %v2216 = vld [vmem:[%s5 + $0x198] sm:$0xff]
        %v2217 = vld [vmem:[%s5 + $0x1a0] sm:$0xff]
        %v2218 = vld [vmem:[%s5 + $0x1a8] sm:$0xff]
        %v2219 = vld [vmem:[%s5 + $0x1b0] sm:$0xff]
        %v2220 = vld [vmem:[%s5 + $0x1b8] sm:$0xff]
        %v2221 = vld [vmem:[%s5 + $0x1c0] sm:$0xff]
        %v2222 = vld [vmem:[%s5 + $0x1c8] sm:$0xff]
        %v2223 = vld [vmem:[%s5 + $0x1d0] sm:$0xff]
        %v2224 = vld [vmem:[%s5 + $0x1d8] sm:$0xff]
        %v2225 = vld [vmem:[%s5 + $0x1e0] sm:$0xff]
        %v2226 = vld [vmem:[%s5 + $0x1e8] sm:$0xff]
        %v2227 = vld [vmem:[%s5 + $0x1f0] sm:$0xff]
        %v2228 = vld [vmem:[%s5 + $0x1f8] sm:$0xff]
        %v2229 = vld [vmem:[%s5 + $0x200] sm:$0xff]
        %v2230 = vld [vmem:[%s5 + $0x208] sm:$0xff]
        %v2231 = vld [vmem:[%s5 + $0x210] sm:$0xff]
        %v2232 = vld [vmem:[%s5 + $0x218] sm:$0xff]
        %v2233 = vld [vmem:[%s5 + $0x220] sm:$0xff]
        %v2234 = vld [vmem:[%s5 + $0x228] sm:$0xff]
        %v2235 = vld [vmem:[%s5 + $0x230] sm:$0xff]
        %v2236 = vld [vmem:[%s5 + $0x238] sm:$0xff]
        %v2237 = vld [vmem:[%s5 + $0x240] sm:$0xff]
        %v2238 = vld [vmem:[%s5 + $0x248] sm:$0xff]
        %v2239 = vld [vmem:[%s5 + $0x250] sm:$0xff]
        %v2240 = vld [vmem:[%s5 + $0x258] sm:$0xff]
        %v2241 = vld [vmem:[%s5 + $0x260] sm:$0xff]
        %v2242 = vld [vmem:[%s5 + $0x268] sm:$0xff]
        %v2321 = vunpack.c.l.b16 %v2165
        %v2322 = vunpack.c.h.b16 %v2165
        %v2323 = vunpack.c.l.b16 %v2166
        %v2324 = vunpack.c.h.b16 %v2166
        %v2325 = vunpack.c.l.b16 %v2167
        %v2326 = vunpack.c.h.b16 %v2167
        %v2327 = vunpack.c.l.b16 %v2168
        %v2328 = vunpack.c.h.b16 %v2168
        %v2329 = vunpack.c.l.b16 %v2169
        %v2330 = vunpack.c.h.b16 %v2169
        %v2331 = vunpack.c.l.b16 %v2170
        %v2332 = vunpack.c.h.b16 %v2170
        %v2333 = vunpack.c.l.b16 %v2171
        %v2334 = vunpack.c.h.b16 %v2171
        %v2335 = vunpack.c.l.b16 %v2172
        %v2336 = vunpack.c.h.b16 %v2172
        %v2337 = vunpack.c.l.b16 %v2173
        %v2338 = vunpack.c.h.b16 %v2173
        %v2339 = vunpack.c.l.b16 %v2174
        %v2340 = vunpack.c.h.b16 %v2174
        %v2341 = vunpack.c.l.b16 %v2175
        %v2342 = vunpack.c.h.b16 %v2175
        %v2343 = vunpack.c.l.b16 %v2176
        %v2344 = vunpack.c.h.b16 %v2176
        %v2345 = vunpack.c.l.b16 %v2177
        %v2346 = vunpack.c.h.b16 %v2177
        %v2347 = vunpack.c.l.b16 %v2178
        %v2348 = vunpack.c.h.b16 %v2178
        %v2349 = vunpack.c.l.b16 %v2179
        %v2350 = vunpack.c.h.b16 %v2179
        %v2351 = vunpack.c.l.b16 %v2180
        %v2352 = vunpack.c.h.b16 %v2180
        %v2353 = vunpack.c.l.b16 %v2181
        %v2354 = vunpack.c.h.b16 %v2181
        %v2355 = vunpack.c.l.b16 %v2182
        %v2356 = vunpack.c.h.b16 %v2182
        %v2357 = vunpack.c.l.b16 %v2183
        %v2358 = vunpack.c.h.b16 %v2183
        %v2359 = vunpack.c.l.b16 %v2184
        %v2360 = vunpack.c.h.b16 %v2184
        %v2361 = vunpack.c.l.b16 %v2185
        %v2362 = vunpack.c.h.b16 %v2185
        %v2363 = vunpack.c.l.b16 %v2186
        %v2364 = vunpack.c.h.b16 %v2186
        %v2365 = vunpack.c.l.b16 %v2187
        %v2366 = vunpack.c.h.b16 %v2187
        %v2367 = vunpack.c.l.b16 %v2188
        %v2368 = vunpack.c.h.b16 %v2188
        %v2369 = vunpack.c.l.b16 %v2189
        %v2370 = vunpack.c.h.b16 %v2189
        %v2371 = vunpack.c.l.b16 %v2190
        %v2372 = vunpack.c.h.b16 %v2190
        %v2373 = vunpack.c.l.b16 %v2191
        %v2374 = vunpack.c.h.b16 %v2191
        %v2375 = vunpack.c.l.b16 %v2192
        %v2376 = vunpack.c.h.b16 %v2192
        %v2377 = vunpack.c.l.b16 %v2193
        %v2378 = vunpack.c.h.b16 %v2193
        %v2379 = vunpack.c.l.b16 %v2194
        %v2380 = vunpack.c.h.b16 %v2194
        %v2381 = vunpack.c.l.b16 %v2195
        %v2382 = vunpack.c.h.b16 %v2195
        %v2383 = vunpack.c.l.b16 %v2196
        %v2384 = vunpack.c.h.b16 %v2196
        %v2385 = vunpack.c.l.b16 %v2197
        %v2386 = vunpack.c.h.b16 %v2197
        %v2387 = vunpack.c.l.b16 %v2198
        %v2388 = vunpack.c.h.b16 %v2198
        %v2389 = vunpack.c.l.b16 %v2199
        %v2390 = vunpack.c.h.b16 %v2199
        %v2391 = vunpack.c.l.b16 %v2200
        %v2392 = vunpack.c.h.b16 %v2200
        %v2393 = vunpack.c.l.b16 %v2201
        %v2394 = vunpack.c.h.b16 %v2201
        %v2395 = vunpack.c.l.b16 %v2202
        %v2396 = vunpack.c.h.b16 %v2202
        %v2397 = vunpack.c.l.b16 %v2203
        %v2398 = vunpack.c.h.b16 %v2203
        %v2399 = vunpack.c.l.b16 %v2204
        %v2400 = vunpack.c.h.b16 %v2204
        %v2401 = vunpack.c.l.b16 %v2205
        %v2402 = vunpack.c.h.b16 %v2205
        %v2403 = vunpack.c.l.b16 %v2206
        %v2404 = vunpack.c.h.b16 %v2206
        %v2405 = vunpack.c.l.b16 %v2207
        %v2406 = vunpack.c.h.b16 %v2207
        %v2407 = vunpack.c.l.b16 %v2208
        %v2408 = vunpack.c.h.b16 %v2208
        %v2409 = vunpack.c.l.b16 %v2209
        %v2410 = vunpack.c.h.b16 %v2209
        %v2411 = vunpack.c.l.b16 %v2210
        %v2412 = vunpack.c.h.b16 %v2210
        %v2413 = vunpack.c.l.b16 %v2211
        %v2414 = vunpack.c.h.b16 %v2211
        %v2415 = vunpack.c.l.b16 %v2212
        %v2416 = vunpack.c.h.b16 %v2212
        %v2417 = vunpack.c.l.b16 %v2213
        %v2418 = vunpack.c.h.b16 %v2213
        %v2419 = vunpack.c.l.b16 %v2214
        %v2420 = vunpack.c.h.b16 %v2214
        %v2421 = vunpack.c.l.b16 %v2215
        %v2422 = vunpack.c.h.b16 %v2215
        %v2423 = vunpack.c.l.b16 %v2216
        %v2424 = vunpack.c.h.b16 %v2216
        %v2425 = vunpack.c.l.b16 %v2217
        %v2426 = vunpack.c.h.b16 %v2217
        %v2427 = vunpack.c.l.b16 %v2218
        %v2428 = vunpack.c.h.b16 %v2218
        %v2429 = vunpack.c.l.b16 %v2219
        %v2430 = vunpack.c.h.b16 %v2219
        %v2431 = vunpack.c.l.b16 %v2220
        %v2432 = vunpack.c.h.b16 %v2220
        %v2433 = vunpack.c.l.b16 %v2221
        %v2434 = vunpack.c.h.b16 %v2221
        %v2435 = vunpack.c.l.b16 %v2222
        %v2436 = vunpack.c.h.b16 %v2222
        %v2437 = vunpack.c.l.b16 %v2223
        %v2438 = vunpack.c.h.b16 %v2223
        %v2439 = vunpack.c.l.b16 %v2224
        %v2440 = vunpack.c.h.b16 %v2224
        %v2441 = vunpack.c.l.b16 %v2225
        %v2442 = vunpack.c.h.b16 %v2225
        %v2443 = vunpack.c.l.b16 %v2226
        %v2444 = vunpack.c.h.b16 %v2226
        %v2445 = vunpack.c.l.b16 %v2227
        %v2446 = vunpack.c.h.b16 %v2227
        %v2447 = vunpack.c.l.b16 %v2228
        %v2448 = vunpack.c.h.b16 %v2228
        %v2449 = vunpack.c.l.b16 %v2229
        %v2450 = vunpack.c.h.b16 %v2229
        %v2451 = vunpack.c.l.b16 %v2230
        %v2452 = vunpack.c.h.b16 %v2230
        %v2453 = vunpack.c.l.b16 %v2231
        %v2454 = vunpack.c.h.b16 %v2231
        %v2455 = vunpack.c.l.b16 %v2232
        %v2456 = vunpack.c.h.b16 %v2232
        %v2457 = vunpack.c.l.b16 %v2233
        %v2458 = vunpack.c.h.b16 %v2233
        %v2459 = vunpack.c.l.b16 %v2234
        %v2460 = vunpack.c.h.b16 %v2234
        %v2461 = vunpack.c.l.b16 %v2235
        %v2462 = vunpack.c.h.b16 %v2235
        %v2463 = vunpack.c.l.b16 %v2236
        %v2464 = vunpack.c.h.b16 %v2236
        %v2465 = vunpack.c.l.b16 %v2237
        %v2466 = vunpack.c.h.b16 %v2237
        %v2467 = vunpack.c.l.b16 %v2238
        %v2468 = vunpack.c.h.b16 %v2238
        %v2469 = vunpack.c.l.b16 %v2239
        %v2470 = vunpack.c.h.b16 %v2239
        %v2471 = vunpack.c.l.b16 %v2240
        %v2472 = vunpack.c.h.b16 %v2240
        %v2473 = vunpack.c.l.b16 %v2241
        %v2474 = vunpack.c.h.b16 %v2241
        %v2475 = vunpack.c.l.b16 %v2242
        %v2476 = vunpack.c.h.b16 %v2242
        %v2477 = vpack.c.b16 %v2327, %v2321
        %v2478 = vpack.c.b16 %v2328, %v2322
        %v2479 = vpack.c.b16 %v2329, %v2323
        %v2480 = vpack.c.b16 %v2330, %v2324
        %v2481 = vpack.c.b16 %v2331, %v2325
        %v2482 = vpack.c.b16 %v2332, %v2326
        %v2483 = vpack.c.b16 %v2339, %v2333
        %v2484 = vpack.c.b16 %v2340, %v2334
        %v2485 = vpack.c.b16 %v2341, %v2335
        %v2486 = vpack.c.b16 %v2342, %v2336
        %v2487 = vpack.c.b16 %v2343, %v2337
        %v2488 = vpack.c.b16 %v2344, %v2338
        %v2489 = vpack.c.b16 %v2351, %v2345
        %v2490 = vpack.c.b16 %v2352, %v2346
        %v2491 = vpack.c.b16 %v2353, %v2347
        %v2492 = vpack.c.b16 %v2354, %v2348
        %v2493 = vpack.c.b16 %v2355, %v2349
        %v2494 = vpack.c.b16 %v2356, %v2350
        %v2495 = vpack.c.b16 %v2363, %v2357
        %v2496 = vpack.c.b16 %v2364, %v2358
        %v2497 = vpack.c.b16 %v2365, %v2359
        %v2498 = vpack.c.b16 %v2366, %v2360
        %v2499 = vpack.c.b16 %v2367, %v2361
        %v2500 = vpack.c.b16 %v2368, %v2362
        %v2501 = vpack.c.b16 %v2375, %v2369
        %v2502 = vpack.c.b16 %v2376, %v2370
        %v2503 = vpack.c.b16 %v2377, %v2371
        %v2504 = vpack.c.b16 %v2378, %v2372
        %v2505 = vpack.c.b16 %v2379, %v2373
        %v2506 = vpack.c.b16 %v2380, %v2374
        %v2507 = vpack.c.b16 %v2387, %v2381
        %v2508 = vpack.c.b16 %v2388, %v2382
        %v2509 = vpack.c.b16 %v2389, %v2383
        %v2510 = vpack.c.b16 %v2390, %v2384
        %v2511 = vpack.c.b16 %v2391, %v2385
        %v2512 = vpack.c.b16 %v2392, %v2386
        %v2513 = vpack.c.b16 %v2399, %v2393
        %v2514 = vpack.c.b16 %v2400, %v2394
        %v2515 = vpack.c.b16 %v2401, %v2395
        %v2516 = vpack.c.b16 %v2402, %v2396
        %v2517 = vpack.c.b16 %v2403, %v2397
        %v2518 = vpack.c.b16 %v2404, %v2398
        %v2519 = vpack.c.b16 %v2411, %v2405
        %v2520 = vpack.c.b16 %v2412, %v2406
        %v2521 = vpack.c.b16 %v2413, %v2407
        %v2522 = vpack.c.b16 %v2414, %v2408
        %v2523 = vpack.c.b16 %v2415, %v2409
        %v2524 = vpack.c.b16 %v2416, %v2410
        %v2525 = vpack.c.b16 %v2423, %v2417
        %v2526 = vpack.c.b16 %v2424, %v2418
        %v2527 = vpack.c.b16 %v2425, %v2419
        %v2528 = vpack.c.b16 %v2426, %v2420
        %v2529 = vpack.c.b16 %v2427, %v2421
        %v2530 = vpack.c.b16 %v2428, %v2422
        %v2531 = vpack.c.b16 %v2435, %v2429
        %v2532 = vpack.c.b16 %v2436, %v2430
        %v2533 = vpack.c.b16 %v2437, %v2431
        %v2534 = vpack.c.b16 %v2438, %v2432
        %v2535 = vpack.c.b16 %v2439, %v2433
        %v2536 = vpack.c.b16 %v2440, %v2434
        %v2537 = vpack.c.b16 %v2447, %v2441
        %v2538 = vpack.c.b16 %v2448, %v2442
        %v2539 = vpack.c.b16 %v2449, %v2443
        %v2540 = vpack.c.b16 %v2450, %v2444
        %v2541 = vpack.c.b16 %v2451, %v2445
        %v2542 = vpack.c.b16 %v2452, %v2446
        %v2543 = vpack.c.b16 %v2459, %v2453
        %v2544 = vpack.c.b16 %v2460, %v2454
        %v2545 = vpack.c.b16 %v2461, %v2455
        %v2546 = vpack.c.b16 %v2462, %v2456
        %v2547 = vpack.c.b16 %v2463, %v2457
        %v2548 = vpack.c.b16 %v2464, %v2458
        %v2549 = vpack.c.b16 %v2471, %v2465
        %v2550 = vpack.c.b16 %v2472, %v2466
        %v2551 = vpack.c.b16 %v2473, %v2467
        %v2552 = vpack.c.b16 %v2474, %v2468
        %v2553 = vpack.c.b16 %v2475, %v2469
        %v2554 = vpack.c.b16 %v2476, %v2470
        %v2634 = vsel %vm2043, %v2154, 0
        %v2637 = vsel %vm2043, %v2156, 0
        %v2640 = vsel %vm2043, %v2158, 0
        %v2643 = vsel %vm2043, %v2160, 0
        %v2646 = vsel %vm2043, %v2162, 0
        %v2649 = vsel %vm2043, %v2164, 0
        %2651 = vmatprep.subr.bf16.mxu0 %v2520
        %2652 = vmatpush1.bf16.msra.mxu0 %v2519
        %2653 = vmatprep.subr.bf16.mxu0 %v2514
        %2654 = vmatpush1.bf16.msra.mxu0 %v2513
        %2655 = vmatprep.subr.bf16.mxu0 %v2508
        %2656 = vmatpush1.bf16.msra.mxu0 %v2507
        %2657 = vmatprep.subr.bf16.mxu0 %v2502
        %2658 = vmatpush1.bf16.msra.mxu0 %v2501
        %2659 = vmatprep.subr.bf16.mxu0 %v2496
        %2660 = vmatpush1.bf16.msra.mxu0 %v2495
        %2661 = vmatprep.subr.bf16.mxu0 %v2490
        %2662 = vmatpush1.bf16.msra.mxu0 %v2489
        %2663 = vmatprep.subr.bf16.mxu0 %v2484
        %2664 = vmatpush1.bf16.msra.mxu0 %v2483
        %2665 = vmatprep.subr.bf16.mxu0 %v2478
        %2666 = vmatpush1.bf16.msra.mxu0 %v2477
        %2667 = vmatprep.subr.bf16.mxu0 0
        %2668 = vmatpush2.bf16.msra.mxu0 0
        %2669 = vmatprep.subr.bf16.mxu0 0
        %2670 = vmatpush2.bf16.msra.mxu0 0
        %2671 = vmatprep.subr.bf16.mxu0 0
        %2672 = vmatpush2.bf16.msra.mxu0 0
        %2673 = vmatprep.subr.bf16.mxu0 %v2550
        %2674 = vmatpush2.bf16.msra.mxu0 %v2549
        %2675 = vmatprep.subr.bf16.mxu0 %v2544
        %2676 = vmatpush2.bf16.msra.mxu0 %v2543
        %2677 = vmatprep.subr.bf16.mxu0 %v2538
        %2678 = vmatpush2.bf16.msra.mxu0 %v2537
        %2679 = vmatprep.subr.bf16.mxu0 %v2532
        %2680 = vmatpush2.bf16.msra.mxu0 %v2531
        %2681 = vmatprep.subr.bf16.mxu0 %v2526
        %2682 = vmatpush2.bf16.msra.mxu0 %v2525
        %2683 = vmatprep.mubr.bf16.mxu0 %v2634
        %2684 = vmatmul.mubr.bf16.gmra.mxu0 %v2153
        %v2685 = vpop.f32.mrf.mxu0
        %v2686 = vadd.f32 0.0, %v2685
        %v2687 = vpop.f32.mrf.mxu0
        %v2688 = vadd.f32 0.0, %v2687
        %v2689 = vpop.f32.mrf.mxu0
        %v2690 = vadd.f32 0.0, %v2689
        %v2691 = vpop.f32.mrf.mxu0
        %v2692 = vadd.f32 0.0, %v2691
        %2693 = vmatprep.mubr.bf16.mxu0 %v2637
        %2694 = vmatmul.mubr.bf16.gmra.mxu0 %v2155
        %v2695 = vpop.f32.mrf.mxu0
        %v2696 = vadd.f32 0.0, %v2695
        %v2697 = vpop.f32.mrf.mxu0
        %v2698 = vadd.f32 0.0, %v2697
        %v2699 = vpop.f32.mrf.mxu0
        %v2700 = vadd.f32 0.0, %v2699
        %v2701 = vpop.f32.mrf.mxu0
        %v2702 = vadd.f32 0.0, %v2701
        %2703 = vmatprep.mubr.bf16.mxu0 %v2640
        %2704 = vmatmul.mubr.bf16.gmra.mxu0 %v2157
        %v2705 = vpop.f32.mrf.mxu0
        %v2706 = vadd.f32 0.0, %v2705
        %v2707 = vpop.f32.mrf.mxu0
        %v2708 = vadd.f32 0.0, %v2707
        %v2709 = vpop.f32.mrf.mxu0
        %v2710 = vadd.f32 0.0, %v2709
        %v2711 = vpop.f32.mrf.mxu0
        %v2712 = vadd.f32 0.0, %v2711
        %2713 = vmatprep.mubr.bf16.mxu0 %v2643
        %2714 = vmatmul.mubr.bf16.gmra.mxu0 %v2159
        %v2715 = vpop.f32.mrf.mxu0
        %v2716 = vadd.f32 0.0, %v2715
        %v2717 = vpop.f32.mrf.mxu0
        %v2718 = vadd.f32 0.0, %v2717
        %v2719 = vpop.f32.mrf.mxu0
        %v2720 = vadd.f32 0.0, %v2719
        %v2721 = vpop.f32.mrf.mxu0
        %v2722 = vadd.f32 0.0, %v2721
        %2723 = vmatprep.mubr.bf16.mxu0 %v2646
        %2724 = vmatmul.mubr.bf16.gmra.mxu0 %v2161
        %v2725 = vpop.f32.mrf.mxu0
        %v2726 = vadd.f32 0.0, %v2725
        %v2727 = vpop.f32.mrf.mxu0
        %v2728 = vadd.f32 0.0, %v2727
        %v2729 = vpop.f32.mrf.mxu0
        %v2730 = vadd.f32 0.0, %v2729
        %v2731 = vpop.f32.mrf.mxu0
        %v2732 = vadd.f32 0.0, %v2731
        %2733 = vmatprep.mubr.bf16.mxu0 %v2649
        %2734 = vmatmul.mubr.bf16.gmra.mxu0 %v2163
        %v2735 = vpop.f32.mrf.mxu0
        %v2736 = vadd.f32 0.0, %v2735
        %v2737 = vpop.f32.mrf.mxu0
        %v2738 = vadd.f32 0.0, %v2737
        %v2739 = vpop.f32.mrf.mxu0
        %v2740 = vpop.f32.mrf.mxu0
        %2741 = vdwg.mxu0
        %2742 = vmatprep.subr.bf16.mxu0 %v2522
        %2743 = vmatpush1.bf16.msra.mxu0 %v2521
        %2744 = vmatprep.subr.bf16.mxu0 %v2516
        %2745 = vmatpush1.bf16.msra.mxu0 %v2515
        %2746 = vmatprep.subr.bf16.mxu0 %v2510
        %2747 = vmatpush1.bf16.msra.mxu0 %v2509
        %2748 = vmatprep.subr.bf16.mxu0 %v2504
        %2749 = vmatpush1.bf16.msra.mxu0 %v2503
        %2750 = vmatprep.subr.bf16.mxu0 %v2498
        %2751 = vmatpush1.bf16.msra.mxu0 %v2497
        %2752 = vmatprep.subr.bf16.mxu0 %v2492
        %2753 = vmatpush1.bf16.msra.mxu0 %v2491
        %2754 = vmatprep.subr.bf16.mxu0 %v2486
        %2755 = vmatpush1.bf16.msra.mxu0 %v2485
        %2756 = vmatprep.subr.bf16.mxu0 %v2480
        %2757 = vmatpush1.bf16.msra.mxu0 %v2479
        %2758 = vmatprep.subr.bf16.mxu0 0
        %2759 = vmatpush2.bf16.msra.mxu0 0
        %2760 = vmatprep.subr.bf16.mxu0 0
        %2761 = vmatpush2.bf16.msra.mxu0 0
        %2762 = vmatprep.subr.bf16.mxu0 0
        %2763 = vmatpush2.bf16.msra.mxu0 0
        %2764 = vmatprep.subr.bf16.mxu0 %v2552
        %2765 = vmatpush2.bf16.msra.mxu0 %v2551
        %2766 = vmatprep.subr.bf16.mxu0 %v2546
        %2767 = vmatpush2.bf16.msra.mxu0 %v2545
        %2768 = vmatprep.subr.bf16.mxu0 %v2540
        %2769 = vmatpush2.bf16.msra.mxu0 %v2539
        %2770 = vmatprep.subr.bf16.mxu0 %v2534
        %2771 = vmatpush2.bf16.msra.mxu0 %v2533
        %2772 = vmatprep.subr.bf16.mxu0 %v2528
        %2773 = vmatpush2.bf16.msra.mxu0 %v2527
        %2774 = vmatprep.mubr.bf16.mxu0 %v2634
        %2775 = vmatmul.mubr.bf16.gmra.mxu0 %v2153
        %v2776 = vpop.f32.mrf.mxu0
        %v2777 = vadd.f32 0.0, %v2776
        %v2778 = vpop.f32.mrf.mxu0
        %v2779 = vadd.f32 0.0, %v2778
        %v2780 = vpop.f32.mrf.mxu0
        %v2781 = vadd.f32 0.0, %v2780
        %v2782 = vpop.f32.mrf.mxu0
        %v2783 = vadd.f32 0.0, %v2782
        %2784 = vmatprep.mubr.bf16.mxu0 %v2637
        %2785 = vmatmul.mubr.bf16.gmra.mxu0 %v2155
        %v2786 = vpop.f32.mrf.mxu0
        %v2787 = vadd.f32 0.0, %v2786
        %v2788 = vpop.f32.mrf.mxu0
        %v2789 = vadd.f32 0.0, %v2788
        %v2790 = vpop.f32.mrf.mxu0
        %v2791 = vadd.f32 0.0, %v2790
        %v2792 = vpop.f32.mrf.mxu0
        %v2793 = vadd.f32 0.0, %v2792
        %2794 = vmatprep.mubr.bf16.mxu0 %v2640
        %2795 = vmatmul.mubr.bf16.gmra.mxu0 %v2157
        %v2796 = vpop.f32.mrf.mxu0
        %v2797 = vadd.f32 0.0, %v2796
        %v2798 = vpop.f32.mrf.mxu0
        %v2799 = vadd.f32 0.0, %v2798
        %v2800 = vpop.f32.mrf.mxu0
        %v2801 = vadd.f32 0.0, %v2800
        %v2802 = vpop.f32.mrf.mxu0
        %v2803 = vadd.f32 0.0, %v2802
        %2804 = vmatprep.mubr.bf16.mxu0 %v2643
        %2805 = vmatmul.mubr.bf16.gmra.mxu0 %v2159
        %v2806 = vpop.f32.mrf.mxu0
        %v2807 = vadd.f32 0.0, %v2806
        %v2808 = vpop.f32.mrf.mxu0
        %v2809 = vadd.f32 0.0, %v2808
        %v2810 = vpop.f32.mrf.mxu0
        %v2811 = vadd.f32 0.0, %v2810
        %v2812 = vpop.f32.mrf.mxu0
        %v2813 = vadd.f32 0.0, %v2812
        %2814 = vmatprep.mubr.bf16.mxu0 %v2646
        %2815 = vmatmul.mubr.bf16.gmra.mxu0 %v2161
        %v2816 = vpop.f32.mrf.mxu0
        %v2817 = vadd.f32 0.0, %v2816
        %v2818 = vpop.f32.mrf.mxu0
        %v2819 = vadd.f32 0.0, %v2818
        %v2820 = vpop.f32.mrf.mxu0
        %v2821 = vadd.f32 0.0, %v2820
        %v2822 = vpop.f32.mrf.mxu0
        %v2823 = vadd.f32 0.0, %v2822
        %2824 = vmatprep.mubr.bf16.mxu0 %v2649
        %2825 = vmatmul.mubr.bf16.gmra.mxu0 %v2163
        %v2826 = vpop.f32.mrf.mxu0
        %v2827 = vadd.f32 0.0, %v2826
        %v2828 = vpop.f32.mrf.mxu0
        %v2829 = vadd.f32 0.0, %v2828
        %v2830 = vpop.f32.mrf.mxu0
        %v2831 = vpop.f32.mrf.mxu0
        %2832 = vdwg.mxu0
        %2833 = vmatprep.subr.bf16.mxu0 %v2524
        %2834 = vmatpush1.bf16.msra.mxu0 %v2523
        %2835 = vmatprep.subr.bf16.mxu0 %v2518
        %2836 = vmatpush1.bf16.msra.mxu0 %v2517
        %2837 = vmatprep.subr.bf16.mxu0 %v2512
        %2838 = vmatpush1.bf16.msra.mxu0 %v2511
        %2839 = vmatprep.subr.bf16.mxu0 %v2506
        %2840 = vmatpush1.bf16.msra.mxu0 %v2505
        %2841 = vmatprep.subr.bf16.mxu0 %v2500
        %2842 = vmatpush1.bf16.msra.mxu0 %v2499
        %2843 = vmatprep.subr.bf16.mxu0 %v2494
        %2844 = vmatpush1.bf16.msra.mxu0 %v2493
        %2845 = vmatprep.subr.bf16.mxu0 %v2488
        %2846 = vmatpush1.bf16.msra.mxu0 %v2487
        %2847 = vmatprep.subr.bf16.mxu0 %v2482
        %2848 = vmatpush1.bf16.msra.mxu0 %v2481
        %2849 = vmatprep.subr.bf16.mxu0 0
        %2850 = vmatpush2.bf16.msra.mxu0 0
        %2851 = vmatprep.subr.bf16.mxu0 0
        %2852 = vmatpush2.bf16.msra.mxu0 0
        %2853 = vmatprep.subr.bf16.mxu0 0
        %2854 = vmatpush2.bf16.msra.mxu0 0
        %2855 = vmatprep.subr.bf16.mxu0 %v2554
        %2856 = vmatpush2.bf16.msra.mxu0 %v2553
        %2857 = vmatprep.subr.bf16.mxu0 %v2548
        %2858 = vmatpush2.bf16.msra.mxu0 %v2547
        %2859 = vmatprep.subr.bf16.mxu0 %v2542
        %2860 = vmatpush2.bf16.msra.mxu0 %v2541
        %2861 = vmatprep.subr.bf16.mxu0 %v2536
        %2862 = vmatpush2.bf16.msra.mxu0 %v2535
        %2863 = vmatprep.subr.bf16.mxu0 %v2530
        %2864 = vmatpush2.bf16.msra.mxu0 %v2529
        %2865 = vmatprep.mubr.bf16.mxu0 %v2634
        %2866 = vmatmul.mubr.bf16.gmra.mxu0 %v2153
        %v2867 = vpop.f32.mrf.mxu0
        %v2868 = vadd.f32 0.0, %v2867
        %v2869 = vpop.f32.mrf.mxu0
        %v2870 = vadd.f32 0.0, %v2869
        %v2871 = vpop.f32.mrf.mxu0
        %v2872 = vadd.f32 0.0, %v2871
        %v2873 = vpop.f32.mrf.mxu0
        %v2874 = vadd.f32 0.0, %v2873
        %2875 = vmatprep.mubr.bf16.mxu0 %v2637
        %2876 = vmatmul.mubr.bf16.gmra.mxu0 %v2155
        %v2877 = vpop.f32.mrf.mxu0
        %v2878 = vadd.f32 0.0, %v2877
        %v2879 = vpop.f32.mrf.mxu0
        %v2880 = vadd.f32 0.0, %v2879
        %v2881 = vpop.f32.mrf.mxu0
        %v2882 = vadd.f32 0.0, %v2881
        %v2883 = vpop.f32.mrf.mxu0
        %v2884 = vadd.f32 0.0, %v2883
        %2885 = vmatprep.mubr.bf16.mxu0 %v2640
        %2886 = vmatmul.mubr.bf16.gmra.mxu0 %v2157
        %v2887 = vpop.f32.mrf.mxu0
        %v2888 = vadd.f32 0.0, %v2887
        %v2889 = vpop.f32.mrf.mxu0
        %v2890 = vadd.f32 0.0, %v2889
        %v2891 = vpop.f32.mrf.mxu0
        %v2892 = vadd.f32 0.0, %v2891
        %v2893 = vpop.f32.mrf.mxu0
        %v2894 = vadd.f32 0.0, %v2893
        %2895 = vmatprep.mubr.bf16.mxu0 %v2643
        %2896 = vmatmul.mubr.bf16.gmra.mxu0 %v2159
        %v2897 = vpop.f32.mrf.mxu0
        %v2898 = vadd.f32 0.0, %v2897
        %v2899 = vpop.f32.mrf.mxu0
        %v2900 = vadd.f32 0.0, %v2899
        %v2901 = vpop.f32.mrf.mxu0
        %v2902 = vadd.f32 0.0, %v2901
        %v2903 = vpop.f32.mrf.mxu0
        %v2904 = vadd.f32 0.0, %v2903
        %2905 = vmatprep.mubr.bf16.mxu0 %v2646
        %2906 = vmatmul.mubr.bf16.gmra.mxu0 %v2161
        %v2907 = vpop.f32.mrf.mxu0
        %v2908 = vadd.f32 0.0, %v2907
        %v2909 = vpop.f32.mrf.mxu0
        %v2910 = vadd.f32 0.0, %v2909
        %v2911 = vpop.f32.mrf.mxu0
        %v2912 = vadd.f32 0.0, %v2911
        %v2913 = vpop.f32.mrf.mxu0
        %v2914 = vadd.f32 0.0, %v2913
        %2915 = vmatprep.mubr.bf16.mxu0 %v2649
        %2916 = vmatmul.mubr.bf16.gmra.mxu0 %v2163
        %v2917 = vpop.f32.mrf.mxu0
        %v2918 = vadd.f32 0.0, %v2917
        %v2919 = vpop.f32.mrf.mxu0
        %v2920 = vadd.f32 0.0, %v2919
        %v2921 = vpop.f32.mrf.mxu0
        %v2922 = vpop.f32.mrf.mxu0
        %2923 = vdwg.mxu0
        %v2925 = vlaneseq
        %v2926 = vshrl.u32 %v2925, 7
        %v2927 = vsub.s32 0, %v2926
        %v2928 = vrot.slane %v1980, %v2927
        %v2929 = vlaneseq
        %v2930 = vshrl.u32 %v2929, 7
        %v2931 = vsub.s32 1, %v2930
        %v2932 = vrot.slane %v1980, %v2931
        %v2933 = vlaneseq
        %v2934 = vshrl.u32 %v2933, 7
        %v2935 = vsub.s32 2, %v2934
        %v2936 = vrot.slane %v1980, %v2935
        %v2937 = vlaneseq
        %v2938 = vshrl.u32 %v2937, 7
        %v2939 = vsub.s32 3, %v2938
        %v2940 = vrot.slane %v1980, %v2939
        %v2941 = vlaneseq
        %v2942 = vshrl.u32 %v2941, 7
        %v2943 = vsub.s32 4, %v2942
        %v2944 = vrot.slane %v1980, %v2943
        %v2945 = vlaneseq
        %v2946 = vshrl.u32 %v2945, 7
        %v2947 = vsub.s32 5, %v2946
        %v2948 = vrot.slane %v1980, %v2947
        %v2955 = vadd.f32 %v2928, %v2686
        %v2956 = vadd.f32 %v2932, %v2688
        %v2957 = vadd.f32 %v2936, %v2777
        %v2958 = vadd.f32 %v2940, %v2779
        %v2959 = vadd.f32 %v2944, %v2868
        %v2960 = vadd.f32 %v2948, %v2870
        %v2961 = vadd.f32 %v2928, %v2690
        %v2962 = vadd.f32 %v2932, %v2692
        %v2963 = vadd.f32 %v2936, %v2781
        %v2964 = vadd.f32 %v2940, %v2783
        %v2965 = vadd.f32 %v2944, %v2872
        %v2966 = vadd.f32 %v2948, %v2874
        %v2967 = vadd.f32 %v2928, %v2696
        %v2968 = vadd.f32 %v2932, %v2698
        %v2969 = vadd.f32 %v2936, %v2787
        %v2970 = vadd.f32 %v2940, %v2789
        %v2971 = vadd.f32 %v2944, %v2878
        %v2972 = vadd.f32 %v2948, %v2880
        %v2973 = vadd.f32 %v2928, %v2700
        %v2974 = vadd.f32 %v2932, %v2702
        %v2975 = vadd.f32 %v2936, %v2791
        %v2976 = vadd.f32 %v2940, %v2793
        %v2977 = vadd.f32 %v2944, %v2882
        %v2978 = vadd.f32 %v2948, %v2884
        %v2979 = vadd.f32 %v2928, %v2706
        %v2980 = vadd.f32 %v2932, %v2708
        %v2981 = vadd.f32 %v2936, %v2797
        %v2982 = vadd.f32 %v2940, %v2799
        %v2983 = vadd.f32 %v2944, %v2888
        %v2984 = vadd.f32 %v2948, %v2890
        %v2985 = vadd.f32 %v2928, %v2710
        %v2986 = vadd.f32 %v2932, %v2712
        %v2987 = vadd.f32 %v2936, %v2801
        %v2988 = vadd.f32 %v2940, %v2803
        %v2989 = vadd.f32 %v2944, %v2892
        %v2990 = vadd.f32 %v2948, %v2894
        %v2991 = vadd.f32 %v2928, %v2716
        %v2992 = vadd.f32 %v2932, %v2718
        %v2993 = vadd.f32 %v2936, %v2807
        %v2994 = vadd.f32 %v2940, %v2809
        %v2995 = vadd.f32 %v2944, %v2898
        %v2996 = vadd.f32 %v2948, %v2900
        %v2997 = vadd.f32 %v2928, %v2720
        %v2998 = vadd.f32 %v2932, %v2722
        %v2999 = vadd.f32 %v2936, %v2811
        %v3000 = vadd.f32 %v2940, %v2813
        %v3001 = vadd.f32 %v2944, %v2902
        %v3002 = vadd.f32 %v2948, %v2904
        %v3003 = vadd.f32 %v2928, %v2726
        %v3004 = vadd.f32 %v2932, %v2728
        %v3005 = vadd.f32 %v2936, %v2817
        %v3006 = vadd.f32 %v2940, %v2819
        %v3007 = vadd.f32 %v2944, %v2908
        %v3008 = vadd.f32 %v2948, %v2910
        %v3009 = vadd.f32 %v2928, %v2730
        %v3010 = vadd.f32 %v2932, %v2732
        %v3011 = vadd.f32 %v2936, %v2821
        %v3012 = vadd.f32 %v2940, %v2823
        %v3013 = vadd.f32 %v2944, %v2912
        %v3014 = vadd.f32 %v2948, %v2914
        %v3015 = vadd.f32 %v2928, %v2736
        %v3016 = vadd.f32 %v2932, %v2738
        %v3017 = vadd.f32 %v2936, %v2827
        %v3018 = vadd.f32 %v2940, %v2829
        %v3019 = vadd.f32 %v2944, %v2918
        %v3020 = vadd.f32 %v2948, %v2920
        %s3021 = scalar_lea.vmem %s4, 88
        %v3022 = vld [vmem:[%s3021] sm:$0xff]
        %v3023 = vld [vmem:[%s3021 + $0x8] sm:$0xff]
        %v3024 = vld [vmem:[%s3021 + $0x10] sm:$0xff]
        %v3025 = vld [vmem:[%s3021 + $0x18] sm:$0xff]
        %v3026 = vld [vmem:[%s3021 + $0x20] sm:$0xff]
        %v3027 = vld [vmem:[%s3021 + $0x28] sm:$0xff]
        %v3028 = vld [vmem:[%s3021 + $0x30] sm:$0xff]
        %v3029 = vld [vmem:[%s3021 + $0x38] sm:$0xff]
        %v3030 = vld [vmem:[%s3021 + $0x40] sm:$0xff]
        %v3031 = vld [vmem:[%s3021 + $0x48] sm:$0xff]
        %v3032 = vld [vmem:[%s3021 + $0x50] sm:$0xff]
        %v3044 = vunpack.c.l.b16 %v3022
        %v3045 = vunpack.c.h.b16 %v3022
        %v3046 = vunpack.c.l.b16 %v3023
        %v3047 = vunpack.c.h.b16 %v3023
        %v3048 = vunpack.c.l.b16 %v3024
        %v3049 = vunpack.c.h.b16 %v3024
        %v3050 = vunpack.c.l.b16 %v3025
        %v3051 = vunpack.c.h.b16 %v3025
        %v3052 = vunpack.c.l.b16 %v3026
        %v3053 = vunpack.c.h.b16 %v3026
        %v3054 = vunpack.c.l.b16 %v3027
        %v3055 = vunpack.c.h.b16 %v3027
        %v3056 = vunpack.c.l.b16 %v3028
        %v3057 = vunpack.c.h.b16 %v3028
        %v3058 = vunpack.c.l.b16 %v3029
        %v3059 = vunpack.c.h.b16 %v3029
        %v3060 = vunpack.c.l.b16 %v3030
        %v3061 = vunpack.c.h.b16 %v3030
        %v3062 = vunpack.c.l.b16 %v3031
        %v3063 = vunpack.c.h.b16 %v3031
        %v3064 = vunpack.c.l.b16 %v3032
        %v3065 = vunpack.c.h.b16 %v3032
        %v3066 = vpack.c.b16 %v3046, %v3044
        %v3067 = vpack.c.b16 %v3047, %v3045
        %v3068 = vpack.c.b16 %v3050, %v3048
        %v3069 = vpack.c.b16 %v3051, %v3049
        %v3070 = vpack.c.b16 %v3054, %v3052
        %v3071 = vpack.c.b16 %v3055, %v3053
        %v3072 = vpack.c.b16 %v3058, %v3056
        %v3073 = vpack.c.b16 %v3059, %v3057
        %v3074 = vpack.c.b16 %v3062, %v3060
        %v3075 = vpack.c.b16 %v3063, %v3061
        %v3076 = vpack.c.b16 %v3064, %v3064
        %v3077 = vpack.c.b16 %v3065, %v3065
        %v3085 = vsel %vm2043, %v3067, 0
        %v3088 = vsel %vm2043, %v3069, 0
        %v3091 = vsel %vm2043, %v3071, 0
        %v3094 = vsel %vm2043, %v3073, 0
        %v3097 = vsel %vm2043, %v3075, 0
        %v3100 = vsel %vm2043, %v3077, 0
        %3102 = vmatprep.subr.bf16.mxu0 %v1969
        %3103 = vmatpush1.bf16.msra.mxu0 %v1968
        %3104 = vmatprep.subr.bf16.mxu0 %v1967
        %3105 = vmatpush1.bf16.msra.mxu0 %v1966
        %3106 = vmatprep.subr.bf16.mxu0 %v1965
        %3107 = vmatpush1.bf16.msra.mxu0 %v1964
        %3108 = vmatprep.subr.bf16.mxu0 %v1963
        %3109 = vmatpush1.bf16.msra.mxu0 %v1962
        %3110 = vmatprep.subr.bf16.mxu0 %v1961
        %3111 = vmatpush1.bf16.msra.mxu0 %v1960
        %3112 = vmatprep.subr.bf16.mxu0 %v1959
        %3113 = vmatpush1.bf16.msra.mxu0 %v1958
        %3114 = vmatprep.subr.bf16.mxu0 %v1957
        %3115 = vmatpush1.bf16.msra.mxu0 %v1956
        %3116 = vmatprep.subr.bf16.mxu0 %v1955
        %3117 = vmatpush1.bf16.msra.mxu0 %v1954
        %3118 = vmatprep.subr.bf16.mxu0 0
        %3119 = vmatpush2.bf16.msra.mxu0 0
        %3120 = vmatprep.subr.bf16.mxu0 0
        %3121 = vmatpush2.bf16.msra.mxu0 0
        %3122 = vmatprep.subr.bf16.mxu0 0
        %3123 = vmatpush2.bf16.msra.mxu0 0
        %3124 = vmatprep.subr.bf16.mxu0 %v1979
        %3125 = vmatpush2.bf16.msra.mxu0 %v1978
        %3126 = vmatprep.subr.bf16.mxu0 %v1977
        %3127 = vmatpush2.bf16.msra.mxu0 %v1976
        %3128 = vmatprep.subr.bf16.mxu0 %v1975
        %3129 = vmatpush2.bf16.msra.mxu0 %v1974
        %3130 = vmatprep.subr.bf16.mxu0 %v1973
        %3131 = vmatpush2.bf16.msra.mxu0 %v1972
        %3132 = vmatprep.subr.bf16.mxu0 %v1971
        %3133 = vmatpush2.bf16.msra.mxu0 %v1970
        %3134 = vmatprep.mubr.bf16.mxu0 %v3085
        %3135 = vmatmul.mubr.bf16.gmra.mxu0 %v3066
        %v3136 = vpop.f32.mrf.mxu0
        %v3137 = vadd.f32 0.0, %v3136
        %v3138 = vpop.f32.mrf.mxu0
        %v3139 = vadd.f32 0.0, %v3138
        %v3140 = vpop.f32.mrf.mxu0
        %v3141 = vadd.f32 0.0, %v3140
        %v3142 = vpop.f32.mrf.mxu0
        %v3143 = vadd.f32 0.0, %v3142
        %3144 = vmatprep.mubr.bf16.mxu0 %v3088
        %3145 = vmatmul.mubr.bf16.gmra.mxu0 %v3068
        %v3146 = vpop.f32.mrf.mxu0
        %v3147 = vadd.f32 0.0, %v3146
        %v3148 = vpop.f32.mrf.mxu0
        %v3149 = vadd.f32 0.0, %v3148
        %v3150 = vpop.f32.mrf.mxu0
        %v3151 = vadd.f32 0.0, %v3150
        %v3152 = vpop.f32.mrf.mxu0
        %v3153 = vadd.f32 0.0, %v3152
        %3154 = vmatprep.mubr.bf16.mxu0 %v3091
        %3155 = vmatmul.mubr.bf16.gmra.mxu0 %v3070
        %v3156 = vpop.f32.mrf.mxu0
        %v3157 = vadd.f32 0.0, %v3156
        %v3158 = vpop.f32.mrf.mxu0
        %v3159 = vadd.f32 0.0, %v3158
        %v3160 = vpop.f32.mrf.mxu0
        %v3161 = vadd.f32 0.0, %v3160
        %v3162 = vpop.f32.mrf.mxu0
        %v3163 = vadd.f32 0.0, %v3162
        %3164 = vmatprep.mubr.bf16.mxu0 %v3094
        %3165 = vmatmul.mubr.bf16.gmra.mxu0 %v3072
        %v3166 = vpop.f32.mrf.mxu0
        %v3167 = vadd.f32 0.0, %v3166
        %v3168 = vpop.f32.mrf.mxu0
        %v3169 = vadd.f32 0.0, %v3168
        %v3170 = vpop.f32.mrf.mxu0
        %v3171 = vadd.f32 0.0, %v3170
        %v3172 = vpop.f32.mrf.mxu0
        %v3173 = vadd.f32 0.0, %v3172
        %3174 = vmatprep.mubr.bf16.mxu0 %v3097
        %3175 = vmatmul.mubr.bf16.gmra.mxu0 %v3074
        %v3176 = vpop.f32.mrf.mxu0
        %v3177 = vadd.f32 0.0, %v3176
        %v3178 = vpop.f32.mrf.mxu0
        %v3179 = vadd.f32 0.0, %v3178
        %v3180 = vpop.f32.mrf.mxu0
        %v3181 = vadd.f32 0.0, %v3180
        %v3182 = vpop.f32.mrf.mxu0
        %v3183 = vadd.f32 0.0, %v3182
        %3184 = vmatprep.mubr.bf16.mxu0 %v3100
        %3185 = vmatmul.mubr.bf16.gmra.mxu0 %v3076
        %v3186 = vpop.f32.mrf.mxu0
        %v3187 = vadd.f32 0.0, %v3186
        %v3188 = vpop.f32.mrf.mxu0
        %v3189 = vadd.f32 0.0, %v3188
        %v3190 = vpop.f32.mrf.mxu0
        %v3191 = vpop.f32.mrf.mxu0
        %3192 = vdwg.mxu0
        %v3193 = vpack.c.bf16 %v3141, %v3137
        %v3194 = vpack.c.bf16 %v3143, %v3139
        %v3195 = vpack.c.bf16 %v3151, %v3147
        %v3196 = vpack.c.bf16 %v3153, %v3149
        %v3197 = vpack.c.bf16 %v3161, %v3157
        %v3198 = vpack.c.bf16 %v3163, %v3159
        %v3199 = vpack.c.bf16 %v3171, %v3167
        %v3200 = vpack.c.bf16 %v3173, %v3169
        %v3201 = vpack.c.bf16 %v3181, %v3177
        %v3202 = vpack.c.bf16 %v3183, %v3179
        %v3203 = vpack.c.bf16 %v3187, %v3187
        %v3204 = vpack.c.bf16 %v3189, %v3189
        %s3205 = scalar_lea.vmem %s5, 624
        %v3206 = vld [vmem:[%s3205] sm:$0xff]
        %v3207 = vld [vmem:[%s3205 + $0x8] sm:$0xff]
        %v3208 = vld [vmem:[%s3205 + $0x10] sm:$0xff]
        %v3209 = vld [vmem:[%s3205 + $0x18] sm:$0xff]
        %v3210 = vld [vmem:[%s3205 + $0x20] sm:$0xff]
        %v3211 = vld [vmem:[%s3205 + $0x28] sm:$0xff]
        %v3212 = vld [vmem:[%s3205 + $0x30] sm:$0xff]
        %v3213 = vld [vmem:[%s3205 + $0x38] sm:$0xff]
        %v3214 = vld [vmem:[%s3205 + $0x40] sm:$0xff]
        %v3215 = vld [vmem:[%s3205 + $0x48] sm:$0xff]
        %v3216 = vld [vmem:[%s3205 + $0x50] sm:$0xff]
        %v3217 = vld [vmem:[%s3205 + $0x58] sm:$0xff]
        %v3218 = vld [vmem:[%s3205 + $0x60] sm:$0xff]
        %v3219 = vld [vmem:[%s3205 + $0x68] sm:$0xff]
        %v3220 = vld [vmem:[%s3205 + $0x70] sm:$0xff]
        %v3221 = vld [vmem:[%s3205 + $0x78] sm:$0xff]
        %v3222 = vld [vmem:[%s3205 + $0x80] sm:$0xff]
        %v3223 = vld [vmem:[%s3205 + $0x88] sm:$0xff]
        %v3224 = vld [vmem:[%s3205 + $0x90] sm:$0xff]
        %v3225 = vld [vmem:[%s3205 + $0x98] sm:$0xff]
        %v3226 = vld [vmem:[%s3205 + $0xa0] sm:$0xff]
        %v3227 = vld [vmem:[%s3205 + $0xa8] sm:$0xff]
        %v3228 = vld [vmem:[%s3205 + $0xb0] sm:$0xff]
        %v3229 = vld [vmem:[%s3205 + $0xb8] sm:$0xff]
        %v3230 = vld [vmem:[%s3205 + $0xc0] sm:$0xff]
        %v3231 = vld [vmem:[%s3205 + $0xc8] sm:$0xff]
        %v3232 = vld [vmem:[%s3205 + $0xd0] sm:$0xff]
        %v3233 = vld [vmem:[%s3205 + $0xd8] sm:$0xff]
        %v3234 = vld [vmem:[%s3205 + $0xe0] sm:$0xff]
        %v3235 = vld [vmem:[%s3205 + $0xe8] sm:$0xff]
        %v3236 = vld [vmem:[%s3205 + $0xf0] sm:$0xff]
        %v3237 = vld [vmem:[%s3205 + $0xf8] sm:$0xff]
        %v3238 = vld [vmem:[%s3205 + $0x100] sm:$0xff]
        %v3239 = vld [vmem:[%s3205 + $0x108] sm:$0xff]
        %v3240 = vld [vmem:[%s3205 + $0x110] sm:$0xff]
        %v3241 = vld [vmem:[%s3205 + $0x118] sm:$0xff]
        %v3242 = vld [vmem:[%s3205 + $0x120] sm:$0xff]
        %v3243 = vld [vmem:[%s3205 + $0x128] sm:$0xff]
        %v3244 = vld [vmem:[%s3205 + $0x130] sm:$0xff]
        %v3245 = vld [vmem:[%s3205 + $0x138] sm:$0xff]
        %v3246 = vld [vmem:[%s3205 + $0x140] sm:$0xff]
        %v3247 = vld [vmem:[%s3205 + $0x148] sm:$0xff]
        %v3248 = vld [vmem:[%s3205 + $0x150] sm:$0xff]
        %v3249 = vld [vmem:[%s3205 + $0x158] sm:$0xff]
        %v3250 = vld [vmem:[%s3205 + $0x160] sm:$0xff]
        %v3251 = vld [vmem:[%s3205 + $0x168] sm:$0xff]
        %v3252 = vld [vmem:[%s3205 + $0x170] sm:$0xff]
        %v3253 = vld [vmem:[%s3205 + $0x178] sm:$0xff]
        %v3254 = vld [vmem:[%s3205 + $0x180] sm:$0xff]
        %v3255 = vld [vmem:[%s3205 + $0x188] sm:$0xff]
        %v3256 = vld [vmem:[%s3205 + $0x190] sm:$0xff]
        %v3257 = vld [vmem:[%s3205 + $0x198] sm:$0xff]
        %v3258 = vld [vmem:[%s3205 + $0x1a0] sm:$0xff]
        %v3259 = vld [vmem:[%s3205 + $0x1a8] sm:$0xff]
        %v3260 = vld [vmem:[%s3205 + $0x1b0] sm:$0xff]
        %v3261 = vld [vmem:[%s3205 + $0x1b8] sm:$0xff]
        %v3262 = vld [vmem:[%s3205 + $0x1c0] sm:$0xff]
        %v3263 = vld [vmem:[%s3205 + $0x1c8] sm:$0xff]
        %v3264 = vld [vmem:[%s3205 + $0x1d0] sm:$0xff]
        %v3265 = vld [vmem:[%s3205 + $0x1d8] sm:$0xff]
        %v3266 = vld [vmem:[%s3205 + $0x1e0] sm:$0xff]
        %v3267 = vld [vmem:[%s3205 + $0x1e8] sm:$0xff]
        %v3268 = vld [vmem:[%s3205 + $0x1f0] sm:$0xff]
        %v3269 = vld [vmem:[%s3205 + $0x1f8] sm:$0xff]
        %v3270 = vld [vmem:[%s3205 + $0x200] sm:$0xff]
        %v3271 = vld [vmem:[%s3205 + $0x208] sm:$0xff]
        %v3272 = vld [vmem:[%s3205 + $0x210] sm:$0xff]
        %v3273 = vld [vmem:[%s3205 + $0x218] sm:$0xff]
        %v3274 = vld [vmem:[%s3205 + $0x220] sm:$0xff]
        %v3275 = vld [vmem:[%s3205 + $0x228] sm:$0xff]
        %v3276 = vld [vmem:[%s3205 + $0x230] sm:$0xff]
        %v3277 = vld [vmem:[%s3205 + $0x238] sm:$0xff]
        %v3278 = vld [vmem:[%s3205 + $0x240] sm:$0xff]
        %v3279 = vld [vmem:[%s3205 + $0x248] sm:$0xff]
        %v3280 = vld [vmem:[%s3205 + $0x250] sm:$0xff]
        %v3281 = vld [vmem:[%s3205 + $0x258] sm:$0xff]
        %v3282 = vld [vmem:[%s3205 + $0x260] sm:$0xff]
        %v3283 = vld [vmem:[%s3205 + $0x268] sm:$0xff]
        %v3362 = vunpack.c.l.b16 %v3206
        %v3363 = vunpack.c.h.b16 %v3206
        %v3364 = vunpack.c.l.b16 %v3207
        %v3365 = vunpack.c.h.b16 %v3207
        %v3366 = vunpack.c.l.b16 %v3208
        %v3367 = vunpack.c.h.b16 %v3208
        %v3368 = vunpack.c.l.b16 %v3209
        %v3369 = vunpack.c.h.b16 %v3209
        %v3370 = vunpack.c.l.b16 %v3210
        %v3371 = vunpack.c.h.b16 %v3210
        %v3372 = vunpack.c.l.b16 %v3211
        %v3373 = vunpack.c.h.b16 %v3211
        %v3374 = vunpack.c.l.b16 %v3212
        %v3375 = vunpack.c.h.b16 %v3212
        %v3376 = vunpack.c.l.b16 %v3213
        %v3377 = vunpack.c.h.b16 %v3213
        %v3378 = vunpack.c.l.b16 %v3214
        %v3379 = vunpack.c.h.b16 %v3214
        %v3380 = vunpack.c.l.b16 %v3215
        %v3381 = vunpack.c.h.b16 %v3215
        %v3382 = vunpack.c.l.b16 %v3216
        %v3383 = vunpack.c.h.b16 %v3216
        %v3384 = vunpack.c.l.b16 %v3217
        %v3385 = vunpack.c.h.b16 %v3217
        %v3386 = vunpack.c.l.b16 %v3218
        %v3387 = vunpack.c.h.b16 %v3218
        %v3388 = vunpack.c.l.b16 %v3219
        %v3389 = vunpack.c.h.b16 %v3219
        %v3390 = vunpack.c.l.b16 %v3220
        %v3391 = vunpack.c.h.b16 %v3220
        %v3392 = vunpack.c.l.b16 %v3221
        %v3393 = vunpack.c.h.b16 %v3221
        %v3394 = vunpack.c.l.b16 %v3222
        %v3395 = vunpack.c.h.b16 %v3222
        %v3396 = vunpack.c.l.b16 %v3223
        %v3397 = vunpack.c.h.b16 %v3223
        %v3398 = vunpack.c.l.b16 %v3224
        %v3399 = vunpack.c.h.b16 %v3224
        %v3400 = vunpack.c.l.b16 %v3225
        %v3401 = vunpack.c.h.b16 %v3225
        %v3402 = vunpack.c.l.b16 %v3226
        %v3403 = vunpack.c.h.b16 %v3226
        %v3404 = vunpack.c.l.b16 %v3227
        %v3405 = vunpack.c.h.b16 %v3227
        %v3406 = vunpack.c.l.b16 %v3228
        %v3407 = vunpack.c.h.b16 %v3228
        %v3408 = vunpack.c.l.b16 %v3229
        %v3409 = vunpack.c.h.b16 %v3229
        %v3410 = vunpack.c.l.b16 %v3230
        %v3411 = vunpack.c.h.b16 %v3230
        %v3412 = vunpack.c.l.b16 %v3231
        %v3413 = vunpack.c.h.b16 %v3231
        %v3414 = vunpack.c.l.b16 %v3232
        %v3415 = vunpack.c.h.b16 %v3232
        %v3416 = vunpack.c.l.b16 %v3233
        %v3417 = vunpack.c.h.b16 %v3233
        %v3418 = vunpack.c.l.b16 %v3234
        %v3419 = vunpack.c.h.b16 %v3234
        %v3420 = vunpack.c.l.b16 %v3235
        %v3421 = vunpack.c.h.b16 %v3235
        %v3422 = vunpack.c.l.b16 %v3236
        %v3423 = vunpack.c.h.b16 %v3236
        %v3424 = vunpack.c.l.b16 %v3237
        %v3425 = vunpack.c.h.b16 %v3237
        %v3426 = vunpack.c.l.b16 %v3238
        %v3427 = vunpack.c.h.b16 %v3238
        %v3428 = vunpack.c.l.b16 %v3239
        %v3429 = vunpack.c.h.b16 %v3239
        %v3430 = vunpack.c.l.b16 %v3240
        %v3431 = vunpack.c.h.b16 %v3240
        %v3432 = vunpack.c.l.b16 %v3241
        %v3433 = vunpack.c.h.b16 %v3241
        %v3434 = vunpack.c.l.b16 %v3242
        %v3435 = vunpack.c.h.b16 %v3242
        %v3436 = vunpack.c.l.b16 %v3243
        %v3437 = vunpack.c.h.b16 %v3243
        %v3438 = vunpack.c.l.b16 %v3244
        %v3439 = vunpack.c.h.b16 %v3244
        %v3440 = vunpack.c.l.b16 %v3245
        %v3441 = vunpack.c.h.b16 %v3245
        %v3442 = vunpack.c.l.b16 %v3246
        %v3443 = vunpack.c.h.b16 %v3246
        %v3444 = vunpack.c.l.b16 %v3247
        %v3445 = vunpack.c.h.b16 %v3247
        %v3446 = vunpack.c.l.b16 %v3248
        %v3447 = vunpack.c.h.b16 %v3248
        %v3448 = vunpack.c.l.b16 %v3249
        %v3449 = vunpack.c.h.b16 %v3249
        %v3450 = vunpack.c.l.b16 %v3250
        %v3451 = vunpack.c.h.b16 %v3250
        %v3452 = vunpack.c.l.b16 %v3251
        %v3453 = vunpack.c.h.b16 %v3251
        %v3454 = vunpack.c.l.b16 %v3252
        %v3455 = vunpack.c.h.b16 %v3252
        %v3456 = vunpack.c.l.b16 %v3253
        %v3457 = vunpack.c.h.b16 %v3253
        %v3458 = vunpack.c.l.b16 %v3254
        %v3459 = vunpack.c.h.b16 %v3254
        %v3460 = vunpack.c.l.b16 %v3255
        %v3461 = vunpack.c.h.b16 %v3255
        %v3462 = vunpack.c.l.b16 %v3256
        %v3463 = vunpack.c.h.b16 %v3256
        %v3464 = vunpack.c.l.b16 %v3257
        %v3465 = vunpack.c.h.b16 %v3257
        %v3466 = vunpack.c.l.b16 %v3258
        %v3467 = vunpack.c.h.b16 %v3258
        %v3468 = vunpack.c.l.b16 %v3259
        %v3469 = vunpack.c.h.b16 %v3259
        %v3470 = vunpack.c.l.b16 %v3260
        %v3471 = vunpack.c.h.b16 %v3260
        %v3472 = vunpack.c.l.b16 %v3261
        %v3473 = vunpack.c.h.b16 %v3261
        %v3474 = vunpack.c.l.b16 %v3262
        %v3475 = vunpack.c.h.b16 %v3262
        %v3476 = vunpack.c.l.b16 %v3263
        %v3477 = vunpack.c.h.b16 %v3263
        %v3478 = vunpack.c.l.b16 %v3264
        %v3479 = vunpack.c.h.b16 %v3264
        %v3480 = vunpack.c.l.b16 %v3265
        %v3481 = vunpack.c.h.b16 %v3265
        %v3482 = vunpack.c.l.b16 %v3266
        %v3483 = vunpack.c.h.b16 %v3266
        %v3484 = vunpack.c.l.b16 %v3267
        %v3485 = vunpack.c.h.b16 %v3267
        %v3486 = vunpack.c.l.b16 %v3268
        %v3487 = vunpack.c.h.b16 %v3268
        %v3488 = vunpack.c.l.b16 %v3269
        %v3489 = vunpack.c.h.b16 %v3269
        %v3490 = vunpack.c.l.b16 %v3270
        %v3491 = vunpack.c.h.b16 %v3270
        %v3492 = vunpack.c.l.b16 %v3271
        %v3493 = vunpack.c.h.b16 %v3271
        %v3494 = vunpack.c.l.b16 %v3272
        %v3495 = vunpack.c.h.b16 %v3272
        %v3496 = vunpack.c.l.b16 %v3273
        %v3497 = vunpack.c.h.b16 %v3273
        %v3498 = vunpack.c.l.b16 %v3274
        %v3499 = vunpack.c.h.b16 %v3274
        %v3500 = vunpack.c.l.b16 %v3275
        %v3501 = vunpack.c.h.b16 %v3275
        %v3502 = vunpack.c.l.b16 %v3276
        %v3503 = vunpack.c.h.b16 %v3276
        %v3504 = vunpack.c.l.b16 %v3277
        %v3505 = vunpack.c.h.b16 %v3277
        %v3506 = vunpack.c.l.b16 %v3278
        %v3507 = vunpack.c.h.b16 %v3278
        %v3508 = vunpack.c.l.b16 %v3279
        %v3509 = vunpack.c.h.b16 %v3279
        %v3510 = vunpack.c.l.b16 %v3280
        %v3511 = vunpack.c.h.b16 %v3280
        %v3512 = vunpack.c.l.b16 %v3281
        %v3513 = vunpack.c.h.b16 %v3281
        %v3514 = vunpack.c.l.b16 %v3282
        %v3515 = vunpack.c.h.b16 %v3282
        %v3516 = vunpack.c.l.b16 %v3283
        %v3517 = vunpack.c.h.b16 %v3283
        %v3518 = vpack.c.b16 %v3368, %v3362
        %v3519 = vpack.c.b16 %v3369, %v3363
        %v3520 = vpack.c.b16 %v3370, %v3364
        %v3521 = vpack.c.b16 %v3371, %v3365
        %v3522 = vpack.c.b16 %v3372, %v3366
        %v3523 = vpack.c.b16 %v3373, %v3367
        %v3524 = vpack.c.b16 %v3380, %v3374
        %v3525 = vpack.c.b16 %v3381, %v3375
        %v3526 = vpack.c.b16 %v3382, %v3376
        %v3527 = vpack.c.b16 %v3383, %v3377
        %v3528 = vpack.c.b16 %v3384, %v3378
        %v3529 = vpack.c.b16 %v3385, %v3379
        %v3530 = vpack.c.b16 %v3392, %v3386
        %v3531 = vpack.c.b16 %v3393, %v3387
        %v3532 = vpack.c.b16 %v3394, %v3388
        %v3533 = vpack.c.b16 %v3395, %v3389
        %v3534 = vpack.c.b16 %v3396, %v3390
        %v3535 = vpack.c.b16 %v3397, %v3391
        %v3536 = vpack.c.b16 %v3404, %v3398
        %v3537 = vpack.c.b16 %v3405, %v3399
        %v3538 = vpack.c.b16 %v3406, %v3400
        %v3539 = vpack.c.b16 %v3407, %v3401
        %v3540 = vpack.c.b16 %v3408, %v3402
        %v3541 = vpack.c.b16 %v3409, %v3403
        %v3542 = vpack.c.b16 %v3416, %v3410
        %v3543 = vpack.c.b16 %v3417, %v3411
        %v3544 = vpack.c.b16 %v3418, %v3412
        %v3545 = vpack.c.b16 %v3419, %v3413
        %v3546 = vpack.c.b16 %v3420, %v3414
        %v3547 = vpack.c.b16 %v3421, %v3415
        %v3548 = vpack.c.b16 %v3428, %v3422
        %v3549 = vpack.c.b16 %v3429, %v3423
        %v3550 = vpack.c.b16 %v3430, %v3424
        %v3551 = vpack.c.b16 %v3431, %v3425
        %v3552 = vpack.c.b16 %v3432, %v3426
        %v3553 = vpack.c.b16 %v3433, %v3427
        %v3554 = vpack.c.b16 %v3440, %v3434
        %v3555 = vpack.c.b16 %v3441, %v3435
        %v3556 = vpack.c.b16 %v3442, %v3436
        %v3557 = vpack.c.b16 %v3443, %v3437
        %v3558 = vpack.c.b16 %v3444, %v3438
        %v3559 = vpack.c.b16 %v3445, %v3439
        %v3560 = vpack.c.b16 %v3452, %v3446
        %v3561 = vpack.c.b16 %v3453, %v3447
        %v3562 = vpack.c.b16 %v3454, %v3448
        %v3563 = vpack.c.b16 %v3455, %v3449
        %v3564 = vpack.c.b16 %v3456, %v3450
        %v3565 = vpack.c.b16 %v3457, %v3451
        %v3566 = vpack.c.b16 %v3464, %v3458
        %v3567 = vpack.c.b16 %v3465, %v3459
        %v3568 = vpack.c.b16 %v3466, %v3460
        %v3569 = vpack.c.b16 %v3467, %v3461
        %v3570 = vpack.c.b16 %v3468, %v3462
        %v3571 = vpack.c.b16 %v3469, %v3463
        %v3572 = vpack.c.b16 %v3476, %v3470
        %v3573 = vpack.c.b16 %v3477, %v3471
        %v3574 = vpack.c.b16 %v3478, %v3472
        %v3575 = vpack.c.b16 %v3479, %v3473
        %v3576 = vpack.c.b16 %v3480, %v3474
        %v3577 = vpack.c.b16 %v3481, %v3475
        %v3578 = vpack.c.b16 %v3488, %v3482
        %v3579 = vpack.c.b16 %v3489, %v3483
        %v3580 = vpack.c.b16 %v3490, %v3484
        %v3581 = vpack.c.b16 %v3491, %v3485
        %v3582 = vpack.c.b16 %v3492, %v3486
        %v3583 = vpack.c.b16 %v3493, %v3487
        %v3584 = vpack.c.b16 %v3500, %v3494
        %v3585 = vpack.c.b16 %v3501, %v3495
        %v3586 = vpack.c.b16 %v3502, %v3496
        %v3587 = vpack.c.b16 %v3503, %v3497
        %v3588 = vpack.c.b16 %v3504, %v3498
        %v3589 = vpack.c.b16 %v3505, %v3499
        %v3590 = vpack.c.b16 %v3512, %v3506
        %v3591 = vpack.c.b16 %v3513, %v3507
        %v3592 = vpack.c.b16 %v3514, %v3508
        %v3593 = vpack.c.b16 %v3515, %v3509
        %v3594 = vpack.c.b16 %v3516, %v3510
        %v3595 = vpack.c.b16 %v3517, %v3511
        %v3675 = vsel %vm2043, %v3194, 0
        %v3678 = vsel %vm2043, %v3196, 0
        %v3681 = vsel %vm2043, %v3198, 0
        %v3684 = vsel %vm2043, %v3200, 0
        %v3687 = vsel %vm2043, %v3202, 0
        %v3690 = vsel %vm2043, %v3204, 0
        %3692 = vmatprep.subr.bf16.mxu0 %v3561
        %3693 = vmatpush1.bf16.msra.mxu0 %v3560
        %3694 = vmatprep.subr.bf16.mxu0 %v3555
        %3695 = vmatpush1.bf16.msra.mxu0 %v3554
        %3696 = vmatprep.subr.bf16.mxu0 %v3549
        %3697 = vmatpush1.bf16.msra.mxu0 %v3548
        %3698 = vmatprep.subr.bf16.mxu0 %v3543
        %3699 = vmatpush1.bf16.msra.mxu0 %v3542
        %3700 = vmatprep.subr.bf16.mxu0 %v3537
        %3701 = vmatpush1.bf16.msra.mxu0 %v3536
        %3702 = vmatprep.subr.bf16.mxu0 %v3531
        %3703 = vmatpush1.bf16.msra.mxu0 %v3530
        %3704 = vmatprep.subr.bf16.mxu0 %v3525
        %3705 = vmatpush1.bf16.msra.mxu0 %v3524
        %3706 = vmatprep.subr.bf16.mxu0 %v3519
        %3707 = vmatpush1.bf16.msra.mxu0 %v3518
        %3708 = vmatprep.subr.bf16.mxu0 0
        %3709 = vmatpush2.bf16.msra.mxu0 0
        %3710 = vmatprep.subr.bf16.mxu0 0
        %3711 = vmatpush2.bf16.msra.mxu0 0
        %3712 = vmatprep.subr.bf16.mxu0 0
        %3713 = vmatpush2.bf16.msra.mxu0 0
        %3714 = vmatprep.subr.bf16.mxu0 %v3591
        %3715 = vmatpush2.bf16.msra.mxu0 %v3590
        %3716 = vmatprep.subr.bf16.mxu0 %v3585
        %3717 = vmatpush2.bf16.msra.mxu0 %v3584
        %3718 = vmatprep.subr.bf16.mxu0 %v3579
        %3719 = vmatpush2.bf16.msra.mxu0 %v3578
        %3720 = vmatprep.subr.bf16.mxu0 %v3573
        %3721 = vmatpush2.bf16.msra.mxu0 %v3572
        %3722 = vmatprep.subr.bf16.mxu0 %v3567
        %3723 = vmatpush2.bf16.msra.mxu0 %v3566
        %3724 = vmatprep.mubr.bf16.mxu0 %v3675
        %3725 = vmatmul.mubr.bf16.gmra.mxu0 %v3193
        %v3726 = vpop.f32.mrf.mxu0
        %v3727 = vadd.f32 0.0, %v3726
        %v3728 = vpop.f32.mrf.mxu0
        %v3729 = vadd.f32 0.0, %v3728
        %v3730 = vpop.f32.mrf.mxu0
        %v3731 = vadd.f32 0.0, %v3730
        %v3732 = vpop.f32.mrf.mxu0
        %v3733 = vadd.f32 0.0, %v3732
        %3734 = vmatprep.mubr.bf16.mxu0 %v3678
        %3735 = vmatmul.mubr.bf16.gmra.mxu0 %v3195
        %v3736 = vpop.f32.mrf.mxu0
        %v3737 = vadd.f32 0.0, %v3736
        %v3738 = vpop.f32.mrf.mxu0
        %v3739 = vadd.f32 0.0, %v3738
        %v3740 = vpop.f32.mrf.mxu0
        %v3741 = vadd.f32 0.0, %v3740
        %v3742 = vpop.f32.mrf.mxu0
        %v3743 = vadd.f32 0.0, %v3742
        %3744 = vmatprep.mubr.bf16.mxu0 %v3681
        %3745 = vmatmul.mubr.bf16.gmra.mxu0 %v3197
        %v3746 = vpop.f32.mrf.mxu0
        %v3747 = vadd.f32 0.0, %v3746
        %v3748 = vpop.f32.mrf.mxu0
        %v3749 = vadd.f32 0.0, %v3748
        %v3750 = vpop.f32.mrf.mxu0
        %v3751 = vadd.f32 0.0, %v3750
        %v3752 = vpop.f32.mrf.mxu0
        %v3753 = vadd.f32 0.0, %v3752
        %3754 = vmatprep.mubr.bf16.mxu0 %v3684
        %3755 = vmatmul.mubr.bf16.gmra.mxu0 %v3199
        %v3756 = vpop.f32.mrf.mxu0
        %v3757 = vadd.f32 0.0, %v3756
        %v3758 = vpop.f32.mrf.mxu0
        %v3759 = vadd.f32 0.0, %v3758
        %v3760 = vpop.f32.mrf.mxu0
        %v3761 = vadd.f32 0.0, %v3760
        %v3762 = vpop.f32.mrf.mxu0
        %v3763 = vadd.f32 0.0, %v3762
        %3764 = vmatprep.mubr.bf16.mxu0 %v3687
        %3765 = vmatmul.mubr.bf16.gmra.mxu0 %v3201
        %v3766 = vpop.f32.mrf.mxu0
        %v3767 = vadd.f32 0.0, %v3766
        %v3768 = vpop.f32.mrf.mxu0
        %v3769 = vadd.f32 0.0, %v3768
        %v3770 = vpop.f32.mrf.mxu0
        %v3771 = vadd.f32 0.0, %v3770
        %v3772 = vpop.f32.mrf.mxu0
        %v3773 = vadd.f32 0.0, %v3772
        %3774 = vmatprep.mubr.bf16.mxu0 %v3690
        %3775 = vmatmul.mubr.bf16.gmra.mxu0 %v3203
        %v3776 = vpop.f32.mrf.mxu0
        %v3777 = vadd.f32 0.0, %v3776
        %v3778 = vpop.f32.mrf.mxu0
        %v3779 = vadd.f32 0.0, %v3778
        %v3780 = vpop.f32.mrf.mxu0
        %v3781 = vpop.f32.mrf.mxu0
        %3782 = vdwg.mxu0
        %3783 = vmatprep.subr.bf16.mxu0 %v3563
        %3784 = vmatpush1.bf16.msra.mxu0 %v3562
        %3785 = vmatprep.subr.bf16.mxu0 %v3557
        %3786 = vmatpush1.bf16.msra.mxu0 %v3556
        %3787 = vmatprep.subr.bf16.mxu0 %v3551
        %3788 = vmatpush1.bf16.msra.mxu0 %v3550
        %3789 = vmatprep.subr.bf16.mxu0 %v3545
        %3790 = vmatpush1.bf16.msra.mxu0 %v3544
        %3791 = vmatprep.subr.bf16.mxu0 %v3539
        %3792 = vmatpush1.bf16.msra.mxu0 %v3538
        %3793 = vmatprep.subr.bf16.mxu0 %v3533
        %3794 = vmatpush1.bf16.msra.mxu0 %v3532
        %3795 = vmatprep.subr.bf16.mxu0 %v3527
        %3796 = vmatpush1.bf16.msra.mxu0 %v3526
        %3797 = vmatprep.subr.bf16.mxu0 %v3521
        %3798 = vmatpush1.bf16.msra.mxu0 %v3520
        %3799 = vmatprep.subr.bf16.mxu0 0
        %3800 = vmatpush2.bf16.msra.mxu0 0
        %3801 = vmatprep.subr.bf16.mxu0 0
        %3802 = vmatpush2.bf16.msra.mxu0 0
        %3803 = vmatprep.subr.bf16.mxu0 0
        %3804 = vmatpush2.bf16.msra.mxu0 0
        %3805 = vmatprep.subr.bf16.mxu0 %v3593
        %3806 = vmatpush2.bf16.msra.mxu0 %v3592
        %3807 = vmatprep.subr.bf16.mxu0 %v3587
        %3808 = vmatpush2.bf16.msra.mxu0 %v3586
        %3809 = vmatprep.subr.bf16.mxu0 %v3581
        %3810 = vmatpush2.bf16.msra.mxu0 %v3580
        %3811 = vmatprep.subr.bf16.mxu0 %v3575
        %3812 = vmatpush2.bf16.msra.mxu0 %v3574
        %3813 = vmatprep.subr.bf16.mxu0 %v3569
        %3814 = vmatpush2.bf16.msra.mxu0 %v3568
        %3815 = vmatprep.mubr.bf16.mxu0 %v3675
        %3816 = vmatmul.mubr.bf16.gmra.mxu0 %v3193
        %v3817 = vpop.f32.mrf.mxu0
        %v3818 = vadd.f32 0.0, %v3817
        %v3819 = vpop.f32.mrf.mxu0
        %v3820 = vadd.f32 0.0, %v3819
        %v3821 = vpop.f32.mrf.mxu0
        %v3822 = vadd.f32 0.0, %v3821
        %v3823 = vpop.f32.mrf.mxu0
        %v3824 = vadd.f32 0.0, %v3823
        %3825 = vmatprep.mubr.bf16.mxu0 %v3678
        %3826 = vmatmul.mubr.bf16.gmra.mxu0 %v3195
        %v3827 = vpop.f32.mrf.mxu0
        %v3828 = vadd.f32 0.0, %v3827
        %v3829 = vpop.f32.mrf.mxu0
        %v3830 = vadd.f32 0.0, %v3829
        %v3831 = vpop.f32.mrf.mxu0
        %v3832 = vadd.f32 0.0, %v3831
        %v3833 = vpop.f32.mrf.mxu0
        %v3834 = vadd.f32 0.0, %v3833
        %3835 = vmatprep.mubr.bf16.mxu0 %v3681
        %3836 = vmatmul.mubr.bf16.gmra.mxu0 %v3197
        %v3837 = vpop.f32.mrf.mxu0
        %v3838 = vadd.f32 0.0, %v3837
        %v3839 = vpop.f32.mrf.mxu0
        %v3840 = vadd.f32 0.0, %v3839
        %v3841 = vpop.f32.mrf.mxu0
        %v3842 = vadd.f32 0.0, %v3841
        %v3843 = vpop.f32.mrf.mxu0
        %v3844 = vadd.f32 0.0, %v3843
        %3845 = vmatprep.mubr.bf16.mxu0 %v3684
        %3846 = vmatmul.mubr.bf16.gmra.mxu0 %v3199
        %v3847 = vpop.f32.mrf.mxu0
        %v3848 = vadd.f32 0.0, %v3847
        %v3849 = vpop.f32.mrf.mxu0
        %v3850 = vadd.f32 0.0, %v3849
        %v3851 = vpop.f32.mrf.mxu0
        %v3852 = vadd.f32 0.0, %v3851
        %v3853 = vpop.f32.mrf.mxu0
        %v3854 = vadd.f32 0.0, %v3853
        %3855 = vmatprep.mubr.bf16.mxu0 %v3687
        %3856 = vmatmul.mubr.bf16.gmra.mxu0 %v3201
        %v3857 = vpop.f32.mrf.mxu0
        %v3858 = vadd.f32 0.0, %v3857
        %v3859 = vpop.f32.mrf.mxu0
        %v3860 = vadd.f32 0.0, %v3859
        %v3861 = vpop.f32.mrf.mxu0
        %v3862 = vadd.f32 0.0, %v3861
        %v3863 = vpop.f32.mrf.mxu0
        %v3864 = vadd.f32 0.0, %v3863
        %3865 = vmatprep.mubr.bf16.mxu0 %v3690
        %3866 = vmatmul.mubr.bf16.gmra.mxu0 %v3203
        %v3867 = vpop.f32.mrf.mxu0
        %v3868 = vadd.f32 0.0, %v3867
        %v3869 = vpop.f32.mrf.mxu0
        %v3870 = vadd.f32 0.0, %v3869
        %v3871 = vpop.f32.mrf.mxu0
        %v3872 = vpop.f32.mrf.mxu0
        %3873 = vdwg.mxu0
        %3874 = vmatprep.subr.bf16.mxu0 %v3565
        %3875 = vmatpush1.bf16.msra.mxu0 %v3564
        %3876 = vmatprep.subr.bf16.mxu0 %v3559
        %3877 = vmatpush1.bf16.msra.mxu0 %v3558
        %3878 = vmatprep.subr.bf16.mxu0 %v3553
        %3879 = vmatpush1.bf16.msra.mxu0 %v3552
        %3880 = vmatprep.subr.bf16.mxu0 %v3547
        %3881 = vmatpush1.bf16.msra.mxu0 %v3546
        %3882 = vmatprep.subr.bf16.mxu0 %v3541
        %3883 = vmatpush1.bf16.msra.mxu0 %v3540
        %3884 = vmatprep.subr.bf16.mxu0 %v3535
        %3885 = vmatpush1.bf16.msra.mxu0 %v3534
        %3886 = vmatprep.subr.bf16.mxu0 %v3529
        %3887 = vmatpush1.bf16.msra.mxu0 %v3528
        %3888 = vmatprep.subr.bf16.mxu0 %v3523
        %3889 = vmatpush1.bf16.msra.mxu0 %v3522
        %3890 = vmatprep.subr.bf16.mxu0 0
        %3891 = vmatpush2.bf16.msra.mxu0 0
        %3892 = vmatprep.subr.bf16.mxu0 0
        %3893 = vmatpush2.bf16.msra.mxu0 0
        %3894 = vmatprep.subr.bf16.mxu0 0
        %3895 = vmatpush2.bf16.msra.mxu0 0
        %3896 = vmatprep.subr.bf16.mxu0 %v3595
        %3897 = vmatpush2.bf16.msra.mxu0 %v3594
        %3898 = vmatprep.subr.bf16.mxu0 %v3589
        %3899 = vmatpush2.bf16.msra.mxu0 %v3588
        %3900 = vmatprep.subr.bf16.mxu0 %v3583
        %3901 = vmatpush2.bf16.msra.mxu0 %v3582
        %3902 = vmatprep.subr.bf16.mxu0 %v3577
        %3903 = vmatpush2.bf16.msra.mxu0 %v3576
        %3904 = vmatprep.subr.bf16.mxu0 %v3571
        %3905 = vmatpush2.bf16.msra.mxu0 %v3570
        %3906 = vmatprep.mubr.bf16.mxu0 %v3675
        %3907 = vmatmul.mubr.bf16.gmra.mxu0 %v3193
        %v3908 = vpop.f32.mrf.mxu0
        %v3909 = vadd.f32 0.0, %v3908
        %v3910 = vpop.f32.mrf.mxu0
        %v3911 = vadd.f32 0.0, %v3910
        %v3912 = vpop.f32.mrf.mxu0
        %v3913 = vadd.f32 0.0, %v3912
        %v3914 = vpop.f32.mrf.mxu0
        %v3915 = vadd.f32 0.0, %v3914
        %3916 = vmatprep.mubr.bf16.mxu0 %v3678
        %3917 = vmatmul.mubr.bf16.gmra.mxu0 %v3195
        %v3918 = vpop.f32.mrf.mxu0
        %v3919 = vadd.f32 0.0, %v3918
        %v3920 = vpop.f32.mrf.mxu0
        %v3921 = vadd.f32 0.0, %v3920
        %v3922 = vpop.f32.mrf.mxu0
        %v3923 = vadd.f32 0.0, %v3922
        %v3924 = vpop.f32.mrf.mxu0
        %v3925 = vadd.f32 0.0, %v3924
        %3926 = vmatprep.mubr.bf16.mxu0 %v3681
        %3927 = vmatmul.mubr.bf16.gmra.mxu0 %v3197
        %v3928 = vpop.f32.mrf.mxu0
        %v3929 = vadd.f32 0.0, %v3928
        %v3930 = vpop.f32.mrf.mxu0
        %v3931 = vadd.f32 0.0, %v3930
        %v3932 = vpop.f32.mrf.mxu0
        %v3933 = vadd.f32 0.0, %v3932
        %v3934 = vpop.f32.mrf.mxu0
        %v3935 = vadd.f32 0.0, %v3934
        %3936 = vmatprep.mubr.bf16.mxu0 %v3684
        %3937 = vmatmul.mubr.bf16.gmra.mxu0 %v3199
        %v3938 = vpop.f32.mrf.mxu0
        %v3939 = vadd.f32 0.0, %v3938
        %v3940 = vpop.f32.mrf.mxu0
        %v3941 = vadd.f32 0.0, %v3940
        %v3942 = vpop.f32.mrf.mxu0
        %v3943 = vadd.f32 0.0, %v3942
        %v3944 = vpop.f32.mrf.mxu0
        %v3945 = vadd.f32 0.0, %v3944
        %3946 = vmatprep.mubr.bf16.mxu0 %v3687
        %3947 = vmatmul.mubr.bf16.gmra.mxu0 %v3201
        %v3948 = vpop.f32.mrf.mxu0
        %v3949 = vadd.f32 0.0, %v3948
        %v3950 = vpop.f32.mrf.mxu0
        %v3951 = vadd.f32 0.0, %v3950
        %v3952 = vpop.f32.mrf.mxu0
        %v3953 = vadd.f32 0.0, %v3952
        %v3954 = vpop.f32.mrf.mxu0
        %v3955 = vadd.f32 0.0, %v3954
        %3956 = vmatprep.mubr.bf16.mxu0 %v3690
        %3957 = vmatmul.mubr.bf16.gmra.mxu0 %v3203
        %v3958 = vpop.f32.mrf.mxu0
        %v3959 = vadd.f32 0.0, %v3958
        %v3960 = vpop.f32.mrf.mxu0
        %v3961 = vadd.f32 0.0, %v3960
        %v3962 = vpop.f32.mrf.mxu0
        %v3963 = vpop.f32.mrf.mxu0
        %3964 = vdwg.mxu0
        %v3965 = vadd.f32 %v2955, %v3727
        %v3966 = vadd.f32 %v2956, %v3729
        %v3967 = vadd.f32 %v2957, %v3818
        %v3968 = vadd.f32 %v2958, %v3820
        %v3969 = vadd.f32 %v2959, %v3909
        %v3970 = vadd.f32 %v2960, %v3911
        %v3971 = vadd.f32 %v2961, %v3731
        %v3972 = vadd.f32 %v2962, %v3733
        %v3973 = vadd.f32 %v2963, %v3822
        %v3974 = vadd.f32 %v2964, %v3824
        %v3975 = vadd.f32 %v2965, %v3913
        %v3976 = vadd.f32 %v2966, %v3915
        %v3977 = vadd.f32 %v2967, %v3737
        %v3978 = vadd.f32 %v2968, %v3739
        %v3979 = vadd.f32 %v2969, %v3828
        %v3980 = vadd.f32 %v2970, %v3830
        %v3981 = vadd.f32 %v2971, %v3919
        %v3982 = vadd.f32 %v2972, %v3921
        %v3983 = vadd.f32 %v2973, %v3741
        %v3984 = vadd.f32 %v2974, %v3743
        %v3985 = vadd.f32 %v2975, %v3832
        %v3986 = vadd.f32 %v2976, %v3834
        %v3987 = vadd.f32 %v2977, %v3923
        %v3988 = vadd.f32 %v2978, %v3925
        %v3989 = vadd.f32 %v2979, %v3747
        %v3990 = vadd.f32 %v2980, %v3749
        %v3991 = vadd.f32 %v2981, %v3838
        %v3992 = vadd.f32 %v2982, %v3840
        %v3993 = vadd.f32 %v2983, %v3929
        %v3994 = vadd.f32 %v2984, %v3931
        %v3995 = vadd.f32 %v2985, %v3751
        %v3996 = vadd.f32 %v2986, %v3753
        %v3997 = vadd.f32 %v2987, %v3842
        %v3998 = vadd.f32 %v2988, %v3844
        %v3999 = vadd.f32 %v2989, %v3933
        %v4000 = vadd.f32 %v2990, %v3935
        %v4001 = vadd.f32 %v2991, %v3757
        %v4002 = vadd.f32 %v2992, %v3759
        %v4003 = vadd.f32 %v2993, %v3848
        %v4004 = vadd.f32 %v2994, %v3850
        %v4005 = vadd.f32 %v2995, %v3939
        %v4006 = vadd.f32 %v2996, %v3941
        %v4007 = vadd.f32 %v2997, %v3761
        %v4008 = vadd.f32 %v2998, %v3763
        %v4009 = vadd.f32 %v2999, %v3852
        %v4010 = vadd.f32 %v3000, %v3854
        %v4011 = vadd.f32 %v3001, %v3943
        %v4012 = vadd.f32 %v3002, %v3945
        %v4013 = vadd.f32 %v3003, %v3767
        %v4014 = vadd.f32 %v3004, %v3769
        %v4015 = vadd.f32 %v3005, %v3858
        %v4016 = vadd.f32 %v3006, %v3860
        %v4017 = vadd.f32 %v3007, %v3949
        %v4018 = vadd.f32 %v3008, %v3951
        %v4019 = vadd.f32 %v3009, %v3771
        %v4020 = vadd.f32 %v3010, %v3773
        %v4021 = vadd.f32 %v3011, %v3862
        %v4022 = vadd.f32 %v3012, %v3864
        %v4023 = vadd.f32 %v3013, %v3953
        %v4024 = vadd.f32 %v3014, %v3955
        %v4025 = vadd.f32 %v3015, %v3777
        %v4026 = vadd.f32 %v3016, %v3779
        %v4027 = vadd.f32 %v3017, %v3868
        %v4028 = vadd.f32 %v3018, %v3870
        %v4029 = vadd.f32 %v3019, %v3959
        %v4030 = vadd.f32 %v3020, %v3961
        %s4031 = scalar_lea.vmem %s4, 176
        %v4032 = vld [vmem:[%s4031] sm:$0xff]
        %v4033 = vld [vmem:[%s4031 + $0x8] sm:$0xff]
        %v4034 = vld [vmem:[%s4031 + $0x10] sm:$0xff]
        %v4035 = vld [vmem:[%s4031 + $0x18] sm:$0xff]
        %v4036 = vld [vmem:[%s4031 + $0x20] sm:$0xff]
        %v4037 = vld [vmem:[%s4031 + $0x28] sm:$0xff]
        %v4038 = vld [vmem:[%s4031 + $0x30] sm:$0xff]
        %v4039 = vld [vmem:[%s4031 + $0x38] sm:$0xff]
        %v4040 = vld [vmem:[%s4031 + $0x40] sm:$0xff]
        %v4041 = vld [vmem:[%s4031 + $0x48] sm:$0xff]
        %v4042 = vld [vmem:[%s4031 + $0x50] sm:$0xff]
        %v4054 = vunpack.c.l.b16 %v4032
        %v4055 = vunpack.c.h.b16 %v4032
        %v4056 = vunpack.c.l.b16 %v4033
        %v4057 = vunpack.c.h.b16 %v4033
        %v4058 = vunpack.c.l.b16 %v4034
        %v4059 = vunpack.c.h.b16 %v4034
        %v4060 = vunpack.c.l.b16 %v4035
        %v4061 = vunpack.c.h.b16 %v4035
        %v4062 = vunpack.c.l.b16 %v4036
        %v4063 = vunpack.c.h.b16 %v4036
        %v4064 = vunpack.c.l.b16 %v4037
        %v4065 = vunpack.c.h.b16 %v4037
        %v4066 = vunpack.c.l.b16 %v4038
        %v4067 = vunpack.c.h.b16 %v4038
        %v4068 = vunpack.c.l.b16 %v4039
        %v4069 = vunpack.c.h.b16 %v4039
        %v4070 = vunpack.c.l.b16 %v4040
        %v4071 = vunpack.c.h.b16 %v4040
        %v4072 = vunpack.c.l.b16 %v4041
        %v4073 = vunpack.c.h.b16 %v4041
        %v4074 = vunpack.c.l.b16 %v4042
        %v4075 = vunpack.c.h.b16 %v4042
        %v4076 = vpack.c.b16 %v4056, %v4054
        %v4077 = vpack.c.b16 %v4057, %v4055
        %v4078 = vpack.c.b16 %v4060, %v4058
        %v4079 = vpack.c.b16 %v4061, %v4059
        %v4080 = vpack.c.b16 %v4064, %v4062
        %v4081 = vpack.c.b16 %v4065, %v4063
        %v4082 = vpack.c.b16 %v4068, %v4066
        %v4083 = vpack.c.b16 %v4069, %v4067
        %v4084 = vpack.c.b16 %v4072, %v4070
        %v4085 = vpack.c.b16 %v4073, %v4071
        %v4086 = vpack.c.b16 %v4074, %v4074
        %v4087 = vpack.c.b16 %v4075, %v4075
        %v4095 = vsel %vm2043, %v4077, 0
        %v4098 = vsel %vm2043, %v4079, 0
        %v4101 = vsel %vm2043, %v4081, 0
        %v4104 = vsel %vm2043, %v4083, 0
        %v4107 = vsel %vm2043, %v4085, 0
        %v4110 = vsel %vm2043, %v4087, 0
        %4112 = vmatprep.subr.bf16.mxu0 %v1969
        %4113 = vmatpush1.bf16.msra.mxu0 %v1968
        %4114 = vmatprep.subr.bf16.mxu0 %v1967
        %4115 = vmatpush1.bf16.msra.mxu0 %v1966
        %4116 = vmatprep.subr.bf16.mxu0 %v1965
        %4117 = vmatpush1.bf16.msra.mxu0 %v1964
        %4118 = vmatprep.subr.bf16.mxu0 %v1963
        %4119 = vmatpush1.bf16.msra.mxu0 %v1962
        %4120 = vmatprep.subr.bf16.mxu0 %v1961
        %4121 = vmatpush1.bf16.msra.mxu0 %v1960
        %4122 = vmatprep.subr.bf16.mxu0 %v1959
        %4123 = vmatpush1.bf16.msra.mxu0 %v1958
        %4124 = vmatprep.subr.bf16.mxu0 %v1957
        %4125 = vmatpush1.bf16.msra.mxu0 %v1956
        %4126 = vmatprep.subr.bf16.mxu0 %v1955
        %4127 = vmatpush1.bf16.msra.mxu0 %v1954
        %4128 = vmatprep.subr.bf16.mxu0 0
        %4129 = vmatpush2.bf16.msra.mxu0 0
        %4130 = vmatprep.subr.bf16.mxu0 0
        %4131 = vmatpush2.bf16.msra.mxu0 0
        %4132 = vmatprep.subr.bf16.mxu0 0
        %4133 = vmatpush2.bf16.msra.mxu0 0
        %4134 = vmatprep.subr.bf16.mxu0 %v1979
        %4135 = vmatpush2.bf16.msra.mxu0 %v1978
        %4136 = vmatprep.subr.bf16.mxu0 %v1977
        %4137 = vmatpush2.bf16.msra.mxu0 %v1976
        %4138 = vmatprep.subr.bf16.mxu0 %v1975
        %4139 = vmatpush2.bf16.msra.mxu0 %v1974
        %4140 = vmatprep.subr.bf16.mxu0 %v1973
        %4141 = vmatpush2.bf16.msra.mxu0 %v1972
        %4142 = vmatprep.subr.bf16.mxu0 %v1971
        %4143 = vmatpush2.bf16.msra.mxu0 %v1970
        %4144 = vmatprep.mubr.bf16.mxu0 %v4095
        %4145 = vmatmul.mubr.bf16.gmra.mxu0 %v4076
        %v4146 = vpop.f32.mrf.mxu0
        %v4147 = vadd.f32 0.0, %v4146
        %v4148 = vpop.f32.mrf.mxu0
        %v4149 = vadd.f32 0.0, %v4148
        %v4150 = vpop.f32.mrf.mxu0
        %v4151 = vadd.f32 0.0, %v4150
        %v4152 = vpop.f32.mrf.mxu0
        %v4153 = vadd.f32 0.0, %v4152
        %4154 = vmatprep.mubr.bf16.mxu0 %v4098
        %4155 = vmatmul.mubr.bf16.gmra.mxu0 %v4078
        %v4156 = vpop.f32.mrf.mxu0
        %v4157 = vadd.f32 0.0, %v4156
        %v4158 = vpop.f32.mrf.mxu0
        %v4159 = vadd.f32 0.0, %v4158
        %v4160 = vpop.f32.mrf.mxu0
        %v4161 = vadd.f32 0.0, %v4160
        %v4162 = vpop.f32.mrf.mxu0
        %v4163 = vadd.f32 0.0, %v4162
        %4164 = vmatprep.mubr.bf16.mxu0 %v4101
        %4165 = vmatmul.mubr.bf16.gmra.mxu0 %v4080
        %v4166 = vpop.f32.mrf.mxu0
        %v4167 = vadd.f32 0.0, %v4166
        %v4168 = vpop.f32.mrf.mxu0
        %v4169 = vadd.f32 0.0, %v4168
        %v4170 = vpop.f32.mrf.mxu0
        %v4171 = vadd.f32 0.0, %v4170
        %v4172 = vpop.f32.mrf.mxu0
        %v4173 = vadd.f32 0.0, %v4172
        %4174 = vmatprep.mubr.bf16.mxu0 %v4104
        %4175 = vmatmul.mubr.bf16.gmra.mxu0 %v4082
        %v4176 = vpop.f32.mrf.mxu0
        %v4177 = vadd.f32 0.0, %v4176
        %v4178 = vpop.f32.mrf.mxu0
        %v4179 = vadd.f32 0.0, %v4178
        %v4180 = vpop.f32.mrf.mxu0
        %v4181 = vadd.f32 0.0, %v4180
        %v4182 = vpop.f32.mrf.mxu0
        %v4183 = vadd.f32 0.0, %v4182
        %4184 = vmatprep.mubr.bf16.mxu0 %v4107
        %4185 = vmatmul.mubr.bf16.gmra.mxu0 %v4084
        %v4186 = vpop.f32.mrf.mxu0
        %v4187 = vadd.f32 0.0, %v4186
        %v4188 = vpop.f32.mrf.mxu0
        %v4189 = vadd.f32 0.0, %v4188
        %v4190 = vpop.f32.mrf.mxu0
        %v4191 = vadd.f32 0.0, %v4190
        %v4192 = vpop.f32.mrf.mxu0
        %v4193 = vadd.f32 0.0, %v4192
        %4194 = vmatprep.mubr.bf16.mxu0 %v4110
        %4195 = vmatmul.mubr.bf16.gmra.mxu0 %v4086
        %v4196 = vpop.f32.mrf.mxu0
        %v4197 = vadd.f32 0.0, %v4196
        %v4198 = vpop.f32.mrf.mxu0
        %v4199 = vadd.f32 0.0, %v4198
        %v4200 = vpop.f32.mrf.mxu0
        %v4201 = vpop.f32.mrf.mxu0
        %4202 = vdwg.mxu0
        %v4203 = vpack.c.bf16 %v4151, %v4147
        %v4204 = vpack.c.bf16 %v4153, %v4149
        %v4205 = vpack.c.bf16 %v4161, %v4157
        %v4206 = vpack.c.bf16 %v4163, %v4159
        %v4207 = vpack.c.bf16 %v4171, %v4167
        %v4208 = vpack.c.bf16 %v4173, %v4169
        %v4209 = vpack.c.bf16 %v4181, %v4177
        %v4210 = vpack.c.bf16 %v4183, %v4179
        %v4211 = vpack.c.bf16 %v4191, %v4187
        %v4212 = vpack.c.bf16 %v4193, %v4189
        %v4213 = vpack.c.bf16 %v4197, %v4197
        %v4214 = vpack.c.bf16 %v4199, %v4199
        %s4215 = scalar_lea.vmem %s5, 1248
        %v4216 = vld [vmem:[%s4215] sm:$0xff]
        %v4217 = vld [vmem:[%s4215 + $0x8] sm:$0xff]
        %v4218 = vld [vmem:[%s4215 + $0x10] sm:$0xff]
        %v4219 = vld [vmem:[%s4215 + $0x18] sm:$0xff]
        %v4220 = vld [vmem:[%s4215 + $0x20] sm:$0xff]
        %v4221 = vld [vmem:[%s4215 + $0x28] sm:$0xff]
        %v4222 = vld [vmem:[%s4215 + $0x30] sm:$0xff]
        %v4223 = vld [vmem:[%s4215 + $0x38] sm:$0xff]
        %v4224 = vld [vmem:[%s4215 + $0x40] sm:$0xff]
        %v4225 = vld [vmem:[%s4215 + $0x48] sm:$0xff]
        %v4226 = vld [vmem:[%s4215 + $0x50] sm:$0xff]
        %v4227 = vld [vmem:[%s4215 + $0x58] sm:$0xff]
        %v4228 = vld [vmem:[%s4215 + $0x60] sm:$0xff]
        %v4229 = vld [vmem:[%s4215 + $0x68] sm:$0xff]
        %v4230 = vld [vmem:[%s4215 + $0x70] sm:$0xff]
        %v4231 = vld [vmem:[%s4215 + $0x78] sm:$0xff]
        %v4232 = vld [vmem:[%s4215 + $0x80] sm:$0xff]
        %v4233 = vld [vmem:[%s4215 + $0x88] sm:$0xff]
        %v4234 = vld [vmem:[%s4215 + $0x90] sm:$0xff]
        %v4235 = vld [vmem:[%s4215 + $0x98] sm:$0xff]
        %v4236 = vld [vmem:[%s4215 + $0xa0] sm:$0xff]
        %v4237 = vld [vmem:[%s4215 + $0xa8] sm:$0xff]
        %v4238 = vld [vmem:[%s4215 + $0xb0] sm:$0xff]
        %v4239 = vld [vmem:[%s4215 + $0xb8] sm:$0xff]
        %v4240 = vld [vmem:[%s4215 + $0xc0] sm:$0xff]
        %v4241 = vld [vmem:[%s4215 + $0xc8] sm:$0xff]
        %v4242 = vld [vmem:[%s4215 + $0xd0] sm:$0xff]
        %v4243 = vld [vmem:[%s4215 + $0xd8] sm:$0xff]
        %v4244 = vld [vmem:[%s4215 + $0xe0] sm:$0xff]
        %v4245 = vld [vmem:[%s4215 + $0xe8] sm:$0xff]
        %v4246 = vld [vmem:[%s4215 + $0xf0] sm:$0xff]
        %v4247 = vld [vmem:[%s4215 + $0xf8] sm:$0xff]
        %v4248 = vld [vmem:[%s4215 + $0x100] sm:$0xff]
        %v4249 = vld [vmem:[%s4215 + $0x108] sm:$0xff]
        %v4250 = vld [vmem:[%s4215 + $0x110] sm:$0xff]
        %v4251 = vld [vmem:[%s4215 + $0x118] sm:$0xff]
        %v4252 = vld [vmem:[%s4215 + $0x120] sm:$0xff]
        %v4253 = vld [vmem:[%s4215 + $0x128] sm:$0xff]
        %v4254 = vld [vmem:[%s4215 + $0x130] sm:$0xff]
        %v4255 = vld [vmem:[%s4215 + $0x138] sm:$0xff]
        %v4256 = vld [vmem:[%s4215 + $0x140] sm:$0xff]
        %v4257 = vld [vmem:[%s4215 + $0x148] sm:$0xff]
        %v4258 = vld [vmem:[%s4215 + $0x150] sm:$0xff]
        %v4259 = vld [vmem:[%s4215 + $0x158] sm:$0xff]
        %v4260 = vld [vmem:[%s4215 + $0x160] sm:$0xff]
        %v4261 = vld [vmem:[%s4215 + $0x168] sm:$0xff]
        %v4262 = vld [vmem:[%s4215 + $0x170] sm:$0xff]
        %v4263 = vld [vmem:[%s4215 + $0x178] sm:$0xff]
        %v4264 = vld [vmem:[%s4215 + $0x180] sm:$0xff]
        %v4265 = vld [vmem:[%s4215 + $0x188] sm:$0xff]
        %v4266 = vld [vmem:[%s4215 + $0x190] sm:$0xff]
        %v4267 = vld [vmem:[%s4215 + $0x198] sm:$0xff]
        %v4268 = vld [vmem:[%s4215 + $0x1a0] sm:$0xff]
        %v4269 = vld [vmem:[%s4215 + $0x1a8] sm:$0xff]
        %v4270 = vld [vmem:[%s4215 + $0x1b0] sm:$0xff]
        %v4271 = vld [vmem:[%s4215 + $0x1b8] sm:$0xff]
        %v4272 = vld [vmem:[%s4215 + $0x1c0] sm:$0xff]
        %v4273 = vld [vmem:[%s4215 + $0x1c8] sm:$0xff]
        %v4274 = vld [vmem:[%s4215 + $0x1d0] sm:$0xff]
        %v4275 = vld [vmem:[%s4215 + $0x1d8] sm:$0xff]
        %v4276 = vld [vmem:[%s4215 + $0x1e0] sm:$0xff]
        %v4277 = vld [vmem:[%s4215 + $0x1e8] sm:$0xff]
        %v4278 = vld [vmem:[%s4215 + $0x1f0] sm:$0xff]
        %v4279 = vld [vmem:[%s4215 + $0x1f8] sm:$0xff]
        %v4280 = vld [vmem:[%s4215 + $0x200] sm:$0xff]
        %v4281 = vld [vmem:[%s4215 + $0x208] sm:$0xff]
        %v4282 = vld [vmem:[%s4215 + $0x210] sm:$0xff]
        %v4283 = vld [vmem:[%s4215 + $0x218] sm:$0xff]
        %v4284 = vld [vmem:[%s4215 + $0x220] sm:$0xff]
        %v4285 = vld [vmem:[%s4215 + $0x228] sm:$0xff]
        %v4286 = vld [vmem:[%s4215 + $0x230] sm:$0xff]
        %v4287 = vld [vmem:[%s4215 + $0x238] sm:$0xff]
        %v4288 = vld [vmem:[%s4215 + $0x240] sm:$0xff]
        %v4289 = vld [vmem:[%s4215 + $0x248] sm:$0xff]
        %v4290 = vld [vmem:[%s4215 + $0x250] sm:$0xff]
        %v4291 = vld [vmem:[%s4215 + $0x258] sm:$0xff]
        %v4292 = vld [vmem:[%s4215 + $0x260] sm:$0xff]
        %v4293 = vld [vmem:[%s4215 + $0x268] sm:$0xff]
        %v4372 = vunpack.c.l.b16 %v4216
        %v4373 = vunpack.c.h.b16 %v4216
        %v4374 = vunpack.c.l.b16 %v4217
        %v4375 = vunpack.c.h.b16 %v4217
        %v4376 = vunpack.c.l.b16 %v4218
        %v4377 = vunpack.c.h.b16 %v4218
        %v4378 = vunpack.c.l.b16 %v4219
        %v4379 = vunpack.c.h.b16 %v4219
        %v4380 = vunpack.c.l.b16 %v4220
        %v4381 = vunpack.c.h.b16 %v4220
        %v4382 = vunpack.c.l.b16 %v4221
        %v4383 = vunpack.c.h.b16 %v4221
        %v4384 = vunpack.c.l.b16 %v4222
        %v4385 = vunpack.c.h.b16 %v4222
        %v4386 = vunpack.c.l.b16 %v4223
        %v4387 = vunpack.c.h.b16 %v4223
        %v4388 = vunpack.c.l.b16 %v4224
        %v4389 = vunpack.c.h.b16 %v4224
        %v4390 = vunpack.c.l.b16 %v4225
        %v4391 = vunpack.c.h.b16 %v4225
        %v4392 = vunpack.c.l.b16 %v4226
        %v4393 = vunpack.c.h.b16 %v4226
        %v4394 = vunpack.c.l.b16 %v4227
        %v4395 = vunpack.c.h.b16 %v4227
        %v4396 = vunpack.c.l.b16 %v4228
        %v4397 = vunpack.c.h.b16 %v4228
        %v4398 = vunpack.c.l.b16 %v4229
        %v4399 = vunpack.c.h.b16 %v4229
        %v4400 = vunpack.c.l.b16 %v4230
        %v4401 = vunpack.c.h.b16 %v4230
        %v4402 = vunpack.c.l.b16 %v4231
        %v4403 = vunpack.c.h.b16 %v4231
        %v4404 = vunpack.c.l.b16 %v4232
        %v4405 = vunpack.c.h.b16 %v4232
        %v4406 = vunpack.c.l.b16 %v4233
        %v4407 = vunpack.c.h.b16 %v4233
        %v4408 = vunpack.c.l.b16 %v4234
        %v4409 = vunpack.c.h.b16 %v4234
        %v4410 = vunpack.c.l.b16 %v4235
        %v4411 = vunpack.c.h.b16 %v4235
        %v4412 = vunpack.c.l.b16 %v4236
        %v4413 = vunpack.c.h.b16 %v4236
        %v4414 = vunpack.c.l.b16 %v4237
        %v4415 = vunpack.c.h.b16 %v4237
        %v4416 = vunpack.c.l.b16 %v4238
        %v4417 = vunpack.c.h.b16 %v4238
        %v4418 = vunpack.c.l.b16 %v4239
        %v4419 = vunpack.c.h.b16 %v4239
        %v4420 = vunpack.c.l.b16 %v4240
        %v4421 = vunpack.c.h.b16 %v4240
        %v4422 = vunpack.c.l.b16 %v4241
        %v4423 = vunpack.c.h.b16 %v4241
        %v4424 = vunpack.c.l.b16 %v4242
        %v4425 = vunpack.c.h.b16 %v4242
        %v4426 = vunpack.c.l.b16 %v4243
        %v4427 = vunpack.c.h.b16 %v4243
        %v4428 = vunpack.c.l.b16 %v4244
        %v4429 = vunpack.c.h.b16 %v4244
        %v4430 = vunpack.c.l.b16 %v4245
        %v4431 = vunpack.c.h.b16 %v4245
        %v4432 = vunpack.c.l.b16 %v4246
        %v4433 = vunpack.c.h.b16 %v4246
        %v4434 = vunpack.c.l.b16 %v4247
        %v4435 = vunpack.c.h.b16 %v4247
        %v4436 = vunpack.c.l.b16 %v4248
        %v4437 = vunpack.c.h.b16 %v4248
        %v4438 = vunpack.c.l.b16 %v4249
        %v4439 = vunpack.c.h.b16 %v4249
        %v4440 = vunpack.c.l.b16 %v4250
        %v4441 = vunpack.c.h.b16 %v4250
        %v4442 = vunpack.c.l.b16 %v4251
        %v4443 = vunpack.c.h.b16 %v4251
        %v4444 = vunpack.c.l.b16 %v4252
        %v4445 = vunpack.c.h.b16 %v4252
        %v4446 = vunpack.c.l.b16 %v4253
        %v4447 = vunpack.c.h.b16 %v4253
        %v4448 = vunpack.c.l.b16 %v4254
        %v4449 = vunpack.c.h.b16 %v4254
        %v4450 = vunpack.c.l.b16 %v4255
        %v4451 = vunpack.c.h.b16 %v4255
        %v4452 = vunpack.c.l.b16 %v4256
        %v4453 = vunpack.c.h.b16 %v4256
        %v4454 = vunpack.c.l.b16 %v4257
        %v4455 = vunpack.c.h.b16 %v4257
        %v4456 = vunpack.c.l.b16 %v4258
        %v4457 = vunpack.c.h.b16 %v4258
        %v4458 = vunpack.c.l.b16 %v4259
        %v4459 = vunpack.c.h.b16 %v4259
        %v4460 = vunpack.c.l.b16 %v4260
        %v4461 = vunpack.c.h.b16 %v4260
        %v4462 = vunpack.c.l.b16 %v4261
        %v4463 = vunpack.c.h.b16 %v4261
        %v4464 = vunpack.c.l.b16 %v4262
        %v4465 = vunpack.c.h.b16 %v4262
        %v4466 = vunpack.c.l.b16 %v4263
        %v4467 = vunpack.c.h.b16 %v4263
        %v4468 = vunpack.c.l.b16 %v4264
        %v4469 = vunpack.c.h.b16 %v4264
        %v4470 = vunpack.c.l.b16 %v4265
        %v4471 = vunpack.c.h.b16 %v4265
        %v4472 = vunpack.c.l.b16 %v4266
        %v4473 = vunpack.c.h.b16 %v4266
        %v4474 = vunpack.c.l.b16 %v4267
        %v4475 = vunpack.c.h.b16 %v4267
        %v4476 = vunpack.c.l.b16 %v4268
        %v4477 = vunpack.c.h.b16 %v4268
        %v4478 = vunpack.c.l.b16 %v4269
        %v4479 = vunpack.c.h.b16 %v4269
        %v4480 = vunpack.c.l.b16 %v4270
        %v4481 = vunpack.c.h.b16 %v4270
        %v4482 = vunpack.c.l.b16 %v4271
        %v4483 = vunpack.c.h.b16 %v4271
        %v4484 = vunpack.c.l.b16 %v4272
        %v4485 = vunpack.c.h.b16 %v4272
        %v4486 = vunpack.c.l.b16 %v4273
        %v4487 = vunpack.c.h.b16 %v4273
        %v4488 = vunpack.c.l.b16 %v4274
        %v4489 = vunpack.c.h.b16 %v4274
        %v4490 = vunpack.c.l.b16 %v4275
        %v4491 = vunpack.c.h.b16 %v4275
        %v4492 = vunpack.c.l.b16 %v4276
        %v4493 = vunpack.c.h.b16 %v4276
        %v4494 = vunpack.c.l.b16 %v4277
        %v4495 = vunpack.c.h.b16 %v4277
        %v4496 = vunpack.c.l.b16 %v4278
        %v4497 = vunpack.c.h.b16 %v4278
        %v4498 = vunpack.c.l.b16 %v4279
        %v4499 = vunpack.c.h.b16 %v4279
        %v4500 = vunpack.c.l.b16 %v4280
        %v4501 = vunpack.c.h.b16 %v4280
        %v4502 = vunpack.c.l.b16 %v4281
        %v4503 = vunpack.c.h.b16 %v4281
        %v4504 = vunpack.c.l.b16 %v4282
        %v4505 = vunpack.c.h.b16 %v4282
        %v4506 = vunpack.c.l.b16 %v4283
        %v4507 = vunpack.c.h.b16 %v4283
        %v4508 = vunpack.c.l.b16 %v4284
        %v4509 = vunpack.c.h.b16 %v4284
        %v4510 = vunpack.c.l.b16 %v4285
        %v4511 = vunpack.c.h.b16 %v4285
        %v4512 = vunpack.c.l.b16 %v4286
        %v4513 = vunpack.c.h.b16 %v4286
        %v4514 = vunpack.c.l.b16 %v4287
        %v4515 = vunpack.c.h.b16 %v4287
        %v4516 = vunpack.c.l.b16 %v4288
        %v4517 = vunpack.c.h.b16 %v4288
        %v4518 = vunpack.c.l.b16 %v4289
        %v4519 = vunpack.c.h.b16 %v4289
        %v4520 = vunpack.c.l.b16 %v4290
        %v4521 = vunpack.c.h.b16 %v4290
        %v4522 = vunpack.c.l.b16 %v4291
        %v4523 = vunpack.c.h.b16 %v4291
        %v4524 = vunpack.c.l.b16 %v4292
        %v4525 = vunpack.c.h.b16 %v4292
        %v4526 = vunpack.c.l.b16 %v4293
        %v4527 = vunpack.c.h.b16 %v4293
        %v4528 = vpack.c.b16 %v4378, %v4372
        %v4529 = vpack.c.b16 %v4379, %v4373
        %v4530 = vpack.c.b16 %v4380, %v4374
        %v4531 = vpack.c.b16 %v4381, %v4375
        %v4532 = vpack.c.b16 %v4382, %v4376
        %v4533 = vpack.c.b16 %v4383, %v4377
        %v4534 = vpack.c.b16 %v4390, %v4384
        %v4535 = vpack.c.b16 %v4391, %v4385
        %v4536 = vpack.c.b16 %v4392, %v4386
        %v4537 = vpack.c.b16 %v4393, %v4387
        %v4538 = vpack.c.b16 %v4394, %v4388
        %v4539 = vpack.c.b16 %v4395, %v4389
        %v4540 = vpack.c.b16 %v4402, %v4396
        %v4541 = vpack.c.b16 %v4403, %v4397
        %v4542 = vpack.c.b16 %v4404, %v4398
        %v4543 = vpack.c.b16 %v4405, %v4399
        %v4544 = vpack.c.b16 %v4406, %v4400
        %v4545 = vpack.c.b16 %v4407, %v4401
        %v4546 = vpack.c.b16 %v4414, %v4408
        %v4547 = vpack.c.b16 %v4415, %v4409
        %v4548 = vpack.c.b16 %v4416, %v4410
        %v4549 = vpack.c.b16 %v4417, %v4411
        %v4550 = vpack.c.b16 %v4418, %v4412
        %v4551 = vpack.c.b16 %v4419, %v4413
        %v4552 = vpack.c.b16 %v4426, %v4420
        %v4553 = vpack.c.b16 %v4427, %v4421
        %v4554 = vpack.c.b16 %v4428, %v4422
        %v4555 = vpack.c.b16 %v4429, %v4423
        %v4556 = vpack.c.b16 %v4430, %v4424
        %v4557 = vpack.c.b16 %v4431, %v4425
        %v4558 = vpack.c.b16 %v4438, %v4432
        %v4559 = vpack.c.b16 %v4439, %v4433
        %v4560 = vpack.c.b16 %v4440, %v4434
        %v4561 = vpack.c.b16 %v4441, %v4435
        %v4562 = vpack.c.b16 %v4442, %v4436
        %v4563 = vpack.c.b16 %v4443, %v4437
        %v4564 = vpack.c.b16 %v4450, %v4444
        %v4565 = vpack.c.b16 %v4451, %v4445
        %v4566 = vpack.c.b16 %v4452, %v4446
        %v4567 = vpack.c.b16 %v4453, %v4447
        %v4568 = vpack.c.b16 %v4454, %v4448
        %v4569 = vpack.c.b16 %v4455, %v4449
        %v4570 = vpack.c.b16 %v4462, %v4456
        %v4571 = vpack.c.b16 %v4463, %v4457
        %v4572 = vpack.c.b16 %v4464, %v4458
        %v4573 = vpack.c.b16 %v4465, %v4459
        %v4574 = vpack.c.b16 %v4466, %v4460
        %v4575 = vpack.c.b16 %v4467, %v4461
        %v4576 = vpack.c.b16 %v4474, %v4468
        %v4577 = vpack.c.b16 %v4475, %v4469
        %v4578 = vpack.c.b16 %v4476, %v4470
        %v4579 = vpack.c.b16 %v4477, %v4471
        %v4580 = vpack.c.b16 %v4478, %v4472
        %v4581 = vpack.c.b16 %v4479, %v4473
        %v4582 = vpack.c.b16 %v4486, %v4480
        %v4583 = vpack.c.b16 %v4487, %v4481
        %v4584 = vpack.c.b16 %v4488, %v4482
        %v4585 = vpack.c.b16 %v4489, %v4483
        %v4586 = vpack.c.b16 %v4490, %v4484
        %v4587 = vpack.c.b16 %v4491, %v4485
        %v4588 = vpack.c.b16 %v4498, %v4492
        %v4589 = vpack.c.b16 %v4499, %v4493
        %v4590 = vpack.c.b16 %v4500, %v4494
        %v4591 = vpack.c.b16 %v4501, %v4495
        %v4592 = vpack.c.b16 %v4502, %v4496
        %v4593 = vpack.c.b16 %v4503, %v4497
        %v4594 = vpack.c.b16 %v4510, %v4504
        %v4595 = vpack.c.b16 %v4511, %v4505
        %v4596 = vpack.c.b16 %v4512, %v4506
        %v4597 = vpack.c.b16 %v4513, %v4507
        %v4598 = vpack.c.b16 %v4514, %v4508
        %v4599 = vpack.c.b16 %v4515, %v4509
        %v4600 = vpack.c.b16 %v4522, %v4516
        %v4601 = vpack.c.b16 %v4523, %v4517
        %v4602 = vpack.c.b16 %v4524, %v4518
        %v4603 = vpack.c.b16 %v4525, %v4519
        %v4604 = vpack.c.b16 %v4526, %v4520
        %v4605 = vpack.c.b16 %v4527, %v4521
        %v4685 = vsel %vm2043, %v4204, 0
        %v4688 = vsel %vm2043, %v4206, 0
        %v4691 = vsel %vm2043, %v4208, 0
        %v4694 = vsel %vm2043, %v4210, 0
        %v4697 = vsel %vm2043, %v4212, 0
        %v4700 = vsel %vm2043, %v4214, 0
        %4702 = vmatprep.subr.bf16.mxu0 %v4571
        %4703 = vmatpush1.bf16.msra.mxu0 %v4570
        %4704 = vmatprep.subr.bf16.mxu0 %v4565
        %4705 = vmatpush1.bf16.msra.mxu0 %v4564
        %4706 = vmatprep.subr.bf16.mxu0 %v4559
        %4707 = vmatpush1.bf16.msra.mxu0 %v4558
        %4708 = vmatprep.subr.bf16.mxu0 %v4553
        %4709 = vmatpush1.bf16.msra.mxu0 %v4552
        %4710 = vmatprep.subr.bf16.mxu0 %v4547
        %4711 = vmatpush1.bf16.msra.mxu0 %v4546
        %4712 = vmatprep.subr.bf16.mxu0 %v4541
        %4713 = vmatpush1.bf16.msra.mxu0 %v4540
        %4714 = vmatprep.subr.bf16.mxu0 %v4535
        %4715 = vmatpush1.bf16.msra.mxu0 %v4534
        %4716 = vmatprep.subr.bf16.mxu0 %v4529
        %4717 = vmatpush1.bf16.msra.mxu0 %v4528
        %4718 = vmatprep.subr.bf16.mxu0 0
        %4719 = vmatpush2.bf16.msra.mxu0 0
        %4720 = vmatprep.subr.bf16.mxu0 0
        %4721 = vmatpush2.bf16.msra.mxu0 0
        %4722 = vmatprep.subr.bf16.mxu0 0
        %4723 = vmatpush2.bf16.msra.mxu0 0
        %4724 = vmatprep.subr.bf16.mxu0 %v4601
        %4725 = vmatpush2.bf16.msra.mxu0 %v4600
        %4726 = vmatprep.subr.bf16.mxu0 %v4595
        %4727 = vmatpush2.bf16.msra.mxu0 %v4594
        %4728 = vmatprep.subr.bf16.mxu0 %v4589
        %4729 = vmatpush2.bf16.msra.mxu0 %v4588
        %4730 = vmatprep.subr.bf16.mxu0 %v4583
        %4731 = vmatpush2.bf16.msra.mxu0 %v4582
        %4732 = vmatprep.subr.bf16.mxu0 %v4577
        %4733 = vmatpush2.bf16.msra.mxu0 %v4576
        %4734 = vmatprep.mubr.bf16.mxu0 %v4685
        %4735 = vmatmul.mubr.bf16.gmra.mxu0 %v4203
        %v4736 = vpop.f32.mrf.mxu0
        %v4737 = vadd.f32 0.0, %v4736
        %v4738 = vpop.f32.mrf.mxu0
        %v4739 = vadd.f32 0.0, %v4738
        %v4740 = vpop.f32.mrf.mxu0
        %v4741 = vadd.f32 0.0, %v4740
        %v4742 = vpop.f32.mrf.mxu0
        %v4743 = vadd.f32 0.0, %v4742
        %4744 = vmatprep.mubr.bf16.mxu0 %v4688
        %4745 = vmatmul.mubr.bf16.gmra.mxu0 %v4205
        %v4746 = vpop.f32.mrf.mxu0
        %v4747 = vadd.f32 0.0, %v4746
        %v4748 = vpop.f32.mrf.mxu0
        %v4749 = vadd.f32 0.0, %v4748
        %v4750 = vpop.f32.mrf.mxu0
        %v4751 = vadd.f32 0.0, %v4750
        %v4752 = vpop.f32.mrf.mxu0
        %v4753 = vadd.f32 0.0, %v4752
        %4754 = vmatprep.mubr.bf16.mxu0 %v4691
        %4755 = vmatmul.mubr.bf16.gmra.mxu0 %v4207
        %v4756 = vpop.f32.mrf.mxu0
        %v4757 = vadd.f32 0.0, %v4756
        %v4758 = vpop.f32.mrf.mxu0
        %v4759 = vadd.f32 0.0, %v4758
        %v4760 = vpop.f32.mrf.mxu0
        %v4761 = vadd.f32 0.0, %v4760
        %v4762 = vpop.f32.mrf.mxu0
        %v4763 = vadd.f32 0.0, %v4762
        %4764 = vmatprep.mubr.bf16.mxu0 %v4694
        %4765 = vmatmul.mubr.bf16.gmra.mxu0 %v4209
        %v4766 = vpop.f32.mrf.mxu0
        %v4767 = vadd.f32 0.0, %v4766
        %v4768 = vpop.f32.mrf.mxu0
        %v4769 = vadd.f32 0.0, %v4768
        %v4770 = vpop.f32.mrf.mxu0
        %v4771 = vadd.f32 0.0, %v4770
        %v4772 = vpop.f32.mrf.mxu0
        %v4773 = vadd.f32 0.0, %v4772
        %4774 = vmatprep.mubr.bf16.mxu0 %v4697
        %4775 = vmatmul.mubr.bf16.gmra.mxu0 %v4211
        %v4776 = vpop.f32.mrf.mxu0
        %v4777 = vadd.f32 0.0, %v4776
        %v4778 = vpop.f32.mrf.mxu0
        %v4779 = vadd.f32 0.0, %v4778
        %v4780 = vpop.f32.mrf.mxu0
        %v4781 = vadd.f32 0.0, %v4780
        %v4782 = vpop.f32.mrf.mxu0
        %v4783 = vadd.f32 0.0, %v4782
        %4784 = vmatprep.mubr.bf16.mxu0 %v4700
        %4785 = vmatmul.mubr.bf16.gmra.mxu0 %v4213
        %v4786 = vpop.f32.mrf.mxu0
        %v4787 = vadd.f32 0.0, %v4786
        %v4788 = vpop.f32.mrf.mxu0
        %v4789 = vadd.f32 0.0, %v4788
        %v4790 = vpop.f32.mrf.mxu0
        %v4791 = vpop.f32.mrf.mxu0
        %4792 = vdwg.mxu0
        %4793 = vmatprep.subr.bf16.mxu0 %v4573
        %4794 = vmatpush1.bf16.msra.mxu0 %v4572
        %4795 = vmatprep.subr.bf16.mxu0 %v4567
        %4796 = vmatpush1.bf16.msra.mxu0 %v4566
        %4797 = vmatprep.subr.bf16.mxu0 %v4561
        %4798 = vmatpush1.bf16.msra.mxu0 %v4560
        %4799 = vmatprep.subr.bf16.mxu0 %v4555
        %4800 = vmatpush1.bf16.msra.mxu0 %v4554
        %4801 = vmatprep.subr.bf16.mxu0 %v4549
        %4802 = vmatpush1.bf16.msra.mxu0 %v4548
        %4803 = vmatprep.subr.bf16.mxu0 %v4543
        %4804 = vmatpush1.bf16.msra.mxu0 %v4542
        %4805 = vmatprep.subr.bf16.mxu0 %v4537
        %4806 = vmatpush1.bf16.msra.mxu0 %v4536
        %4807 = vmatprep.subr.bf16.mxu0 %v4531
        %4808 = vmatpush1.bf16.msra.mxu0 %v4530
        %4809 = vmatprep.subr.bf16.mxu0 0
        %4810 = vmatpush2.bf16.msra.mxu0 0
        %4811 = vmatprep.subr.bf16.mxu0 0
        %4812 = vmatpush2.bf16.msra.mxu0 0
        %4813 = vmatprep.subr.bf16.mxu0 0
        %4814 = vmatpush2.bf16.msra.mxu0 0
        %4815 = vmatprep.subr.bf16.mxu0 %v4603
        %4816 = vmatpush2.bf16.msra.mxu0 %v4602
        %4817 = vmatprep.subr.bf16.mxu0 %v4597
        %4818 = vmatpush2.bf16.msra.mxu0 %v4596
        %4819 = vmatprep.subr.bf16.mxu0 %v4591
        %4820 = vmatpush2.bf16.msra.mxu0 %v4590
        %4821 = vmatprep.subr.bf16.mxu0 %v4585
        %4822 = vmatpush2.bf16.msra.mxu0 %v4584
        %4823 = vmatprep.subr.bf16.mxu0 %v4579
        %4824 = vmatpush2.bf16.msra.mxu0 %v4578
        %4825 = vmatprep.mubr.bf16.mxu0 %v4685
        %4826 = vmatmul.mubr.bf16.gmra.mxu0 %v4203
        %v4827 = vpop.f32.mrf.mxu0
        %v4828 = vadd.f32 0.0, %v4827
        %v4829 = vpop.f32.mrf.mxu0
        %v4830 = vadd.f32 0.0, %v4829
        %v4831 = vpop.f32.mrf.mxu0
        %v4832 = vadd.f32 0.0, %v4831
        %v4833 = vpop.f32.mrf.mxu0
        %v4834 = vadd.f32 0.0, %v4833
        %4835 = vmatprep.mubr.bf16.mxu0 %v4688
        %4836 = vmatmul.mubr.bf16.gmra.mxu0 %v4205
        %v4837 = vpop.f32.mrf.mxu0
        %v4838 = vadd.f32 0.0, %v4837
        %v4839 = vpop.f32.mrf.mxu0
        %v4840 = vadd.f32 0.0, %v4839
        %v4841 = vpop.f32.mrf.mxu0
        %v4842 = vadd.f32 0.0, %v4841
        %v4843 = vpop.f32.mrf.mxu0
        %v4844 = vadd.f32 0.0, %v4843
        %4845 = vmatprep.mubr.bf16.mxu0 %v4691
        %4846 = vmatmul.mubr.bf16.gmra.mxu0 %v4207
        %v4847 = vpop.f32.mrf.mxu0
        %v4848 = vadd.f32 0.0, %v4847
        %v4849 = vpop.f32.mrf.mxu0
        %v4850 = vadd.f32 0.0, %v4849
        %v4851 = vpop.f32.mrf.mxu0
        %v4852 = vadd.f32 0.0, %v4851
        %v4853 = vpop.f32.mrf.mxu0
        %v4854 = vadd.f32 0.0, %v4853
        %4855 = vmatprep.mubr.bf16.mxu0 %v4694
        %4856 = vmatmul.mubr.bf16.gmra.mxu0 %v4209
        %v4857 = vpop.f32.mrf.mxu0
        %v4858 = vadd.f32 0.0, %v4857
        %v4859 = vpop.f32.mrf.mxu0
        %v4860 = vadd.f32 0.0, %v4859
        %v4861 = vpop.f32.mrf.mxu0
        %v4862 = vadd.f32 0.0, %v4861
        %v4863 = vpop.f32.mrf.mxu0
        %v4864 = vadd.f32 0.0, %v4863
        %4865 = vmatprep.mubr.bf16.mxu0 %v4697
        %4866 = vmatmul.mubr.bf16.gmra.mxu0 %v4211
        %v4867 = vpop.f32.mrf.mxu0
        %v4868 = vadd.f32 0.0, %v4867
        %v4869 = vpop.f32.mrf.mxu0
        %v4870 = vadd.f32 0.0, %v4869
        %v4871 = vpop.f32.mrf.mxu0
        %v4872 = vadd.f32 0.0, %v4871
        %v4873 = vpop.f32.mrf.mxu0
        %v4874 = vadd.f32 0.0, %v4873
        %4875 = vmatprep.mubr.bf16.mxu0 %v4700
        %4876 = vmatmul.mubr.bf16.gmra.mxu0 %v4213
        %v4877 = vpop.f32.mrf.mxu0
        %v4878 = vadd.f32 0.0, %v4877
        %v4879 = vpop.f32.mrf.mxu0
        %v4880 = vadd.f32 0.0, %v4879
        %v4881 = vpop.f32.mrf.mxu0
        %v4882 = vpop.f32.mrf.mxu0
        %4883 = vdwg.mxu0
        %4884 = vmatprep.subr.bf16.mxu0 %v4575
        %4885 = vmatpush1.bf16.msra.mxu0 %v4574
        %4886 = vmatprep.subr.bf16.mxu0 %v4569
        %4887 = vmatpush1.bf16.msra.mxu0 %v4568
        %4888 = vmatprep.subr.bf16.mxu0 %v4563
        %4889 = vmatpush1.bf16.msra.mxu0 %v4562
        %4890 = vmatprep.subr.bf16.mxu0 %v4557
        %4891 = vmatpush1.bf16.msra.mxu0 %v4556
        %4892 = vmatprep.subr.bf16.mxu0 %v4551
        %4893 = vmatpush1.bf16.msra.mxu0 %v4550
        %4894 = vmatprep.subr.bf16.mxu0 %v4545
        %4895 = vmatpush1.bf16.msra.mxu0 %v4544
        %4896 = vmatprep.subr.bf16.mxu0 %v4539
        %4897 = vmatpush1.bf16.msra.mxu0 %v4538
        %4898 = vmatprep.subr.bf16.mxu0 %v4533
        %4899 = vmatpush1.bf16.msra.mxu0 %v4532
        %4900 = vmatprep.subr.bf16.mxu0 0
        %4901 = vmatpush2.bf16.msra.mxu0 0
        %4902 = vmatprep.subr.bf16.mxu0 0
        %4903 = vmatpush2.bf16.msra.mxu0 0
        %4904 = vmatprep.subr.bf16.mxu0 0
        %4905 = vmatpush2.bf16.msra.mxu0 0
        %4906 = vmatprep.subr.bf16.mxu0 %v4605
        %4907 = vmatpush2.bf16.msra.mxu0 %v4604
        %4908 = vmatprep.subr.bf16.mxu0 %v4599
        %4909 = vmatpush2.bf16.msra.mxu0 %v4598
        %4910 = vmatprep.subr.bf16.mxu0 %v4593
        %4911 = vmatpush2.bf16.msra.mxu0 %v4592
        %4912 = vmatprep.subr.bf16.mxu0 %v4587
        %4913 = vmatpush2.bf16.msra.mxu0 %v4586
        %4914 = vmatprep.subr.bf16.mxu0 %v4581
        %4915 = vmatpush2.bf16.msra.mxu0 %v4580
        %4916 = vmatprep.mubr.bf16.mxu0 %v4685
        %4917 = vmatmul.mubr.bf16.gmra.mxu0 %v4203
        %v4918 = vpop.f32.mrf.mxu0
        %v4919 = vadd.f32 0.0, %v4918
        %v4920 = vpop.f32.mrf.mxu0
        %v4921 = vadd.f32 0.0, %v4920
        %v4922 = vpop.f32.mrf.mxu0
        %v4923 = vadd.f32 0.0, %v4922
        %v4924 = vpop.f32.mrf.mxu0
        %v4925 = vadd.f32 0.0, %v4924
        %4926 = vmatprep.mubr.bf16.mxu0 %v4688
        %4927 = vmatmul.mubr.bf16.gmra.mxu0 %v4205
        %v4928 = vpop.f32.mrf.mxu0
        %v4929 = vadd.f32 0.0, %v4928
        %v4930 = vpop.f32.mrf.mxu0
        %v4931 = vadd.f32 0.0, %v4930
        %v4932 = vpop.f32.mrf.mxu0
        %v4933 = vadd.f32 0.0, %v4932
        %v4934 = vpop.f32.mrf.mxu0
        %v4935 = vadd.f32 0.0, %v4934
        %4936 = vmatprep.mubr.bf16.mxu0 %v4691
        %4937 = vmatmul.mubr.bf16.gmra.mxu0 %v4207
        %v4938 = vpop.f32.mrf.mxu0
        %v4939 = vadd.f32 0.0, %v4938
        %v4940 = vpop.f32.mrf.mxu0
        %v4941 = vadd.f32 0.0, %v4940
        %v4942 = vpop.f32.mrf.mxu0
        %v4943 = vadd.f32 0.0, %v4942
        %v4944 = vpop.f32.mrf.mxu0
        %v4945 = vadd.f32 0.0, %v4944
        %4946 = vmatprep.mubr.bf16.mxu0 %v4694
        %4947 = vmatmul.mubr.bf16.gmra.mxu0 %v4209
        %v4948 = vpop.f32.mrf.mxu0
        %v4949 = vadd.f32 0.0, %v4948
        %v4950 = vpop.f32.mrf.mxu0
        %v4951 = vadd.f32 0.0, %v4950
        %v4952 = vpop.f32.mrf.mxu0
        %v4953 = vadd.f32 0.0, %v4952
        %v4954 = vpop.f32.mrf.mxu0
        %v4955 = vadd.f32 0.0, %v4954
        %4956 = vmatprep.mubr.bf16.mxu0 %v4697
        %4957 = vmatmul.mubr.bf16.gmra.mxu0 %v4211
        %v4958 = vpop.f32.mrf.mxu0
        %v4959 = vadd.f32 0.0, %v4958
        %v4960 = vpop.f32.mrf.mxu0
        %v4961 = vadd.f32 0.0, %v4960
        %v4962 = vpop.f32.mrf.mxu0
        %v4963 = vadd.f32 0.0, %v4962
        %v4964 = vpop.f32.mrf.mxu0
        %v4965 = vadd.f32 0.0, %v4964
        %4966 = vmatprep.mubr.bf16.mxu0 %v4700
        %4967 = vmatmul.mubr.bf16.gmra.mxu0 %v4213
        %v4968 = vpop.f32.mrf.mxu0
        %v4969 = vadd.f32 0.0, %v4968
        %v4970 = vpop.f32.mrf.mxu0
        %v4971 = vadd.f32 0.0, %v4970
        %v4972 = vpop.f32.mrf.mxu0
        %v4973 = vpop.f32.mrf.mxu0
        %4974 = vdwg.mxu0
        %v4975 = vadd.f32 %v3965, %v4737
        %v4976 = vadd.f32 %v3966, %v4739
        %v4977 = vadd.f32 %v3967, %v4828
        %v4978 = vadd.f32 %v3968, %v4830
        %v4979 = vadd.f32 %v3969, %v4919
        %v4980 = vadd.f32 %v3970, %v4921
        %v4981 = vadd.f32 %v3971, %v4741
        %v4982 = vadd.f32 %v3972, %v4743
        %v4983 = vadd.f32 %v3973, %v4832
        %v4984 = vadd.f32 %v3974, %v4834
        %v4985 = vadd.f32 %v3975, %v4923
        %v4986 = vadd.f32 %v3976, %v4925
        %v4987 = vadd.f32 %v3977, %v4747
        %v4988 = vadd.f32 %v3978, %v4749
        %v4989 = vadd.f32 %v3979, %v4838
        %v4990 = vadd.f32 %v3980, %v4840
        %v4991 = vadd.f32 %v3981, %v4929
        %v4992 = vadd.f32 %v3982, %v4931
        %v4993 = vadd.f32 %v3983, %v4751
        %v4994 = vadd.f32 %v3984, %v4753
        %v4995 = vadd.f32 %v3985, %v4842
        %v4996 = vadd.f32 %v3986, %v4844
        %v4997 = vadd.f32 %v3987, %v4933
        %v4998 = vadd.f32 %v3988, %v4935
        %v4999 = vadd.f32 %v3989, %v4757
        %v5000 = vadd.f32 %v3990, %v4759
        %v5001 = vadd.f32 %v3991, %v4848
        %v5002 = vadd.f32 %v3992, %v4850
        %v5003 = vadd.f32 %v3993, %v4939
        %v5004 = vadd.f32 %v3994, %v4941
        %v5005 = vadd.f32 %v3995, %v4761
        %v5006 = vadd.f32 %v3996, %v4763
        %v5007 = vadd.f32 %v3997, %v4852
        %v5008 = vadd.f32 %v3998, %v4854
        %v5009 = vadd.f32 %v3999, %v4943
        %v5010 = vadd.f32 %v4000, %v4945
        %v5011 = vadd.f32 %v4001, %v4767
        %v5012 = vadd.f32 %v4002, %v4769
        %v5013 = vadd.f32 %v4003, %v4858
        %v5014 = vadd.f32 %v4004, %v4860
        %v5015 = vadd.f32 %v4005, %v4949
        %v5016 = vadd.f32 %v4006, %v4951
        %v5017 = vadd.f32 %v4007, %v4771
        %v5018 = vadd.f32 %v4008, %v4773
        %v5019 = vadd.f32 %v4009, %v4862
        %v5020 = vadd.f32 %v4010, %v4864
        %v5021 = vadd.f32 %v4011, %v4953
        %v5022 = vadd.f32 %v4012, %v4955
        %v5023 = vadd.f32 %v4013, %v4777
        %v5024 = vadd.f32 %v4014, %v4779
        %v5025 = vadd.f32 %v4015, %v4868
        %v5026 = vadd.f32 %v4016, %v4870
        %v5027 = vadd.f32 %v4017, %v4959
        %v5028 = vadd.f32 %v4018, %v4961
        %v5029 = vadd.f32 %v4019, %v4781
        %v5030 = vadd.f32 %v4020, %v4783
        %v5031 = vadd.f32 %v4021, %v4872
        %v5032 = vadd.f32 %v4022, %v4874
        %v5033 = vadd.f32 %v4023, %v4963
        %v5034 = vadd.f32 %v4024, %v4965
        %v5035 = vadd.f32 %v4025, %v4787
        %v5036 = vadd.f32 %v4026, %v4789
        %v5037 = vadd.f32 %v4027, %v4878
        %v5038 = vadd.f32 %v4028, %v4880
        %v5039 = vadd.f32 %v4029, %v4969
        %v5040 = vadd.f32 %v4030, %v4971
        %v5041 = vmax.f32 %v4975, 0.0
        %v5042 = vmax.f32 %v4976, 0.0
        %v5043 = vmax.f32 %v4977, 0.0
        %v5044 = vmax.f32 %v4978, 0.0
        %v5045 = vmax.f32 %v4979, 0.0
        %v5046 = vmax.f32 %v4980, 0.0
        %v5047 = vmax.f32 %v4981, 0.0
        %v5048 = vmax.f32 %v4982, 0.0
        %v5049 = vmax.f32 %v4983, 0.0
        %v5050 = vmax.f32 %v4984, 0.0
        %v5051 = vmax.f32 %v4985, 0.0
        %v5052 = vmax.f32 %v4986, 0.0
        %v5053 = vmax.f32 %v4987, 0.0
        %v5054 = vmax.f32 %v4988, 0.0
        %v5055 = vmax.f32 %v4989, 0.0
        %v5056 = vmax.f32 %v4990, 0.0
        %v5057 = vmax.f32 %v4991, 0.0
        %v5058 = vmax.f32 %v4992, 0.0
        %v5059 = vmax.f32 %v4993, 0.0
        %v5060 = vmax.f32 %v4994, 0.0
        %v5061 = vmax.f32 %v4995, 0.0
        %v5062 = vmax.f32 %v4996, 0.0
        %v5063 = vmax.f32 %v4997, 0.0
        %v5064 = vmax.f32 %v4998, 0.0
        %v5065 = vmax.f32 %v4999, 0.0
        %v5066 = vmax.f32 %v5000, 0.0
        %v5067 = vmax.f32 %v5001, 0.0
        %v5068 = vmax.f32 %v5002, 0.0
        %v5069 = vmax.f32 %v5003, 0.0
        %v5070 = vmax.f32 %v5004, 0.0
        %v5071 = vmax.f32 %v5005, 0.0
        %v5072 = vmax.f32 %v5006, 0.0
        %v5073 = vmax.f32 %v5007, 0.0
        %v5074 = vmax.f32 %v5008, 0.0
        %v5075 = vmax.f32 %v5009, 0.0
        %v5076 = vmax.f32 %v5010, 0.0
        %v5077 = vmax.f32 %v5011, 0.0
        %v5078 = vmax.f32 %v5012, 0.0
        %v5079 = vmax.f32 %v5013, 0.0
        %v5080 = vmax.f32 %v5014, 0.0
        %v5081 = vmax.f32 %v5015, 0.0
        %v5082 = vmax.f32 %v5016, 0.0
        %v5083 = vmax.f32 %v5017, 0.0
        %v5084 = vmax.f32 %v5018, 0.0
        %v5085 = vmax.f32 %v5019, 0.0
        %v5086 = vmax.f32 %v5020, 0.0
        %v5087 = vmax.f32 %v5021, 0.0
        %v5088 = vmax.f32 %v5022, 0.0
        %v5089 = vmax.f32 %v5023, 0.0
        %v5090 = vmax.f32 %v5024, 0.0
        %v5091 = vmax.f32 %v5025, 0.0
        %v5092 = vmax.f32 %v5026, 0.0
        %v5093 = vmax.f32 %v5027, 0.0
        %v5094 = vmax.f32 %v5028, 0.0
        %v5095 = vmax.f32 %v5029, 0.0
        %v5096 = vmax.f32 %v5030, 0.0
        %v5097 = vmax.f32 %v5031, 0.0
        %v5098 = vmax.f32 %v5032, 0.0
        %v5099 = vmax.f32 %v5033, 0.0
        %v5100 = vmax.f32 %v5034, 0.0
        %v5101 = vmax.f32 %v5035, 0.0
        %v5102 = vmax.f32 %v5036, 0.0
        %v5103 = vmax.f32 %v5037, 0.0
        %v5104 = vmax.f32 %v5038, 0.0
        %v5105 = vmax.f32 %v5039, 0.0
        %v5106 = vmax.f32 %v5040, 0.0
        %v5107 = vpack.c.bf16 %v5047, %v5041
        %v5108 = vpack.c.bf16 %v5048, %v5042
        %v5109 = vpack.c.bf16 %v5049, %v5043
        %v5110 = vpack.c.bf16 %v5050, %v5044
        %v5111 = vpack.c.bf16 %v5051, %v5045
        %v5112 = vpack.c.bf16 %v5052, %v5046
        %v5113 = vpack.c.bf16 %v5059, %v5053
        %v5114 = vpack.c.bf16 %v5060, %v5054
        %v5115 = vpack.c.bf16 %v5061, %v5055
        %v5116 = vpack.c.bf16 %v5062, %v5056
        %v5117 = vpack.c.bf16 %v5063, %v5057
        %v5118 = vpack.c.bf16 %v5064, %v5058
        %v5119 = vpack.c.bf16 %v5071, %v5065
        %v5120 = vpack.c.bf16 %v5072, %v5066
        %v5121 = vpack.c.bf16 %v5073, %v5067
        %v5122 = vpack.c.bf16 %v5074, %v5068
        %v5123 = vpack.c.bf16 %v5075, %v5069
        %v5124 = vpack.c.bf16 %v5076, %v5070
        %v5125 = vpack.c.bf16 %v5083, %v5077
        %v5126 = vpack.c.bf16 %v5084, %v5078
        %v5127 = vpack.c.bf16 %v5085, %v5079
        %v5128 = vpack.c.bf16 %v5086, %v5080
        %v5129 = vpack.c.bf16 %v5087, %v5081
        %v5130 = vpack.c.bf16 %v5088, %v5082
        %v5131 = vpack.c.bf16 %v5095, %v5089
        %v5132 = vpack.c.bf16 %v5096, %v5090
        %v5133 = vpack.c.bf16 %v5097, %v5091
        %v5134 = vpack.c.bf16 %v5098, %v5092
        %v5135 = vpack.c.bf16 %v5099, %v5093
        %v5136 = vpack.c.bf16 %v5100, %v5094
        %v5137 = vpack.c.bf16 %v5101, %v5101
        %v5138 = vpack.c.bf16 %v5102, %v5102
        %v5139 = vpack.c.bf16 %v5103, %v5103
        %v5140 = vpack.c.bf16 %v5104, %v5104
        %v5141 = vpack.c.bf16 %v5105, %v5105
        %v5142 = vpack.c.bf16 %v5106, %v5106
        %v5143 = vld [vmem:[%s7] sm:$0xf]
        %v5144 = vld [vmem:[%s7 + $0x4] sm:$0xf]
        %v5145 = vld [vmem:[%s7 + $0x8] sm:$0xf]
        %v5146 = vld [vmem:[%s7 + $0xc] sm:$0xf]
        %v5147 = vld [vmem:[%s7 + $0x10] sm:$0xf]
        %v5153 = vunpack.c.l.b16 %v5143
        %v5154 = vunpack.c.l.b16 %v5144
        %v5155 = vunpack.c.l.b16 %v5145
        %v5156 = vunpack.c.l.b16 %v5146
        %v5157 = vunpack.c.l.b16 %v5147
        %v5158 = vpack.c.b16 %v5154, %v5153
        %v5159 = vpack.c.b16 %v5156, %v5155
        %v5160 = vpack.c.b16 %v5157, %v5157
        %vm5161 = vcmask 719872
        %v5163 = vsel %vm5161, %v5158, 0
        %v5166 = vsel %vm5161, %v5159, 0
        %v5169 = vsel %vm5161, %v5160, 0
        %vm5171 = vcmask 1043456
        %v5173 = vsel %vm5171, %v5137, 0
        %v5176 = vsel %vm5171, %v5138, 0
        %v5179 = vsel %vm5171, %v5139, 0
        %v5182 = vsel %vm5171, %v5140, 0
        %v5185 = vsel %vm5171, %v5141, 0
        %v5188 = vsel %vm5171, %v5142, 0
        %5190 = vmatprep.subr.bf16.mxu0 0
        %5191 = vmatpush1.bf16.msra.mxu0 0
        %5192 = vmatprep.subr.bf16.mxu0 0
        %5193 = vmatpush1.bf16.msra.mxu0 0
        %5194 = vmatprep.subr.bf16.mxu0 %v5176
        %5195 = vmatpush1.bf16.msra.mxu0 %v5173
        %5196 = vmatprep.subr.bf16.mxu0 %v5132
        %5197 = vmatpush1.bf16.msra.mxu0 %v5131
        %5198 = vmatprep.subr.bf16.mxu0 %v5126
        %5199 = vmatpush1.bf16.msra.mxu0 %v5125
        %5200 = vmatprep.subr.bf16.mxu0 %v5120
        %5201 = vmatpush1.bf16.msra.mxu0 %v5119
        %5202 = vmatprep.subr.bf16.mxu0 %v5114
        %5203 = vmatpush1.bf16.msra.mxu0 %v5113
        %5204 = vmatprep.subr.bf16.mxu0 %v5108
        %5205 = vmatpush1.bf16.msra.mxu0 %v5107
        %5206 = vmatprep.subr.bf16.mxu0 0
        %5207 = vmatpush2.bf16.msra.mxu0 0
        %5208 = vmatprep.subr.bf16.mxu0 0
        %5209 = vmatpush2.bf16.msra.mxu0 0
        %5210 = vmatprep.subr.bf16.mxu0 0
        %5211 = vmatpush2.bf16.msra.mxu0 0
        %5212 = vmatprep.subr.bf16.mxu0 0
        %5213 = vmatpush2.bf16.msra.mxu0 0
        %5214 = vmatprep.subr.bf16.mxu0 0
        %5215 = vmatpush2.bf16.msra.mxu0 0
        %5216 = vmatprep.subr.bf16.mxu0 0
        %5217 = vmatpush2.bf16.msra.mxu0 0
        %5218 = vmatprep.subr.bf16.mxu0 0
        %5219 = vmatpush2.bf16.msra.mxu0 0
        %5220 = vmatprep.subr.bf16.mxu0 0
        %5221 = vmatpush2.bf16.msra.mxu0 0
        %5222 = vmatprep.mubr.bf16.mxu0 0
        %5223 = vmatmul.mubr.bf16.gmra.mxu0 %v5163
        %v5224 = vpop.f32.mrf.mxu0
        %v5225 = vadd.f32 0.0, %v5224
        %v5226 = vpop.f32.mrf.mxu0
        %v5227 = vadd.f32 0.0, %v5226
        %v5228 = vpop.f32.mrf.mxu0
        %v5229 = vadd.f32 0.0, %v5228
        %v5230 = vpop.f32.mrf.mxu0
        %v5231 = vadd.f32 0.0, %v5230
        %5232 = vmatprep.mubr.bf16.mxu0 0
        %5233 = vmatmul.mubr.bf16.gmra.mxu0 %v5166
        %v5234 = vpop.f32.mrf.mxu0
        %v5235 = vadd.f32 0.0, %v5234
        %v5236 = vpop.f32.mrf.mxu0
        %v5237 = vadd.f32 0.0, %v5236
        %v5238 = vpop.f32.mrf.mxu0
        %v5239 = vadd.f32 0.0, %v5238
        %v5240 = vpop.f32.mrf.mxu0
        %v5241 = vadd.f32 0.0, %v5240
        %5242 = vmatprep.mubr.bf16.mxu0 0
        %5243 = vmatmul.mubr.bf16.gmra.mxu0 %v5169
        %v5244 = vpop.f32.mrf.mxu0
        %v5245 = vadd.f32 0.0, %v5244
        %v5246 = vpop.f32.mrf.mxu0
        %v5247 = vadd.f32 0.0, %v5246
        %v5248 = vpop.f32.mrf.mxu0
        %v5249 = vpop.f32.mrf.mxu0
        %5250 = vdwg.mxu0
        %5251 = vmatprep.subr.bf16.mxu0 0
        %5252 = vmatpush1.bf16.msra.mxu0 0
        %5253 = vmatprep.subr.bf16.mxu0 0
        %5254 = vmatpush1.bf16.msra.mxu0 0
        %5255 = vmatprep.subr.bf16.mxu0 %v5182
        %5256 = vmatpush1.bf16.msra.mxu0 %v5179
        %5257 = vmatprep.subr.bf16.mxu0 %v5134
        %5258 = vmatpush1.bf16.msra.mxu0 %v5133
        %5259 = vmatprep.subr.bf16.mxu0 %v5128
        %5260 = vmatpush1.bf16.msra.mxu0 %v5127
        %5261 = vmatprep.subr.bf16.mxu0 %v5122
        %5262 = vmatpush1.bf16.msra.mxu0 %v5121
        %5263 = vmatprep.subr.bf16.mxu0 %v5116
        %5264 = vmatpush1.bf16.msra.mxu0 %v5115
        %5265 = vmatprep.subr.bf16.mxu0 %v5110
        %5266 = vmatpush1.bf16.msra.mxu0 %v5109
        %5267 = vmatprep.subr.bf16.mxu0 0
        %5268 = vmatpush2.bf16.msra.mxu0 0
        %5269 = vmatprep.subr.bf16.mxu0 0
        %5270 = vmatpush2.bf16.msra.mxu0 0
        %5271 = vmatprep.subr.bf16.mxu0 0
        %5272 = vmatpush2.bf16.msra.mxu0 0
        %5273 = vmatprep.subr.bf16.mxu0 0
        %5274 = vmatpush2.bf16.msra.mxu0 0
        %5275 = vmatprep.subr.bf16.mxu0 0
        %5276 = vmatpush2.bf16.msra.mxu0 0
        %5277 = vmatprep.subr.bf16.mxu0 0
        %5278 = vmatpush2.bf16.msra.mxu0 0
        %5279 = vmatprep.subr.bf16.mxu0 0
        %5280 = vmatpush2.bf16.msra.mxu0 0
        %5281 = vmatprep.subr.bf16.mxu0 0
        %5282 = vmatpush2.bf16.msra.mxu0 0
        %5283 = vmatprep.mubr.bf16.mxu0 0
        %5284 = vmatmul.mubr.bf16.gmra.mxu0 %v5163
        %v5285 = vpop.f32.mrf.mxu0
        %v5286 = vadd.f32 0.0, %v5285
        %v5287 = vpop.f32.mrf.mxu0
        %v5288 = vadd.f32 0.0, %v5287
        %v5289 = vpop.f32.mrf.mxu0
        %v5290 = vadd.f32 0.0, %v5289
        %v5291 = vpop.f32.mrf.mxu0
        %v5292 = vadd.f32 0.0, %v5291
        %5293 = vmatprep.mubr.bf16.mxu0 0
        %5294 = vmatmul.mubr.bf16.gmra.mxu0 %v5166
        %v5295 = vpop.f32.mrf.mxu0
        %v5296 = vadd.f32 0.0, %v5295
        %v5297 = vpop.f32.mrf.mxu0
        %v5298 = vadd.f32 0.0, %v5297
        %v5299 = vpop.f32.mrf.mxu0
        %v5300 = vadd.f32 0.0, %v5299
        %v5301 = vpop.f32.mrf.mxu0
        %v5302 = vadd.f32 0.0, %v5301
        %5303 = vmatprep.mubr.bf16.mxu0 0
        %5304 = vmatmul.mubr.bf16.gmra.mxu0 %v5169
        %v5305 = vpop.f32.mrf.mxu0
        %v5306 = vadd.f32 0.0, %v5305
        %v5307 = vpop.f32.mrf.mxu0
        %v5308 = vadd.f32 0.0, %v5307
        %v5309 = vpop.f32.mrf.mxu0
        %v5310 = vpop.f32.mrf.mxu0
        %5311 = vdwg.mxu0
        %5312 = vmatprep.subr.bf16.mxu0 0
        %5313 = vmatpush1.bf16.msra.mxu0 0
        %5314 = vmatprep.subr.bf16.mxu0 0
        %5315 = vmatpush1.bf16.msra.mxu0 0
        %5316 = vmatprep.subr.bf16.mxu0 %v5188
        %5317 = vmatpush1.bf16.msra.mxu0 %v5185
        %5318 = vmatprep.subr.bf16.mxu0 %v5136
        %5319 = vmatpush1.bf16.msra.mxu0 %v5135
        %5320 = vmatprep.subr.bf16.mxu0 %v5130
        %5321 = vmatpush1.bf16.msra.mxu0 %v5129
        %5322 = vmatprep.subr.bf16.mxu0 %v5124
        %5323 = vmatpush1.bf16.msra.mxu0 %v5123
        %5324 = vmatprep.subr.bf16.mxu0 %v5118
        %5325 = vmatpush1.bf16.msra.mxu0 %v5117
        %5326 = vmatprep.subr.bf16.mxu0 %v5112
        %5327 = vmatpush1.bf16.msra.mxu0 %v5111
        %5328 = vmatprep.subr.bf16.mxu0 0
        %5329 = vmatpush2.bf16.msra.mxu0 0
        %5330 = vmatprep.subr.bf16.mxu0 0
        %5331 = vmatpush2.bf16.msra.mxu0 0
        %5332 = vmatprep.subr.bf16.mxu0 0
        %5333 = vmatpush2.bf16.msra.mxu0 0
        %5334 = vmatprep.subr.bf16.mxu0 0
        %5335 = vmatpush2.bf16.msra.mxu0 0
        %5336 = vmatprep.subr.bf16.mxu0 0
        %5337 = vmatpush2.bf16.msra.mxu0 0
        %5338 = vmatprep.subr.bf16.mxu0 0
        %5339 = vmatpush2.bf16.msra.mxu0 0
        %5340 = vmatprep.subr.bf16.mxu0 0
        %5341 = vmatpush2.bf16.msra.mxu0 0
        %5342 = vmatprep.subr.bf16.mxu0 0
        %5343 = vmatpush2.bf16.msra.mxu0 0
        %5344 = vmatprep.mubr.bf16.mxu0 0
        %5345 = vmatmul.mubr.bf16.gmra.mxu0 %v5163
        %v5346 = vpop.f32.mrf.mxu0
        %v5347 = vadd.f32 0.0, %v5346
        %v5348 = vpop.f32.mrf.mxu0
        %v5349 = vadd.f32 0.0, %v5348
        %v5350 = vpop.f32.mrf.mxu0
        %v5351 = vadd.f32 0.0, %v5350
        %v5352 = vpop.f32.mrf.mxu0
        %v5353 = vadd.f32 0.0, %v5352
        %5354 = vmatprep.mubr.bf16.mxu0 0
        %5355 = vmatmul.mubr.bf16.gmra.mxu0 %v5166
        %v5356 = vpop.f32.mrf.mxu0
        %v5357 = vadd.f32 0.0, %v5356
        %v5358 = vpop.f32.mrf.mxu0
        %v5359 = vadd.f32 0.0, %v5358
        %v5360 = vpop.f32.mrf.mxu0
        %v5361 = vadd.f32 0.0, %v5360
        %v5362 = vpop.f32.mrf.mxu0
        %v5363 = vadd.f32 0.0, %v5362
        %5364 = vmatprep.mubr.bf16.mxu0 0
        %5365 = vmatmul.mubr.bf16.gmra.mxu0 %v5169
        %v5366 = vpop.f32.mrf.mxu0
        %v5367 = vadd.f32 0.0, %v5366
        %v5368 = vpop.f32.mrf.mxu0
        %v5369 = vadd.f32 0.0, %v5368
        %v5370 = vpop.f32.mrf.mxu0
        %v5371 = vpop.f32.mrf.mxu0
        %5372 = vdwg.mxu0
        %v5373 = vld [vmem:[%s8] sm:$0xf]
        %v5374 = vld [vmem:[%s8 + $0x4] sm:$0xf]
        %v5375 = vld [vmem:[%s8 + $0x8] sm:$0xf]
        %v5376 = vld [vmem:[%s8 + $0xc] sm:$0xf]
        %v5377 = vld [vmem:[%s8 + $0x10] sm:$0xf]
        %v5383 = vunpack.c.l.b16 %v5373
        %v5384 = vunpack.c.l.b16 %v5374
        %v5385 = vunpack.c.l.b16 %v5375
        %v5386 = vunpack.c.l.b16 %v5376
        %v5387 = vunpack.c.l.b16 %v5377
        %v5388 = vpack.c.b16 %v5384, %v5383
        %v5389 = vpack.c.b16 %v5386, %v5385
        %v5390 = vpack.c.b16 %v5387, %v5387
        %v5392 = vsel %vm5161, %v5388, 0
        %v5395 = vsel %vm5161, %v5389, 0
        %v5398 = vsel %vm5161, %v5390, 0
        %5400 = vmatprep.subr.bf16.mxu0 0
        %5401 = vmatpush1.bf16.msra.mxu0 0
        %5402 = vmatprep.subr.bf16.mxu0 0
        %5403 = vmatpush1.bf16.msra.mxu0 0
        %5404 = vmatprep.subr.bf16.mxu0 %v5176
        %5405 = vmatpush1.bf16.msra.mxu0 %v5173
        %5406 = vmatprep.subr.bf16.mxu0 %v5132
        %5407 = vmatpush1.bf16.msra.mxu0 %v5131
        %5408 = vmatprep.subr.bf16.mxu0 %v5126
        %5409 = vmatpush1.bf16.msra.mxu0 %v5125
        %5410 = vmatprep.subr.bf16.mxu0 %v5120
        %5411 = vmatpush1.bf16.msra.mxu0 %v5119
        %5412 = vmatprep.subr.bf16.mxu0 %v5114
        %5413 = vmatpush1.bf16.msra.mxu0 %v5113
        %5414 = vmatprep.subr.bf16.mxu0 %v5108
        %5415 = vmatpush1.bf16.msra.mxu0 %v5107
        %5416 = vmatprep.subr.bf16.mxu0 0
        %5417 = vmatpush2.bf16.msra.mxu0 0
        %5418 = vmatprep.subr.bf16.mxu0 0
        %5419 = vmatpush2.bf16.msra.mxu0 0
        %5420 = vmatprep.subr.bf16.mxu0 0
        %5421 = vmatpush2.bf16.msra.mxu0 0
        %5422 = vmatprep.subr.bf16.mxu0 0
        %5423 = vmatpush2.bf16.msra.mxu0 0
        %5424 = vmatprep.subr.bf16.mxu0 0
        %5425 = vmatpush2.bf16.msra.mxu0 0
        %5426 = vmatprep.subr.bf16.mxu0 0
        %5427 = vmatpush2.bf16.msra.mxu0 0
        %5428 = vmatprep.subr.bf16.mxu0 0
        %5429 = vmatpush2.bf16.msra.mxu0 0
        %5430 = vmatprep.subr.bf16.mxu0 0
        %5431 = vmatpush2.bf16.msra.mxu0 0
        %5432 = vmatprep.mubr.bf16.mxu0 0
        %5433 = vmatmul.mubr.bf16.gmra.mxu0 %v5392
        %v5434 = vpop.f32.mrf.mxu0
        %v5435 = vadd.f32 0.0, %v5434
        %v5436 = vpop.f32.mrf.mxu0
        %v5437 = vadd.f32 0.0, %v5436
        %v5438 = vpop.f32.mrf.mxu0
        %v5439 = vadd.f32 0.0, %v5438
        %v5440 = vpop.f32.mrf.mxu0
        %v5441 = vadd.f32 0.0, %v5440
        %5442 = vmatprep.mubr.bf16.mxu0 0
        %5443 = vmatmul.mubr.bf16.gmra.mxu0 %v5395
        %v5444 = vpop.f32.mrf.mxu0
        %v5445 = vadd.f32 0.0, %v5444
        %v5446 = vpop.f32.mrf.mxu0
        %v5447 = vadd.f32 0.0, %v5446
        %v5448 = vpop.f32.mrf.mxu0
        %v5449 = vadd.f32 0.0, %v5448
        %v5450 = vpop.f32.mrf.mxu0
        %v5451 = vadd.f32 0.0, %v5450
        %5452 = vmatprep.mubr.bf16.mxu0 0
        %5453 = vmatmul.mubr.bf16.gmra.mxu0 %v5398
        %v5454 = vpop.f32.mrf.mxu0
        %v5455 = vadd.f32 0.0, %v5454
        %v5456 = vpop.f32.mrf.mxu0
        %v5457 = vadd.f32 0.0, %v5456
        %v5458 = vpop.f32.mrf.mxu0
        %v5459 = vpop.f32.mrf.mxu0
        %5460 = vdwg.mxu0
        %5461 = vmatprep.subr.bf16.mxu0 0
        %5462 = vmatpush1.bf16.msra.mxu0 0
        %5463 = vmatprep.subr.bf16.mxu0 0
        %5464 = vmatpush1.bf16.msra.mxu0 0
        %5465 = vmatprep.subr.bf16.mxu0 %v5182
        %5466 = vmatpush1.bf16.msra.mxu0 %v5179
        %5467 = vmatprep.subr.bf16.mxu0 %v5134
        %5468 = vmatpush1.bf16.msra.mxu0 %v5133
        %5469 = vmatprep.subr.bf16.mxu0 %v5128
        %5470 = vmatpush1.bf16.msra.mxu0 %v5127
        %5471 = vmatprep.subr.bf16.mxu0 %v5122
        %5472 = vmatpush1.bf16.msra.mxu0 %v5121
        %5473 = vmatprep.subr.bf16.mxu0 %v5116
        %5474 = vmatpush1.bf16.msra.mxu0 %v5115
        %5475 = vmatprep.subr.bf16.mxu0 %v5110
        %5476 = vmatpush1.bf16.msra.mxu0 %v5109
        %5477 = vmatprep.subr.bf16.mxu0 0
        %5478 = vmatpush2.bf16.msra.mxu0 0
        %5479 = vmatprep.subr.bf16.mxu0 0
        %5480 = vmatpush2.bf16.msra.mxu0 0
        %5481 = vmatprep.subr.bf16.mxu0 0
        %5482 = vmatpush2.bf16.msra.mxu0 0
        %5483 = vmatprep.subr.bf16.mxu0 0
        %5484 = vmatpush2.bf16.msra.mxu0 0
        %5485 = vmatprep.subr.bf16.mxu0 0
        %5486 = vmatpush2.bf16.msra.mxu0 0
        %5487 = vmatprep.subr.bf16.mxu0 0
        %5488 = vmatpush2.bf16.msra.mxu0 0
        %5489 = vmatprep.subr.bf16.mxu0 0
        %5490 = vmatpush2.bf16.msra.mxu0 0
        %5491 = vmatprep.subr.bf16.mxu0 0
        %5492 = vmatpush2.bf16.msra.mxu0 0
        %5493 = vmatprep.mubr.bf16.mxu0 0
        %5494 = vmatmul.mubr.bf16.gmra.mxu0 %v5392
        %v5495 = vpop.f32.mrf.mxu0
        %v5496 = vadd.f32 0.0, %v5495
        %v5497 = vpop.f32.mrf.mxu0
        %v5498 = vadd.f32 0.0, %v5497
        %v5499 = vpop.f32.mrf.mxu0
        %v5500 = vadd.f32 0.0, %v5499
        %v5501 = vpop.f32.mrf.mxu0
        %v5502 = vadd.f32 0.0, %v5501
        %5503 = vmatprep.mubr.bf16.mxu0 0
        %5504 = vmatmul.mubr.bf16.gmra.mxu0 %v5395
        %v5505 = vpop.f32.mrf.mxu0
        %v5506 = vadd.f32 0.0, %v5505
        %v5507 = vpop.f32.mrf.mxu0
        %v5508 = vadd.f32 0.0, %v5507
        %v5509 = vpop.f32.mrf.mxu0
        %v5510 = vadd.f32 0.0, %v5509
        %v5511 = vpop.f32.mrf.mxu0
        %v5512 = vadd.f32 0.0, %v5511
        %5513 = vmatprep.mubr.bf16.mxu0 0
        %5514 = vmatmul.mubr.bf16.gmra.mxu0 %v5398
        %v5515 = vpop.f32.mrf.mxu0
        %v5516 = vadd.f32 0.0, %v5515
        %v5517 = vpop.f32.mrf.mxu0
        %v5518 = vadd.f32 0.0, %v5517
        %v5519 = vpop.f32.mrf.mxu0
        %v5520 = vpop.f32.mrf.mxu0
        %5521 = vdwg.mxu0
        %5522 = vmatprep.subr.bf16.mxu0 0
        %5523 = vmatpush1.bf16.msra.mxu0 0
        %5524 = vmatprep.subr.bf16.mxu0 0
        %5525 = vmatpush1.bf16.msra.mxu0 0
        %5526 = vmatprep.subr.bf16.mxu0 %v5188
        %5527 = vmatpush1.bf16.msra.mxu0 %v5185
        %5528 = vmatprep.subr.bf16.mxu0 %v5136
        %5529 = vmatpush1.bf16.msra.mxu0 %v5135
        %5530 = vmatprep.subr.bf16.mxu0 %v5130
        %5531 = vmatpush1.bf16.msra.mxu0 %v5129
        %5532 = vmatprep.subr.bf16.mxu0 %v5124
        %5533 = vmatpush1.bf16.msra.mxu0 %v5123
        %5534 = vmatprep.subr.bf16.mxu0 %v5118
        %5535 = vmatpush1.bf16.msra.mxu0 %v5117
        %5536 = vmatprep.subr.bf16.mxu0 %v5112
        %5537 = vmatpush1.bf16.msra.mxu0 %v5111
        %5538 = vmatprep.subr.bf16.mxu0 0
        %5539 = vmatpush2.bf16.msra.mxu0 0
        %5540 = vmatprep.subr.bf16.mxu0 0
        %5541 = vmatpush2.bf16.msra.mxu0 0
        %5542 = vmatprep.subr.bf16.mxu0 0
        %5543 = vmatpush2.bf16.msra.mxu0 0
        %5544 = vmatprep.subr.bf16.mxu0 0
        %5545 = vmatpush2.bf16.msra.mxu0 0
        %5546 = vmatprep.subr.bf16.mxu0 0
        %5547 = vmatpush2.bf16.msra.mxu0 0
        %5548 = vmatprep.subr.bf16.mxu0 0
        %5549 = vmatpush2.bf16.msra.mxu0 0
        %5550 = vmatprep.subr.bf16.mxu0 0
        %5551 = vmatpush2.bf16.msra.mxu0 0
        %5552 = vmatprep.subr.bf16.mxu0 0
        %5553 = vmatpush2.bf16.msra.mxu0 0
        %5554 = vmatprep.mubr.bf16.mxu0 0
        %5555 = vmatmul.mubr.bf16.gmra.mxu0 %v5392
        %v5556 = vpop.f32.mrf.mxu0
        %v5557 = vadd.f32 0.0, %v5556
        %v5558 = vpop.f32.mrf.mxu0
        %v5559 = vadd.f32 0.0, %v5558
        %v5560 = vpop.f32.mrf.mxu0
        %v5561 = vadd.f32 0.0, %v5560
        %v5562 = vpop.f32.mrf.mxu0
        %v5563 = vadd.f32 0.0, %v5562
        %5564 = vmatprep.mubr.bf16.mxu0 0
        %5565 = vmatmul.mubr.bf16.gmra.mxu0 %v5395
        %v5566 = vpop.f32.mrf.mxu0
        %v5567 = vadd.f32 0.0, %v5566
        %v5568 = vpop.f32.mrf.mxu0
        %v5569 = vadd.f32 0.0, %v5568
        %v5570 = vpop.f32.mrf.mxu0
        %v5571 = vadd.f32 0.0, %v5570
        %v5572 = vpop.f32.mrf.mxu0
        %v5573 = vadd.f32 0.0, %v5572
        %5574 = vmatprep.mubr.bf16.mxu0 0
        %5575 = vmatmul.mubr.bf16.gmra.mxu0 %v5398
        %v5576 = vpop.f32.mrf.mxu0
        %v5577 = vadd.f32 0.0, %v5576
        %v5578 = vpop.f32.mrf.mxu0
        %v5579 = vadd.f32 0.0, %v5578
        %v5580 = vpop.f32.mrf.mxu0
        %v5581 = vpop.f32.mrf.mxu0
        %5582 = vdwg.mxu0
        %v5583 = vmax.f32 %v5225, %v5435
        %v5584 = vmax.f32 %v5227, %v5437
        %v5585 = vmax.f32 %v5286, %v5496
        %v5586 = vmax.f32 %v5288, %v5498
        %v5587 = vmax.f32 %v5347, %v5557
        %v5588 = vmax.f32 %v5349, %v5559
        %v5589 = vmax.f32 %v5229, %v5439
        %v5590 = vmax.f32 %v5231, %v5441
        %v5591 = vmax.f32 %v5290, %v5500
        %v5592 = vmax.f32 %v5292, %v5502
        %v5593 = vmax.f32 %v5351, %v5561
        %v5594 = vmax.f32 %v5353, %v5563
        %v5595 = vmax.f32 %v5235, %v5445
        %v5596 = vmax.f32 %v5237, %v5447
        %v5597 = vmax.f32 %v5296, %v5506
        %v5598 = vmax.f32 %v5298, %v5508
        %v5599 = vmax.f32 %v5357, %v5567
        %v5600 = vmax.f32 %v5359, %v5569
        %v5601 = vmax.f32 %v5239, %v5449
        %v5602 = vmax.f32 %v5241, %v5451
        %v5603 = vmax.f32 %v5300, %v5510
        %v5604 = vmax.f32 %v5302, %v5512
        %v5605 = vmax.f32 %v5361, %v5571
        %v5606 = vmax.f32 %v5363, %v5573
        %v5607 = vmax.f32 %v5245, %v5455
        %v5608 = vmax.f32 %v5247, %v5457
        %v5609 = vmax.f32 %v5306, %v5516
        %v5610 = vmax.f32 %v5308, %v5518
        %v5611 = vmax.f32 %v5367, %v5577
        %v5612 = vmax.f32 %v5369, %v5579
        %v5613 = vpack.c.bf16 %v5589, %v5583
        %v5614 = vpack.c.bf16 %v5590, %v5584
        %v5615 = vpack.c.bf16 %v5591, %v5585
        %v5616 = vpack.c.bf16 %v5592, %v5586
        %v5617 = vpack.c.bf16 %v5593, %v5587
        %v5618 = vpack.c.bf16 %v5594, %v5588
        %v5619 = vpack.c.bf16 %v5601, %v5595
        %v5620 = vpack.c.bf16 %v5602, %v5596
        %v5621 = vpack.c.bf16 %v5603, %v5597
        %v5622 = vpack.c.bf16 %v5604, %v5598
        %v5623 = vpack.c.bf16 %v5605, %v5599
        %v5624 = vpack.c.bf16 %v5606, %v5600
        %v5625 = vpack.c.bf16 %v5607, %v5607
        %v5626 = vpack.c.bf16 %v5608, %v5608
        %v5627 = vpack.c.bf16 %v5609, %v5609
        %v5628 = vpack.c.bf16 %v5610, %v5610
        %v5629 = vpack.c.bf16 %v5611, %v5611
        %v5630 = vpack.c.bf16 %v5612, %v5612
        %v5631 = vld [vmem:[%s9] sm:$0xff]
        %v5632 = vld [vmem:[%s9 + $0x8] sm:$0xf]
        %v5633 = vld [vmem:[%s9 + $0xc] sm:$0xff]
        %v5634 = vld [vmem:[%s9 + $0x14] sm:$0xf]
        %v5635 = vld [vmem:[%s9 + $0x18] sm:$0xff]
        %v5636 = vld [vmem:[%s9 + $0x20] sm:$0xf]
        %v5637 = vld [vmem:[%s9 + $0x24] sm:$0xff]
        %v5638 = vld [vmem:[%s9 + $0x2c] sm:$0xf]
        %v5639 = vld [vmem:[%s9 + $0x30] sm:$0xff]
        %v5640 = vld [vmem:[%s9 + $0x38] sm:$0xf]
        %v5641 = vld [vmem:[%s9 + $0x3c] sm:$0xff]
        %v5642 = vld [vmem:[%s9 + $0x44] sm:$0xf]
        %v5643 = vld [vmem:[%s9 + $0x48] sm:$0xff]
        %v5644 = vld [vmem:[%s9 + $0x50] sm:$0xf]
        %v5645 = vld [vmem:[%s9 + $0x54] sm:$0xff]
        %v5646 = vld [vmem:[%s9 + $0x5c] sm:$0xf]
        %v5647 = vld [vmem:[%s9 + $0x60] sm:$0xff]
        %v5648 = vld [vmem:[%s9 + $0x68] sm:$0xf]
        %v5649 = vld [vmem:[%s9 + $0x6c] sm:$0xff]
        %v5650 = vld [vmem:[%s9 + $0x74] sm:$0xf]
        %v5651 = vld [vmem:[%s9 + $0x78] sm:$0xff]
        %v5652 = vld [vmem:[%s9 + $0x80] sm:$0xf]
        %v5653 = vld [vmem:[%s9 + $0x84] sm:$0xff]
        %v5654 = vld [vmem:[%s9 + $0x8c] sm:$0xf]
        %v5655 = vld [vmem:[%s9 + $0x90] sm:$0xff]
        %v5656 = vld [vmem:[%s9 + $0x98] sm:$0xf]
        %v5657 = vld [vmem:[%s9 + $0x9c] sm:$0xff]
        %v5658 = vld [vmem:[%s9 + $0xa4] sm:$0xf]
        %v5659 = vld [vmem:[%s9 + $0xa8] sm:$0xff]
        %v5660 = vld [vmem:[%s9 + $0xb0] sm:$0xf]
        %v5661 = vld [vmem:[%s9 + $0xb4] sm:$0xff]
        %v5662 = vld [vmem:[%s9 + $0xbc] sm:$0xf]
        %v5663 = vld [vmem:[%s9 + $0xc0] sm:$0xff]
        %v5664 = vld [vmem:[%s9 + $0xc8] sm:$0xf]
        %v5665 = vld [vmem:[%s9 + $0xcc] sm:$0xff]
        %v5666 = vld [vmem:[%s9 + $0xd4] sm:$0xf]
        %v5667 = vld [vmem:[%s9 + $0xd8] sm:$0xff]
        %v5668 = vld [vmem:[%s9 + $0xe0] sm:$0xf]
        %v5669 = vld [vmem:[%s9 + $0xe4] sm:$0xff]
        %v5670 = vld [vmem:[%s9 + $0xec] sm:$0xf]
        %v5671 = vld [vmem:[%s9 + $0xf0] sm:$0xff]
        %v5672 = vld [vmem:[%s9 + $0xf8] sm:$0xf]
        %v5673 = vld [vmem:[%s9 + $0xfc] sm:$0xff]
        %v5674 = vld [vmem:[%s9 + $0x104] sm:$0xf]
        %v5675 = vld [vmem:[%s9 + $0x108] sm:$0xff]
        %v5676 = vld [vmem:[%s9 + $0x110] sm:$0xf]
        %v5677 = vld [vmem:[%s9 + $0x114] sm:$0xff]
        %v5678 = vld [vmem:[%s9 + $0x11c] sm:$0xf]
        %v5679 = vld [vmem:[%s9 + $0x120] sm:$0xff]
        %v5680 = vld [vmem:[%s9 + $0x128] sm:$0xf]
        %v5681 = vld [vmem:[%s9 + $0x12c] sm:$0xff]
        %v5682 = vld [vmem:[%s9 + $0x134] sm:$0xf]
        %v5683 = vld [vmem:[%s9 + $0x138] sm:$0xff]
        %v5684 = vld [vmem:[%s9 + $0x140] sm:$0xf]
        %v5685 = vld [vmem:[%s9 + $0x144] sm:$0xff]
        %v5686 = vld [vmem:[%s9 + $0x14c] sm:$0xf]
        %v5687 = vld [vmem:[%s9 + $0x150] sm:$0xff]
        %v5688 = vld [vmem:[%s9 + $0x158] sm:$0xf]
        %v5689 = vld [vmem:[%s9 + $0x15c] sm:$0xff]
        %v5690 = vld [vmem:[%s9 + $0x164] sm:$0xf]
        %v5691 = vld [vmem:[%s9 + $0x168] sm:$0xff]
        %v5692 = vld [vmem:[%s9 + $0x170] sm:$0xf]
        %v5693 = vld [vmem:[%s9 + $0x174] sm:$0xff]
        %v5694 = vld [vmem:[%s9 + $0x17c] sm:$0xf]
        %v5695 = vld [vmem:[%s9 + $0x180] sm:$0xff]
        %v5696 = vld [vmem:[%s9 + $0x188] sm:$0xf]
        %v5697 = vld [vmem:[%s9 + $0x18c] sm:$0xff]
        %v5698 = vld [vmem:[%s9 + $0x194] sm:$0xf]
        %v5699 = vld [vmem:[%s9 + $0x198] sm:$0xff]
        %v5700 = vld [vmem:[%s9 + $0x1a0] sm:$0xf]
        %v5701 = vld [vmem:[%s9 + $0x1a4] sm:$0xff]
        %v5702 = vld [vmem:[%s9 + $0x1ac] sm:$0xf]
        %v5703 = vld [vmem:[%s9 + $0x1b0] sm:$0xff]
        %v5704 = vld [vmem:[%s9 + $0x1b8] sm:$0xf]
        %v5705 = vld [vmem:[%s9 + $0x1bc] sm:$0xff]
        %v5706 = vld [vmem:[%s9 + $0x1c4] sm:$0xf]
        %v5707 = vld [vmem:[%s9 + $0x1c8] sm:$0xff]
        %v5708 = vld [vmem:[%s9 + $0x1d0] sm:$0xf]
        %v5709 = vld [vmem:[%s9 + $0x1d4] sm:$0xff]
        %v5710 = vld [vmem:[%s9 + $0x1dc] sm:$0xf]
        %v5711 = vld [vmem:[%s9 + $0x1e0] sm:$0xff]
        %v5712 = vld [vmem:[%s9 + $0x1e8] sm:$0xf]
        %v5713 = vld [vmem:[%s9 + $0x1ec] sm:$0xff]
        %v5714 = vld [vmem:[%s9 + $0x1f4] sm:$0xf]
        %v5715 = vld [vmem:[%s9 + $0x1f8] sm:$0xff]
        %v5716 = vld [vmem:[%s9 + $0x200] sm:$0xf]
        %v5717 = vld [vmem:[%s9 + $0x204] sm:$0xff]
        %v5718 = vld [vmem:[%s9 + $0x20c] sm:$0xf]
        %v5719 = vld [vmem:[%s9 + $0x210] sm:$0xff]
        %v5720 = vld [vmem:[%s9 + $0x218] sm:$0xf]
        %v5721 = vld [vmem:[%s9 + $0x21c] sm:$0xff]
        %v5722 = vld [vmem:[%s9 + $0x224] sm:$0xf]
        %v5723 = vld [vmem:[%s9 + $0x228] sm:$0xff]
        %v5724 = vld [vmem:[%s9 + $0x230] sm:$0xf]
        %v5725 = vld [vmem:[%s9 + $0x234] sm:$0xff]
        %v5726 = vld [vmem:[%s9 + $0x23c] sm:$0xf]
        %v5727 = vld [vmem:[%s9 + $0x240] sm:$0xff]
        %v5728 = vld [vmem:[%s9 + $0x248] sm:$0xf]
        %v5729 = vld [vmem:[%s9 + $0x24c] sm:$0xff]
        %v5730 = vld [vmem:[%s9 + $0x254] sm:$0xf]
        %v5731 = vld [vmem:[%s9 + $0x258] sm:$0xff]
        %v5732 = vld [vmem:[%s9 + $0x260] sm:$0xf]
        %v5733 = vld [vmem:[%s9 + $0x264] sm:$0xff]
        %v5734 = vld [vmem:[%s9 + $0x26c] sm:$0xf]
        %v5735 = vld [vmem:[%s9 + $0x270] sm:$0xff]
        %v5736 = vld [vmem:[%s9 + $0x278] sm:$0xf]
        %v5737 = vld [vmem:[%s9 + $0x27c] sm:$0xff]
        %v5738 = vld [vmem:[%s9 + $0x284] sm:$0xf]
        %v5739 = vld [vmem:[%s9 + $0x288] sm:$0xff]
        %v5740 = vld [vmem:[%s9 + $0x290] sm:$0xf]
        %v5741 = vld [vmem:[%s9 + $0x294] sm:$0xff]
        %v5742 = vld [vmem:[%s9 + $0x29c] sm:$0xf]
        %v5743 = vld [vmem:[%s9 + $0x2a0] sm:$0xff]
        %v5744 = vld [vmem:[%s9 + $0x2a8] sm:$0xf]
        %v5745 = vld [vmem:[%s9 + $0x2ac] sm:$0xff]
        %v5746 = vld [vmem:[%s9 + $0x2b4] sm:$0xf]
        %v5747 = vld [vmem:[%s9 + $0x2b8] sm:$0xff]
        %v5748 = vld [vmem:[%s9 + $0x2c0] sm:$0xf]
        %v5749 = vld [vmem:[%s9 + $0x2c4] sm:$0xff]
        %v5750 = vld [vmem:[%s9 + $0x2cc] sm:$0xf]
        %v5751 = vld [vmem:[%s9 + $0x2d0] sm:$0xff]
        %v5752 = vld [vmem:[%s9 + $0x2d8] sm:$0xf]
        %v5753 = vld [vmem:[%s9 + $0x2dc] sm:$0xff]
        %v5754 = vld [vmem:[%s9 + $0x2e4] sm:$0xf]
        %v5755 = vld [vmem:[%s9 + $0x2e8] sm:$0xff]
        %v5756 = vld [vmem:[%s9 + $0x2f0] sm:$0xf]
        %v5757 = vld [vmem:[%s9 + $0x2f4] sm:$0xff]
        %v5758 = vld [vmem:[%s9 + $0x2fc] sm:$0xf]
        %v5759 = vld [vmem:[%s9 + $0x300] sm:$0xff]
        %v5760 = vld [vmem:[%s9 + $0x308] sm:$0xf]
        %v5761 = vld [vmem:[%s9 + $0x30c] sm:$0xff]
        %v5762 = vld [vmem:[%s9 + $0x314] sm:$0xf]
        %v5763 = vld [vmem:[%s9 + $0x318] sm:$0xff]
        %v5764 = vld [vmem:[%s9 + $0x320] sm:$0xf]
        %v5765 = vld [vmem:[%s9 + $0x324] sm:$0xff]
        %v5766 = vld [vmem:[%s9 + $0x32c] sm:$0xf]
        %v5767 = vld [vmem:[%s9 + $0x330] sm:$0xff]
        %v5768 = vld [vmem:[%s9 + $0x338] sm:$0xf]
        %v5769 = vld [vmem:[%s9 + $0x33c] sm:$0xff]
        %v5770 = vld [vmem:[%s9 + $0x344] sm:$0xf]
        %v5771 = vld [vmem:[%s9 + $0x348] sm:$0xff]
        %v5772 = vld [vmem:[%s9 + $0x350] sm:$0xf]
        %v5773 = vld [vmem:[%s9 + $0x354] sm:$0xff]
        %v5774 = vld [vmem:[%s9 + $0x35c] sm:$0xf]
        %v5775 = vld [vmem:[%s9 + $0x360] sm:$0xff]
        %v5776 = vld [vmem:[%s9 + $0x368] sm:$0xf]
        %v5777 = vld [vmem:[%s9 + $0x36c] sm:$0xff]
        %v5778 = vld [vmem:[%s9 + $0x374] sm:$0xf]
        %v5779 = vld [vmem:[%s9 + $0x378] sm:$0xff]
        %v5780 = vld [vmem:[%s9 + $0x380] sm:$0xf]
        %v5781 = vld [vmem:[%s9 + $0x384] sm:$0xff]
        %v5782 = vld [vmem:[%s9 + $0x38c] sm:$0xf]
        %v5783 = vld [vmem:[%s9 + $0x390] sm:$0xff]
        %v5784 = vld [vmem:[%s9 + $0x398] sm:$0xf]
        %v5785 = vld [vmem:[%s9 + $0x39c] sm:$0xff]
        %v5786 = vld [vmem:[%s9 + $0x3a4] sm:$0xf]
        %v5787 = vld [vmem:[%s9 + $0x3a8] sm:$0xff]
        %v5788 = vld [vmem:[%s9 + $0x3b0] sm:$0xf]
        %v5789 = vld [vmem:[%s9 + $0x3b4] sm:$0xff]
        %v5790 = vld [vmem:[%s9 + $0x3bc] sm:$0xf]
        %v5791 = vld [vmem:[%s9 + $0x3c0] sm:$0xff]
        %v5792 = vld [vmem:[%s9 + $0x3c8] sm:$0xf]
        %v5793 = vld [vmem:[%s9 + $0x3cc] sm:$0xff]
        %v5794 = vld [vmem:[%s9 + $0x3d4] sm:$0xf]
        %v5795 = vld [vmem:[%s9 + $0x3d8] sm:$0xff]
        %v5796 = vld [vmem:[%s9 + $0x3e0] sm:$0xf]
        %v5797 = vld [vmem:[%s9 + $0x3e4] sm:$0xff]
        %v5798 = vld [vmem:[%s9 + $0x3ec] sm:$0xf]
        %v5799 = vld [vmem:[%s9 + $0x3f0] sm:$0xff]
        %v5800 = vld [vmem:[%s9 + $0x3f8] sm:$0xf]
        %v5801 = vld [vmem:[%s9 + $0x3fc] sm:$0xff]
        %v5802 = vld [vmem:[%s9 + $0x404] sm:$0xf]
        %v5803 = vld [vmem:[%s9 + $0x408] sm:$0xff]
        %v5804 = vld [vmem:[%s9 + $0x410] sm:$0xf]
        %v5805 = vld [vmem:[%s9 + $0x414] sm:$0xff]
        %v5806 = vld [vmem:[%s9 + $0x41c] sm:$0xf]
        %v5983 = vunpack.c.l.b16 %v5631
        %v5984 = vunpack.c.h.b16 %v5631
        %v5985 = vunpack.c.l.b16 %v5632
        %v5986 = vunpack.c.l.b16 %v5633
        %v5987 = vunpack.c.h.b16 %v5633
        %v5988 = vunpack.c.l.b16 %v5634
        %v5989 = vunpack.c.l.b16 %v5635
        %v5990 = vunpack.c.h.b16 %v5635
        %v5991 = vunpack.c.l.b16 %v5636
        %v5992 = vunpack.c.l.b16 %v5637
        %v5993 = vunpack.c.h.b16 %v5637
        %v5994 = vunpack.c.l.b16 %v5638
        %v5995 = vunpack.c.l.b16 %v5639
        %v5996 = vunpack.c.h.b16 %v5639
        %v5997 = vunpack.c.l.b16 %v5640
        %v5998 = vunpack.c.l.b16 %v5641
        %v5999 = vunpack.c.h.b16 %v5641
        %v6000 = vunpack.c.l.b16 %v5642
        %v6001 = vunpack.c.l.b16 %v5643
        %v6002 = vunpack.c.h.b16 %v5643
        %v6003 = vunpack.c.l.b16 %v5644
        %v6004 = vunpack.c.l.b16 %v5645
        %v6005 = vunpack.c.h.b16 %v5645
        %v6006 = vunpack.c.l.b16 %v5646
        %v6007 = vunpack.c.l.b16 %v5647
        %v6008 = vunpack.c.h.b16 %v5647
        %v6009 = vunpack.c.l.b16 %v5648
        %v6010 = vunpack.c.l.b16 %v5649
        %v6011 = vunpack.c.h.b16 %v5649
        %v6012 = vunpack.c.l.b16 %v5650
        %v6013 = vunpack.c.l.b16 %v5651
        %v6014 = vunpack.c.h.b16 %v5651
        %v6015 = vunpack.c.l.b16 %v5652
        %v6016 = vunpack.c.l.b16 %v5653
        %v6017 = vunpack.c.h.b16 %v5653
        %v6018 = vunpack.c.l.b16 %v5654
        %v6019 = vunpack.c.l.b16 %v5655
        %v6020 = vunpack.c.h.b16 %v5655
        %v6021 = vunpack.c.l.b16 %v5656
        %v6022 = vunpack.c.l.b16 %v5657
        %v6023 = vunpack.c.h.b16 %v5657
        %v6024 = vunpack.c.l.b16 %v5658
        %v6025 = vunpack.c.l.b16 %v5659
        %v6026 = vunpack.c.h.b16 %v5659
        %v6027 = vunpack.c.l.b16 %v5660
        %v6028 = vunpack.c.l.b16 %v5661
        %v6029 = vunpack.c.h.b16 %v5661
        %v6030 = vunpack.c.l.b16 %v5662
        %v6031 = vunpack.c.l.b16 %v5663
        %v6032 = vunpack.c.h.b16 %v5663
        %v6033 = vunpack.c.l.b16 %v5664
        %v6034 = vunpack.c.l.b16 %v5665
        %v6035 = vunpack.c.h.b16 %v5665
        %v6036 = vunpack.c.l.b16 %v5666
        %v6037 = vunpack.c.l.b16 %v5667
        %v6038 = vunpack.c.h.b16 %v5667
        %v6039 = vunpack.c.l.b16 %v5668
        %v6040 = vunpack.c.l.b16 %v5669
        %v6041 = vunpack.c.h.b16 %v5669
        %v6042 = vunpack.c.l.b16 %v5670
        %v6043 = vunpack.c.l.b16 %v5671
        %v6044 = vunpack.c.h.b16 %v5671
        %v6045 = vunpack.c.l.b16 %v5672
        %v6046 = vunpack.c.l.b16 %v5673
        %v6047 = vunpack.c.h.b16 %v5673
        %v6048 = vunpack.c.l.b16 %v5674
        %v6049 = vunpack.c.l.b16 %v5675
        %v6050 = vunpack.c.h.b16 %v5675
        %v6051 = vunpack.c.l.b16 %v5676
        %v6052 = vunpack.c.l.b16 %v5677
        %v6053 = vunpack.c.h.b16 %v5677
        %v6054 = vunpack.c.l.b16 %v5678
        %v6055 = vunpack.c.l.b16 %v5679
        %v6056 = vunpack.c.h.b16 %v5679
        %v6057 = vunpack.c.l.b16 %v5680
        %v6058 = vunpack.c.l.b16 %v5681
        %v6059 = vunpack.c.h.b16 %v5681
        %v6060 = vunpack.c.l.b16 %v5682
        %v6061 = vunpack.c.l.b16 %v5683
        %v6062 = vunpack.c.h.b16 %v5683
        %v6063 = vunpack.c.l.b16 %v5684
        %v6064 = vunpack.c.l.b16 %v5685
        %v6065 = vunpack.c.h.b16 %v5685
        %v6066 = vunpack.c.l.b16 %v5686
        %v6067 = vunpack.c.l.b16 %v5687
        %v6068 = vunpack.c.h.b16 %v5687
        %v6069 = vunpack.c.l.b16 %v5688
        %v6070 = vunpack.c.l.b16 %v5689
        %v6071 = vunpack.c.h.b16 %v5689
        %v6072 = vunpack.c.l.b16 %v5690
        %v6073 = vunpack.c.l.b16 %v5691
        %v6074 = vunpack.c.h.b16 %v5691
        %v6075 = vunpack.c.l.b16 %v5692
        %v6076 = vunpack.c.l.b16 %v5693
        %v6077 = vunpack.c.h.b16 %v5693
        %v6078 = vunpack.c.l.b16 %v5694
        %v6079 = vunpack.c.l.b16 %v5695
        %v6080 = vunpack.c.h.b16 %v5695
        %v6081 = vunpack.c.l.b16 %v5696
        %v6082 = vunpack.c.l.b16 %v5697
        %v6083 = vunpack.c.h.b16 %v5697
        %v6084 = vunpack.c.l.b16 %v5698
        %v6085 = vunpack.c.l.b16 %v5699
        %v6086 = vunpack.c.h.b16 %v5699
        %v6087 = vunpack.c.l.b16 %v5700
        %v6088 = vunpack.c.l.b16 %v5701
        %v6089 = vunpack.c.h.b16 %v5701
        %v6090 = vunpack.c.l.b16 %v5702
        %v6091 = vunpack.c.l.b16 %v5703
        %v6092 = vunpack.c.h.b16 %v5703
        %v6093 = vunpack.c.l.b16 %v5704
        %v6094 = vunpack.c.l.b16 %v5705
        %v6095 = vunpack.c.h.b16 %v5705
        %v6096 = vunpack.c.l.b16 %v5706
        %v6097 = vunpack.c.l.b16 %v5707
        %v6098 = vunpack.c.h.b16 %v5707
        %v6099 = vunpack.c.l.b16 %v5708
        %v6100 = vunpack.c.l.b16 %v5709
        %v6101 = vunpack.c.h.b16 %v5709
        %v6102 = vunpack.c.l.b16 %v5710
        %v6103 = vunpack.c.l.b16 %v5711
        %v6104 = vunpack.c.h.b16 %v5711
        %v6105 = vunpack.c.l.b16 %v5712
        %v6106 = vunpack.c.l.b16 %v5713
        %v6107 = vunpack.c.h.b16 %v5713
        %v6108 = vunpack.c.l.b16 %v5714
        %v6109 = vunpack.c.l.b16 %v5715
        %v6110 = vunpack.c.h.b16 %v5715
        %v6111 = vunpack.c.l.b16 %v5716
        %v6112 = vunpack.c.l.b16 %v5717
        %v6113 = vunpack.c.h.b16 %v5717
        %v6114 = vunpack.c.l.b16 %v5718
        %v6115 = vunpack.c.l.b16 %v5719
        %v6116 = vunpack.c.h.b16 %v5719
        %v6117 = vunpack.c.l.b16 %v5720
        %v6118 = vunpack.c.l.b16 %v5721
        %v6119 = vunpack.c.h.b16 %v5721
        %v6120 = vunpack.c.l.b16 %v5722
        %v6121 = vunpack.c.l.b16 %v5723
        %v6122 = vunpack.c.h.b16 %v5723
        %v6123 = vunpack.c.l.b16 %v5724
        %v6124 = vunpack.c.l.b16 %v5725
        %v6125 = vunpack.c.h.b16 %v5725
        %v6126 = vunpack.c.l.b16 %v5726
        %v6127 = vunpack.c.l.b16 %v5727
        %v6128 = vunpack.c.h.b16 %v5727
        %v6129 = vunpack.c.l.b16 %v5728
        %v6130 = vunpack.c.l.b16 %v5729
        %v6131 = vunpack.c.h.b16 %v5729
        %v6132 = vunpack.c.l.b16 %v5730
        %v6133 = vunpack.c.l.b16 %v5731
        %v6134 = vunpack.c.h.b16 %v5731
        %v6135 = vunpack.c.l.b16 %v5732
        %v6136 = vunpack.c.l.b16 %v5733
        %v6137 = vunpack.c.h.b16 %v5733
        %v6138 = vunpack.c.l.b16 %v5734
        %v6139 = vunpack.c.l.b16 %v5735
        %v6140 = vunpack.c.h.b16 %v5735
        %v6141 = vunpack.c.l.b16 %v5736
        %v6142 = vunpack.c.l.b16 %v5737
        %v6143 = vunpack.c.h.b16 %v5737
        %v6144 = vunpack.c.l.b16 %v5738
        %v6145 = vunpack.c.l.b16 %v5739
        %v6146 = vunpack.c.h.b16 %v5739
        %v6147 = vunpack.c.l.b16 %v5740
        %v6148 = vunpack.c.l.b16 %v5741
        %v6149 = vunpack.c.h.b16 %v5741
        %v6150 = vunpack.c.l.b16 %v5742
        %v6151 = vunpack.c.l.b16 %v5743
        %v6152 = vunpack.c.h.b16 %v5743
        %v6153 = vunpack.c.l.b16 %v5744
        %v6154 = vunpack.c.l.b16 %v5745
        %v6155 = vunpack.c.h.b16 %v5745
        %v6156 = vunpack.c.l.b16 %v5746
        %v6157 = vunpack.c.l.b16 %v5747
        %v6158 = vunpack.c.h.b16 %v5747
        %v6159 = vunpack.c.l.b16 %v5748
        %v6160 = vunpack.c.l.b16 %v5749
        %v6161 = vunpack.c.h.b16 %v5749
        %v6162 = vunpack.c.l.b16 %v5750
        %v6163 = vunpack.c.l.b16 %v5751
        %v6164 = vunpack.c.h.b16 %v5751
        %v6165 = vunpack.c.l.b16 %v5752
        %v6166 = vunpack.c.l.b16 %v5753
        %v6167 = vunpack.c.h.b16 %v5753
        %v6168 = vunpack.c.l.b16 %v5754
        %v6169 = vunpack.c.l.b16 %v5755
        %v6170 = vunpack.c.h.b16 %v5755
        %v6171 = vunpack.c.l.b16 %v5756
        %v6172 = vunpack.c.l.b16 %v5757
        %v6173 = vunpack.c.h.b16 %v5757
        %v6174 = vunpack.c.l.b16 %v5758
        %v6175 = vunpack.c.l.b16 %v5759
        %v6176 = vunpack.c.h.b16 %v5759
        %v6177 = vunpack.c.l.b16 %v5760
        %v6178 = vunpack.c.l.b16 %v5761
        %v6179 = vunpack.c.h.b16 %v5761
        %v6180 = vunpack.c.l.b16 %v5762
        %v6181 = vunpack.c.l.b16 %v5763
        %v6182 = vunpack.c.h.b16 %v5763
        %v6183 = vunpack.c.l.b16 %v5764
        %v6184 = vunpack.c.l.b16 %v5765
        %v6185 = vunpack.c.h.b16 %v5765
        %v6186 = vunpack.c.l.b16 %v5766
        %v6187 = vunpack.c.l.b16 %v5767
        %v6188 = vunpack.c.h.b16 %v5767
        %v6189 = vunpack.c.l.b16 %v5768
        %v6190 = vunpack.c.l.b16 %v5769
        %v6191 = vunpack.c.h.b16 %v5769
        %v6192 = vunpack.c.l.b16 %v5770
        %v6193 = vunpack.c.l.b16 %v5771
        %v6194 = vunpack.c.h.b16 %v5771
        %v6195 = vunpack.c.l.b16 %v5772
        %v6196 = vunpack.c.l.b16 %v5773
        %v6197 = vunpack.c.h.b16 %v5773
        %v6198 = vunpack.c.l.b16 %v5774
        %v6199 = vunpack.c.l.b16 %v5775
        %v6200 = vunpack.c.h.b16 %v5775
        %v6201 = vunpack.c.l.b16 %v5776
        %v6202 = vunpack.c.l.b16 %v5777
        %v6203 = vunpack.c.h.b16 %v5777
        %v6204 = vunpack.c.l.b16 %v5778
        %v6205 = vunpack.c.l.b16 %v5779
        %v6206 = vunpack.c.h.b16 %v5779
        %v6207 = vunpack.c.l.b16 %v5780
        %v6208 = vunpack.c.l.b16 %v5781
        %v6209 = vunpack.c.h.b16 %v5781
        %v6210 = vunpack.c.l.b16 %v5782
        %v6211 = vunpack.c.l.b16 %v5783
        %v6212 = vunpack.c.h.b16 %v5783
        %v6213 = vunpack.c.l.b16 %v5784
        %v6214 = vunpack.c.l.b16 %v5785
        %v6215 = vunpack.c.h.b16 %v5785
        %v6216 = vunpack.c.l.b16 %v5786
        %v6217 = vunpack.c.l.b16 %v5787
        %v6218 = vunpack.c.h.b16 %v5787
        %v6219 = vunpack.c.l.b16 %v5788
        %v6220 = vunpack.c.l.b16 %v5789
        %v6221 = vunpack.c.h.b16 %v5789
        %v6222 = vunpack.c.l.b16 %v5790
        %v6223 = vunpack.c.l.b16 %v5791
        %v6224 = vunpack.c.h.b16 %v5791
        %v6225 = vunpack.c.l.b16 %v5792
        %v6226 = vunpack.c.l.b16 %v5793
        %v6227 = vunpack.c.h.b16 %v5793
        %v6228 = vunpack.c.l.b16 %v5794
        %v6229 = vunpack.c.l.b16 %v5795
        %v6230 = vunpack.c.h.b16 %v5795
        %v6231 = vunpack.c.l.b16 %v5796
        %v6232 = vunpack.c.l.b16 %v5797
        %v6233 = vunpack.c.h.b16 %v5797
        %v6234 = vunpack.c.l.b16 %v5798
        %v6235 = vunpack.c.l.b16 %v5799
        %v6236 = vunpack.c.h.b16 %v5799
        %v6237 = vunpack.c.l.b16 %v5800
        %v6238 = vunpack.c.l.b16 %v5801
        %v6239 = vunpack.c.h.b16 %v5801
        %v6240 = vunpack.c.l.b16 %v5802
        %v6241 = vunpack.c.l.b16 %v5803
        %v6242 = vunpack.c.h.b16 %v5803
        %v6243 = vunpack.c.l.b16 %v5804
        %v6244 = vunpack.c.l.b16 %v5805
        %v6245 = vunpack.c.h.b16 %v5805
        %v6246 = vunpack.c.l.b16 %v5806
        %v6247 = vpack.c.b16 %v5986, %v5983
        %v6248 = vpack.c.b16 %v5987, %v5984
        %v6249 = vpack.c.b16 %v5988, %v5985
        %v6250 = vpack.c.b16 %v5992, %v5989
        %v6251 = vpack.c.b16 %v5993, %v5990
        %v6252 = vpack.c.b16 %v5994, %v5991
        %v6253 = vpack.c.b16 %v5998, %v5995
        %v6254 = vpack.c.b16 %v5999, %v5996
        %v6255 = vpack.c.b16 %v6000, %v5997
        %v6256 = vpack.c.b16 %v6004, %v6001
        %v6257 = vpack.c.b16 %v6005, %v6002
        %v6258 = vpack.c.b16 %v6006, %v6003
        %v6259 = vpack.c.b16 %v6010, %v6007
        %v6260 = vpack.c.b16 %v6011, %v6008
        %v6261 = vpack.c.b16 %v6012, %v6009
        %v6262 = vpack.c.b16 %v6016, %v6013
        %v6263 = vpack.c.b16 %v6017, %v6014
        %v6264 = vpack.c.b16 %v6018, %v6015
        %v6265 = vpack.c.b16 %v6022, %v6019
        %v6266 = vpack.c.b16 %v6023, %v6020
        %v6267 = vpack.c.b16 %v6024, %v6021
        %v6268 = vpack.c.b16 %v6028, %v6025
        %v6269 = vpack.c.b16 %v6029, %v6026
        %v6270 = vpack.c.b16 %v6030, %v6027
        %v6271 = vpack.c.b16 %v6034, %v6031
        %v6272 = vpack.c.b16 %v6035, %v6032
        %v6273 = vpack.c.b16 %v6036, %v6033
        %v6274 = vpack.c.b16 %v6040, %v6037
        %v6275 = vpack.c.b16 %v6041, %v6038
        %v6276 = vpack.c.b16 %v6042, %v6039
        %v6277 = vpack.c.b16 %v6046, %v6043
        %v6278 = vpack.c.b16 %v6047, %v6044
        %v6279 = vpack.c.b16 %v6048, %v6045
        %v6280 = vpack.c.b16 %v6052, %v6049
        %v6281 = vpack.c.b16 %v6053, %v6050
        %v6282 = vpack.c.b16 %v6054, %v6051
        %v6283 = vpack.c.b16 %v6058, %v6055
        %v6284 = vpack.c.b16 %v6059, %v6056
        %v6285 = vpack.c.b16 %v6060, %v6057
        %v6286 = vpack.c.b16 %v6064, %v6061
        %v6287 = vpack.c.b16 %v6065, %v6062
        %v6288 = vpack.c.b16 %v6066, %v6063
        %v6289 = vpack.c.b16 %v6070, %v6067
        %v6290 = vpack.c.b16 %v6071, %v6068
        %v6291 = vpack.c.b16 %v6072, %v6069
        %v6292 = vpack.c.b16 %v6076, %v6073
        %v6293 = vpack.c.b16 %v6077, %v6074
        %v6294 = vpack.c.b16 %v6078, %v6075
        %v6295 = vpack.c.b16 %v6082, %v6079
        %v6296 = vpack.c.b16 %v6083, %v6080
        %v6297 = vpack.c.b16 %v6084, %v6081
        %v6298 = vpack.c.b16 %v6088, %v6085
        %v6299 = vpack.c.b16 %v6089, %v6086
        %v6300 = vpack.c.b16 %v6090, %v6087
        %v6301 = vpack.c.b16 %v6094, %v6091
        %v6302 = vpack.c.b16 %v6095, %v6092
        %v6303 = vpack.c.b16 %v6096, %v6093
        %v6304 = vpack.c.b16 %v6100, %v6097
        %v6305 = vpack.c.b16 %v6101, %v6098
        %v6306 = vpack.c.b16 %v6102, %v6099
        %v6307 = vpack.c.b16 %v6106, %v6103
        %v6308 = vpack.c.b16 %v6107, %v6104
        %v6309 = vpack.c.b16 %v6108, %v6105
        %v6310 = vpack.c.b16 %v6112, %v6109
        %v6311 = vpack.c.b16 %v6113, %v6110
        %v6312 = vpack.c.b16 %v6114, %v6111
        %v6313 = vpack.c.b16 %v6118, %v6115
        %v6314 = vpack.c.b16 %v6119, %v6116
        %v6315 = vpack.c.b16 %v6120, %v6117
        %v6316 = vpack.c.b16 %v6124, %v6121
        %v6317 = vpack.c.b16 %v6125, %v6122
        %v6318 = vpack.c.b16 %v6126, %v6123
        %v6319 = vpack.c.b16 %v6130, %v6127
        %v6320 = vpack.c.b16 %v6131, %v6128
        %v6321 = vpack.c.b16 %v6132, %v6129
        %v6322 = vpack.c.b16 %v6136, %v6133
        %v6323 = vpack.c.b16 %v6137, %v6134
        %v6324 = vpack.c.b16 %v6138, %v6135
        %v6325 = vpack.c.b16 %v6142, %v6139
        %v6326 = vpack.c.b16 %v6143, %v6140
        %v6327 = vpack.c.b16 %v6144, %v6141
        %v6328 = vpack.c.b16 %v6148, %v6145
        %v6329 = vpack.c.b16 %v6149, %v6146
        %v6330 = vpack.c.b16 %v6150, %v6147
        %v6331 = vpack.c.b16 %v6154, %v6151
        %v6332 = vpack.c.b16 %v6155, %v6152
        %v6333 = vpack.c.b16 %v6156, %v6153
        %v6334 = vpack.c.b16 %v6160, %v6157
        %v6335 = vpack.c.b16 %v6161, %v6158
        %v6336 = vpack.c.b16 %v6162, %v6159
        %v6337 = vpack.c.b16 %v6166, %v6163
        %v6338 = vpack.c.b16 %v6167, %v6164
        %v6339 = vpack.c.b16 %v6168, %v6165
        %v6340 = vpack.c.b16 %v6172, %v6169
        %v6341 = vpack.c.b16 %v6173, %v6170
        %v6342 = vpack.c.b16 %v6174, %v6171
        %v6343 = vpack.c.b16 %v6178, %v6175
        %v6344 = vpack.c.b16 %v6179, %v6176
        %v6345 = vpack.c.b16 %v6180, %v6177
        %v6346 = vpack.c.b16 %v6184, %v6181
        %v6347 = vpack.c.b16 %v6185, %v6182
        %v6348 = vpack.c.b16 %v6186, %v6183
        %v6349 = vpack.c.b16 %v6190, %v6187
        %v6350 = vpack.c.b16 %v6191, %v6188
        %v6351 = vpack.c.b16 %v6192, %v6189
        %v6352 = vpack.c.b16 %v6196, %v6193
        %v6353 = vpack.c.b16 %v6197, %v6194
        %v6354 = vpack.c.b16 %v6198, %v6195
        %v6355 = vpack.c.b16 %v6202, %v6199
        %v6356 = vpack.c.b16 %v6203, %v6200
        %v6357 = vpack.c.b16 %v6204, %v6201
        %v6358 = vpack.c.b16 %v6208, %v6205
        %v6359 = vpack.c.b16 %v6209, %v6206
        %v6360 = vpack.c.b16 %v6210, %v6207
        %v6361 = vpack.c.b16 %v6214, %v6211
        %v6362 = vpack.c.b16 %v6215, %v6212
        %v6363 = vpack.c.b16 %v6216, %v6213
        %v6364 = vpack.c.b16 %v6220, %v6217
        %v6365 = vpack.c.b16 %v6221, %v6218
        %v6366 = vpack.c.b16 %v6222, %v6219
        %v6367 = vpack.c.b16 %v6226, %v6223
        %v6368 = vpack.c.b16 %v6227, %v6224
        %v6369 = vpack.c.b16 %v6228, %v6225
        %v6370 = vpack.c.b16 %v6232, %v6229
        %v6371 = vpack.c.b16 %v6233, %v6230
        %v6372 = vpack.c.b16 %v6234, %v6231
        %v6373 = vpack.c.b16 %v6238, %v6235
        %v6374 = vpack.c.b16 %v6239, %v6236
        %v6375 = vpack.c.b16 %v6240, %v6237
        %v6376 = vpack.c.b16 %v6244, %v6241
        %v6377 = vpack.c.b16 %v6245, %v6242
        %v6378 = vpack.c.b16 %v6246, %v6243
        %vm6511 = vcmask 523264
        %v6513 = vsel %vm6511, %v5618, 0
        %v6516 = vsel %vm6511, %v5624, 0
        %v6519 = vsel %vm6511, %v5630, 0
        %6521 = vmatprep.subr.bf16.mxu0 %v6269
        %6522 = vmatpush1.bf16.msra.mxu0 %v6268
        %6523 = vmatprep.subr.bf16.mxu0 %v6266
        %6524 = vmatpush1.bf16.msra.mxu0 %v6265
        %6525 = vmatprep.subr.bf16.mxu0 %v6263
        %6526 = vmatpush1.bf16.msra.mxu0 %v6262
        %6527 = vmatprep.subr.bf16.mxu0 %v6260
        %6528 = vmatpush1.bf16.msra.mxu0 %v6259
        %6529 = vmatprep.subr.bf16.mxu0 %v6257
        %6530 = vmatpush1.bf16.msra.mxu0 %v6256
        %6531 = vmatprep.subr.bf16.mxu0 %v6254
        %6532 = vmatpush1.bf16.msra.mxu0 %v6253
        %6533 = vmatprep.subr.bf16.mxu0 %v6251
        %6534 = vmatpush1.bf16.msra.mxu0 %v6250
        %6535 = vmatprep.subr.bf16.mxu0 %v6248
        %6536 = vmatpush1.bf16.msra.mxu0 %v6247
        %6537 = vmatprep.subr.bf16.mxu0 %v6293
        %6538 = vmatpush2.bf16.msra.mxu0 %v6292
        %6539 = vmatprep.subr.bf16.mxu0 %v6290
        %6540 = vmatpush2.bf16.msra.mxu0 %v6289
        %6541 = vmatprep.subr.bf16.mxu0 %v6287
        %6542 = vmatpush2.bf16.msra.mxu0 %v6286
        %6543 = vmatprep.subr.bf16.mxu0 %v6284
        %6544 = vmatpush2.bf16.msra.mxu0 %v6283
        %6545 = vmatprep.subr.bf16.mxu0 %v6281
        %6546 = vmatpush2.bf16.msra.mxu0 %v6280
        %6547 = vmatprep.subr.bf16.mxu0 %v6278
        %6548 = vmatpush2.bf16.msra.mxu0 %v6277
        %6549 = vmatprep.subr.bf16.mxu0 %v6275
        %6550 = vmatpush2.bf16.msra.mxu0 %v6274
        %6551 = vmatprep.subr.bf16.mxu0 %v6272
        %6552 = vmatpush2.bf16.msra.mxu0 %v6271
        %6553 = vmatprep.mubr.bf16.mxu0 %v5614
        %6554 = vmatmul.mubr.bf16.gmra.mxu0 %v5613
        %v6555 = vpop.f32.mrf.mxu0
        %v6556 = vadd.f32 0.0, %v6555
        %v6557 = vpop.f32.mrf.mxu0
        %v6558 = vadd.f32 0.0, %v6557
        %v6559 = vpop.f32.mrf.mxu0
        %v6560 = vadd.f32 0.0, %v6559
        %v6561 = vpop.f32.mrf.mxu0
        %v6562 = vadd.f32 0.0, %v6561
        %6563 = vmatprep.mubr.bf16.mxu0 %v5620
        %6564 = vmatmul.mubr.bf16.gmra.mxu0 %v5619
        %v6565 = vpop.f32.mrf.mxu0
        %v6566 = vadd.f32 0.0, %v6565
        %v6567 = vpop.f32.mrf.mxu0
        %v6568 = vadd.f32 0.0, %v6567
        %v6569 = vpop.f32.mrf.mxu0
        %v6570 = vadd.f32 0.0, %v6569
        %v6571 = vpop.f32.mrf.mxu0
        %v6572 = vadd.f32 0.0, %v6571
        %6573 = vmatprep.mubr.bf16.mxu0 %v5626
        %6574 = vmatmul.mubr.bf16.gmra.mxu0 %v5625
        %v6575 = vpop.f32.mrf.mxu0
        %v6576 = vadd.f32 0.0, %v6575
        %v6577 = vpop.f32.mrf.mxu0
        %v6578 = vadd.f32 0.0, %v6577
        %v6579 = vpop.f32.mrf.mxu0
        %v6580 = vpop.f32.mrf.mxu0
        %6581 = vdwg.mxu0
        %6582 = vmatprep.subr.bf16.mxu0 %v6317
        %6583 = vmatpush1.bf16.msra.mxu0 %v6316
        %6584 = vmatprep.subr.bf16.mxu0 %v6314
        %6585 = vmatpush1.bf16.msra.mxu0 %v6313
        %6586 = vmatprep.subr.bf16.mxu0 %v6311
        %6587 = vmatpush1.bf16.msra.mxu0 %v6310
        %6588 = vmatprep.subr.bf16.mxu0 %v6308
        %6589 = vmatpush1.bf16.msra.mxu0 %v6307
        %6590 = vmatprep.subr.bf16.mxu0 %v6305
        %6591 = vmatpush1.bf16.msra.mxu0 %v6304
        %6592 = vmatprep.subr.bf16.mxu0 %v6302
        %6593 = vmatpush1.bf16.msra.mxu0 %v6301
        %6594 = vmatprep.subr.bf16.mxu0 %v6299
        %6595 = vmatpush1.bf16.msra.mxu0 %v6298
        %6596 = vmatprep.subr.bf16.mxu0 %v6296
        %6597 = vmatpush1.bf16.msra.mxu0 %v6295
        %6598 = vmatprep.subr.bf16.mxu0 %v6341
        %6599 = vmatpush2.bf16.msra.mxu0 %v6340
        %6600 = vmatprep.subr.bf16.mxu0 %v6338
        %6601 = vmatpush2.bf16.msra.mxu0 %v6337
        %6602 = vmatprep.subr.bf16.mxu0 %v6335
        %6603 = vmatpush2.bf16.msra.mxu0 %v6334
        %6604 = vmatprep.subr.bf16.mxu0 %v6332
        %6605 = vmatpush2.bf16.msra.mxu0 %v6331
        %6606 = vmatprep.subr.bf16.mxu0 %v6329
        %6607 = vmatpush2.bf16.msra.mxu0 %v6328
        %6608 = vmatprep.subr.bf16.mxu0 %v6326
        %6609 = vmatpush2.bf16.msra.mxu0 %v6325
        %6610 = vmatprep.subr.bf16.mxu0 %v6323
        %6611 = vmatpush2.bf16.msra.mxu0 %v6322
        %6612 = vmatprep.subr.bf16.mxu0 %v6320
        %6613 = vmatpush2.bf16.msra.mxu0 %v6319
        %6614 = vmatprep.mubr.bf16.mxu0 %v5616
        %6615 = vmatmul.mubr.bf16.gmra.mxu0 %v5615
        %v6616 = vpop.f32.mrf.mxu0
        %v6617 = vadd.f32 %v6556, %v6616
        %v6618 = vpop.f32.mrf.mxu0
        %v6619 = vadd.f32 %v6558, %v6618
        %v6620 = vpop.f32.mrf.mxu0
        %v6621 = vadd.f32 %v6560, %v6620
        %v6622 = vpop.f32.mrf.mxu0
        %v6623 = vadd.f32 %v6562, %v6622
        %6624 = vmatprep.mubr.bf16.mxu0 %v5622
        %6625 = vmatmul.mubr.bf16.gmra.mxu0 %v5621
        %v6626 = vpop.f32.mrf.mxu0
        %v6627 = vadd.f32 %v6566, %v6626
        %v6628 = vpop.f32.mrf.mxu0
        %v6629 = vadd.f32 %v6568, %v6628
        %v6630 = vpop.f32.mrf.mxu0
        %v6631 = vadd.f32 %v6570, %v6630
        %v6632 = vpop.f32.mrf.mxu0
        %v6633 = vadd.f32 %v6572, %v6632
        %6634 = vmatprep.mubr.bf16.mxu0 %v5628
        %6635 = vmatmul.mubr.bf16.gmra.mxu0 %v5627
        %v6636 = vpop.f32.mrf.mxu0
        %v6637 = vadd.f32 %v6576, %v6636
        %v6638 = vpop.f32.mrf.mxu0
        %v6639 = vadd.f32 %v6578, %v6638
        %v6640 = vpop.f32.mrf.mxu0
        %v6641 = vpop.f32.mrf.mxu0
        %6642 = vdwg.mxu0
        %6643 = vmatprep.subr.bf16.mxu0 %v6365
        %6644 = vmatpush1.bf16.msra.mxu0 %v6364
        %6645 = vmatprep.subr.bf16.mxu0 %v6362
        %6646 = vmatpush1.bf16.msra.mxu0 %v6361
        %6647 = vmatprep.subr.bf16.mxu0 %v6359
        %6648 = vmatpush1.bf16.msra.mxu0 %v6358
        %6649 = vmatprep.subr.bf16.mxu0 %v6356
        %6650 = vmatpush1.bf16.msra.mxu0 %v6355
        %6651 = vmatprep.subr.bf16.mxu0 %v6353
        %6652 = vmatpush1.bf16.msra.mxu0 %v6352
        %6653 = vmatprep.subr.bf16.mxu0 %v6350
        %6654 = vmatpush1.bf16.msra.mxu0 %v6349
        %6655 = vmatprep.subr.bf16.mxu0 %v6347
        %6656 = vmatpush1.bf16.msra.mxu0 %v6346
        %6657 = vmatprep.subr.bf16.mxu0 %v6344
        %6658 = vmatpush1.bf16.msra.mxu0 %v6343
        %6659 = vmatprep.subr.bf16.mxu0 0
        %6660 = vmatpush2.bf16.msra.mxu0 0
        %6661 = vmatprep.subr.bf16.mxu0 0
        %6662 = vmatpush2.bf16.msra.mxu0 0
        %6663 = vmatprep.subr.bf16.mxu0 0
        %6664 = vmatpush2.bf16.msra.mxu0 0
        %6665 = vmatprep.subr.bf16.mxu0 0
        %6666 = vmatpush2.bf16.msra.mxu0 0
        %6667 = vmatprep.subr.bf16.mxu0 %v6377
        %6668 = vmatpush2.bf16.msra.mxu0 %v6376
        %6669 = vmatprep.subr.bf16.mxu0 %v6374
        %6670 = vmatpush2.bf16.msra.mxu0 %v6373
        %6671 = vmatprep.subr.bf16.mxu0 %v6371
        %6672 = vmatpush2.bf16.msra.mxu0 %v6370
        %6673 = vmatprep.subr.bf16.mxu0 %v6368
        %6674 = vmatpush2.bf16.msra.mxu0 %v6367
        %6675 = vmatprep.mubr.bf16.mxu0 %v6513
        %6676 = vmatmul.mubr.bf16.gmra.mxu0 %v5617
        %v6677 = vpop.f32.mrf.mxu0
        %v6678 = vadd.f32 %v6617, %v6677
        %v6679 = vpop.f32.mrf.mxu0
        %v6680 = vadd.f32 %v6619, %v6679
        %v6681 = vpop.f32.mrf.mxu0
        %v6682 = vadd.f32 %v6621, %v6681
        %v6683 = vpop.f32.mrf.mxu0
        %v6684 = vadd.f32 %v6623, %v6683
        %6685 = vmatprep.mubr.bf16.mxu0 %v6516
        %6686 = vmatmul.mubr.bf16.gmra.mxu0 %v5623
        %v6687 = vpop.f32.mrf.mxu0
        %v6688 = vadd.f32 %v6627, %v6687
        %v6689 = vpop.f32.mrf.mxu0
        %v6690 = vadd.f32 %v6629, %v6689
        %v6691 = vpop.f32.mrf.mxu0
        %v6692 = vadd.f32 %v6631, %v6691
        %v6693 = vpop.f32.mrf.mxu0
        %v6694 = vadd.f32 %v6633, %v6693
        %6695 = vmatprep.mubr.bf16.mxu0 %v6519
        %6696 = vmatmul.mubr.bf16.gmra.mxu0 %v5629
        %v6697 = vpop.f32.mrf.mxu0
        %v6698 = vadd.f32 %v6637, %v6697
        %v6699 = vpop.f32.mrf.mxu0
        %v6700 = vadd.f32 %v6639, %v6699
        %v6701 = vpop.f32.mrf.mxu0
        %v6702 = vpop.f32.mrf.mxu0
        %6703 = vdwg.mxu0
        %6704 = vmatprep.subr.bf16.mxu0 0
        %6705 = vmatpush1.bf16.msra.mxu0 %v6270
        %6706 = vmatprep.subr.bf16.mxu0 0
        %6707 = vmatpush1.bf16.msra.mxu0 %v6267
        %6708 = vmatprep.subr.bf16.mxu0 0
        %6709 = vmatpush1.bf16.msra.mxu0 %v6264
        %6710 = vmatprep.subr.bf16.mxu0 0
        %6711 = vmatpush1.bf16.msra.mxu0 %v6261
        %6712 = vmatprep.subr.bf16.mxu0 0
        %6713 = vmatpush1.bf16.msra.mxu0 %v6258
        %6714 = vmatprep.subr.bf16.mxu0 0
        %6715 = vmatpush1.bf16.msra.mxu0 %v6255
        %6716 = vmatprep.subr.bf16.mxu0 0
        %6717 = vmatpush1.bf16.msra.mxu0 %v6252
        %6718 = vmatprep.subr.bf16.mxu0 0
        %6719 = vmatpush1.bf16.msra.mxu0 %v6249
        %6720 = vmatprep.subr.bf16.mxu0 0
        %6721 = vmatpush2.bf16.msra.mxu0 %v6294
        %6722 = vmatprep.subr.bf16.mxu0 0
        %6723 = vmatpush2.bf16.msra.mxu0 %v6291
        %6724 = vmatprep.subr.bf16.mxu0 0
        %6725 = vmatpush2.bf16.msra.mxu0 %v6288
        %6726 = vmatprep.subr.bf16.mxu0 0
        %6727 = vmatpush2.bf16.msra.mxu0 %v6285
        %6728 = vmatprep.subr.bf16.mxu0 0
        %6729 = vmatpush2.bf16.msra.mxu0 %v6282
        %6730 = vmatprep.subr.bf16.mxu0 0
        %6731 = vmatpush2.bf16.msra.mxu0 %v6279
        %6732 = vmatprep.subr.bf16.mxu0 0
        %6733 = vmatpush2.bf16.msra.mxu0 %v6276
        %6734 = vmatprep.subr.bf16.mxu0 0
        %6735 = vmatpush2.bf16.msra.mxu0 %v6273
        %6736 = vmatprep.mubr.bf16.mxu0 %v5614
        %6737 = vmatmul.mubr.bf16.gmra.mxu0 %v5613
        %v6738 = vpop.f32.mrf.mxu0
        %v6739 = vadd.f32 0.0, %v6738
        %v6740 = vpop.f32.mrf.mxu0
        %v6741 = vpop.f32.mrf.mxu0
        %v6742 = vadd.f32 0.0, %v6741
        %v6743 = vpop.f32.mrf.mxu0
        %6744 = vmatprep.mubr.bf16.mxu0 %v5620
        %6745 = vmatmul.mubr.bf16.gmra.mxu0 %v5619
        %v6746 = vpop.f32.mrf.mxu0
        %v6747 = vadd.f32 0.0, %v6746
        %v6748 = vpop.f32.mrf.mxu0
        %v6749 = vpop.f32.mrf.mxu0
        %v6750 = vadd.f32 0.0, %v6749
        %v6751 = vpop.f32.mrf.mxu0
        %6752 = vmatprep.mubr.bf16.mxu0 %v5626
        %6753 = vmatmul.mubr.bf16.gmra.mxu0 %v5625
        %v6754 = vpop.f32.mrf.mxu0
        %v6755 = vadd.f32 0.0, %v6754
        %v6756 = vpop.f32.mrf.mxu0
        %v6757 = vpop.f32.mrf.mxu0
        %v6758 = vpop.f32.mrf.mxu0
        %6759 = vdwg.mxu0
        %6760 = vmatprep.subr.bf16.mxu0 0
        %6761 = vmatpush1.bf16.msra.mxu0 %v6318
        %6762 = vmatprep.subr.bf16.mxu0 0
        %6763 = vmatpush1.bf16.msra.mxu0 %v6315
        %6764 = vmatprep.subr.bf16.mxu0 0
        %6765 = vmatpush1.bf16.msra.mxu0 %v6312
        %6766 = vmatprep.subr.bf16.mxu0 0
        %6767 = vmatpush1.bf16.msra.mxu0 %v6309
        %6768 = vmatprep.subr.bf16.mxu0 0
        %6769 = vmatpush1.bf16.msra.mxu0 %v6306
        %6770 = vmatprep.subr.bf16.mxu0 0
        %6771 = vmatpush1.bf16.msra.mxu0 %v6303
        %6772 = vmatprep.subr.bf16.mxu0 0
        %6773 = vmatpush1.bf16.msra.mxu0 %v6300
        %6774 = vmatprep.subr.bf16.mxu0 0
        %6775 = vmatpush1.bf16.msra.mxu0 %v6297
        %6776 = vmatprep.subr.bf16.mxu0 0
        %6777 = vmatpush2.bf16.msra.mxu0 %v6342
        %6778 = vmatprep.subr.bf16.mxu0 0
        %6779 = vmatpush2.bf16.msra.mxu0 %v6339
        %6780 = vmatprep.subr.bf16.mxu0 0
        %6781 = vmatpush2.bf16.msra.mxu0 %v6336
        %6782 = vmatprep.subr.bf16.mxu0 0
        %6783 = vmatpush2.bf16.msra.mxu0 %v6333
        %6784 = vmatprep.subr.bf16.mxu0 0
        %6785 = vmatpush2.bf16.msra.mxu0 %v6330
        %6786 = vmatprep.subr.bf16.mxu0 0
        %6787 = vmatpush2.bf16.msra.mxu0 %v6327
        %6788 = vmatprep.subr.bf16.mxu0 0
        %6789 = vmatpush2.bf16.msra.mxu0 %v6324
        %6790 = vmatprep.subr.bf16.mxu0 0
        %6791 = vmatpush2.bf16.msra.mxu0 %v6321
        %6792 = vmatprep.mubr.bf16.mxu0 %v5616
        %6793 = vmatmul.mubr.bf16.gmra.mxu0 %v5615
        %v6794 = vpop.f32.mrf.mxu0
        %v6795 = vadd.f32 %v6739, %v6794
        %v6796 = vpop.f32.mrf.mxu0
        %v6797 = vpop.f32.mrf.mxu0
        %v6798 = vadd.f32 %v6742, %v6797
        %v6799 = vpop.f32.mrf.mxu0
        %6800 = vmatprep.mubr.bf16.mxu0 %v5622
        %6801 = vmatmul.mubr.bf16.gmra.mxu0 %v5621
        %v6802 = vpop.f32.mrf.mxu0
        %v6803 = vadd.f32 %v6747, %v6802
        %v6804 = vpop.f32.mrf.mxu0
        %v6805 = vpop.f32.mrf.mxu0
        %v6806 = vadd.f32 %v6750, %v6805
        %v6807 = vpop.f32.mrf.mxu0
        %6808 = vmatprep.mubr.bf16.mxu0 %v5628
        %6809 = vmatmul.mubr.bf16.gmra.mxu0 %v5627
        %v6810 = vpop.f32.mrf.mxu0
        %v6811 = vadd.f32 %v6755, %v6810
        %v6812 = vpop.f32.mrf.mxu0
        %v6813 = vpop.f32.mrf.mxu0
        %v6814 = vpop.f32.mrf.mxu0
        %6815 = vdwg.mxu0
        %6816 = vmatprep.subr.bf16.mxu0 0
        %6817 = vmatpush1.bf16.msra.mxu0 %v6366
        %6818 = vmatprep.subr.bf16.mxu0 0
        %6819 = vmatpush1.bf16.msra.mxu0 %v6363
        %6820 = vmatprep.subr.bf16.mxu0 0
        %6821 = vmatpush1.bf16.msra.mxu0 %v6360
        %6822 = vmatprep.subr.bf16.mxu0 0
        %6823 = vmatpush1.bf16.msra.mxu0 %v6357
        %6824 = vmatprep.subr.bf16.mxu0 0
        %6825 = vmatpush1.bf16.msra.mxu0 %v6354
        %6826 = vmatprep.subr.bf16.mxu0 0
        %6827 = vmatpush1.bf16.msra.mxu0 %v6351
        %6828 = vmatprep.subr.bf16.mxu0 0
        %6829 = vmatpush1.bf16.msra.mxu0 %v6348
        %6830 = vmatprep.subr.bf16.mxu0 0
        %6831 = vmatpush1.bf16.msra.mxu0 %v6345
        %6832 = vmatprep.subr.bf16.mxu0 0
        %6833 = vmatpush2.bf16.msra.mxu0 0
        %6834 = vmatprep.subr.bf16.mxu0 0
        %6835 = vmatpush2.bf16.msra.mxu0 0
        %6836 = vmatprep.subr.bf16.mxu0 0
        %6837 = vmatpush2.bf16.msra.mxu0 0
        %6838 = vmatprep.subr.bf16.mxu0 0
        %6839 = vmatpush2.bf16.msra.mxu0 0
        %6840 = vmatprep.subr.bf16.mxu0 0
        %6841 = vmatpush2.bf16.msra.mxu0 %v6378
        %6842 = vmatprep.subr.bf16.mxu0 0
        %6843 = vmatpush2.bf16.msra.mxu0 %v6375
        %6844 = vmatprep.subr.bf16.mxu0 0
        %6845 = vmatpush2.bf16.msra.mxu0 %v6372
        %6846 = vmatprep.subr.bf16.mxu0 0
        %6847 = vmatpush2.bf16.msra.mxu0 %v6369
        %6848 = vmatprep.mubr.bf16.mxu0 %v6513
        %6849 = vmatmul.mubr.bf16.gmra.mxu0 %v5617
        %v6850 = vpop.f32.mrf.mxu0
        %v6851 = vadd.f32 %v6795, %v6850
        %v6852 = vpop.f32.mrf.mxu0
        %v6853 = vpop.f32.mrf.mxu0
        %v6854 = vadd.f32 %v6798, %v6853
        %v6855 = vpop.f32.mrf.mxu0
        %6856 = vmatprep.mubr.bf16.mxu0 %v6516
        %6857 = vmatmul.mubr.bf16.gmra.mxu0 %v5623
        %v6858 = vpop.f32.mrf.mxu0
        %v6859 = vadd.f32 %v6803, %v6858
        %v6860 = vpop.f32.mrf.mxu0
        %v6861 = vpop.f32.mrf.mxu0
        %v6862 = vadd.f32 %v6806, %v6861
        %v6863 = vpop.f32.mrf.mxu0
        %6864 = vmatprep.mubr.bf16.mxu0 %v6519
        %6865 = vmatmul.mubr.bf16.gmra.mxu0 %v5629
        %v6866 = vpop.f32.mrf.mxu0
        %v6867 = vadd.f32 %v6811, %v6866
        %v6868 = vpop.f32.mrf.mxu0
        %v6869 = vpop.f32.mrf.mxu0
        %v6870 = vpop.f32.mrf.mxu0
        %6871 = vdwg.mxu0
        %v6872 = vld [vmem:[%s10] sm:$0xff]
        %v6873 = vld [vmem:[%s10 + $0x8] sm:$0xf]
        %v6874 = vld [vmem:[%s10 + $0xc] sm:$0xff]
        %v6875 = vld [vmem:[%s10 + $0x14] sm:$0xf]
        %v6876 = vld [vmem:[%s10 + $0x18] sm:$0xff]
        %v6877 = vld [vmem:[%s10 + $0x20] sm:$0xf]
        %v6878 = vld [vmem:[%s10 + $0x24] sm:$0xff]
        %v6879 = vld [vmem:[%s10 + $0x2c] sm:$0xf]
        %v6880 = vld [vmem:[%s10 + $0x30] sm:$0xff]
        %v6881 = vld [vmem:[%s10 + $0x38] sm:$0xf]
        %v6882 = vld [vmem:[%s10 + $0x3c] sm:$0xff]
        %v6883 = vld [vmem:[%s10 + $0x44] sm:$0xf]
        %v6884 = vld [vmem:[%s10 + $0x48] sm:$0xff]
        %v6885 = vld [vmem:[%s10 + $0x50] sm:$0xf]
        %v6886 = vld [vmem:[%s10 + $0x54] sm:$0xff]
        %v6887 = vld [vmem:[%s10 + $0x5c] sm:$0xf]
        %v6888 = vld [vmem:[%s10 + $0x60] sm:$0xff]
        %v6889 = vld [vmem:[%s10 + $0x68] sm:$0xf]
        %v6890 = vld [vmem:[%s10 + $0x6c] sm:$0xff]
        %v6891 = vld [vmem:[%s10 + $0x74] sm:$0xf]
        %v6892 = vld [vmem:[%s10 + $0x78] sm:$0xff]
        %v6893 = vld [vmem:[%s10 + $0x80] sm:$0xf]
        %v6894 = vld [vmem:[%s10 + $0x84] sm:$0xff]
        %v6895 = vld [vmem:[%s10 + $0x8c] sm:$0xf]
        %v6896 = vld [vmem:[%s10 + $0x90] sm:$0xff]
        %v6897 = vld [vmem:[%s10 + $0x98] sm:$0xf]
        %v6898 = vld [vmem:[%s10 + $0x9c] sm:$0xff]
        %v6899 = vld [vmem:[%s10 + $0xa4] sm:$0xf]
        %v6900 = vld [vmem:[%s10 + $0xa8] sm:$0xff]
        %v6901 = vld [vmem:[%s10 + $0xb0] sm:$0xf]
        %v6902 = vld [vmem:[%s10 + $0xb4] sm:$0xff]
        %v6903 = vld [vmem:[%s10 + $0xbc] sm:$0xf]
        %v6904 = vld [vmem:[%s10 + $0xc0] sm:$0xff]
        %v6905 = vld [vmem:[%s10 + $0xc8] sm:$0xf]
        %v6906 = vld [vmem:[%s10 + $0xcc] sm:$0xff]
        %v6907 = vld [vmem:[%s10 + $0xd4] sm:$0xf]
        %v6908 = vld [vmem:[%s10 + $0xd8] sm:$0xff]
        %v6909 = vld [vmem:[%s10 + $0xe0] sm:$0xf]
        %v6910 = vld [vmem:[%s10 + $0xe4] sm:$0xff]
        %v6911 = vld [vmem:[%s10 + $0xec] sm:$0xf]
        %v6912 = vld [vmem:[%s10 + $0xf0] sm:$0xff]
        %v6913 = vld [vmem:[%s10 + $0xf8] sm:$0xf]
        %v6914 = vld [vmem:[%s10 + $0xfc] sm:$0xff]
        %v6915 = vld [vmem:[%s10 + $0x104] sm:$0xf]
        %v6916 = vld [vmem:[%s10 + $0x108] sm:$0xff]
        %v6917 = vld [vmem:[%s10 + $0x110] sm:$0xf]
        %v6918 = vld [vmem:[%s10 + $0x114] sm:$0xff]
        %v6919 = vld [vmem:[%s10 + $0x11c] sm:$0xf]
        %v6920 = vld [vmem:[%s10 + $0x120] sm:$0xff]
        %v6921 = vld [vmem:[%s10 + $0x128] sm:$0xf]
        %v6922 = vld [vmem:[%s10 + $0x12c] sm:$0xff]
        %v6923 = vld [vmem:[%s10 + $0x134] sm:$0xf]
        %v6924 = vld [vmem:[%s10 + $0x138] sm:$0xff]
        %v6925 = vld [vmem:[%s10 + $0x140] sm:$0xf]
        %v6926 = vld [vmem:[%s10 + $0x144] sm:$0xff]
        %v6927 = vld [vmem:[%s10 + $0x14c] sm:$0xf]
        %v6928 = vld [vmem:[%s10 + $0x150] sm:$0xff]
        %v6929 = vld [vmem:[%s10 + $0x158] sm:$0xf]
        %v6930 = vld [vmem:[%s10 + $0x15c] sm:$0xff]
        %v6931 = vld [vmem:[%s10 + $0x164] sm:$0xf]
        %v6932 = vld [vmem:[%s10 + $0x168] sm:$0xff]
        %v6933 = vld [vmem:[%s10 + $0x170] sm:$0xf]
        %v6934 = vld [vmem:[%s10 + $0x174] sm:$0xff]
        %v6935 = vld [vmem:[%s10 + $0x17c] sm:$0xf]
        %v6936 = vld [vmem:[%s10 + $0x180] sm:$0xff]
        %v6937 = vld [vmem:[%s10 + $0x188] sm:$0xf]
        %v6938 = vld [vmem:[%s10 + $0x18c] sm:$0xff]
        %v6939 = vld [vmem:[%s10 + $0x194] sm:$0xf]
        %v6940 = vld [vmem:[%s10 + $0x198] sm:$0xff]
        %v6941 = vld [vmem:[%s10 + $0x1a0] sm:$0xf]
        %v6942 = vld [vmem:[%s10 + $0x1a4] sm:$0xff]
        %v6943 = vld [vmem:[%s10 + $0x1ac] sm:$0xf]
        %v6944 = vld [vmem:[%s10 + $0x1b0] sm:$0xff]
        %v6945 = vld [vmem:[%s10 + $0x1b8] sm:$0xf]
        %v6946 = vld [vmem:[%s10 + $0x1bc] sm:$0xff]
        %v6947 = vld [vmem:[%s10 + $0x1c4] sm:$0xf]
        %v6948 = vld [vmem:[%s10 + $0x1c8] sm:$0xff]
        %v6949 = vld [vmem:[%s10 + $0x1d0] sm:$0xf]
        %v6950 = vld [vmem:[%s10 + $0x1d4] sm:$0xff]
        %v6951 = vld [vmem:[%s10 + $0x1dc] sm:$0xf]
        %v6952 = vld [vmem:[%s10 + $0x1e0] sm:$0xff]
        %v6953 = vld [vmem:[%s10 + $0x1e8] sm:$0xf]
        %v6954 = vld [vmem:[%s10 + $0x1ec] sm:$0xff]
        %v6955 = vld [vmem:[%s10 + $0x1f4] sm:$0xf]
        %v6956 = vld [vmem:[%s10 + $0x1f8] sm:$0xff]
        %v6957 = vld [vmem:[%s10 + $0x200] sm:$0xf]
        %v6958 = vld [vmem:[%s10 + $0x204] sm:$0xff]
        %v6959 = vld [vmem:[%s10 + $0x20c] sm:$0xf]
        %v6960 = vld [vmem:[%s10 + $0x210] sm:$0xff]
        %v6961 = vld [vmem:[%s10 + $0x218] sm:$0xf]
        %v6962 = vld [vmem:[%s10 + $0x21c] sm:$0xff]
        %v6963 = vld [vmem:[%s10 + $0x224] sm:$0xf]
        %v6964 = vld [vmem:[%s10 + $0x228] sm:$0xff]
        %v6965 = vld [vmem:[%s10 + $0x230] sm:$0xf]
        %v6966 = vld [vmem:[%s10 + $0x234] sm:$0xff]
        %v6967 = vld [vmem:[%s10 + $0x23c] sm:$0xf]
        %v6968 = vld [vmem:[%s10 + $0x240] sm:$0xff]
        %v6969 = vld [vmem:[%s10 + $0x248] sm:$0xf]
        %v6970 = vld [vmem:[%s10 + $0x24c] sm:$0xff]
        %v6971 = vld [vmem:[%s10 + $0x254] sm:$0xf]
        %v6972 = vld [vmem:[%s10 + $0x258] sm:$0xff]
        %v6973 = vld [vmem:[%s10 + $0x260] sm:$0xf]
        %v6974 = vld [vmem:[%s10 + $0x264] sm:$0xff]
        %v6975 = vld [vmem:[%s10 + $0x26c] sm:$0xf]
        %v6976 = vld [vmem:[%s10 + $0x270] sm:$0xff]
        %v6977 = vld [vmem:[%s10 + $0x278] sm:$0xf]
        %v6978 = vld [vmem:[%s10 + $0x27c] sm:$0xff]
        %v6979 = vld [vmem:[%s10 + $0x284] sm:$0xf]
        %v6980 = vld [vmem:[%s10 + $0x288] sm:$0xff]
        %v6981 = vld [vmem:[%s10 + $0x290] sm:$0xf]
        %v6982 = vld [vmem:[%s10 + $0x294] sm:$0xff]
        %v6983 = vld [vmem:[%s10 + $0x29c] sm:$0xf]
        %v6984 = vld [vmem:[%s10 + $0x2a0] sm:$0xff]
        %v6985 = vld [vmem:[%s10 + $0x2a8] sm:$0xf]
        %v6986 = vld [vmem:[%s10 + $0x2ac] sm:$0xff]
        %v6987 = vld [vmem:[%s10 + $0x2b4] sm:$0xf]
        %v6988 = vld [vmem:[%s10 + $0x2b8] sm:$0xff]
        %v6989 = vld [vmem:[%s10 + $0x2c0] sm:$0xf]
        %v6990 = vld [vmem:[%s10 + $0x2c4] sm:$0xff]
        %v6991 = vld [vmem:[%s10 + $0x2cc] sm:$0xf]
        %v6992 = vld [vmem:[%s10 + $0x2d0] sm:$0xff]
        %v6993 = vld [vmem:[%s10 + $0x2d8] sm:$0xf]
        %v6994 = vld [vmem:[%s10 + $0x2dc] sm:$0xff]
        %v6995 = vld [vmem:[%s10 + $0x2e4] sm:$0xf]
        %v6996 = vld [vmem:[%s10 + $0x2e8] sm:$0xff]
        %v6997 = vld [vmem:[%s10 + $0x2f0] sm:$0xf]
        %v6998 = vld [vmem:[%s10 + $0x2f4] sm:$0xff]
        %v6999 = vld [vmem:[%s10 + $0x2fc] sm:$0xf]
        %v7000 = vld [vmem:[%s10 + $0x300] sm:$0xff]
        %v7001 = vld [vmem:[%s10 + $0x308] sm:$0xf]
        %v7002 = vld [vmem:[%s10 + $0x30c] sm:$0xff]
        %v7003 = vld [vmem:[%s10 + $0x314] sm:$0xf]
        %v7004 = vld [vmem:[%s10 + $0x318] sm:$0xff]
        %v7005 = vld [vmem:[%s10 + $0x320] sm:$0xf]
        %v7006 = vld [vmem:[%s10 + $0x324] sm:$0xff]
        %v7007 = vld [vmem:[%s10 + $0x32c] sm:$0xf]
        %v7008 = vld [vmem:[%s10 + $0x330] sm:$0xff]
        %v7009 = vld [vmem:[%s10 + $0x338] sm:$0xf]
        %v7010 = vld [vmem:[%s10 + $0x33c] sm:$0xff]
        %v7011 = vld [vmem:[%s10 + $0x344] sm:$0xf]
        %v7012 = vld [vmem:[%s10 + $0x348] sm:$0xff]
        %v7013 = vld [vmem:[%s10 + $0x350] sm:$0xf]
        %v7014 = vld [vmem:[%s10 + $0x354] sm:$0xff]
        %v7015 = vld [vmem:[%s10 + $0x35c] sm:$0xf]
        %v7016 = vld [vmem:[%s10 + $0x360] sm:$0xff]
        %v7017 = vld [vmem:[%s10 + $0x368] sm:$0xf]
        %v7018 = vld [vmem:[%s10 + $0x36c] sm:$0xff]
        %v7019 = vld [vmem:[%s10 + $0x374] sm:$0xf]
        %v7020 = vld [vmem:[%s10 + $0x378] sm:$0xff]
        %v7021 = vld [vmem:[%s10 + $0x380] sm:$0xf]
        %v7022 = vld [vmem:[%s10 + $0x384] sm:$0xff]
        %v7023 = vld [vmem:[%s10 + $0x38c] sm:$0xf]
        %v7024 = vld [vmem:[%s10 + $0x390] sm:$0xff]
        %v7025 = vld [vmem:[%s10 + $0x398] sm:$0xf]
        %v7026 = vld [vmem:[%s10 + $0x39c] sm:$0xff]
        %v7027 = vld [vmem:[%s10 + $0x3a4] sm:$0xf]
        %v7028 = vld [vmem:[%s10 + $0x3a8] sm:$0xff]
        %v7029 = vld [vmem:[%s10 + $0x3b0] sm:$0xf]
        %v7030 = vld [vmem:[%s10 + $0x3b4] sm:$0xff]
        %v7031 = vld [vmem:[%s10 + $0x3bc] sm:$0xf]
        %v7032 = vld [vmem:[%s10 + $0x3c0] sm:$0xff]
        %v7033 = vld [vmem:[%s10 + $0x3c8] sm:$0xf]
        %v7034 = vld [vmem:[%s10 + $0x3cc] sm:$0xff]
        %v7035 = vld [vmem:[%s10 + $0x3d4] sm:$0xf]
        %v7036 = vld [vmem:[%s10 + $0x3d8] sm:$0xff]
        %v7037 = vld [vmem:[%s10 + $0x3e0] sm:$0xf]
        %v7038 = vld [vmem:[%s10 + $0x3e4] sm:$0xff]
        %v7039 = vld [vmem:[%s10 + $0x3ec] sm:$0xf]
        %v7040 = vld [vmem:[%s10 + $0x3f0] sm:$0xff]
        %v7041 = vld [vmem:[%s10 + $0x3f8] sm:$0xf]
        %v7042 = vld [vmem:[%s10 + $0x3fc] sm:$0xff]
        %v7043 = vld [vmem:[%s10 + $0x404] sm:$0xf]
        %v7044 = vld [vmem:[%s10 + $0x408] sm:$0xff]
        %v7045 = vld [vmem:[%s10 + $0x410] sm:$0xf]
        %v7046 = vld [vmem:[%s10 + $0x414] sm:$0xff]
        %v7047 = vld [vmem:[%s10 + $0x41c] sm:$0xf]
        %v7224 = vunpack.c.l.b16 %v6872
        %v7225 = vunpack.c.h.b16 %v6872
        %v7226 = vunpack.c.l.b16 %v6873
        %v7227 = vunpack.c.l.b16 %v6874
        %v7228 = vunpack.c.h.b16 %v6874
        %v7229 = vunpack.c.l.b16 %v6875
        %v7230 = vunpack.c.l.b16 %v6876
        %v7231 = vunpack.c.h.b16 %v6876
        %v7232 = vunpack.c.l.b16 %v6877
        %v7233 = vunpack.c.l.b16 %v6878
        %v7234 = vunpack.c.h.b16 %v6878
        %v7235 = vunpack.c.l.b16 %v6879
        %v7236 = vunpack.c.l.b16 %v6880
        %v7237 = vunpack.c.h.b16 %v6880
        %v7238 = vunpack.c.l.b16 %v6881
        %v7239 = vunpack.c.l.b16 %v6882
        %v7240 = vunpack.c.h.b16 %v6882
        %v7241 = vunpack.c.l.b16 %v6883
        %v7242 = vunpack.c.l.b16 %v6884
        %v7243 = vunpack.c.h.b16 %v6884
        %v7244 = vunpack.c.l.b16 %v6885
        %v7245 = vunpack.c.l.b16 %v6886
        %v7246 = vunpack.c.h.b16 %v6886
        %v7247 = vunpack.c.l.b16 %v6887
        %v7248 = vunpack.c.l.b16 %v6888
        %v7249 = vunpack.c.h.b16 %v6888
        %v7250 = vunpack.c.l.b16 %v6889
        %v7251 = vunpack.c.l.b16 %v6890
        %v7252 = vunpack.c.h.b16 %v6890
        %v7253 = vunpack.c.l.b16 %v6891
        %v7254 = vunpack.c.l.b16 %v6892
        %v7255 = vunpack.c.h.b16 %v6892
        %v7256 = vunpack.c.l.b16 %v6893
        %v7257 = vunpack.c.l.b16 %v6894
        %v7258 = vunpack.c.h.b16 %v6894
        %v7259 = vunpack.c.l.b16 %v6895
        %v7260 = vunpack.c.l.b16 %v6896
        %v7261 = vunpack.c.h.b16 %v6896
        %v7262 = vunpack.c.l.b16 %v6897
        %v7263 = vunpack.c.l.b16 %v6898
        %v7264 = vunpack.c.h.b16 %v6898
        %v7265 = vunpack.c.l.b16 %v6899
        %v7266 = vunpack.c.l.b16 %v6900
        %v7267 = vunpack.c.h.b16 %v6900
        %v7268 = vunpack.c.l.b16 %v6901
        %v7269 = vunpack.c.l.b16 %v6902
        %v7270 = vunpack.c.h.b16 %v6902
        %v7271 = vunpack.c.l.b16 %v6903
        %v7272 = vunpack.c.l.b16 %v6904
        %v7273 = vunpack.c.h.b16 %v6904
        %v7274 = vunpack.c.l.b16 %v6905
        %v7275 = vunpack.c.l.b16 %v6906
        %v7276 = vunpack.c.h.b16 %v6906
        %v7277 = vunpack.c.l.b16 %v6907
        %v7278 = vunpack.c.l.b16 %v6908
        %v7279 = vunpack.c.h.b16 %v6908
        %v7280 = vunpack.c.l.b16 %v6909
        %v7281 = vunpack.c.l.b16 %v6910
        %v7282 = vunpack.c.h.b16 %v6910
        %v7283 = vunpack.c.l.b16 %v6911
        %v7284 = vunpack.c.l.b16 %v6912
        %v7285 = vunpack.c.h.b16 %v6912
        %v7286 = vunpack.c.l.b16 %v6913
        %v7287 = vunpack.c.l.b16 %v6914
        %v7288 = vunpack.c.h.b16 %v6914
        %v7289 = vunpack.c.l.b16 %v6915
        %v7290 = vunpack.c.l.b16 %v6916
        %v7291 = vunpack.c.h.b16 %v6916
        %v7292 = vunpack.c.l.b16 %v6917
        %v7293 = vunpack.c.l.b16 %v6918
        %v7294 = vunpack.c.h.b16 %v6918
        %v7295 = vunpack.c.l.b16 %v6919
        %v7296 = vunpack.c.l.b16 %v6920
        %v7297 = vunpack.c.h.b16 %v6920
        %v7298 = vunpack.c.l.b16 %v6921
        %v7299 = vunpack.c.l.b16 %v6922
        %v7300 = vunpack.c.h.b16 %v6922
        %v7301 = vunpack.c.l.b16 %v6923
        %v7302 = vunpack.c.l.b16 %v6924
        %v7303 = vunpack.c.h.b16 %v6924
        %v7304 = vunpack.c.l.b16 %v6925
        %v7305 = vunpack.c.l.b16 %v6926
        %v7306 = vunpack.c.h.b16 %v6926
        %v7307 = vunpack.c.l.b16 %v6927
        %v7308 = vunpack.c.l.b16 %v6928
        %v7309 = vunpack.c.h.b16 %v6928
        %v7310 = vunpack.c.l.b16 %v6929
        %v7311 = vunpack.c.l.b16 %v6930
        %v7312 = vunpack.c.h.b16 %v6930
        %v7313 = vunpack.c.l.b16 %v6931
        %v7314 = vunpack.c.l.b16 %v6932
        %v7315 = vunpack.c.h.b16 %v6932
        %v7316 = vunpack.c.l.b16 %v6933
        %v7317 = vunpack.c.l.b16 %v6934
        %v7318 = vunpack.c.h.b16 %v6934
        %v7319 = vunpack.c.l.b16 %v6935
        %v7320 = vunpack.c.l.b16 %v6936
        %v7321 = vunpack.c.h.b16 %v6936
        %v7322 = vunpack.c.l.b16 %v6937
        %v7323 = vunpack.c.l.b16 %v6938
        %v7324 = vunpack.c.h.b16 %v6938
        %v7325 = vunpack.c.l.b16 %v6939
        %v7326 = vunpack.c.l.b16 %v6940
        %v7327 = vunpack.c.h.b16 %v6940
        %v7328 = vunpack.c.l.b16 %v6941
        %v7329 = vunpack.c.l.b16 %v6942
        %v7330 = vunpack.c.h.b16 %v6942
        %v7331 = vunpack.c.l.b16 %v6943
        %v7332 = vunpack.c.l.b16 %v6944
        %v7333 = vunpack.c.h.b16 %v6944
        %v7334 = vunpack.c.l.b16 %v6945
        %v7335 = vunpack.c.l.b16 %v6946
        %v7336 = vunpack.c.h.b16 %v6946
        %v7337 = vunpack.c.l.b16 %v6947
        %v7338 = vunpack.c.l.b16 %v6948
        %v7339 = vunpack.c.h.b16 %v6948
        %v7340 = vunpack.c.l.b16 %v6949
        %v7341 = vunpack.c.l.b16 %v6950
        %v7342 = vunpack.c.h.b16 %v6950
        %v7343 = vunpack.c.l.b16 %v6951
        %v7344 = vunpack.c.l.b16 %v6952
        %v7345 = vunpack.c.h.b16 %v6952
        %v7346 = vunpack.c.l.b16 %v6953
        %v7347 = vunpack.c.l.b16 %v6954
        %v7348 = vunpack.c.h.b16 %v6954
        %v7349 = vunpack.c.l.b16 %v6955
        %v7350 = vunpack.c.l.b16 %v6956
        %v7351 = vunpack.c.h.b16 %v6956
        %v7352 = vunpack.c.l.b16 %v6957
        %v7353 = vunpack.c.l.b16 %v6958
        %v7354 = vunpack.c.h.b16 %v6958
        %v7355 = vunpack.c.l.b16 %v6959
        %v7356 = vunpack.c.l.b16 %v6960
        %v7357 = vunpack.c.h.b16 %v6960
        %v7358 = vunpack.c.l.b16 %v6961
        %v7359 = vunpack.c.l.b16 %v6962
        %v7360 = vunpack.c.h.b16 %v6962
        %v7361 = vunpack.c.l.b16 %v6963
        %v7362 = vunpack.c.l.b16 %v6964
        %v7363 = vunpack.c.h.b16 %v6964
        %v7364 = vunpack.c.l.b16 %v6965
        %v7365 = vunpack.c.l.b16 %v6966
        %v7366 = vunpack.c.h.b16 %v6966
        %v7367 = vunpack.c.l.b16 %v6967
        %v7368 = vunpack.c.l.b16 %v6968
        %v7369 = vunpack.c.h.b16 %v6968
        %v7370 = vunpack.c.l.b16 %v6969
        %v7371 = vunpack.c.l.b16 %v6970
        %v7372 = vunpack.c.h.b16 %v6970
        %v7373 = vunpack.c.l.b16 %v6971
        %v7374 = vunpack.c.l.b16 %v6972
        %v7375 = vunpack.c.h.b16 %v6972
        %v7376 = vunpack.c.l.b16 %v6973
        %v7377 = vunpack.c.l.b16 %v6974
        %v7378 = vunpack.c.h.b16 %v6974
        %v7379 = vunpack.c.l.b16 %v6975
        %v7380 = vunpack.c.l.b16 %v6976
        %v7381 = vunpack.c.h.b16 %v6976
        %v7382 = vunpack.c.l.b16 %v6977
        %v7383 = vunpack.c.l.b16 %v6978
        %v7384 = vunpack.c.h.b16 %v6978
        %v7385 = vunpack.c.l.b16 %v6979
        %v7386 = vunpack.c.l.b16 %v6980
        %v7387 = vunpack.c.h.b16 %v6980
        %v7388 = vunpack.c.l.b16 %v6981
        %v7389 = vunpack.c.l.b16 %v6982
        %v7390 = vunpack.c.h.b16 %v6982
        %v7391 = vunpack.c.l.b16 %v6983
        %v7392 = vunpack.c.l.b16 %v6984
        %v7393 = vunpack.c.h.b16 %v6984
        %v7394 = vunpack.c.l.b16 %v6985
        %v7395 = vunpack.c.l.b16 %v6986
        %v7396 = vunpack.c.h.b16 %v6986
        %v7397 = vunpack.c.l.b16 %v6987
        %v7398 = vunpack.c.l.b16 %v6988
        %v7399 = vunpack.c.h.b16 %v6988
        %v7400 = vunpack.c.l.b16 %v6989
        %v7401 = vunpack.c.l.b16 %v6990
        %v7402 = vunpack.c.h.b16 %v6990
        %v7403 = vunpack.c.l.b16 %v6991
        %v7404 = vunpack.c.l.b16 %v6992
        %v7405 = vunpack.c.h.b16 %v6992
        %v7406 = vunpack.c.l.b16 %v6993
        %v7407 = vunpack.c.l.b16 %v6994
        %v7408 = vunpack.c.h.b16 %v6994
        %v7409 = vunpack.c.l.b16 %v6995
        %v7410 = vunpack.c.l.b16 %v6996
        %v7411 = vunpack.c.h.b16 %v6996
        %v7412 = vunpack.c.l.b16 %v6997
        %v7413 = vunpack.c.l.b16 %v6998
        %v7414 = vunpack.c.h.b16 %v6998
        %v7415 = vunpack.c.l.b16 %v6999
        %v7416 = vunpack.c.l.b16 %v7000
        %v7417 = vunpack.c.h.b16 %v7000
        %v7418 = vunpack.c.l.b16 %v7001
        %v7419 = vunpack.c.l.b16 %v7002
        %v7420 = vunpack.c.h.b16 %v7002
        %v7421 = vunpack.c.l.b16 %v7003
        %v7422 = vunpack.c.l.b16 %v7004
        %v7423 = vunpack.c.h.b16 %v7004
        %v7424 = vunpack.c.l.b16 %v7005
        %v7425 = vunpack.c.l.b16 %v7006
        %v7426 = vunpack.c.h.b16 %v7006
        %v7427 = vunpack.c.l.b16 %v7007
        %v7428 = vunpack.c.l.b16 %v7008
        %v7429 = vunpack.c.h.b16 %v7008
        %v7430 = vunpack.c.l.b16 %v7009
        %v7431 = vunpack.c.l.b16 %v7010
        %v7432 = vunpack.c.h.b16 %v7010
        %v7433 = vunpack.c.l.b16 %v7011
        %v7434 = vunpack.c.l.b16 %v7012
        %v7435 = vunpack.c.h.b16 %v7012
        %v7436 = vunpack.c.l.b16 %v7013
        %v7437 = vunpack.c.l.b16 %v7014
        %v7438 = vunpack.c.h.b16 %v7014
        %v7439 = vunpack.c.l.b16 %v7015
        %v7440 = vunpack.c.l.b16 %v7016
        %v7441 = vunpack.c.h.b16 %v7016
        %v7442 = vunpack.c.l.b16 %v7017
        %v7443 = vunpack.c.l.b16 %v7018
        %v7444 = vunpack.c.h.b16 %v7018
        %v7445 = vunpack.c.l.b16 %v7019
        %v7446 = vunpack.c.l.b16 %v7020
        %v7447 = vunpack.c.h.b16 %v7020
        %v7448 = vunpack.c.l.b16 %v7021
        %v7449 = vunpack.c.l.b16 %v7022
        %v7450 = vunpack.c.h.b16 %v7022
        %v7451 = vunpack.c.l.b16 %v7023
        %v7452 = vunpack.c.l.b16 %v7024
        %v7453 = vunpack.c.h.b16 %v7024
        %v7454 = vunpack.c.l.b16 %v7025
        %v7455 = vunpack.c.l.b16 %v7026
        %v7456 = vunpack.c.h.b16 %v7026
        %v7457 = vunpack.c.l.b16 %v7027
        %v7458 = vunpack.c.l.b16 %v7028
        %v7459 = vunpack.c.h.b16 %v7028
        %v7460 = vunpack.c.l.b16 %v7029
        %v7461 = vunpack.c.l.b16 %v7030
        %v7462 = vunpack.c.h.b16 %v7030
        %v7463 = vunpack.c.l.b16 %v7031
        %v7464 = vunpack.c.l.b16 %v7032
        %v7465 = vunpack.c.h.b16 %v7032
        %v7466 = vunpack.c.l.b16 %v7033
        %v7467 = vunpack.c.l.b16 %v7034
        %v7468 = vunpack.c.h.b16 %v7034
        %v7469 = vunpack.c.l.b16 %v7035
        %v7470 = vunpack.c.l.b16 %v7036
        %v7471 = vunpack.c.h.b16 %v7036
        %v7472 = vunpack.c.l.b16 %v7037
        %v7473 = vunpack.c.l.b16 %v7038
        %v7474 = vunpack.c.h.b16 %v7038
        %v7475 = vunpack.c.l.b16 %v7039
        %v7476 = vunpack.c.l.b16 %v7040
        %v7477 = vunpack.c.h.b16 %v7040
        %v7478 = vunpack.c.l.b16 %v7041
        %v7479 = vunpack.c.l.b16 %v7042
        %v7480 = vunpack.c.h.b16 %v7042
        %v7481 = vunpack.c.l.b16 %v7043
        %v7482 = vunpack.c.l.b16 %v7044
        %v7483 = vunpack.c.h.b16 %v7044
        %v7484 = vunpack.c.l.b16 %v7045
        %v7485 = vunpack.c.l.b16 %v7046
        %v7486 = vunpack.c.h.b16 %v7046
        %v7487 = vunpack.c.l.b16 %v7047
        %v7488 = vpack.c.b16 %v7227, %v7224
        %v7489 = vpack.c.b16 %v7228, %v7225
        %v7490 = vpack.c.b16 %v7229, %v7226
        %v7491 = vpack.c.b16 %v7233, %v7230
        %v7492 = vpack.c.b16 %v7234, %v7231
        %v7493 = vpack.c.b16 %v7235, %v7232
        %v7494 = vpack.c.b16 %v7239, %v7236
        %v7495 = vpack.c.b16 %v7240, %v7237
        %v7496 = vpack.c.b16 %v7241, %v7238
        %v7497 = vpack.c.b16 %v7245, %v7242
        %v7498 = vpack.c.b16 %v7246, %v7243
        %v7499 = vpack.c.b16 %v7247, %v7244
        %v7500 = vpack.c.b16 %v7251, %v7248
        %v7501 = vpack.c.b16 %v7252, %v7249
        %v7502 = vpack.c.b16 %v7253, %v7250
        %v7503 = vpack.c.b16 %v7257, %v7254
        %v7504 = vpack.c.b16 %v7258, %v7255
        %v7505 = vpack.c.b16 %v7259, %v7256
        %v7506 = vpack.c.b16 %v7263, %v7260
        %v7507 = vpack.c.b16 %v7264, %v7261
        %v7508 = vpack.c.b16 %v7265, %v7262
        %v7509 = vpack.c.b16 %v7269, %v7266
        %v7510 = vpack.c.b16 %v7270, %v7267
        %v7511 = vpack.c.b16 %v7271, %v7268
        %v7512 = vpack.c.b16 %v7275, %v7272
        %v7513 = vpack.c.b16 %v7276, %v7273
        %v7514 = vpack.c.b16 %v7277, %v7274
        %v7515 = vpack.c.b16 %v7281, %v7278
        %v7516 = vpack.c.b16 %v7282, %v7279
        %v7517 = vpack.c.b16 %v7283, %v7280
        %v7518 = vpack.c.b16 %v7287, %v7284
        %v7519 = vpack.c.b16 %v7288, %v7285
        %v7520 = vpack.c.b16 %v7289, %v7286
        %v7521 = vpack.c.b16 %v7293, %v7290
        %v7522 = vpack.c.b16 %v7294, %v7291
        %v7523 = vpack.c.b16 %v7295, %v7292
        %v7524 = vpack.c.b16 %v7299, %v7296
        %v7525 = vpack.c.b16 %v7300, %v7297
        %v7526 = vpack.c.b16 %v7301, %v7298
        %v7527 = vpack.c.b16 %v7305, %v7302
        %v7528 = vpack.c.b16 %v7306, %v7303
        %v7529 = vpack.c.b16 %v7307, %v7304
        %v7530 = vpack.c.b16 %v7311, %v7308
        %v7531 = vpack.c.b16 %v7312, %v7309
        %v7532 = vpack.c.b16 %v7313, %v7310
        %v7533 = vpack.c.b16 %v7317, %v7314
        %v7534 = vpack.c.b16 %v7318, %v7315
        %v7535 = vpack.c.b16 %v7319, %v7316
        %v7536 = vpack.c.b16 %v7323, %v7320
        %v7537 = vpack.c.b16 %v7324, %v7321
        %v7538 = vpack.c.b16 %v7325, %v7322
        %v7539 = vpack.c.b16 %v7329, %v7326
        %v7540 = vpack.c.b16 %v7330, %v7327
        %v7541 = vpack.c.b16 %v7331, %v7328
        %v7542 = vpack.c.b16 %v7335, %v7332
        %v7543 = vpack.c.b16 %v7336, %v7333
        %v7544 = vpack.c.b16 %v7337, %v7334
        %v7545 = vpack.c.b16 %v7341, %v7338
        %v7546 = vpack.c.b16 %v7342, %v7339
        %v7547 = vpack.c.b16 %v7343, %v7340
        %v7548 = vpack.c.b16 %v7347, %v7344
        %v7549 = vpack.c.b16 %v7348, %v7345
        %v7550 = vpack.c.b16 %v7349, %v7346
        %v7551 = vpack.c.b16 %v7353, %v7350
        %v7552 = vpack.c.b16 %v7354, %v7351
        %v7553 = vpack.c.b16 %v7355, %v7352
        %v7554 = vpack.c.b16 %v7359, %v7356
        %v7555 = vpack.c.b16 %v7360, %v7357
        %v7556 = vpack.c.b16 %v7361, %v7358
        %v7557 = vpack.c.b16 %v7365, %v7362
        %v7558 = vpack.c.b16 %v7366, %v7363
        %v7559 = vpack.c.b16 %v7367, %v7364
        %v7560 = vpack.c.b16 %v7371, %v7368
        %v7561 = vpack.c.b16 %v7372, %v7369
        %v7562 = vpack.c.b16 %v7373, %v7370
        %v7563 = vpack.c.b16 %v7377, %v7374
        %v7564 = vpack.c.b16 %v7378, %v7375
        %v7565 = vpack.c.b16 %v7379, %v7376
        %v7566 = vpack.c.b16 %v7383, %v7380
        %v7567 = vpack.c.b16 %v7384, %v7381
        %v7568 = vpack.c.b16 %v7385, %v7382
        %v7569 = vpack.c.b16 %v7389, %v7386
        %v7570 = vpack.c.b16 %v7390, %v7387
        %v7571 = vpack.c.b16 %v7391, %v7388
        %v7572 = vpack.c.b16 %v7395, %v7392
        %v7573 = vpack.c.b16 %v7396, %v7393
        %v7574 = vpack.c.b16 %v7397, %v7394
        %v7575 = vpack.c.b16 %v7401, %v7398
        %v7576 = vpack.c.b16 %v7402, %v7399
        %v7577 = vpack.c.b16 %v7403, %v7400
        %v7578 = vpack.c.b16 %v7407, %v7404
        %v7579 = vpack.c.b16 %v7408, %v7405
        %v7580 = vpack.c.b16 %v7409, %v7406
        %v7581 = vpack.c.b16 %v7413, %v7410
        %v7582 = vpack.c.b16 %v7414, %v7411
        %v7583 = vpack.c.b16 %v7415, %v7412
        %v7584 = vpack.c.b16 %v7419, %v7416
        %v7585 = vpack.c.b16 %v7420, %v7417
        %v7586 = vpack.c.b16 %v7421, %v7418
        %v7587 = vpack.c.b16 %v7425, %v7422
        %v7588 = vpack.c.b16 %v7426, %v7423
        %v7589 = vpack.c.b16 %v7427, %v7424
        %v7590 = vpack.c.b16 %v7431, %v7428
        %v7591 = vpack.c.b16 %v7432, %v7429
        %v7592 = vpack.c.b16 %v7433, %v7430
        %v7593 = vpack.c.b16 %v7437, %v7434
        %v7594 = vpack.c.b16 %v7438, %v7435
        %v7595 = vpack.c.b16 %v7439, %v7436
        %v7596 = vpack.c.b16 %v7443, %v7440
        %v7597 = vpack.c.b16 %v7444, %v7441
        %v7598 = vpack.c.b16 %v7445, %v7442
        %v7599 = vpack.c.b16 %v7449, %v7446
        %v7600 = vpack.c.b16 %v7450, %v7447
        %v7601 = vpack.c.b16 %v7451, %v7448
        %v7602 = vpack.c.b16 %v7455, %v7452
        %v7603 = vpack.c.b16 %v7456, %v7453
        %v7604 = vpack.c.b16 %v7457, %v7454
        %v7605 = vpack.c.b16 %v7461, %v7458
        %v7606 = vpack.c.b16 %v7462, %v7459
        %v7607 = vpack.c.b16 %v7463, %v7460
        %v7608 = vpack.c.b16 %v7467, %v7464
        %v7609 = vpack.c.b16 %v7468, %v7465
        %v7610 = vpack.c.b16 %v7469, %v7466
        %v7611 = vpack.c.b16 %v7473, %v7470
        %v7612 = vpack.c.b16 %v7474, %v7471
        %v7613 = vpack.c.b16 %v7475, %v7472
        %v7614 = vpack.c.b16 %v7479, %v7476
        %v7615 = vpack.c.b16 %v7480, %v7477
        %v7616 = vpack.c.b16 %v7481, %v7478
        %v7617 = vpack.c.b16 %v7485, %v7482
        %v7618 = vpack.c.b16 %v7486, %v7483
        %v7619 = vpack.c.b16 %v7487, %v7484
        %7752 = vmatprep.subr.bf16.mxu0 %v7510
        %7753 = vmatpush1.bf16.msra.mxu0 %v7509
        %7754 = vmatprep.subr.bf16.mxu0 %v7507
        %7755 = vmatpush1.bf16.msra.mxu0 %v7506
        %7756 = vmatprep.subr.bf16.mxu0 %v7504
        %7757 = vmatpush1.bf16.msra.mxu0 %v7503
        %7758 = vmatprep.subr.bf16.mxu0 %v7501
        %7759 = vmatpush1.bf16.msra.mxu0 %v7500
        %7760 = vmatprep.subr.bf16.mxu0 %v7498
        %7761 = vmatpush1.bf16.msra.mxu0 %v7497
        %7762 = vmatprep.subr.bf16.mxu0 %v7495
        %7763 = vmatpush1.bf16.msra.mxu0 %v7494
        %7764 = vmatprep.subr.bf16.mxu0 %v7492
        %7765 = vmatpush1.bf16.msra.mxu0 %v7491
        %7766 = vmatprep.subr.bf16.mxu0 %v7489
        %7767 = vmatpush1.bf16.msra.mxu0 %v7488
        %7768 = vmatprep.subr.bf16.mxu0 %v7534
        %7769 = vmatpush2.bf16.msra.mxu0 %v7533
        %7770 = vmatprep.subr.bf16.mxu0 %v7531
        %7771 = vmatpush2.bf16.msra.mxu0 %v7530
        %7772 = vmatprep.subr.bf16.mxu0 %v7528
        %7773 = vmatpush2.bf16.msra.mxu0 %v7527
        %7774 = vmatprep.subr.bf16.mxu0 %v7525
        %7775 = vmatpush2.bf16.msra.mxu0 %v7524
        %7776 = vmatprep.subr.bf16.mxu0 %v7522
        %7777 = vmatpush2.bf16.msra.mxu0 %v7521
        %7778 = vmatprep.subr.bf16.mxu0 %v7519
        %7779 = vmatpush2.bf16.msra.mxu0 %v7518
        %7780 = vmatprep.subr.bf16.mxu0 %v7516
        %7781 = vmatpush2.bf16.msra.mxu0 %v7515
        %7782 = vmatprep.subr.bf16.mxu0 %v7513
        %7783 = vmatpush2.bf16.msra.mxu0 %v7512
        %7784 = vmatprep.mubr.bf16.mxu0 %v5614
        %7785 = vmatmul.mubr.bf16.gmra.mxu0 %v5613
        %v7786 = vpop.f32.mrf.mxu0
        %v7787 = vadd.f32 0.0, %v7786
        %v7788 = vpop.f32.mrf.mxu0
        %v7789 = vadd.f32 0.0, %v7788
        %v7790 = vpop.f32.mrf.mxu0
        %v7791 = vadd.f32 0.0, %v7790
        %v7792 = vpop.f32.mrf.mxu0
        %v7793 = vadd.f32 0.0, %v7792
        %7794 = vmatprep.mubr.bf16.mxu0 %v5620
        %7795 = vmatmul.mubr.bf16.gmra.mxu0 %v5619
        %v7796 = vpop.f32.mrf.mxu0
        %v7797 = vadd.f32 0.0, %v7796
        %v7798 = vpop.f32.mrf.mxu0
        %v7799 = vadd.f32 0.0, %v7798
        %v7800 = vpop.f32.mrf.mxu0
        %v7801 = vadd.f32 0.0, %v7800
        %v7802 = vpop.f32.mrf.mxu0
        %v7803 = vadd.f32 0.0, %v7802
        %7804 = vmatprep.mubr.bf16.mxu0 %v5626
        %7805 = vmatmul.mubr.bf16.gmra.mxu0 %v5625
        %v7806 = vpop.f32.mrf.mxu0
        %v7807 = vadd.f32 0.0, %v7806
        %v7808 = vpop.f32.mrf.mxu0
        %v7809 = vadd.f32 0.0, %v7808
        %v7810 = vpop.f32.mrf.mxu0
        %v7811 = vpop.f32.mrf.mxu0
        %7812 = vdwg.mxu0
        %7813 = vmatprep.subr.bf16.mxu0 %v7558
        %7814 = vmatpush1.bf16.msra.mxu0 %v7557
        %7815 = vmatprep.subr.bf16.mxu0 %v7555
        %7816 = vmatpush1.bf16.msra.mxu0 %v7554
        %7817 = vmatprep.subr.bf16.mxu0 %v7552
        %7818 = vmatpush1.bf16.msra.mxu0 %v7551
        %7819 = vmatprep.subr.bf16.mxu0 %v7549
        %7820 = vmatpush1.bf16.msra.mxu0 %v7548
        %7821 = vmatprep.subr.bf16.mxu0 %v7546
        %7822 = vmatpush1.bf16.msra.mxu0 %v7545
        %7823 = vmatprep.subr.bf16.mxu0 %v7543
        %7824 = vmatpush1.bf16.msra.mxu0 %v7542
        %7825 = vmatprep.subr.bf16.mxu0 %v7540
        %7826 = vmatpush1.bf16.msra.mxu0 %v7539
        %7827 = vmatprep.subr.bf16.mxu0 %v7537
        %7828 = vmatpush1.bf16.msra.mxu0 %v7536
        %7829 = vmatprep.subr.bf16.mxu0 %v7582
        %7830 = vmatpush2.bf16.msra.mxu0 %v7581
        %7831 = vmatprep.subr.bf16.mxu0 %v7579
        %7832 = vmatpush2.bf16.msra.mxu0 %v7578
        %7833 = vmatprep.subr.bf16.mxu0 %v7576
        %7834 = vmatpush2.bf16.msra.mxu0 %v7575
        %7835 = vmatprep.subr.bf16.mxu0 %v7573
        %7836 = vmatpush2.bf16.msra.mxu0 %v7572
        %7837 = vmatprep.subr.bf16.mxu0 %v7570
        %7838 = vmatpush2.bf16.msra.mxu0 %v7569
        %7839 = vmatprep.subr.bf16.mxu0 %v7567
        %7840 = vmatpush2.bf16.msra.mxu0 %v7566
        %7841 = vmatprep.subr.bf16.mxu0 %v7564
        %7842 = vmatpush2.bf16.msra.mxu0 %v7563
        %7843 = vmatprep.subr.bf16.mxu0 %v7561
        %7844 = vmatpush2.bf16.msra.mxu0 %v7560
        %7845 = vmatprep.mubr.bf16.mxu0 %v5616
        %7846 = vmatmul.mubr.bf16.gmra.mxu0 %v5615
        %v7847 = vpop.f32.mrf.mxu0
        %v7848 = vadd.f32 %v7787, %v7847
        %v7849 = vpop.f32.mrf.mxu0
        %v7850 = vadd.f32 %v7789, %v7849
        %v7851 = vpop.f32.mrf.mxu0
        %v7852 = vadd.f32 %v7791, %v7851
        %v7853 = vpop.f32.mrf.mxu0
        %v7854 = vadd.f32 %v7793, %v7853
        %7855 = vmatprep.mubr.bf16.mxu0 %v5622
        %7856 = vmatmul.mubr.bf16.gmra.mxu0 %v5621
        %v7857 = vpop.f32.mrf.mxu0
        %v7858 = vadd.f32 %v7797, %v7857
        %v7859 = vpop.f32.mrf.mxu0
        %v7860 = vadd.f32 %v7799, %v7859
        %v7861 = vpop.f32.mrf.mxu0
        %v7862 = vadd.f32 %v7801, %v7861
        %v7863 = vpop.f32.mrf.mxu0
        %v7864 = vadd.f32 %v7803, %v7863
        %7865 = vmatprep.mubr.bf16.mxu0 %v5628
        %7866 = vmatmul.mubr.bf16.gmra.mxu0 %v5627
        %v7867 = vpop.f32.mrf.mxu0
        %v7868 = vadd.f32 %v7807, %v7867
        %v7869 = vpop.f32.mrf.mxu0
        %v7870 = vadd.f32 %v7809, %v7869
        %v7871 = vpop.f32.mrf.mxu0
        %v7872 = vpop.f32.mrf.mxu0
        %7873 = vdwg.mxu0
        %7874 = vmatprep.subr.bf16.mxu0 %v7606
        %7875 = vmatpush1.bf16.msra.mxu0 %v7605
        %7876 = vmatprep.subr.bf16.mxu0 %v7603
        %7877 = vmatpush1.bf16.msra.mxu0 %v7602
        %7878 = vmatprep.subr.bf16.mxu0 %v7600
        %7879 = vmatpush1.bf16.msra.mxu0 %v7599
        %7880 = vmatprep.subr.bf16.mxu0 %v7597
        %7881 = vmatpush1.bf16.msra.mxu0 %v7596
        %7882 = vmatprep.subr.bf16.mxu0 %v7594
        %7883 = vmatpush1.bf16.msra.mxu0 %v7593
        %7884 = vmatprep.subr.bf16.mxu0 %v7591
        %7885 = vmatpush1.bf16.msra.mxu0 %v7590
        %7886 = vmatprep.subr.bf16.mxu0 %v7588
        %7887 = vmatpush1.bf16.msra.mxu0 %v7587
        %7888 = vmatprep.subr.bf16.mxu0 %v7585
        %7889 = vmatpush1.bf16.msra.mxu0 %v7584
        %7890 = vmatprep.subr.bf16.mxu0 0
        %7891 = vmatpush2.bf16.msra.mxu0 0
        %7892 = vmatprep.subr.bf16.mxu0 0
        %7893 = vmatpush2.bf16.msra.mxu0 0
        %7894 = vmatprep.subr.bf16.mxu0 0
        %7895 = vmatpush2.bf16.msra.mxu0 0
        %7896 = vmatprep.subr.bf16.mxu0 0
        %7897 = vmatpush2.bf16.msra.mxu0 0
        %7898 = vmatprep.subr.bf16.mxu0 %v7618
        %7899 = vmatpush2.bf16.msra.mxu0 %v7617
        %7900 = vmatprep.subr.bf16.mxu0 %v7615
        %7901 = vmatpush2.bf16.msra.mxu0 %v7614
        %7902 = vmatprep.subr.bf16.mxu0 %v7612
        %7903 = vmatpush2.bf16.msra.mxu0 %v7611
        %7904 = vmatprep.subr.bf16.mxu0 %v7609
        %7905 = vmatpush2.bf16.msra.mxu0 %v7608
        %7906 = vmatprep.mubr.bf16.mxu0 %v6513
        %7907 = vmatmul.mubr.bf16.gmra.mxu0 %v5617
        %v7908 = vpop.f32.mrf.mxu0
        %v7909 = vadd.f32 %v7848, %v7908
        %v7910 = vpop.f32.mrf.mxu0
        %v7911 = vadd.f32 %v7850, %v7910
        %v7912 = vpop.f32.mrf.mxu0
        %v7913 = vadd.f32 %v7852, %v7912
        %v7914 = vpop.f32.mrf.mxu0
        %v7915 = vadd.f32 %v7854, %v7914
        %7916 = vmatprep.mubr.bf16.mxu0 %v6516
        %7917 = vmatmul.mubr.bf16.gmra.mxu0 %v5623
        %v7918 = vpop.f32.mrf.mxu0
        %v7919 = vadd.f32 %v7858, %v7918
        %v7920 = vpop.f32.mrf.mxu0
        %v7921 = vadd.f32 %v7860, %v7920
        %v7922 = vpop.f32.mrf.mxu0
        %v7923 = vadd.f32 %v7862, %v7922
        %v7924 = vpop.f32.mrf.mxu0
        %v7925 = vadd.f32 %v7864, %v7924
        %7926 = vmatprep.mubr.bf16.mxu0 %v6519
        %7927 = vmatmul.mubr.bf16.gmra.mxu0 %v5629
        %v7928 = vpop.f32.mrf.mxu0
        %v7929 = vadd.f32 %v7868, %v7928
        %v7930 = vpop.f32.mrf.mxu0
        %v7931 = vadd.f32 %v7870, %v7930
        %v7932 = vpop.f32.mrf.mxu0
        %v7933 = vpop.f32.mrf.mxu0
        %7934 = vdwg.mxu0
        %7935 = vmatprep.subr.bf16.mxu0 0
        %7936 = vmatpush1.bf16.msra.mxu0 %v7511
        %7937 = vmatprep.subr.bf16.mxu0 0
        %7938 = vmatpush1.bf16.msra.mxu0 %v7508
        %7939 = vmatprep.subr.bf16.mxu0 0
        %7940 = vmatpush1.bf16.msra.mxu0 %v7505
        %7941 = vmatprep.subr.bf16.mxu0 0
        %7942 = vmatpush1.bf16.msra.mxu0 %v7502
        %7943 = vmatprep.subr.bf16.mxu0 0
        %7944 = vmatpush1.bf16.msra.mxu0 %v7499
        %7945 = vmatprep.subr.bf16.mxu0 0
        %7946 = vmatpush1.bf16.msra.mxu0 %v7496
        %7947 = vmatprep.subr.bf16.mxu0 0
        %7948 = vmatpush1.bf16.msra.mxu0 %v7493
        %7949 = vmatprep.subr.bf16.mxu0 0
        %7950 = vmatpush1.bf16.msra.mxu0 %v7490
        %7951 = vmatprep.subr.bf16.mxu0 0
        %7952 = vmatpush2.bf16.msra.mxu0 %v7535
        %7953 = vmatprep.subr.bf16.mxu0 0
        %7954 = vmatpush2.bf16.msra.mxu0 %v7532
        %7955 = vmatprep.subr.bf16.mxu0 0
        %7956 = vmatpush2.bf16.msra.mxu0 %v7529
        %7957 = vmatprep.subr.bf16.mxu0 0
        %7958 = vmatpush2.bf16.msra.mxu0 %v7526
        %7959 = vmatprep.subr.bf16.mxu0 0
        %7960 = vmatpush2.bf16.msra.mxu0 %v7523
        %7961 = vmatprep.subr.bf16.mxu0 0
        %7962 = vmatpush2.bf16.msra.mxu0 %v7520
        %7963 = vmatprep.subr.bf16.mxu0 0
        %7964 = vmatpush2.bf16.msra.mxu0 %v7517
        %7965 = vmatprep.subr.bf16.mxu0 0
        %7966 = vmatpush2.bf16.msra.mxu0 %v7514
        %7967 = vmatprep.mubr.bf16.mxu0 %v5614
        %7968 = vmatmul.mubr.bf16.gmra.mxu0 %v5613
        %v7969 = vpop.f32.mrf.mxu0
        %v7970 = vadd.f32 0.0, %v7969
        %v7971 = vpop.f32.mrf.mxu0
        %v7972 = vpop.f32.mrf.mxu0
        %v7973 = vadd.f32 0.0, %v7972
        %v7974 = vpop.f32.mrf.mxu0
        %7975 = vmatprep.mubr.bf16.mxu0 %v5620
        %7976 = vmatmul.mubr.bf16.gmra.mxu0 %v5619
        %v7977 = vpop.f32.mrf.mxu0
        %v7978 = vadd.f32 0.0, %v7977
        %v7979 = vpop.f32.mrf.mxu0
        %v7980 = vpop.f32.mrf.mxu0
        %v7981 = vadd.f32 0.0, %v7980
        %v7982 = vpop.f32.mrf.mxu0
        %7983 = vmatprep.mubr.bf16.mxu0 %v5626
        %7984 = vmatmul.mubr.bf16.gmra.mxu0 %v5625
        %v7985 = vpop.f32.mrf.mxu0
        %v7986 = vadd.f32 0.0, %v7985
        %v7987 = vpop.f32.mrf.mxu0
        %v7988 = vpop.f32.mrf.mxu0
        %v7989 = vpop.f32.mrf.mxu0
        %7990 = vdwg.mxu0
        %7991 = vmatprep.subr.bf16.mxu0 0
        %7992 = vmatpush1.bf16.msra.mxu0 %v7559
        %7993 = vmatprep.subr.bf16.mxu0 0
        %7994 = vmatpush1.bf16.msra.mxu0 %v7556
        %7995 = vmatprep.subr.bf16.mxu0 0
        %7996 = vmatpush1.bf16.msra.mxu0 %v7553
        %7997 = vmatprep.subr.bf16.mxu0 0
        %7998 = vmatpush1.bf16.msra.mxu0 %v7550
        %7999 = vmatprep.subr.bf16.mxu0 0
        %8000 = vmatpush1.bf16.msra.mxu0 %v7547
        %8001 = vmatprep.subr.bf16.mxu0 0
        %8002 = vmatpush1.bf16.msra.mxu0 %v7544
        %8003 = vmatprep.subr.bf16.mxu0 0
        %8004 = vmatpush1.bf16.msra.mxu0 %v7541
        %8005 = vmatprep.subr.bf16.mxu0 0
        %8006 = vmatpush1.bf16.msra.mxu0 %v7538
        %8007 = vmatprep.subr.bf16.mxu0 0
        %8008 = vmatpush2.bf16.msra.mxu0 %v7583
        %8009 = vmatprep.subr.bf16.mxu0 0
        %8010 = vmatpush2.bf16.msra.mxu0 %v7580
        %8011 = vmatprep.subr.bf16.mxu0 0
        %8012 = vmatpush2.bf16.msra.mxu0 %v7577
        %8013 = vmatprep.subr.bf16.mxu0 0
        %8014 = vmatpush2.bf16.msra.mxu0 %v7574
        %8015 = vmatprep.subr.bf16.mxu0 0
        %8016 = vmatpush2.bf16.msra.mxu0 %v7571
        %8017 = vmatprep.subr.bf16.mxu0 0
        %8018 = vmatpush2.bf16.msra.mxu0 %v7568
        %8019 = vmatprep.subr.bf16.mxu0 0
        %8020 = vmatpush2.bf16.msra.mxu0 %v7565
        %8021 = vmatprep.subr.bf16.mxu0 0
        %8022 = vmatpush2.bf16.msra.mxu0 %v7562
        %8023 = vmatprep.mubr.bf16.mxu0 %v5616
        %8024 = vmatmul.mubr.bf16.gmra.mxu0 %v5615
        %v8025 = vpop.f32.mrf.mxu0
        %v8026 = vadd.f32 %v7970, %v8025
        %v8027 = vpop.f32.mrf.mxu0
        %v8028 = vpop.f32.mrf.mxu0
        %v8029 = vadd.f32 %v7973, %v8028
        %v8030 = vpop.f32.mrf.mxu0
        %8031 = vmatprep.mubr.bf16.mxu0 %v5622
        %8032 = vmatmul.mubr.bf16.gmra.mxu0 %v5621
        %v8033 = vpop.f32.mrf.mxu0
        %v8034 = vadd.f32 %v7978, %v8033
        %v8035 = vpop.f32.mrf.mxu0
        %v8036 = vpop.f32.mrf.mxu0
        %v8037 = vadd.f32 %v7981, %v8036
        %v8038 = vpop.f32.mrf.mxu0
        %8039 = vmatprep.mubr.bf16.mxu0 %v5628
        %8040 = vmatmul.mubr.bf16.gmra.mxu0 %v5627
        %v8041 = vpop.f32.mrf.mxu0
        %v8042 = vadd.f32 %v7986, %v8041
        %v8043 = vpop.f32.mrf.mxu0
        %v8044 = vpop.f32.mrf.mxu0
        %v8045 = vpop.f32.mrf.mxu0
        %8046 = vdwg.mxu0
        %8047 = vmatprep.subr.bf16.mxu0 0
        %8048 = vmatpush1.bf16.msra.mxu0 %v7607
        %8049 = vmatprep.subr.bf16.mxu0 0
        %8050 = vmatpush1.bf16.msra.mxu0 %v7604
        %8051 = vmatprep.subr.bf16.mxu0 0
        %8052 = vmatpush1.bf16.msra.mxu0 %v7601
        %8053 = vmatprep.subr.bf16.mxu0 0
        %8054 = vmatpush1.bf16.msra.mxu0 %v7598
        %8055 = vmatprep.subr.bf16.mxu0 0
        %8056 = vmatpush1.bf16.msra.mxu0 %v7595
        %8057 = vmatprep.subr.bf16.mxu0 0
        %8058 = vmatpush1.bf16.msra.mxu0 %v7592
        %8059 = vmatprep.subr.bf16.mxu0 0
        %8060 = vmatpush1.bf16.msra.mxu0 %v7589
        %8061 = vmatprep.subr.bf16.mxu0 0
        %8062 = vmatpush1.bf16.msra.mxu0 %v7586
        %8063 = vmatprep.subr.bf16.mxu0 0
        %8064 = vmatpush2.bf16.msra.mxu0 0
        %8065 = vmatprep.subr.bf16.mxu0 0
        %8066 = vmatpush2.bf16.msra.mxu0 0
        %8067 = vmatprep.subr.bf16.mxu0 0
        %8068 = vmatpush2.bf16.msra.mxu0 0
        %8069 = vmatprep.subr.bf16.mxu0 0
        %8070 = vmatpush2.bf16.msra.mxu0 0
        %8071 = vmatprep.subr.bf16.mxu0 0
        %8072 = vmatpush2.bf16.msra.mxu0 %v7619
        %8073 = vmatprep.subr.bf16.mxu0 0
        %8074 = vmatpush2.bf16.msra.mxu0 %v7616
        %8075 = vmatprep.subr.bf16.mxu0 0
        %8076 = vmatpush2.bf16.msra.mxu0 %v7613
        %8077 = vmatprep.subr.bf16.mxu0 0
        %8078 = vmatpush2.bf16.msra.mxu0 %v7610
        %8079 = vmatprep.mubr.bf16.mxu0 %v6513
        %8080 = vmatmul.mubr.bf16.gmra.mxu0 %v5617
        %v8081 = vpop.f32.mrf.mxu0
        %v8082 = vadd.f32 %v8026, %v8081
        %v8083 = vpop.f32.mrf.mxu0
        %v8084 = vpop.f32.mrf.mxu0
        %v8085 = vadd.f32 %v8029, %v8084
        %v8086 = vpop.f32.mrf.mxu0
        %8087 = vmatprep.mubr.bf16.mxu0 %v6516
        %8088 = vmatmul.mubr.bf16.gmra.mxu0 %v5623
        %v8089 = vpop.f32.mrf.mxu0
        %v8090 = vadd.f32 %v8034, %v8089
        %v8091 = vpop.f32.mrf.mxu0
        %v8092 = vpop.f32.mrf.mxu0
        %v8093 = vadd.f32 %v8037, %v8092
        %v8094 = vpop.f32.mrf.mxu0
        %8095 = vmatprep.mubr.bf16.mxu0 %v6519
        %8096 = vmatmul.mubr.bf16.gmra.mxu0 %v5629
        %v8097 = vpop.f32.mrf.mxu0
        %v8098 = vadd.f32 %v8042, %v8097
        %v8099 = vpop.f32.mrf.mxu0
        %v8100 = vpop.f32.mrf.mxu0
        %v8101 = vpop.f32.mrf.mxu0
        %8102 = vdwg.mxu0
        %v8103 = vmax.f32 %v6678, %v7909
        %v8104 = vmax.f32 %v6680, %v7911
        %v8105 = vmax.f32 %v6851, %v8082
        %v8106 = vmax.f32 %v6682, %v7913
        %v8107 = vmax.f32 %v6684, %v7915
        %v8108 = vmax.f32 %v6854, %v8085
        %v8109 = vmax.f32 %v6688, %v7919
        %v8110 = vmax.f32 %v6690, %v7921
        %v8111 = vmax.f32 %v6859, %v8090
        %v8112 = vmax.f32 %v6692, %v7923
        %v8113 = vmax.f32 %v6694, %v7925
        %v8114 = vmax.f32 %v6862, %v8093
        %v8115 = vmax.f32 %v6698, %v7929
        %v8116 = vmax.f32 %v6700, %v7931
        %v8117 = vmax.f32 %v6867, %v8098
        %v8118 = vpack.c.bf16 %v8106, %v8103
        %v8119 = vpack.c.bf16 %v8107, %v8104
        %v8120 = vpack.c.bf16 %v8108, %v8105
        %v8121 = vpack.c.bf16 %v8112, %v8109
        %v8122 = vpack.c.bf16 %v8113, %v8110
        %v8123 = vpack.c.bf16 %v8114, %v8111
        %v8124 = vpack.c.bf16 %v8115, %v8115
        %v8125 = vpack.c.bf16 %v8116, %v8116
        %v8126 = vpack.c.bf16 %v8117, %v8117
        %v8127 = vld [vmem:[%s12] sm:$0x1]
        %v8128 = vld [vmem:[%s11] sm:$0xf]
        %v8129 = vld [vmem:[%s11 + $0x4] sm:$0xf]
        %v8130 = vld [vmem:[%s11 + $0x8] sm:$0xf]
        %v8131 = vld [vmem:[%s11 + $0xc] sm:$0xf]
        %v8132 = vld [vmem:[%s11 + $0x10] sm:$0xf]
        %v8133 = vld [vmem:[%s11 + $0x14] sm:$0xf]
        %v8134 = vld [vmem:[%s11 + $0x18] sm:$0xf]
        %v8135 = vld [vmem:[%s11 + $0x1c] sm:$0xf]
        %v8136 = vld [vmem:[%s11 + $0x20] sm:$0xf]
        %v8137 = vld [vmem:[%s11 + $0x24] sm:$0xf]
        %v8138 = vld [vmem:[%s11 + $0x28] sm:$0xf]
        %v8139 = vld [vmem:[%s11 + $0x2c] sm:$0xf]
        %v8140 = vld [vmem:[%s11 + $0x30] sm:$0xf]
        %v8141 = vld [vmem:[%s11 + $0x34] sm:$0xf]
        %v8142 = vld [vmem:[%s11 + $0x38] sm:$0xf]
        %v8143 = vld [vmem:[%s11 + $0x3c] sm:$0xf]
        %v8144 = vld [vmem:[%s11 + $0x40] sm:$0xf]
        %v8145 = vld [vmem:[%s11 + $0x44] sm:$0xf]
        %v8146 = vld [vmem:[%s11 + $0x48] sm:$0xf]
        %v8147 = vld [vmem:[%s11 + $0x4c] sm:$0xf]
        %v8148 = vld [vmem:[%s11 + $0x50] sm:$0xf]
        %v8149 = vld [vmem:[%s11 + $0x54] sm:$0xf]
        %v8150 = vld [vmem:[%s11 + $0x58] sm:$0xf]
        %v8151 = vld [vmem:[%s11 + $0x5c] sm:$0xf]
        %v8152 = vld [vmem:[%s11 + $0x60] sm:$0xf]
        %v8153 = vld [vmem:[%s11 + $0x64] sm:$0xf]
        %v8154 = vld [vmem:[%s11 + $0x68] sm:$0xf]
        %v8155 = vld [vmem:[%s11 + $0x6c] sm:$0xf]
        %v8156 = vld [vmem:[%s11 + $0x70] sm:$0xf]
        %v8157 = vld [vmem:[%s11 + $0x74] sm:$0xf]
        %v8158 = vld [vmem:[%s11 + $0x78] sm:$0xf]
        %v8159 = vld [vmem:[%s11 + $0x7c] sm:$0xf]
        %v8160 = vld [vmem:[%s11 + $0x80] sm:$0xf]
        %v8161 = vld [vmem:[%s11 + $0x84] sm:$0xf]
        %v8162 = vld [vmem:[%s11 + $0x88] sm:$0xf]
        %v8163 = vld [vmem:[%s11 + $0x8c] sm:$0xf]
        %v8164 = vld [vmem:[%s11 + $0x90] sm:$0xf]
        %v8165 = vld [vmem:[%s11 + $0x94] sm:$0xf]
        %v8166 = vld [vmem:[%s11 + $0x98] sm:$0xf]
        %v8167 = vld [vmem:[%s11 + $0x9c] sm:$0xf]
        %v8208 = vunpack.c.l.b16 %v8128
        %v8209 = vunpack.c.l.b16 %v8129
        %v8210 = vunpack.c.l.b16 %v8130
        %v8211 = vunpack.c.l.b16 %v8131
        %v8212 = vunpack.c.l.b16 %v8132
        %v8213 = vunpack.c.l.b16 %v8133
        %v8214 = vunpack.c.l.b16 %v8134
        %v8215 = vunpack.c.l.b16 %v8135
        %v8216 = vunpack.c.l.b16 %v8136
        %v8217 = vunpack.c.l.b16 %v8137
        %v8218 = vunpack.c.l.b16 %v8138
        %v8219 = vunpack.c.l.b16 %v8139
        %v8220 = vunpack.c.l.b16 %v8140
        %v8221 = vunpack.c.l.b16 %v8141
        %v8222 = vunpack.c.l.b16 %v8142
        %v8223 = vunpack.c.l.b16 %v8143
        %v8224 = vunpack.c.l.b16 %v8144
        %v8225 = vunpack.c.l.b16 %v8145
        %v8226 = vunpack.c.l.b16 %v8146
        %v8227 = vunpack.c.l.b16 %v8147
        %v8228 = vunpack.c.l.b16 %v8148
        %v8229 = vunpack.c.l.b16 %v8149
        %v8230 = vunpack.c.l.b16 %v8150
        %v8231 = vunpack.c.l.b16 %v8151
        %v8232 = vunpack.c.l.b16 %v8152
        %v8233 = vunpack.c.l.b16 %v8153
        %v8234 = vunpack.c.l.b16 %v8154
        %v8235 = vunpack.c.l.b16 %v8155
        %v8236 = vunpack.c.l.b16 %v8156
        %v8237 = vunpack.c.l.b16 %v8157
        %v8238 = vunpack.c.l.b16 %v8158
        %v8239 = vunpack.c.l.b16 %v8159
        %v8240 = vunpack.c.l.b16 %v8160
        %v8241 = vunpack.c.l.b16 %v8161
        %v8242 = vunpack.c.l.b16 %v8162
        %v8243 = vunpack.c.l.b16 %v8163
        %v8244 = vunpack.c.l.b16 %v8164
        %v8245 = vunpack.c.l.b16 %v8165
        %v8246 = vunpack.c.l.b16 %v8166
        %v8247 = vunpack.c.l.b16 %v8167
        %v8248 = vpack.c.b16 %v8209, %v8208
        %v8249 = vpack.c.b16 %v8211, %v8210
        %v8250 = vpack.c.b16 %v8213, %v8212
        %v8251 = vpack.c.b16 %v8215, %v8214
        %v8252 = vpack.c.b16 %v8217, %v8216
        %v8253 = vpack.c.b16 %v8219, %v8218
        %v8254 = vpack.c.b16 %v8221, %v8220
        %v8255 = vpack.c.b16 %v8223, %v8222
        %v8256 = vpack.c.b16 %v8225, %v8224
        %v8257 = vpack.c.b16 %v8227, %v8226
        %v8258 = vpack.c.b16 %v8229, %v8228
        %v8259 = vpack.c.b16 %v8231, %v8230
        %v8260 = vpack.c.b16 %v8233, %v8232
        %v8261 = vpack.c.b16 %v8235, %v8234
        %v8262 = vpack.c.b16 %v8237, %v8236
        %v8263 = vpack.c.b16 %v8239, %v8238
        %v8264 = vpack.c.b16 %v8241, %v8240
        %v8265 = vpack.c.b16 %v8243, %v8242
        %v8266 = vpack.c.b16 %v8245, %v8244
        %v8267 = vpack.c.b16 %v8247, %v8246
        %v8289 = vsel %vm6511, %v8120, 0
        %8291 = vmatprep.subr.bf16.mxu0 0
        %8292 = vmatpush1.bf16.msra.mxu0 %v8255
        %8293 = vmatprep.subr.bf16.mxu0 0
        %8294 = vmatpush1.bf16.msra.mxu0 %v8254
        %8295 = vmatprep.subr.bf16.mxu0 0
        %8296 = vmatpush1.bf16.msra.mxu0 %v8253
        %8297 = vmatprep.subr.bf16.mxu0 0
        %8298 = vmatpush1.bf16.msra.mxu0 %v8252
        %8299 = vmatprep.subr.bf16.mxu0 0
        %8300 = vmatpush1.bf16.msra.mxu0 %v8251
        %8301 = vmatprep.subr.bf16.mxu0 0
        %8302 = vmatpush1.bf16.msra.mxu0 %v8250
        %8303 = vmatprep.subr.bf16.mxu0 0
        %8304 = vmatpush1.bf16.msra.mxu0 %v8249
        %8305 = vmatprep.subr.bf16.mxu0 0
        %8306 = vmatpush1.bf16.msra.mxu0 %v8248
        %8307 = vmatprep.subr.bf16.mxu0 0
        %8308 = vmatpush2.bf16.msra.mxu0 %v8263
        %8309 = vmatprep.subr.bf16.mxu0 0
        %8310 = vmatpush2.bf16.msra.mxu0 %v8262
        %8311 = vmatprep.subr.bf16.mxu0 0
        %8312 = vmatpush2.bf16.msra.mxu0 %v8261
        %8313 = vmatprep.subr.bf16.mxu0 0
        %8314 = vmatpush2.bf16.msra.mxu0 %v8260
        %8315 = vmatprep.subr.bf16.mxu0 0
        %8316 = vmatpush2.bf16.msra.mxu0 %v8259
        %8317 = vmatprep.subr.bf16.mxu0 0
        %8318 = vmatpush2.bf16.msra.mxu0 %v8258
        %8319 = vmatprep.subr.bf16.mxu0 0
        %8320 = vmatpush2.bf16.msra.mxu0 %v8257
        %8321 = vmatprep.subr.bf16.mxu0 0
        %8322 = vmatpush2.bf16.msra.mxu0 %v8256
        %8323 = vmatprep.mubr.bf16.mxu0 %v8119
        %8324 = vmatmul.mubr.bf16.gmra.mxu0 %v8118
        %v8325 = vpop.f32.mrf.mxu0
        %v8326 = vadd.f32 0.0, %v8325
        %v8327 = vpop.f32.mrf.mxu0
        %v8328 = vpop.f32.mrf.mxu0
        %v8329 = vpop.f32.mrf.mxu0
        %8330 = vdwg.mxu0
        %8331 = vmatprep.subr.bf16.mxu0 0
        %8332 = vmatpush1.bf16.msra.mxu0 0
        %8333 = vmatprep.subr.bf16.mxu0 0
        %8334 = vmatpush1.bf16.msra.mxu0 0
        %8335 = vmatprep.subr.bf16.mxu0 0
        %8336 = vmatpush1.bf16.msra.mxu0 0
        %8337 = vmatprep.subr.bf16.mxu0 0
        %8338 = vmatpush1.bf16.msra.mxu0 0
        %8339 = vmatprep.subr.bf16.mxu0 0
        %8340 = vmatpush1.bf16.msra.mxu0 %v8267
        %8341 = vmatprep.subr.bf16.mxu0 0
        %8342 = vmatpush1.bf16.msra.mxu0 %v8266
        %8343 = vmatprep.subr.bf16.mxu0 0
        %8344 = vmatpush1.bf16.msra.mxu0 %v8265
        %8345 = vmatprep.subr.bf16.mxu0 0
        %8346 = vmatpush1.bf16.msra.mxu0 %v8264
        %8347 = vmatprep.subr.bf16.mxu0 0
        %8348 = vmatpush2.bf16.msra.mxu0 0
        %8349 = vmatprep.subr.bf16.mxu0 0
        %8350 = vmatpush2.bf16.msra.mxu0 0
        %8351 = vmatprep.subr.bf16.mxu0 0
        %8352 = vmatpush2.bf16.msra.mxu0 0
        %8353 = vmatprep.subr.bf16.mxu0 0
        %8354 = vmatpush2.bf16.msra.mxu0 0
        %8355 = vmatprep.subr.bf16.mxu0 0
        %8356 = vmatpush2.bf16.msra.mxu0 0
        %8357 = vmatprep.subr.bf16.mxu0 0
        %8358 = vmatpush2.bf16.msra.mxu0 0
        %8359 = vmatprep.subr.bf16.mxu0 0
        %8360 = vmatpush2.bf16.msra.mxu0 0
        %8361 = vmatprep.subr.bf16.mxu0 0
        %8362 = vmatpush2.bf16.msra.mxu0 0
        %8363 = vmatprep.mubr.bf16.mxu0 0
        %8364 = vmatmul.mubr.bf16.gmra.mxu0 %v8289
        %v8365 = vpop.f32.mrf.mxu0
        %v8366 = vadd.f32 %v8326, %v8365
        %v8367 = vpop.f32.mrf.mxu0
        %v8368 = vpop.f32.mrf.mxu0
        %v8369 = vpop.f32.mrf.mxu0
        %8370 = vdwg.mxu0
        %v8372 = vlaneseq
        %v8373 = vshrl.u32 %v8372, 7
        %v8374 = vsub.s32 0, %v8373
        %v8375 = vrot.slane %v8127, %v8374
        %v8377 = vadd.f32 %v8375, %v8366
        %s8378 = scalar_lea.vmem %s11, 160
        %v8379 = vld [vmem:[%s8378] sm:$0xf]
        %v8380 = vld [vmem:[%s8378 + $0x4] sm:$0xf]
        %v8381 = vld [vmem:[%s8378 + $0x8] sm:$0xf]
        %v8382 = vld [vmem:[%s8378 + $0xc] sm:$0xf]
        %v8383 = vld [vmem:[%s8378 + $0x10] sm:$0xf]
        %v8384 = vld [vmem:[%s8378 + $0x14] sm:$0xf]
        %v8385 = vld [vmem:[%s8378 + $0x18] sm:$0xf]
        %v8386 = vld [vmem:[%s8378 + $0x1c] sm:$0xf]
        %v8387 = vld [vmem:[%s8378 + $0x20] sm:$0xf]
        %v8388 = vld [vmem:[%s8378 + $0x24] sm:$0xf]
        %v8389 = vld [vmem:[%s8378 + $0x28] sm:$0xf]
        %v8390 = vld [vmem:[%s8378 + $0x2c] sm:$0xf]
        %v8391 = vld [vmem:[%s8378 + $0x30] sm:$0xf]
        %v8392 = vld [vmem:[%s8378 + $0x34] sm:$0xf]
        %v8393 = vld [vmem:[%s8378 + $0x38] sm:$0xf]
        %v8394 = vld [vmem:[%s8378 + $0x3c] sm:$0xf]
        %v8395 = vld [vmem:[%s8378 + $0x40] sm:$0xf]
        %v8396 = vld [vmem:[%s8378 + $0x44] sm:$0xf]
        %v8397 = vld [vmem:[%s8378 + $0x48] sm:$0xf]
        %v8398 = vld [vmem:[%s8378 + $0x4c] sm:$0xf]
        %v8399 = vld [vmem:[%s8378 + $0x50] sm:$0xf]
        %v8400 = vld [vmem:[%s8378 + $0x54] sm:$0xf]
        %v8401 = vld [vmem:[%s8378 + $0x58] sm:$0xf]
        %v8402 = vld [vmem:[%s8378 + $0x5c] sm:$0xf]
        %v8403 = vld [vmem:[%s8378 + $0x60] sm:$0xf]
        %v8404 = vld [vmem:[%s8378 + $0x64] sm:$0xf]
        %v8405 = vld [vmem:[%s8378 + $0x68] sm:$0xf]
        %v8406 = vld [vmem:[%s8378 + $0x6c] sm:$0xf]
        %v8407 = vld [vmem:[%s8378 + $0x70] sm:$0xf]
        %v8408 = vld [vmem:[%s8378 + $0x74] sm:$0xf]
        %v8409 = vld [vmem:[%s8378 + $0x78] sm:$0xf]
        %v8410 = vld [vmem:[%s8378 + $0x7c] sm:$0xf]
        %v8411 = vld [vmem:[%s8378 + $0x80] sm:$0xf]
        %v8412 = vld [vmem:[%s8378 + $0x84] sm:$0xf]
        %v8413 = vld [vmem:[%s8378 + $0x88] sm:$0xf]
        %v8414 = vld [vmem:[%s8378 + $0x8c] sm:$0xf]
        %v8415 = vld [vmem:[%s8378 + $0x90] sm:$0xf]
        %v8416 = vld [vmem:[%s8378 + $0x94] sm:$0xf]
        %v8417 = vld [vmem:[%s8378 + $0x98] sm:$0xf]
        %v8418 = vld [vmem:[%s8378 + $0x9c] sm:$0xf]
        %v8422 = vrot.slane %v8118, 4
        %v8423 = vrot.slane %v8119, 4
        %v8424 = vrot.slane %v8120, 4
        %v8467 = vunpack.c.l.b16 %v8379
        %v8468 = vunpack.c.l.b16 %v8380
        %v8469 = vunpack.c.l.b16 %v8381
        %v8470 = vunpack.c.l.b16 %v8382
        %v8471 = vunpack.c.l.b16 %v8383
        %v8472 = vunpack.c.l.b16 %v8384
        %v8473 = vunpack.c.l.b16 %v8385
        %v8474 = vunpack.c.l.b16 %v8386
        %v8475 = vunpack.c.l.b16 %v8387
        %v8476 = vunpack.c.l.b16 %v8388
        %v8477 = vunpack.c.l.b16 %v8389
        %v8478 = vunpack.c.l.b16 %v8390
        %v8479 = vunpack.c.l.b16 %v8391
        %v8480 = vunpack.c.l.b16 %v8392
        %v8481 = vunpack.c.l.b16 %v8393
        %v8482 = vunpack.c.l.b16 %v8394
        %v8483 = vunpack.c.l.b16 %v8395
        %v8484 = vunpack.c.l.b16 %v8396
        %v8485 = vunpack.c.l.b16 %v8397
        %v8486 = vunpack.c.l.b16 %v8398
        %v8487 = vunpack.c.l.b16 %v8399
        %v8488 = vunpack.c.l.b16 %v8400
        %v8489 = vunpack.c.l.b16 %v8401
        %v8490 = vunpack.c.l.b16 %v8402
        %v8491 = vunpack.c.l.b16 %v8403
        %v8492 = vunpack.c.l.b16 %v8404
        %v8493 = vunpack.c.l.b16 %v8405
        %v8494 = vunpack.c.l.b16 %v8406
        %v8495 = vunpack.c.l.b16 %v8407
        %v8496 = vunpack.c.l.b16 %v8408
        %v8497 = vunpack.c.l.b16 %v8409
        %v8498 = vunpack.c.l.b16 %v8410
        %v8499 = vunpack.c.l.b16 %v8411
        %v8500 = vunpack.c.l.b16 %v8412
        %v8501 = vunpack.c.l.b16 %v8413
        %v8502 = vunpack.c.l.b16 %v8414
        %v8503 = vunpack.c.l.b16 %v8415
        %v8504 = vunpack.c.l.b16 %v8416
        %v8505 = vunpack.c.l.b16 %v8417
        %v8506 = vunpack.c.l.b16 %v8418
        %v8507 = vpack.c.b16 %v8468, %v8467
        %v8508 = vpack.c.b16 %v8470, %v8469
        %v8509 = vpack.c.b16 %v8472, %v8471
        %v8510 = vpack.c.b16 %v8474, %v8473
        %v8511 = vpack.c.b16 %v8476, %v8475
        %v8512 = vpack.c.b16 %v8478, %v8477
        %v8513 = vpack.c.b16 %v8480, %v8479
        %v8514 = vpack.c.b16 %v8482, %v8481
        %v8515 = vpack.c.b16 %v8484, %v8483
        %v8516 = vpack.c.b16 %v8486, %v8485
        %v8517 = vpack.c.b16 %v8488, %v8487
        %v8518 = vpack.c.b16 %v8490, %v8489
        %v8519 = vpack.c.b16 %v8492, %v8491
        %v8520 = vpack.c.b16 %v8494, %v8493
        %v8521 = vpack.c.b16 %v8496, %v8495
        %v8522 = vpack.c.b16 %v8498, %v8497
        %v8523 = vpack.c.b16 %v8500, %v8499
        %v8524 = vpack.c.b16 %v8502, %v8501
        %v8525 = vpack.c.b16 %v8504, %v8503
        %v8526 = vpack.c.b16 %v8506, %v8505
        %v8548 = vsel %vm6511, %v8424, 0
        %8550 = vmatprep.subr.bf16.mxu0 0
        %8551 = vmatpush1.bf16.msra.mxu0 %v8514
        %8552 = vmatprep.subr.bf16.mxu0 0
        %8553 = vmatpush1.bf16.msra.mxu0 %v8513
        %8554 = vmatprep.subr.bf16.mxu0 0
        %8555 = vmatpush1.bf16.msra.mxu0 %v8512
        %8556 = vmatprep.subr.bf16.mxu0 0
        %8557 = vmatpush1.bf16.msra.mxu0 %v8511
        %8558 = vmatprep.subr.bf16.mxu0 0
        %8559 = vmatpush1.bf16.msra.mxu0 %v8510
        %8560 = vmatprep.subr.bf16.mxu0 0
        %8561 = vmatpush1.bf16.msra.mxu0 %v8509
        %8562 = vmatprep.subr.bf16.mxu0 0
        %8563 = vmatpush1.bf16.msra.mxu0 %v8508
        %8564 = vmatprep.subr.bf16.mxu0 0
        %8565 = vmatpush1.bf16.msra.mxu0 %v8507
        %8566 = vmatprep.subr.bf16.mxu0 0
        %8567 = vmatpush2.bf16.msra.mxu0 %v8522
        %8568 = vmatprep.subr.bf16.mxu0 0
        %8569 = vmatpush2.bf16.msra.mxu0 %v8521
        %8570 = vmatprep.subr.bf16.mxu0 0
        %8571 = vmatpush2.bf16.msra.mxu0 %v8520
        %8572 = vmatprep.subr.bf16.mxu0 0
        %8573 = vmatpush2.bf16.msra.mxu0 %v8519
        %8574 = vmatprep.subr.bf16.mxu0 0
        %8575 = vmatpush2.bf16.msra.mxu0 %v8518
        %8576 = vmatprep.subr.bf16.mxu0 0
        %8577 = vmatpush2.bf16.msra.mxu0 %v8517
        %8578 = vmatprep.subr.bf16.mxu0 0
        %8579 = vmatpush2.bf16.msra.mxu0 %v8516
        %8580 = vmatprep.subr.bf16.mxu0 0
        %8581 = vmatpush2.bf16.msra.mxu0 %v8515
        %8582 = vmatprep.mubr.bf16.mxu0 %v8423
        %8583 = vmatmul.mubr.bf16.gmra.mxu0 %v8422
        %v8584 = vpop.f32.mrf.mxu0
        %v8585 = vadd.f32 0.0, %v8584
        %v8586 = vpop.f32.mrf.mxu0
        %v8587 = vpop.f32.mrf.mxu0
        %v8588 = vpop.f32.mrf.mxu0
        %8589 = vdwg.mxu0
        %8590 = vmatprep.subr.bf16.mxu0 0
        %8591 = vmatpush1.bf16.msra.mxu0 0
        %8592 = vmatprep.subr.bf16.mxu0 0
        %8593 = vmatpush1.bf16.msra.mxu0 0
        %8594 = vmatprep.subr.bf16.mxu0 0
        %8595 = vmatpush1.bf16.msra.mxu0 0
        %8596 = vmatprep.subr.bf16.mxu0 0
        %8597 = vmatpush1.bf16.msra.mxu0 0
        %8598 = vmatprep.subr.bf16.mxu0 0
        %8599 = vmatpush1.bf16.msra.mxu0 %v8526
        %8600 = vmatprep.subr.bf16.mxu0 0
        %8601 = vmatpush1.bf16.msra.mxu0 %v8525
        %8602 = vmatprep.subr.bf16.mxu0 0
        %8603 = vmatpush1.bf16.msra.mxu0 %v8524
        %8604 = vmatprep.subr.bf16.mxu0 0
        %8605 = vmatpush1.bf16.msra.mxu0 %v8523
        %8606 = vmatprep.subr.bf16.mxu0 0
        %8607 = vmatpush2.bf16.msra.mxu0 0
        %8608 = vmatprep.subr.bf16.mxu0 0
        %8609 = vmatpush2.bf16.msra.mxu0 0
        %8610 = vmatprep.subr.bf16.mxu0 0
        %8611 = vmatpush2.bf16.msra.mxu0 0
        %8612 = vmatprep.subr.bf16.mxu0 0
        %8613 = vmatpush2.bf16.msra.mxu0 0
        %8614 = vmatprep.subr.bf16.mxu0 0
        %8615 = vmatpush2.bf16.msra.mxu0 0
        %8616 = vmatprep.subr.bf16.mxu0 0
        %8617 = vmatpush2.bf16.msra.mxu0 0
        %8618 = vmatprep.subr.bf16.mxu0 0
        %8619 = vmatpush2.bf16.msra.mxu0 0
        %8620 = vmatprep.subr.bf16.mxu0 0
        %8621 = vmatpush2.bf16.msra.mxu0 0
        %8622 = vmatprep.mubr.bf16.mxu0 0
        %8623 = vmatmul.mubr.bf16.gmra.mxu0 %v8548
        %v8624 = vpop.f32.mrf.mxu0
        %v8625 = vadd.f32 %v8585, %v8624
        %v8626 = vpop.f32.mrf.mxu0
        %v8627 = vpop.f32.mrf.mxu0
        %v8628 = vpop.f32.mrf.mxu0
        %8629 = vdwg.mxu0
        %v8630 = vadd.f32 %v8377, %v8625
        %s8631 = scalar_lea.vmem %s11, 320
        %v8632 = vld [vmem:[%s8631] sm:$0xf]
        %v8633 = vld [vmem:[%s8631 + $0x4] sm:$0xf]
        %v8634 = vld [vmem:[%s8631 + $0x8] sm:$0xf]
        %v8635 = vld [vmem:[%s8631 + $0xc] sm:$0xf]
        %v8636 = vld [vmem:[%s8631 + $0x10] sm:$0xf]
        %v8637 = vld [vmem:[%s8631 + $0x14] sm:$0xf]
        %v8638 = vld [vmem:[%s8631 + $0x18] sm:$0xf]
        %v8639 = vld [vmem:[%s8631 + $0x1c] sm:$0xf]
        %v8640 = vld [vmem:[%s8631 + $0x20] sm:$0xf]
        %v8641 = vld [vmem:[%s8631 + $0x24] sm:$0xf]
        %v8642 = vld [vmem:[%s8631 + $0x28] sm:$0xf]
        %v8643 = vld [vmem:[%s8631 + $0x2c] sm:$0xf]
        %v8644 = vld [vmem:[%s8631 + $0x30] sm:$0xf]
        %v8645 = vld [vmem:[%s8631 + $0x34] sm:$0xf]
        %v8646 = vld [vmem:[%s8631 + $0x38] sm:$0xf]
        %v8647 = vld [vmem:[%s8631 + $0x3c] sm:$0xf]
        %v8648 = vld [vmem:[%s8631 + $0x40] sm:$0xf]
        %v8649 = vld [vmem:[%s8631 + $0x44] sm:$0xf]
        %v8650 = vld [vmem:[%s8631 + $0x48] sm:$0xf]
        %v8651 = vld [vmem:[%s8631 + $0x4c] sm:$0xf]
        %v8652 = vld [vmem:[%s8631 + $0x50] sm:$0xf]
        %v8653 = vld [vmem:[%s8631 + $0x54] sm:$0xf]
        %v8654 = vld [vmem:[%s8631 + $0x58] sm:$0xf]
        %v8655 = vld [vmem:[%s8631 + $0x5c] sm:$0xf]
        %v8656 = vld [vmem:[%s8631 + $0x60] sm:$0xf]
        %v8657 = vld [vmem:[%s8631 + $0x64] sm:$0xf]
        %v8658 = vld [vmem:[%s8631 + $0x68] sm:$0xf]
        %v8659 = vld [vmem:[%s8631 + $0x6c] sm:$0xf]
        %v8660 = vld [vmem:[%s8631 + $0x70] sm:$0xf]
        %v8661 = vld [vmem:[%s8631 + $0x74] sm:$0xf]
        %v8662 = vld [vmem:[%s8631 + $0x78] sm:$0xf]
        %v8663 = vld [vmem:[%s8631 + $0x7c] sm:$0xf]
        %v8664 = vld [vmem:[%s8631 + $0x80] sm:$0xf]
        %v8665 = vld [vmem:[%s8631 + $0x84] sm:$0xf]
        %v8666 = vld [vmem:[%s8631 + $0x88] sm:$0xf]
        %v8667 = vld [vmem:[%s8631 + $0x8c] sm:$0xf]
        %v8668 = vld [vmem:[%s8631 + $0x90] sm:$0xf]
        %v8669 = vld [vmem:[%s8631 + $0x94] sm:$0xf]
        %v8670 = vld [vmem:[%s8631 + $0x98] sm:$0xf]
        %v8671 = vld [vmem:[%s8631 + $0x9c] sm:$0xf]
        %v8712 = vunpack.c.l.b16 %v8632
        %v8713 = vunpack.c.l.b16 %v8633
        %v8714 = vunpack.c.l.b16 %v8634
        %v8715 = vunpack.c.l.b16 %v8635
        %v8716 = vunpack.c.l.b16 %v8636
        %v8717 = vunpack.c.l.b16 %v8637
        %v8718 = vunpack.c.l.b16 %v8638
        %v8719 = vunpack.c.l.b16 %v8639
        %v8720 = vunpack.c.l.b16 %v8640
        %v8721 = vunpack.c.l.b16 %v8641
        %v8722 = vunpack.c.l.b16 %v8642
        %v8723 = vunpack.c.l.b16 %v8643
        %v8724 = vunpack.c.l.b16 %v8644
        %v8725 = vunpack.c.l.b16 %v8645
        %v8726 = vunpack.c.l.b16 %v8646
        %v8727 = vunpack.c.l.b16 %v8647
        %v8728 = vunpack.c.l.b16 %v8648
        %v8729 = vunpack.c.l.b16 %v8649
        %v8730 = vunpack.c.l.b16 %v8650
        %v8731 = vunpack.c.l.b16 %v8651
        %v8732 = vunpack.c.l.b16 %v8652
        %v8733 = vunpack.c.l.b16 %v8653
        %v8734 = vunpack.c.l.b16 %v8654
        %v8735 = vunpack.c.l.b16 %v8655
        %v8736 = vunpack.c.l.b16 %v8656
        %v8737 = vunpack.c.l.b16 %v8657
        %v8738 = vunpack.c.l.b16 %v8658
        %v8739 = vunpack.c.l.b16 %v8659
        %v8740 = vunpack.c.l.b16 %v8660
        %v8741 = vunpack.c.l.b16 %v8661
        %v8742 = vunpack.c.l.b16 %v8662
        %v8743 = vunpack.c.l.b16 %v8663
        %v8744 = vunpack.c.l.b16 %v8664
        %v8745 = vunpack.c.l.b16 %v8665
        %v8746 = vunpack.c.l.b16 %v8666
        %v8747 = vunpack.c.l.b16 %v8667
        %v8748 = vunpack.c.l.b16 %v8668
        %v8749 = vunpack.c.l.b16 %v8669
        %v8750 = vunpack.c.l.b16 %v8670
        %v8751 = vunpack.c.l.b16 %v8671
        %v8752 = vpack.c.b16 %v8713, %v8712
        %v8753 = vpack.c.b16 %v8715, %v8714
        %v8754 = vpack.c.b16 %v8717, %v8716
        %v8755 = vpack.c.b16 %v8719, %v8718
        %v8756 = vpack.c.b16 %v8721, %v8720
        %v8757 = vpack.c.b16 %v8723, %v8722
        %v8758 = vpack.c.b16 %v8725, %v8724
        %v8759 = vpack.c.b16 %v8727, %v8726
        %v8760 = vpack.c.b16 %v8729, %v8728
        %v8761 = vpack.c.b16 %v8731, %v8730
        %v8762 = vpack.c.b16 %v8733, %v8732
        %v8763 = vpack.c.b16 %v8735, %v8734
        %v8764 = vpack.c.b16 %v8737, %v8736
        %v8765 = vpack.c.b16 %v8739, %v8738
        %v8766 = vpack.c.b16 %v8741, %v8740
        %v8767 = vpack.c.b16 %v8743, %v8742
        %v8768 = vpack.c.b16 %v8745, %v8744
        %v8769 = vpack.c.b16 %v8747, %v8746
        %v8770 = vpack.c.b16 %v8749, %v8748
        %v8771 = vpack.c.b16 %v8751, %v8750
        %v8793 = vsel %vm6511, %v8123, 0
        %8795 = vmatprep.subr.bf16.mxu0 0
        %8796 = vmatpush1.bf16.msra.mxu0 %v8759
        %8797 = vmatprep.subr.bf16.mxu0 0
        %8798 = vmatpush1.bf16.msra.mxu0 %v8758
        %8799 = vmatprep.subr.bf16.mxu0 0
        %8800 = vmatpush1.bf16.msra.mxu0 %v8757
        %8801 = vmatprep.subr.bf16.mxu0 0
        %8802 = vmatpush1.bf16.msra.mxu0 %v8756
        %8803 = vmatprep.subr.bf16.mxu0 0
        %8804 = vmatpush1.bf16.msra.mxu0 %v8755
        %8805 = vmatprep.subr.bf16.mxu0 0
        %8806 = vmatpush1.bf16.msra.mxu0 %v8754
        %8807 = vmatprep.subr.bf16.mxu0 0
        %8808 = vmatpush1.bf16.msra.mxu0 %v8753
        %8809 = vmatprep.subr.bf16.mxu0 0
        %8810 = vmatpush1.bf16.msra.mxu0 %v8752
        %8811 = vmatprep.subr.bf16.mxu0 0
        %8812 = vmatpush2.bf16.msra.mxu0 %v8767
        %8813 = vmatprep.subr.bf16.mxu0 0
        %8814 = vmatpush2.bf16.msra.mxu0 %v8766
        %8815 = vmatprep.subr.bf16.mxu0 0
        %8816 = vmatpush2.bf16.msra.mxu0 %v8765
        %8817 = vmatprep.subr.bf16.mxu0 0
        %8818 = vmatpush2.bf16.msra.mxu0 %v8764
        %8819 = vmatprep.subr.bf16.mxu0 0
        %8820 = vmatpush2.bf16.msra.mxu0 %v8763
        %8821 = vmatprep.subr.bf16.mxu0 0
        %8822 = vmatpush2.bf16.msra.mxu0 %v8762
        %8823 = vmatprep.subr.bf16.mxu0 0
        %8824 = vmatpush2.bf16.msra.mxu0 %v8761
        %8825 = vmatprep.subr.bf16.mxu0 0
        %8826 = vmatpush2.bf16.msra.mxu0 %v8760
        %8827 = vmatprep.mubr.bf16.mxu0 %v8122
        %8828 = vmatmul.mubr.bf16.gmra.mxu0 %v8121
        %v8829 = vpop.f32.mrf.mxu0
        %v8830 = vadd.f32 0.0, %v8829
        %v8831 = vpop.f32.mrf.mxu0
        %v8832 = vpop.f32.mrf.mxu0
        %v8833 = vpop.f32.mrf.mxu0
        %8834 = vdwg.mxu0
        %8835 = vmatprep.subr.bf16.mxu0 0
        %8836 = vmatpush1.bf16.msra.mxu0 0
        %8837 = vmatprep.subr.bf16.mxu0 0
        %8838 = vmatpush1.bf16.msra.mxu0 0
        %8839 = vmatprep.subr.bf16.mxu0 0
        %8840 = vmatpush1.bf16.msra.mxu0 0
        %8841 = vmatprep.subr.bf16.mxu0 0
        %8842 = vmatpush1.bf16.msra.mxu0 0
        %8843 = vmatprep.subr.bf16.mxu0 0
        %8844 = vmatpush1.bf16.msra.mxu0 %v8771
        %8845 = vmatprep.subr.bf16.mxu0 0
        %8846 = vmatpush1.bf16.msra.mxu0 %v8770
        %8847 = vmatprep.subr.bf16.mxu0 0
        %8848 = vmatpush1.bf16.msra.mxu0 %v8769
        %8849 = vmatprep.subr.bf16.mxu0 0
        %8850 = vmatpush1.bf16.msra.mxu0 %v8768
        %8851 = vmatprep.subr.bf16.mxu0 0
        %8852 = vmatpush2.bf16.msra.mxu0 0
        %8853 = vmatprep.subr.bf16.mxu0 0
        %8854 = vmatpush2.bf16.msra.mxu0 0
        %8855 = vmatprep.subr.bf16.mxu0 0
        %8856 = vmatpush2.bf16.msra.mxu0 0
        %8857 = vmatprep.subr.bf16.mxu0 0
        %8858 = vmatpush2.bf16.msra.mxu0 0
        %8859 = vmatprep.subr.bf16.mxu0 0
        %8860 = vmatpush2.bf16.msra.mxu0 0
        %8861 = vmatprep.subr.bf16.mxu0 0
        %8862 = vmatpush2.bf16.msra.mxu0 0
        %8863 = vmatprep.subr.bf16.mxu0 0
        %8864 = vmatpush2.bf16.msra.mxu0 0
        %8865 = vmatprep.subr.bf16.mxu0 0
        %8866 = vmatpush2.bf16.msra.mxu0 0
        %8867 = vmatprep.mubr.bf16.mxu0 0
        %8868 = vmatmul.mubr.bf16.gmra.mxu0 %v8793
        %v8869 = vpop.f32.mrf.mxu0
        %v8870 = vadd.f32 %v8830, %v8869
        %v8871 = vpop.f32.mrf.mxu0
        %v8872 = vpop.f32.mrf.mxu0
        %v8873 = vpop.f32.mrf.mxu0
        %8874 = vdwg.mxu0
        %v8875 = vadd.f32 %v8630, %v8870
        %s8876 = scalar_lea.vmem %s11, 480
        %v8877 = vld [vmem:[%s8876] sm:$0xf]
        %v8878 = vld [vmem:[%s8876 + $0x4] sm:$0xf]
        %v8879 = vld [vmem:[%s8876 + $0x8] sm:$0xf]
        %v8880 = vld [vmem:[%s8876 + $0xc] sm:$0xf]
        %v8881 = vld [vmem:[%s8876 + $0x10] sm:$0xf]
        %v8882 = vld [vmem:[%s8876 + $0x14] sm:$0xf]
        %v8883 = vld [vmem:[%s8876 + $0x18] sm:$0xf]
        %v8884 = vld [vmem:[%s8876 + $0x1c] sm:$0xf]
        %v8885 = vld [vmem:[%s8876 + $0x20] sm:$0xf]
        %v8886 = vld [vmem:[%s8876 + $0x24] sm:$0xf]
        %v8887 = vld [vmem:[%s8876 + $0x28] sm:$0xf]
        %v8888 = vld [vmem:[%s8876 + $0x2c] sm:$0xf]
        %v8889 = vld [vmem:[%s8876 + $0x30] sm:$0xf]
        %v8890 = vld [vmem:[%s8876 + $0x34] sm:$0xf]
        %v8891 = vld [vmem:[%s8876 + $0x38] sm:$0xf]
        %v8892 = vld [vmem:[%s8876 + $0x3c] sm:$0xf]
        %v8893 = vld [vmem:[%s8876 + $0x40] sm:$0xf]
        %v8894 = vld [vmem:[%s8876 + $0x44] sm:$0xf]
        %v8895 = vld [vmem:[%s8876 + $0x48] sm:$0xf]
        %v8896 = vld [vmem:[%s8876 + $0x4c] sm:$0xf]
        %v8897 = vld [vmem:[%s8876 + $0x50] sm:$0xf]
        %v8898 = vld [vmem:[%s8876 + $0x54] sm:$0xf]
        %v8899 = vld [vmem:[%s8876 + $0x58] sm:$0xf]
        %v8900 = vld [vmem:[%s8876 + $0x5c] sm:$0xf]
        %v8901 = vld [vmem:[%s8876 + $0x60] sm:$0xf]
        %v8902 = vld [vmem:[%s8876 + $0x64] sm:$0xf]
        %v8903 = vld [vmem:[%s8876 + $0x68] sm:$0xf]
        %v8904 = vld [vmem:[%s8876 + $0x6c] sm:$0xf]
        %v8905 = vld [vmem:[%s8876 + $0x70] sm:$0xf]
        %v8906 = vld [vmem:[%s8876 + $0x74] sm:$0xf]
        %v8907 = vld [vmem:[%s8876 + $0x78] sm:$0xf]
        %v8908 = vld [vmem:[%s8876 + $0x7c] sm:$0xf]
        %v8909 = vld [vmem:[%s8876 + $0x80] sm:$0xf]
        %v8910 = vld [vmem:[%s8876 + $0x84] sm:$0xf]
        %v8911 = vld [vmem:[%s8876 + $0x88] sm:$0xf]
        %v8912 = vld [vmem:[%s8876 + $0x8c] sm:$0xf]
        %v8913 = vld [vmem:[%s8876 + $0x90] sm:$0xf]
        %v8914 = vld [vmem:[%s8876 + $0x94] sm:$0xf]
        %v8915 = vld [vmem:[%s8876 + $0x98] sm:$0xf]
        %v8916 = vld [vmem:[%s8876 + $0x9c] sm:$0xf]
        %v8920 = vrot.slane %v8121, 4
        %v8921 = vrot.slane %v8122, 4
        %v8922 = vrot.slane %v8123, 4
        %v8965 = vunpack.c.l.b16 %v8877
        %v8966 = vunpack.c.l.b16 %v8878
        %v8967 = vunpack.c.l.b16 %v8879
        %v8968 = vunpack.c.l.b16 %v8880
        %v8969 = vunpack.c.l.b16 %v8881
        %v8970 = vunpack.c.l.b16 %v8882
        %v8971 = vunpack.c.l.b16 %v8883
        %v8972 = vunpack.c.l.b16 %v8884
        %v8973 = vunpack.c.l.b16 %v8885
        %v8974 = vunpack.c.l.b16 %v8886
        %v8975 = vunpack.c.l.b16 %v8887
        %v8976 = vunpack.c.l.b16 %v8888
        %v8977 = vunpack.c.l.b16 %v8889
        %v8978 = vunpack.c.l.b16 %v8890
        %v8979 = vunpack.c.l.b16 %v8891
        %v8980 = vunpack.c.l.b16 %v8892
        %v8981 = vunpack.c.l.b16 %v8893
        %v8982 = vunpack.c.l.b16 %v8894
        %v8983 = vunpack.c.l.b16 %v8895
        %v8984 = vunpack.c.l.b16 %v8896
        %v8985 = vunpack.c.l.b16 %v8897
        %v8986 = vunpack.c.l.b16 %v8898
        %v8987 = vunpack.c.l.b16 %v8899
        %v8988 = vunpack.c.l.b16 %v8900
        %v8989 = vunpack.c.l.b16 %v8901
        %v8990 = vunpack.c.l.b16 %v8902
        %v8991 = vunpack.c.l.b16 %v8903
        %v8992 = vunpack.c.l.b16 %v8904
        %v8993 = vunpack.c.l.b16 %v8905
        %v8994 = vunpack.c.l.b16 %v8906
        %v8995 = vunpack.c.l.b16 %v8907
        %v8996 = vunpack.c.l.b16 %v8908
        %v8997 = vunpack.c.l.b16 %v8909
        %v8998 = vunpack.c.l.b16 %v8910
        %v8999 = vunpack.c.l.b16 %v8911
        %v9000 = vunpack.c.l.b16 %v8912
        %v9001 = vunpack.c.l.b16 %v8913
        %v9002 = vunpack.c.l.b16 %v8914
        %v9003 = vunpack.c.l.b16 %v8915
        %v9004 = vunpack.c.l.b16 %v8916
        %v9005 = vpack.c.b16 %v8966, %v8965
        %v9006 = vpack.c.b16 %v8968, %v8967
        %v9007 = vpack.c.b16 %v8970, %v8969
        %v9008 = vpack.c.b16 %v8972, %v8971
        %v9009 = vpack.c.b16 %v8974, %v8973
        %v9010 = vpack.c.b16 %v8976, %v8975
        %v9011 = vpack.c.b16 %v8978, %v8977
        %v9012 = vpack.c.b16 %v8980, %v8979
        %v9013 = vpack.c.b16 %v8982, %v8981
        %v9014 = vpack.c.b16 %v8984, %v8983
        %v9015 = vpack.c.b16 %v8986, %v8985
        %v9016 = vpack.c.b16 %v8988, %v8987
        %v9017 = vpack.c.b16 %v8990, %v8989
        %v9018 = vpack.c.b16 %v8992, %v8991
        %v9019 = vpack.c.b16 %v8994, %v8993
        %v9020 = vpack.c.b16 %v8996, %v8995
        %v9021 = vpack.c.b16 %v8998, %v8997
        %v9022 = vpack.c.b16 %v9000, %v8999
        %v9023 = vpack.c.b16 %v9002, %v9001
        %v9024 = vpack.c.b16 %v9004, %v9003
        %v9046 = vsel %vm6511, %v8922, 0
        %9048 = vmatprep.subr.bf16.mxu0 0
        %9049 = vmatpush1.bf16.msra.mxu0 %v9012
        %9050 = vmatprep.subr.bf16.mxu0 0
        %9051 = vmatpush1.bf16.msra.mxu0 %v9011
        %9052 = vmatprep.subr.bf16.mxu0 0
        %9053 = vmatpush1.bf16.msra.mxu0 %v9010
        %9054 = vmatprep.subr.bf16.mxu0 0
        %9055 = vmatpush1.bf16.msra.mxu0 %v9009
        %9056 = vmatprep.subr.bf16.mxu0 0
        %9057 = vmatpush1.bf16.msra.mxu0 %v9008
        %9058 = vmatprep.subr.bf16.mxu0 0
        %9059 = vmatpush1.bf16.msra.mxu0 %v9007
        %9060 = vmatprep.subr.bf16.mxu0 0
        %9061 = vmatpush1.bf16.msra.mxu0 %v9006
        %9062 = vmatprep.subr.bf16.mxu0 0
        %9063 = vmatpush1.bf16.msra.mxu0 %v9005
        %9064 = vmatprep.subr.bf16.mxu0 0
        %9065 = vmatpush2.bf16.msra.mxu0 %v9020
        %9066 = vmatprep.subr.bf16.mxu0 0
        %9067 = vmatpush2.bf16.msra.mxu0 %v9019
        %9068 = vmatprep.subr.bf16.mxu0 0
        %9069 = vmatpush2.bf16.msra.mxu0 %v9018
        %9070 = vmatprep.subr.bf16.mxu0 0
        %9071 = vmatpush2.bf16.msra.mxu0 %v9017
        %9072 = vmatprep.subr.bf16.mxu0 0
        %9073 = vmatpush2.bf16.msra.mxu0 %v9016
        %9074 = vmatprep.subr.bf16.mxu0 0
        %9075 = vmatpush2.bf16.msra.mxu0 %v9015
        %9076 = vmatprep.subr.bf16.mxu0 0
        %9077 = vmatpush2.bf16.msra.mxu0 %v9014
        %9078 = vmatprep.subr.bf16.mxu0 0
        %9079 = vmatpush2.bf16.msra.mxu0 %v9013
        %9080 = vmatprep.mubr.bf16.mxu0 %v8921
        %9081 = vmatmul.mubr.bf16.gmra.mxu0 %v8920
        %v9082 = vpop.f32.mrf.mxu0
        %v9083 = vadd.f32 0.0, %v9082
        %v9084 = vpop.f32.mrf.mxu0
        %v9085 = vpop.f32.mrf.mxu0
        %v9086 = vpop.f32.mrf.mxu0
        %9087 = vdwg.mxu0
        %9088 = vmatprep.subr.bf16.mxu0 0
        %9089 = vmatpush1.bf16.msra.mxu0 0
        %9090 = vmatprep.subr.bf16.mxu0 0
        %9091 = vmatpush1.bf16.msra.mxu0 0
        %9092 = vmatprep.subr.bf16.mxu0 0
        %9093 = vmatpush1.bf16.msra.mxu0 0
        %9094 = vmatprep.subr.bf16.mxu0 0
        %9095 = vmatpush1.bf16.msra.mxu0 0
        %9096 = vmatprep.subr.bf16.mxu0 0
        %9097 = vmatpush1.bf16.msra.mxu0 %v9024
        %9098 = vmatprep.subr.bf16.mxu0 0
        %9099 = vmatpush1.bf16.msra.mxu0 %v9023
        %9100 = vmatprep.subr.bf16.mxu0 0
        %9101 = vmatpush1.bf16.msra.mxu0 %v9022
        %9102 = vmatprep.subr.bf16.mxu0 0
        %9103 = vmatpush1.bf16.msra.mxu0 %v9021
        %9104 = vmatprep.subr.bf16.mxu0 0
        %9105 = vmatpush2.bf16.msra.mxu0 0
        %9106 = vmatprep.subr.bf16.mxu0 0
        %9107 = vmatpush2.bf16.msra.mxu0 0
        %9108 = vmatprep.subr.bf16.mxu0 0
        %9109 = vmatpush2.bf16.msra.mxu0 0
        %9110 = vmatprep.subr.bf16.mxu0 0
        %9111 = vmatpush2.bf16.msra.mxu0 0
        %9112 = vmatprep.subr.bf16.mxu0 0
        %9113 = vmatpush2.bf16.msra.mxu0 0
        %9114 = vmatprep.subr.bf16.mxu0 0
        %9115 = vmatpush2.bf16.msra.mxu0 0
        %9116 = vmatprep.subr.bf16.mxu0 0
        %9117 = vmatpush2.bf16.msra.mxu0 0
        %9118 = vmatprep.subr.bf16.mxu0 0
        %9119 = vmatpush2.bf16.msra.mxu0 0
        %9120 = vmatprep.mubr.bf16.mxu0 0
        %9121 = vmatmul.mubr.bf16.gmra.mxu0 %v9046
        %v9122 = vpop.f32.mrf.mxu0
        %v9123 = vadd.f32 %v9083, %v9122
        %v9124 = vpop.f32.mrf.mxu0
        %v9125 = vpop.f32.mrf.mxu0
        %v9126 = vpop.f32.mrf.mxu0
        %9127 = vdwg.mxu0
        %v9128 = vadd.f32 %v8875, %v9123
        %s9129 = scalar_lea.vmem %s11, 640
        %v9130 = vld [vmem:[%s9129] sm:$0xf]
        %v9131 = vld [vmem:[%s9129 + $0x4] sm:$0xf]
        %v9132 = vld [vmem:[%s9129 + $0x8] sm:$0xf]
        %v9133 = vld [vmem:[%s9129 + $0xc] sm:$0xf]
        %v9134 = vld [vmem:[%s9129 + $0x10] sm:$0xf]
        %v9135 = vld [vmem:[%s9129 + $0x14] sm:$0xf]
        %v9136 = vld [vmem:[%s9129 + $0x18] sm:$0xf]
        %v9137 = vld [vmem:[%s9129 + $0x1c] sm:$0xf]
        %v9138 = vld [vmem:[%s9129 + $0x20] sm:$0xf]
        %v9139 = vld [vmem:[%s9129 + $0x24] sm:$0xf]
        %v9140 = vld [vmem:[%s9129 + $0x28] sm:$0xf]
        %v9141 = vld [vmem:[%s9129 + $0x2c] sm:$0xf]
        %v9142 = vld [vmem:[%s9129 + $0x30] sm:$0xf]
        %v9143 = vld [vmem:[%s9129 + $0x34] sm:$0xf]
        %v9144 = vld [vmem:[%s9129 + $0x38] sm:$0xf]
        %v9145 = vld [vmem:[%s9129 + $0x3c] sm:$0xf]
        %v9146 = vld [vmem:[%s9129 + $0x40] sm:$0xf]
        %v9147 = vld [vmem:[%s9129 + $0x44] sm:$0xf]
        %v9148 = vld [vmem:[%s9129 + $0x48] sm:$0xf]
        %v9149 = vld [vmem:[%s9129 + $0x4c] sm:$0xf]
        %v9150 = vld [vmem:[%s9129 + $0x50] sm:$0xf]
        %v9151 = vld [vmem:[%s9129 + $0x54] sm:$0xf]
        %v9152 = vld [vmem:[%s9129 + $0x58] sm:$0xf]
        %v9153 = vld [vmem:[%s9129 + $0x5c] sm:$0xf]
        %v9154 = vld [vmem:[%s9129 + $0x60] sm:$0xf]
        %v9155 = vld [vmem:[%s9129 + $0x64] sm:$0xf]
        %v9156 = vld [vmem:[%s9129 + $0x68] sm:$0xf]
        %v9157 = vld [vmem:[%s9129 + $0x6c] sm:$0xf]
        %v9158 = vld [vmem:[%s9129 + $0x70] sm:$0xf]
        %v9159 = vld [vmem:[%s9129 + $0x74] sm:$0xf]
        %v9160 = vld [vmem:[%s9129 + $0x78] sm:$0xf]
        %v9161 = vld [vmem:[%s9129 + $0x7c] sm:$0xf]
        %v9162 = vld [vmem:[%s9129 + $0x80] sm:$0xf]
        %v9163 = vld [vmem:[%s9129 + $0x84] sm:$0xf]
        %v9164 = vld [vmem:[%s9129 + $0x88] sm:$0xf]
        %v9165 = vld [vmem:[%s9129 + $0x8c] sm:$0xf]
        %v9166 = vld [vmem:[%s9129 + $0x90] sm:$0xf]
        %v9167 = vld [vmem:[%s9129 + $0x94] sm:$0xf]
        %v9168 = vld [vmem:[%s9129 + $0x98] sm:$0xf]
        %v9169 = vld [vmem:[%s9129 + $0x9c] sm:$0xf]
        %v9210 = vunpack.c.l.b16 %v9130
        %v9211 = vunpack.c.l.b16 %v9131
        %v9212 = vunpack.c.l.b16 %v9132
        %v9213 = vunpack.c.l.b16 %v9133
        %v9214 = vunpack.c.l.b16 %v9134
        %v9215 = vunpack.c.l.b16 %v9135
        %v9216 = vunpack.c.l.b16 %v9136
        %v9217 = vunpack.c.l.b16 %v9137
        %v9218 = vunpack.c.l.b16 %v9138
        %v9219 = vunpack.c.l.b16 %v9139
        %v9220 = vunpack.c.l.b16 %v9140
        %v9221 = vunpack.c.l.b16 %v9141
        %v9222 = vunpack.c.l.b16 %v9142
        %v9223 = vunpack.c.l.b16 %v9143
        %v9224 = vunpack.c.l.b16 %v9144
        %v9225 = vunpack.c.l.b16 %v9145
        %v9226 = vunpack.c.l.b16 %v9146
        %v9227 = vunpack.c.l.b16 %v9147
        %v9228 = vunpack.c.l.b16 %v9148
        %v9229 = vunpack.c.l.b16 %v9149
        %v9230 = vunpack.c.l.b16 %v9150
        %v9231 = vunpack.c.l.b16 %v9151
        %v9232 = vunpack.c.l.b16 %v9152
        %v9233 = vunpack.c.l.b16 %v9153
        %v9234 = vunpack.c.l.b16 %v9154
        %v9235 = vunpack.c.l.b16 %v9155
        %v9236 = vunpack.c.l.b16 %v9156
        %v9237 = vunpack.c.l.b16 %v9157
        %v9238 = vunpack.c.l.b16 %v9158
        %v9239 = vunpack.c.l.b16 %v9159
        %v9240 = vunpack.c.l.b16 %v9160
        %v9241 = vunpack.c.l.b16 %v9161
        %v9242 = vunpack.c.l.b16 %v9162
        %v9243 = vunpack.c.l.b16 %v9163
        %v9244 = vunpack.c.l.b16 %v9164
        %v9245 = vunpack.c.l.b16 %v9165
        %v9246 = vunpack.c.l.b16 %v9166
        %v9247 = vunpack.c.l.b16 %v9167
        %v9248 = vunpack.c.l.b16 %v9168
        %v9249 = vunpack.c.l.b16 %v9169
        %v9250 = vpack.c.b16 %v9211, %v9210
        %v9251 = vpack.c.b16 %v9213, %v9212
        %v9252 = vpack.c.b16 %v9215, %v9214
        %v9253 = vpack.c.b16 %v9217, %v9216
        %v9254 = vpack.c.b16 %v9219, %v9218
        %v9255 = vpack.c.b16 %v9221, %v9220
        %v9256 = vpack.c.b16 %v9223, %v9222
        %v9257 = vpack.c.b16 %v9225, %v9224
        %v9258 = vpack.c.b16 %v9227, %v9226
        %v9259 = vpack.c.b16 %v9229, %v9228
        %v9260 = vpack.c.b16 %v9231, %v9230
        %v9261 = vpack.c.b16 %v9233, %v9232
        %v9262 = vpack.c.b16 %v9235, %v9234
        %v9263 = vpack.c.b16 %v9237, %v9236
        %v9264 = vpack.c.b16 %v9239, %v9238
        %v9265 = vpack.c.b16 %v9241, %v9240
        %v9266 = vpack.c.b16 %v9243, %v9242
        %v9267 = vpack.c.b16 %v9245, %v9244
        %v9268 = vpack.c.b16 %v9247, %v9246
        %v9269 = vpack.c.b16 %v9249, %v9248
        %v9291 = vsel %vm6511, %v8126, 0
        %9293 = vmatprep.subr.bf16.mxu0 0
        %9294 = vmatpush1.bf16.msra.mxu0 %v9257
        %9295 = vmatprep.subr.bf16.mxu0 0
        %9296 = vmatpush1.bf16.msra.mxu0 %v9256
        %9297 = vmatprep.subr.bf16.mxu0 0
        %9298 = vmatpush1.bf16.msra.mxu0 %v9255
        %9299 = vmatprep.subr.bf16.mxu0 0
        %9300 = vmatpush1.bf16.msra.mxu0 %v9254
        %9301 = vmatprep.subr.bf16.mxu0 0
        %9302 = vmatpush1.bf16.msra.mxu0 %v9253
        %9303 = vmatprep.subr.bf16.mxu0 0
        %9304 = vmatpush1.bf16.msra.mxu0 %v9252
        %9305 = vmatprep.subr.bf16.mxu0 0
        %9306 = vmatpush1.bf16.msra.mxu0 %v9251
        %9307 = vmatprep.subr.bf16.mxu0 0
        %9308 = vmatpush1.bf16.msra.mxu0 %v9250
        %9309 = vmatprep.subr.bf16.mxu0 0
        %9310 = vmatpush2.bf16.msra.mxu0 %v9265
        %9311 = vmatprep.subr.bf16.mxu0 0
        %9312 = vmatpush2.bf16.msra.mxu0 %v9264
        %9313 = vmatprep.subr.bf16.mxu0 0
        %9314 = vmatpush2.bf16.msra.mxu0 %v9263
        %9315 = vmatprep.subr.bf16.mxu0 0
        %9316 = vmatpush2.bf16.msra.mxu0 %v9262
        %9317 = vmatprep.subr.bf16.mxu0 0
        %9318 = vmatpush2.bf16.msra.mxu0 %v9261
        %9319 = vmatprep.subr.bf16.mxu0 0
        %9320 = vmatpush2.bf16.msra.mxu0 %v9260
        %9321 = vmatprep.subr.bf16.mxu0 0
        %9322 = vmatpush2.bf16.msra.mxu0 %v9259
        %9323 = vmatprep.subr.bf16.mxu0 0
        %9324 = vmatpush2.bf16.msra.mxu0 %v9258
        %9325 = vmatprep.mubr.bf16.mxu0 %v8125
        %9326 = vmatmul.mubr.bf16.gmra.mxu0 %v8124
        %v9327 = vpop.f32.mrf.mxu0
        %v9328 = vadd.f32 0.0, %v9327
        %v9329 = vpop.f32.mrf.mxu0
        %v9330 = vpop.f32.mrf.mxu0
        %v9331 = vpop.f32.mrf.mxu0
        %9332 = vdwg.mxu0
        %9333 = vmatprep.subr.bf16.mxu0 0
        %9334 = vmatpush1.bf16.msra.mxu0 0
        %9335 = vmatprep.subr.bf16.mxu0 0
        %9336 = vmatpush1.bf16.msra.mxu0 0
        %9337 = vmatprep.subr.bf16.mxu0 0
        %9338 = vmatpush1.bf16.msra.mxu0 0
        %9339 = vmatprep.subr.bf16.mxu0 0
        %9340 = vmatpush1.bf16.msra.mxu0 0
        %9341 = vmatprep.subr.bf16.mxu0 0
        %9342 = vmatpush1.bf16.msra.mxu0 %v9269
        %9343 = vmatprep.subr.bf16.mxu0 0
        %9344 = vmatpush1.bf16.msra.mxu0 %v9268
        %9345 = vmatprep.subr.bf16.mxu0 0
        %9346 = vmatpush1.bf16.msra.mxu0 %v9267
        %9347 = vmatprep.subr.bf16.mxu0 0
        %9348 = vmatpush1.bf16.msra.mxu0 %v9266
        %9349 = vmatprep.subr.bf16.mxu0 0
        %9350 = vmatpush2.bf16.msra.mxu0 0
        %9351 = vmatprep.subr.bf16.mxu0 0
        %9352 = vmatpush2.bf16.msra.mxu0 0
        %9353 = vmatprep.subr.bf16.mxu0 0
        %9354 = vmatpush2.bf16.msra.mxu0 0
        %9355 = vmatprep.subr.bf16.mxu0 0
        %9356 = vmatpush2.bf16.msra.mxu0 0
        %9357 = vmatprep.subr.bf16.mxu0 0
        %9358 = vmatpush2.bf16.msra.mxu0 0
        %9359 = vmatprep.subr.bf16.mxu0 0
        %9360 = vmatpush2.bf16.msra.mxu0 0
        %9361 = vmatprep.subr.bf16.mxu0 0
        %9362 = vmatpush2.bf16.msra.mxu0 0
        %9363 = vmatprep.subr.bf16.mxu0 0
        %9364 = vmatpush2.bf16.msra.mxu0 0
        %9365 = vmatprep.mubr.bf16.mxu0 0
        %9366 = vmatmul.mubr.bf16.gmra.mxu0 %v9291
        %v9367 = vpop.f32.mrf.mxu0
        %v9368 = vadd.f32 %v9328, %v9367
        %v9369 = vpop.f32.mrf.mxu0
        %v9370 = vpop.f32.mrf.mxu0
        %v9371 = vpop.f32.mrf.mxu0
        %9372 = vdwg.mxu0
        %v9373 = vadd.f32 %v9128, %v9368
        %v9374 = vpack.c.bf16 %v9373, %v9373
        %v9375 = vld [vmem:[%s13] sm:$0xf]
        %v9376 = vld [vmem:[%s13 + $0x4] sm:$0xf]
        %v9377 = vld [vmem:[%s13 + $0x8] sm:$0xf]
        %v9378 = vld [vmem:[%s13 + $0xc] sm:$0xf]
        %v9379 = vld [vmem:[%s13 + $0x10] sm:$0xf]
        %v9380 = vld [vmem:[%s13 + $0x14] sm:$0xf]
        %v9381 = vld [vmem:[%s13 + $0x18] sm:$0xf]
        %v9382 = vld [vmem:[%s13 + $0x1c] sm:$0xf]
        %v9383 = vld [vmem:[%s13 + $0x20] sm:$0xf]
        %v9384 = vld [vmem:[%s13 + $0x24] sm:$0xf]
        %v9385 = vld [vmem:[%s13 + $0x28] sm:$0xf]
        %v9386 = vld [vmem:[%s13 + $0x2c] sm:$0xf]
        %v9387 = vld [vmem:[%s13 + $0x30] sm:$0xf]
        %v9388 = vld [vmem:[%s13 + $0x34] sm:$0xf]
        %v9389 = vld [vmem:[%s13 + $0x38] sm:$0xf]
        %v9390 = vld [vmem:[%s13 + $0x3c] sm:$0xf]
        %v9391 = vld [vmem:[%s14] sm:$0x1]
        %v9393 = vlaneseq
        %v9394 = vshrl.u32 %v9393, 7
        %v9395 = vsub.s32 0, %v9394
        %v9396 = vrot.slane %v9391, %v9395
        %v9414 = vunpack.c.l.b16 %v9375
        %v9415 = vunpack.c.l.b16 %v9376
        %v9416 = vunpack.c.l.b16 %v9377
        %v9417 = vunpack.c.l.b16 %v9378
        %v9418 = vunpack.c.l.b16 %v9379
        %v9419 = vunpack.c.l.b16 %v9380
        %v9420 = vunpack.c.l.b16 %v9381
        %v9421 = vunpack.c.l.b16 %v9382
        %v9422 = vunpack.c.l.b16 %v9383
        %v9423 = vunpack.c.l.b16 %v9384
        %v9424 = vunpack.c.l.b16 %v9385
        %v9425 = vunpack.c.l.b16 %v9386
        %v9426 = vunpack.c.l.b16 %v9387
        %v9427 = vunpack.c.l.b16 %v9388
        %v9428 = vunpack.c.l.b16 %v9389
        %v9429 = vunpack.c.l.b16 %v9390
        %v9430 = vpack.c.b16 %v9415, %v9414
        %v9431 = vpack.c.b16 %v9417, %v9416
        %v9432 = vpack.c.b16 %v9419, %v9418
        %v9433 = vpack.c.b16 %v9421, %v9420
        %v9434 = vpack.c.b16 %v9423, %v9422
        %v9435 = vpack.c.b16 %v9425, %v9424
        %v9436 = vpack.c.b16 %v9427, %v9426
        %v9437 = vpack.c.b16 %v9429, %v9428
        %9446 = vmatprep.subr.bf16.mxu0 0
        %9447 = vmatpush1.bf16.msra.mxu0 %v9437
        %9448 = vmatprep.subr.bf16.mxu0 0
        %9449 = vmatpush1.bf16.msra.mxu0 %v9436
        %9450 = vmatprep.subr.bf16.mxu0 0
        %9451 = vmatpush1.bf16.msra.mxu0 %v9435
        %9452 = vmatprep.subr.bf16.mxu0 0
        %9453 = vmatpush1.bf16.msra.mxu0 %v9434
        %9454 = vmatprep.subr.bf16.mxu0 0
        %9455 = vmatpush1.bf16.msra.mxu0 %v9433
        %9456 = vmatprep.subr.bf16.mxu0 0
        %9457 = vmatpush1.bf16.msra.mxu0 %v9432
        %9458 = vmatprep.subr.bf16.mxu0 0
        %9459 = vmatpush1.bf16.msra.mxu0 %v9431
        %9460 = vmatprep.subr.bf16.mxu0 0
        %9461 = vmatpush1.bf16.msra.mxu0 %v9430
        %9462 = vmatprep.subr.bf16.mxu0 0
        %9463 = vmatpush2.bf16.msra.mxu0 0
        %9464 = vmatprep.subr.bf16.mxu0 0
        %9465 = vmatpush2.bf16.msra.mxu0 0
        %9466 = vmatprep.subr.bf16.mxu0 0
        %9467 = vmatpush2.bf16.msra.mxu0 0
        %9468 = vmatprep.subr.bf16.mxu0 0
        %9469 = vmatpush2.bf16.msra.mxu0 0
        %9470 = vmatprep.subr.bf16.mxu0 0
        %9471 = vmatpush2.bf16.msra.mxu0 0
        %9472 = vmatprep.subr.bf16.mxu0 0
        %9473 = vmatpush2.bf16.msra.mxu0 0
        %9474 = vmatprep.subr.bf16.mxu0 0
        %9475 = vmatpush2.bf16.msra.mxu0 0
        %9476 = vmatprep.subr.bf16.mxu0 0
        %9477 = vmatpush2.bf16.msra.mxu0 0
        %9478 = vmatprep.mubr.bf16.mxu0 0
        %9479 = vmatmul.mubr.bf16.gmra.mxu0 %v9374
        %v9480 = vpop.f32.mrf.mxu0
        %v9481 = vadd.f32 %v9396, %v9480
        %v9482 = vpop.f32.mrf.mxu0
        %v9483 = vpop.f32.mrf.mxu0
        %v9484 = vpop.f32.mrf.mxu0
        %9485 = vdwg.mxu0
        %9486 = vst [vmem:[%s488] sm:$0xff] %v9481
        %s9487 = sand.u32 %s357, 1
        %s9488 = scalar_lea.sflag [#allocation3], %s9487
        %s9489 = sand.u32 %s357, 1
        %s9490 = smul.addr %s9489, 8
        %s9491 = scalar_lea.vmem [#allocation2], %s9490
        // Predicated region
        $region81: #{forward.1} parent=79 // pred_check
          %p9492 = pneg %p367
        $region82: #{forward.1} parent=79 // pred_check_branch
          %9494 = sbr.rel (%p9492) target = $region84
        $region83: #{forward.1} parent=79 // pred_region
          %s9496 = ssub.s32 128, 128
          %9497 = vsyncadd %s9488, %s9496
          %s9498 = smul.addr %s29, 128
          %s9499 = scalar_lea.hbm %s15, %s9498
          %s9501 = sshll.u32 %s9491, 4
          %s9502 = int_to_ptr.vmem [resolvable:$true] %s9501
          %9504 = dma.vmem_to_hbm [thread:$0]  %s9502, 128, %s9499, %s9488
        $region84: #{forward.1} parent=79 // pred_fallthru
          _
      $region80: #{forward.1} parent=5 // pred_fallthru
        _
      %p9505 = scmp.le.s32.totalorder 2, %s24
      // Predicated region
      $region85: #{forward.1} parent=5 // pred_check
        %p9506 = pneg %p9505
      $region86: #{forward.1} parent=5 // pred_check_branch
        %9508 = sbr.rel (%p9506) target = $region88
      $region87: #{forward.1} parent=5 // pred_region
        %s9509 = ssub.s32 %s24, 2
        // Predicated region
        $region89: #{forward.1} parent=87 // pred_check
          %p9510 = pneg %p373
        $region90: #{forward.1} parent=87 // pred_check_branch
          %9512 = sbr.rel (%p9510) target = $region92
        $region91: #{forward.1} parent=87 // pred_region
          %s9513 = sand.u32 %s358, 1
          %s9514 = scalar_lea.sflag [#allocation3], %s9513
          %s9515 = sand.u32 %s358, 1
          %s9516 = smul.addr %s9515, 8
          %s9517 = scalar_lea.vmem [#allocation2], %s9516
          %9518 = dma.done %s9514, 128
        $region92: #{forward.1} parent=87 // pred_fallthru
          _
      $region88: #{forward.1} parent=5 // pred_fallthru
        _
    $region6: #{forward.1} parent=1 // loop_footer
      %s28 = sadd.s32 1, %s24
    $region7: #{forward.1} parent=1 // loop_footer_branch
      %23 = sbr.rel target = $region3
    $region8: #{forward.1} parent=1 // loop_exit
      _
    %9519 = vsyncpa [#allocation3], 1
    %s9520 = scalar_lea.sflag [#allocation3], 1
    %9521 = vsyncpa %s9520, 1

</llo_original>
